<compile_context>
chip_gen: v7x
topology: tpu7x:2x2x1
jax: 0.10.0
libtpu: 0.0.40
codegen_flags: <defaults>
</compile_context>

<pallas_src>
import functools

import jax
import jax.numpy as jnp
from jax import lax
from jax.experimental import pallas as pl
from jax.experimental.pallas import tpu as pltpu


# ----------------------------------------------------------------------------
# Fused Pallas kernel: embedding gather + L-layer LSTM (x & src) + decoder
# ----------------------------------------------------------------------------
def _make_fused_kernel(*, S, B, H, V, Q, L):
    """Build the fused kernel for static (seq, batch, hidden, vocab, Q, layers)."""

    def _run_stream(tok, gate_table, wih_refs, whh_refs, b_refs, out_ref):
        """Run the full LSTM stack for one (B, S) int32 token block.

        Writes the last layer's hidden sequence to out_ref (B, S*H) and returns
        the final hidden state (B, H)."""
        # Fused embedding lookup + layer-0 input projection as one-hot matmuls
        # against the precomputed gate table (all off the serial critical path).
        vio = lax.broadcasted_iota(jnp.int32, (B, V), 1)
        layer_in = []
        for t in range(S):                       # S is small & static: unrolled
            onehot = (tok[:, t:t + 1] == vio).astype(jnp.float32)        # (B, V)
            layer_in.append(jnp.dot(onehot, gate_table,
                                    preferred_element_type=jnp.float32))  # (B, 4H)

        # TODO(synk): pltpu.matmul_push_rhs/acc_lhs/pop could keep W_hh resident
        # in the MXU across the S serial steps (and v7x MRB could fuse the gin
        # add); kept on jnp.dot for lowering robustness.
        for l in range(L):
            whh = whh_refs[l][...]
            if l > 0:
                wih = wih_refs[l][...]
                bias = b_refs[l][...]
            h = jnp.zeros((B, H), jnp.float32)
            c = jnp.zeros((B, H), jnp.float32)
            outs = []
            for t in range(S):
                if l == 0:
                    gin = layer_in[t]
                else:
                    # Per-step input projection from the just-produced h of the
                    # layer below -> wavefront dataflow: layer l step t only
                    # depends on layer l-1 step t and layer l step t-1.
                    gin = jnp.dot(layer_in[t], wih,
                                  preferred_element_type=jnp.float32) + bias
                gates = gin + jnp.dot(h, whh, preferred_element_type=jnp.float32)
                # Two full-width transcendentals on the whole (B, 4H) tile, then
                # cheap lane slices in PyTorch gate order i | f | g | o.
                sg = jax.nn.sigmoid(gates)
                tg = jnp.tanh(gates)
                c = sg[:, H:2 * H] * c + sg[:, 0:H] * tg[:, 2 * H:3 * H]
                h = sg[:, 3 * H:4 * H] * jnp.tanh(c)
                outs.append(h)
            layer_in = outs

        # TODO(synk): lane-grouping 128//H timesteps per store would turn these
        # masked vst into dense vst, but the out ref is VMEM-resident in this
        # gridless call so the benefit is a handful of cycles; keep it simple.
        for t in range(S):
            out_ref[:, t * H:(t + 1) * H] = layer_in[t]
        return layer_in[S - 1]

    def kernel(*refs):
        # ---- inputs ---------------------------------------------------------
        x_ref, src_ref, tid_ref, emb_ref = refs[0:4]       # int32 (B,S),(B,S),(B,1); f32 (V,D)
        lyr = refs[4:4 + 3 * L]                            # per layer: w_ih, w_hh, bias
        wih_refs = list(lyr[0::3])                         # (D or H, 4H)
        whh_refs = list(lyr[1::3])                         # (H, 4H)
        b_refs = list(lyr[2::3])                           # (1, 4H)
        wdec_ref = refs[4 + 3 * L]                         # (H, Q)
        bdec_ref = refs[5 + 3 * L]                         # (1, Q)
        # ---- outputs --------------------------------------------------------
        outx_ref = refs[6 + 3 * L]                         # (B, S*H) lane-dense
        outs_ref = refs[7 + 3 * L]                         # (B, S*H)
        outg_ref = refs[8 + 3 * L]                         # (B, 1)

        # Layer-0 gate table: emb @ W_ih0 + b0  -> (V, 4H).  Shared by streams.
        gate_table = (jnp.dot(emb_ref[...], wih_refs[0][...],
                              preferred_element_type=jnp.float32)
                      + b_refs[0][...])

        h_last = _run_stream(x_ref[...], gate_table, wih_refs, whh_refs, b_refs, outx_ref)
        _run_stream(src_ref[...], gate_table, wih_refs, whh_refs, b_refs, outs_ref)

        # Fused decoder + target_id gather (x-stream only).
        logits = (jnp.dot(h_last, wdec_ref[...], preferred_element_type=jnp.float32)
                  + bdec_ref[...])                                        # (B, Q)
        qio = lax.broadcasted_iota(jnp.int32, (B, Q), 1)
        sel = jnp.where(tid_ref[...] == qio, logits, 0.0)
        outg_ref[...] = jnp.sum(sel, axis=1, keepdims=True)

    return kernel


def _fused_forward(params, x_tok, src_tok, target_id):
    """Returns (out_x (B,S,H), out_src (B,S,H), gathered output (B,1))."""
    emb = params["embedding"]
    lstm = params["lstm"]
    L = len(lstm)
    B, S = x_tok.shape
    V = emb.shape[0]
    H = lstm[0]["w_hh"].shape[0]
    Q = params["w_dec"].shape[1]

    args = [x_tok.astype(jnp.int32), src_tok.astype(jnp.int32),
            target_id.astype(jnp.int32), emb]
    for layer in lstm:
        args += [layer["w_ih"], layer["w_hh"], layer["bias"]]
    args += [params["w_dec"], params["b_dec"]]

    vmem = pl.BlockSpec(memory_space=pltpu.MemorySpace.VMEM)
    out_x, out_src, out_g = pl.pallas_call(
        _make_fused_kernel(S=S, B=B, H=H, V=V, Q=Q, L=L),
        out_shape=(jax.ShapeDtypeStruct((B, S * H), jnp.float32),
                   jax.ShapeDtypeStruct((B, S * H), jnp.float32),
                   jax.ShapeDtypeStruct((B, 1), jnp.float32)),
        in_specs=[vmem] * len(args),
        out_specs=(vmem, vmem, vmem),
    )(*args)
    return out_x.reshape(B, S, H), out_src.reshape(B, S, H), out_g


# ----------------------------------------------------------------------------
# Top-level forward: nothing but the pallas_call (plus free output reshapes)
# ----------------------------------------------------------------------------
@functools.partial(jax.jit, static_argnames=("mmd",))
def dkt_lstm_forward(params, x_tok, target_id, src_x_tok, mmd=True):
    # TODO(synk): inter-layer dropout only applies in PyTorch training mode;
    # this forward reproduces eval-mode semantics (no dropout).
    src = src_x_tok if mmd else x_tok
    output_mmd, src_output_mmd, output = _fused_forward(params, x_tok, src, target_id)
    if not mmd:
        src_output_mmd = output_mmd
    return output, output_mmd, src_output_mmd


# ----------------------------------------------------------------------------
# Deterministic parameter init (matches nn.LSTM / nn.Linear / nn.Embedding shapes)
# ----------------------------------------------------------------------------
def init_params(key, input_dim, hidden_dim, num_layers, question_num):
    keys = jax.random.split(key, 4 * num_layers + 3)
    ki = iter(range(len(keys)))
    scale = 0.1

    embedding = scale * jax.random.normal(
        keys[next(ki)], (2 * question_num + 1, input_dim), jnp.float32)

    lstm_layers = []
    for layer in range(num_layers):
        d_in = input_dim if layer == 0 else hidden_dim
        w_ih = scale * jax.random.normal(keys[next(ki)], (d_in, 4 * hidden_dim), jnp.float32)
        w_hh = scale * jax.random.normal(keys[next(ki)], (hidden_dim, 4 * hidden_dim), jnp.float32)
        b_ih = scale * jax.random.normal(keys[next(ki)], (4 * hidden_dim,), jnp.float32)
        b_hh = scale * jax.random.normal(keys[next(ki)], (4 * hidden_dim,), jnp.float32)
        lstm_layers.append({
            "w_ih": w_ih,
            "w_hh": w_hh,
            "bias": (b_ih + b_hh)[None, :],        # (1, 4H), pre-merged once
        })

    w_dec = scale * jax.random.normal(keys[next(ki)], (hidden_dim, question_num), jnp.float32)
    b_dec = scale * jax.random.normal(keys[next(ki)], (1, question_num), jnp.float32)

    return {"embedding": embedding, "lstm": lstm_layers,
            "w_dec": w_dec, "b_dec": b_dec}


# ----------------------------------------------------------------------------
# Pure-JAX reference (lax.scan LSTM) for correctness check
# ----------------------------------------------------------------------------
def _ref_lstm_layer(x_tm, w_ih, w_hh, bias):
    S, B, _ = x_tm.shape
    H = w_hh.shape[0]

    def step(carry, x_t):
        h, c = carry
        gates = x_t @ w_ih + h @ w_hh + bias
        i = jax.nn.sigmoid(gates[:, 0 * H:1 * H])
        f = jax.nn.sigmoid(gates[:, 1 * H:2 * H])
        g = jnp.tanh(gates[:, 2 * H:3 * H])
        o = jax.nn.sigmoid(gates[:, 3 * H:4 * H])
        c_new = f * c + i * g
        h_new = o * jnp.tanh(c_new)
        return (h_new, c_new), h_new

    init = (jnp.zeros((B, H), jnp.float32), jnp.zeros((B, H), jnp.float32))
    _, hs = lax.scan(step, init, x_tm)
    return hs


def ref_forward(params, x_tok, target_id, src_x_tok, mmd=True):
    def run(tok):
        x = jnp.transpose(params["embedding"][tok], (1, 0, 2))
        for layer in params["lstm"]:
            x = _ref_lstm_layer(x, layer["w_ih"], layer["w_hh"], layer["bias"])
        return jnp.transpose(x, (1, 0, 2))

    output_mmd = run(x_tok)
    src_output_mmd = run(src_x_tok) if mmd else output_mmd
    logits = output_mmd[:, -1, :] @ params["w_dec"] + params["b_dec"]
    output = jnp.take_along_axis(logits, target_id, axis=-1)
    return output, output_mmd, src_output_mmd


# ----------------------------------------------------------------------------
if __name__ == "__main__":
    # Hyperparameters implied by the module __init__.
    input_dim, hidden_dim, num_layers, question_num = 16, 32, 2, 12
    batch, seq = 2, 8
    mmd = True

    key = jax.random.PRNGKey(0)
    k_p, k_x, k_src, k_tid = jax.random.split(key, 4)

    params = init_params(k_p, input_dim, hidden_dim, num_layers, question_num)

    x_tok = jax.random.randint(k_x, (batch, seq), 0, 2 * question_num + 1, jnp.int32)
    src_x_tok = jax.random.randint(k_src, (batch, seq), 0, 2 * question_num + 1, jnp.int32)
    target_id = jax.random.randint(k_tid, (batch, 1), 0, question_num, jnp.int32)

    out, out_mmd, src_out_mmd = dkt_lstm_forward(params, x_tok, target_id, src_x_tok, mmd=mmd)
    jax.block_until_ready((out, out_mmd, src_out_mmd))

    # Sanity-check against a pure-JAX reference.
    r_out, r_out_mmd, r_src = ref_forward(params, x_tok, target_id, src_x_tok, mmd=mmd)
    assert out.shape == (batch, 1)
    assert out_mmd.shape == (batch, seq, hidden_dim)
    assert jnp.allclose(out, r_out, rtol=1e-4, atol=1e-4)
    assert jnp.allclose(out_mmd, r_out_mmd, rtol=1e-4, atol=1e-4)
    assert jnp.allclose(src_out_mmd, r_src, rtol=1e-4, atol=1e-4)

    print("KERNEL_OK")
</pallas_src>

<mosaic_0001>
module attributes {stable_mosaic.version = 11 : i64} {
  func.func @kernel(%arg0: memref<2x8xi32, #tpu.memory_space<vmem>>, %arg1: memref<2x8xi32, #tpu.memory_space<vmem>>, %arg2: memref<2x1xi32, #tpu.memory_space<vmem>>, %arg3: memref<25x16xf32, #tpu.memory_space<vmem>>, %arg4: memref<16x128xf32, #tpu.memory_space<vmem>>, %arg5: memref<32x128xf32, #tpu.memory_space<vmem>>, %arg6: memref<1x128xf32, #tpu.memory_space<vmem>>, %arg7: memref<32x128xf32, #tpu.memory_space<vmem>>, %arg8: memref<32x128xf32, #tpu.memory_space<vmem>>, %arg9: memref<1x128xf32, #tpu.memory_space<vmem>>, %arg10: memref<32x12xf32, #tpu.memory_space<vmem>>, %arg11: memref<1x12xf32, #tpu.memory_space<vmem>>, %arg12: memref<2x256xf32, #tpu.memory_space<vmem>>, %arg13: memref<2x256xf32, #tpu.memory_space<vmem>>, %arg14: memref<2x1xf32, #tpu.memory_space<vmem>>) attributes {dimension_semantics = [], scalar_prefetch = 0 : i64, scratch_operands = 0 : i64, tpu.core_type = #tpu.core_type<tc>} {
    %c0 = arith.constant 0 : index
    %c0_0 = arith.constant 0 : index
    %0 = vector.load %arg3[%c0, %c0_0] : memref<25x16xf32, #tpu.memory_space<vmem>>, vector<25x16xf32>
    %c0_1 = arith.constant 0 : index
    %c0_2 = arith.constant 0 : index
    %1 = vector.load %arg4[%c0_1, %c0_2] : memref<16x128xf32, #tpu.memory_space<vmem>>, vector<16x128xf32>
    %cst = arith.constant dense<0.000000e+00> : vector<25x128xf32>
    %2 = tpu.matmul %0, %1, %cst {dimension_numbers = #tpu.dot_dimension_numbers<[1], [0], [0], [1], [0, 0, 1, 1], [], []>} : vector<25x16xf32>, vector<16x128xf32>, vector<25x128xf32> -> vector<25x128xf32>
    %c0_3 = arith.constant 0 : index
    %c0_4 = arith.constant 0 : index
    %3 = vector.load %arg6[%c0_3, %c0_4] : memref<1x128xf32, #tpu.memory_space<vmem>>, vector<1x128xf32>
    %4 = vector.broadcast %3 : vector<1x128xf32> to vector<25x128xf32>
    %5 = arith.addf %2, %4 : vector<25x128xf32>
    %c0_5 = arith.constant 0 : index
    %c0_6 = arith.constant 0 : index
    %6 = vector.load %arg0[%c0_5, %c0_6] : memref<2x8xi32, #tpu.memory_space<vmem>>, vector<2x8xi32>
    %7 = tpu.iota {dimensions = array<i32: 1>} : vector<2x25xi32>
    %8 = vector.extract_strided_slice %6 {offsets = [0, 0], sizes = [2, 1], strides = [1, 1]} : vector<2x8xi32> to vector<2x1xi32>
    %9 = vector.broadcast %8 : vector<2x1xi32> to vector<2x25xi32>
    %10 = arith.cmpi eq, %9, %7 : vector<2x25xi32>
    %11 = arith.extui %10 : vector<2x25xi1> to vector<2x25xi32>
    %12 = arith.sitofp %11 : vector<2x25xi32> to vector<2x25xf32>
    %cst_7 = arith.constant dense<0.000000e+00> : vector<2x128xf32>
    %13 = tpu.matmul %12, %5, %cst_7 {dimension_numbers = #tpu.dot_dimension_numbers<[1], [0], [0], [1], [0, 0, 1, 1], [], []>} : vector<2x25xf32>, vector<25x128xf32>, vector<2x128xf32> -> vector<2x128xf32>
    %14 = vector.extract_strided_slice %6 {offsets = [0, 1], sizes = [2, 1], strides = [1, 1]} : vector<2x8xi32> to vector<2x1xi32>
    %15 = vector.broadcast %14 : vector<2x1xi32> to vector<2x25xi32>
    %16 = arith.cmpi eq, %15, %7 : vector<2x25xi32>
    %17 = arith.extui %16 : vector<2x25xi1> to vector<2x25xi32>
    %18 = arith.sitofp %17 : vector<2x25xi32> to vector<2x25xf32>
    %cst_8 = arith.constant dense<0.000000e+00> : vector<2x128xf32>
    %19 = tpu.matmul %18, %5, %cst_8 {dimension_numbers = #tpu.dot_dimension_numbers<[1], [0], [0], [1], [0, 0, 1, 1], [], []>} : vector<2x25xf32>, vector<25x128xf32>, vector<2x128xf32> -> vector<2x128xf32>
    %20 = vector.extract_strided_slice %6 {offsets = [0, 2], sizes = [2, 1], strides = [1, 1]} : vector<2x8xi32> to vector<2x1xi32>
    %21 = vector.broadcast %20 : vector<2x1xi32> to vector<2x25xi32>
    %22 = arith.cmpi eq, %21, %7 : vector<2x25xi32>
    %23 = arith.extui %22 : vector<2x25xi1> to vector<2x25xi32>
    %24 = arith.sitofp %23 : vector<2x25xi32> to vector<2x25xf32>
    %cst_9 = arith.constant dense<0.000000e+00> : vector<2x128xf32>
    %25 = tpu.matmul %24, %5, %cst_9 {dimension_numbers = #tpu.dot_dimension_numbers<[1], [0], [0], [1], [0, 0, 1, 1], [], []>} : vector<2x25xf32>, vector<25x128xf32>, vector<2x128xf32> -> vector<2x128xf32>
    %26 = vector.extract_strided_slice %6 {offsets = [0, 3], sizes = [2, 1], strides = [1, 1]} : vector<2x8xi32> to vector<2x1xi32>
    %27 = vector.broadcast %26 : vector<2x1xi32> to vector<2x25xi32>
    %28 = arith.cmpi eq, %27, %7 : vector<2x25xi32>
    %29 = arith.extui %28 : vector<2x25xi1> to vector<2x25xi32>
    %30 = arith.sitofp %29 : vector<2x25xi32> to vector<2x25xf32>
    %cst_10 = arith.constant dense<0.000000e+00> : vector<2x128xf32>
    %31 = tpu.matmul %30, %5, %cst_10 {dimension_numbers = #tpu.dot_dimension_numbers<[1], [0], [0], [1], [0, 0, 1, 1], [], []>} : vector<2x25xf32>, vector<25x128xf32>, vector<2x128xf32> -> vector<2x128xf32>
    %32 = vector.extract_strided_slice %6 {offsets = [0, 4], sizes = [2, 1], strides = [1, 1]} : vector<2x8xi32> to vector<2x1xi32>
    %33 = vector.broadcast %32 : vector<2x1xi32> to vector<2x25xi32>
    %34 = arith.cmpi eq, %33, %7 : vector<2x25xi32>
    %35 = arith.extui %34 : vector<2x25xi1> to vector<2x25xi32>
    %36 = arith.sitofp %35 : vector<2x25xi32> to vector<2x25xf32>
    %cst_11 = arith.constant dense<0.000000e+00> : vector<2x128xf32>
    %37 = tpu.matmul %36, %5, %cst_11 {dimension_numbers = #tpu.dot_dimension_numbers<[1], [0], [0], [1], [0, 0, 1, 1], [], []>} : vector<2x25xf32>, vector<25x128xf32>, vector<2x128xf32> -> vector<2x128xf32>
    %38 = vector.extract_strided_slice %6 {offsets = [0, 5], sizes = [2, 1], strides = [1, 1]} : vector<2x8xi32> to vector<2x1xi32>
    %39 = vector.broadcast %38 : vector<2x1xi32> to vector<2x25xi32>
    %40 = arith.cmpi eq, %39, %7 : vector<2x25xi32>
    %41 = arith.extui %40 : vector<2x25xi1> to vector<2x25xi32>
    %42 = arith.sitofp %41 : vector<2x25xi32> to vector<2x25xf32>
    %cst_12 = arith.constant dense<0.000000e+00> : vector<2x128xf32>
    %43 = tpu.matmul %42, %5, %cst_12 {dimension_numbers = #tpu.dot_dimension_numbers<[1], [0], [0], [1], [0, 0, 1, 1], [], []>} : vector<2x25xf32>, vector<25x128xf32>, vector<2x128xf32> -> vector<2x128xf32>
    %44 = vector.extract_strided_slice %6 {offsets = [0, 6], sizes = [2, 1], strides = [1, 1]} : vector<2x8xi32> to vector<2x1xi32>
    %45 = vector.broadcast %44 : vector<2x1xi32> to vector<2x25xi32>
    %46 = arith.cmpi eq, %45, %7 : vector<2x25xi32>
    %47 = arith.extui %46 : vector<2x25xi1> to vector<2x25xi32>
    %48 = arith.sitofp %47 : vector<2x25xi32> to vector<2x25xf32>
    %cst_13 = arith.constant dense<0.000000e+00> : vector<2x128xf32>
    %49 = tpu.matmul %48, %5, %cst_13 {dimension_numbers = #tpu.dot_dimension_numbers<[1], [0], [0], [1], [0, 0, 1, 1], [], []>} : vector<2x25xf32>, vector<25x128xf32>, vector<2x128xf32> -> vector<2x128xf32>
    %50 = vector.extract_strided_slice %6 {offsets = [0, 7], sizes = [2, 1], strides = [1, 1]} : vector<2x8xi32> to vector<2x1xi32>
    %51 = vector.broadcast %50 : vector<2x1xi32> to vector<2x25xi32>
    %52 = arith.cmpi eq, %51, %7 : vector<2x25xi32>
    %53 = arith.extui %52 : vector<2x25xi1> to vector<2x25xi32>
    %54 = arith.sitofp %53 : vector<2x25xi32> to vector<2x25xf32>
    %cst_14 = arith.constant dense<0.000000e+00> : vector<2x128xf32>
    %55 = tpu.matmul %54, %5, %cst_14 {dimension_numbers = #tpu.dot_dimension_numbers<[1], [0], [0], [1], [0, 0, 1, 1], [], []>} : vector<2x25xf32>, vector<25x128xf32>, vector<2x128xf32> -> vector<2x128xf32>
    %c0_15 = arith.constant 0 : index
    %c0_16 = arith.constant 0 : index
    %56 = vector.load %arg5[%c0_15, %c0_16] : memref<32x128xf32, #tpu.memory_space<vmem>>, vector<32x128xf32>
    %cst_17 = arith.constant 0.000000e+00 : f32
    %57 = vector.broadcast %cst_17 : f32 to vector<2x32xf32>
    %cst_18 = arith.constant 0.000000e+00 : f32
    %58 = vector.broadcast %cst_18 : f32 to vector<2x32xf32>
    %cst_19 = arith.constant dense<0.000000e+00> : vector<2x128xf32>
    %59 = tpu.matmul %57, %56, %cst_19 {dimension_numbers = #tpu.dot_dimension_numbers<[1], [0], [0], [1], [0, 0, 1, 1], [], []>} : vector<2x32xf32>, vector<32x128xf32>, vector<2x128xf32> -> vector<2x128xf32>
    %60 = arith.addf %13, %59 : vector<2x128xf32>
    %61 = arith.negf %60 : vector<2x128xf32>
    %62 = math.exp %61 : vector<2x128xf32>
    %cst_20 = arith.constant 1.000000e+00 : f32
    %63 = vector.broadcast %cst_20 : f32 to vector<2x128xf32>
    %64 = arith.addf %63, %62 : vector<2x128xf32>
    %65 = arith.divf %63, %64 : vector<2x128xf32>
    %66 = math.tanh %60 : vector<2x128xf32>
    %67 = vector.extract_strided_slice %65 {offsets = [0, 32], sizes = [2, 32], strides = [1, 1]} : vector<2x128xf32> to vector<2x32xf32>
    %68 = arith.mulf %67, %58 : vector<2x32xf32>
    %69 = vector.extract_strided_slice %65 {offsets = [0, 0], sizes = [2, 32], strides = [1, 1]} : vector<2x128xf32> to vector<2x32xf32>
    %70 = vector.extract_strided_slice %66 {offsets = [0, 64], sizes = [2, 32], strides = [1, 1]} : vector<2x128xf32> to vector<2x32xf32>
    %71 = arith.mulf %69, %70 : vector<2x32xf32>
    %72 = arith.addf %68, %71 : vector<2x32xf32>
    %73 = vector.extract_strided_slice %65 {offsets = [0, 96], sizes = [2, 32], strides = [1, 1]} : vector<2x128xf32> to vector<2x32xf32>
    %74 = math.tanh %72 : vector<2x32xf32>
    %75 = arith.mulf %73, %74 : vector<2x32xf32>
    %cst_21 = arith.constant dense<0.000000e+00> : vector<2x128xf32>
    %76 = tpu.matmul %75, %56, %cst_21 {dimension_numbers = #tpu.dot_dimension_numbers<[1], [0], [0], [1], [0, 0, 1, 1], [], []>} : vector<2x32xf32>, vector<32x128xf32>, vector<2x128xf32> -> vector<2x128xf32>
    %77 = arith.addf %19, %76 : vector<2x128xf32>
    %78 = arith.negf %77 : vector<2x128xf32>
    %79 = math.exp %78 : vector<2x128xf32>
    %cst_22 = arith.constant 1.000000e+00 : f32
    %80 = vector.broadcast %cst_22 : f32 to vector<2x128xf32>
    %81 = arith.addf %80, %79 : vector<2x128xf32>
    %82 = arith.divf %80, %81 : vector<2x128xf32>
    %83 = math.tanh %77 : vector<2x128xf32>
    %84 = vector.extract_strided_slice %82 {offsets = [0, 32], sizes = [2, 32], strides = [1, 1]} : vector<2x128xf32> to vector<2x32xf32>
    %85 = arith.mulf %84, %72 : vector<2x32xf32>
    %86 = vector.extract_strided_slice %82 {offsets = [0, 0], sizes = [2, 32], strides = [1, 1]} : vector<2x128xf32> to vector<2x32xf32>
    %87 = vector.extract_strided_slice %83 {offsets = [0, 64], sizes = [2, 32], strides = [1, 1]} : vector<2x128xf32> to vector<2x32xf32>
    %88 = arith.mulf %86, %87 : vector<2x32xf32>
    %89 = arith.addf %85, %88 : vector<2x32xf32>
    %90 = vector.extract_strided_slice %82 {offsets = [0, 96], sizes = [2, 32], strides = [1, 1]} : vector<2x128xf32> to vector<2x32xf32>
    %91 = math.tanh %89 : vector<2x32xf32>
    %92 = arith.mulf %90, %91 : vector<2x32xf32>
    %cst_23 = arith.constant dense<0.000000e+00> : vector<2x128xf32>
    %93 = tpu.matmul %92, %56, %cst_23 {dimension_numbers = #tpu.dot_dimension_numbers<[1], [0], [0], [1], [0, 0, 1, 1], [], []>} : vector<2x32xf32>, vector<32x128xf32>, vector<2x128xf32> -> vector<2x128xf32>
    %94 = arith.addf %25, %93 : vector<2x128xf32>
    %95 = arith.negf %94 : vector<2x128xf32>
    %96 = math.exp %95 : vector<2x128xf32>
    %cst_24 = arith.constant 1.000000e+00 : f32
    %97 = vector.broadcast %cst_24 : f32 to vector<2x128xf32>
    %98 = arith.addf %97, %96 : vector<2x128xf32>
    %99 = arith.divf %97, %98 : vector<2x128xf32>
    %100 = math.tanh %94 : vector<2x128xf32>
    %101 = vector.extract_strided_slice %99 {offsets = [0, 32], sizes = [2, 32], strides = [1, 1]} : vector<2x128xf32> to vector<2x32xf32>
    %102 = arith.mulf %101, %89 : vector<2x32xf32>
    %103 = vector.extract_strided_slice %99 {offsets = [0, 0], sizes = [2, 32], strides = [1, 1]} : vector<2x128xf32> to vector<2x32xf32>
    %104 = vector.extract_strided_slice %100 {offsets = [0, 64], sizes = [2, 32], strides = [1, 1]} : vector<2x128xf32> to vector<2x32xf32>
    %105 = arith.mulf %103, %104 : vector<2x32xf32>
    %106 = arith.addf %102, %105 : vector<2x32xf32>
    %107 = vector.extract_strided_slice %99 {offsets = [0, 96], sizes = [2, 32], strides = [1, 1]} : vector<2x128xf32> to vector<2x32xf32>
    %108 = math.tanh %106 : vector<2x32xf32>
    %109 = arith.mulf %107, %108 : vector<2x32xf32>
    %cst_25 = arith.constant dense<0.000000e+00> : vector<2x128xf32>
    %110 = tpu.matmul %109, %56, %cst_25 {dimension_numbers = #tpu.dot_dimension_numbers<[1], [0], [0], [1], [0, 0, 1, 1], [], []>} : vector<2x32xf32>, vector<32x128xf32>, vector<2x128xf32> -> vector<2x128xf32>
    %111 = arith.addf %31, %110 : vector<2x128xf32>
    %112 = arith.negf %111 : vector<2x128xf32>
    %113 = math.exp %112 : vector<2x128xf32>
    %cst_26 = arith.constant 1.000000e+00 : f32
    %114 = vector.broadcast %cst_26 : f32 to vector<2x128xf32>
    %115 = arith.addf %114, %113 : vector<2x128xf32>
    %116 = arith.divf %114, %115 : vector<2x128xf32>
    %117 = math.tanh %111 : vector<2x128xf32>
    %118 = vector.extract_strided_slice %116 {offsets = [0, 32], sizes = [2, 32], strides = [1, 1]} : vector<2x128xf32> to vector<2x32xf32>
    %119 = arith.mulf %118, %106 : vector<2x32xf32>
    %120 = vector.extract_strided_slice %116 {offsets = [0, 0], sizes = [2, 32], strides = [1, 1]} : vector<2x128xf32> to vector<2x32xf32>
    %121 = vector.extract_strided_slice %117 {offsets = [0, 64], sizes = [2, 32], strides = [1, 1]} : vector<2x128xf32> to vector<2x32xf32>
    %122 = arith.mulf %120, %121 : vector<2x32xf32>
    %123 = arith.addf %119, %122 : vector<2x32xf32>
    %124 = vector.extract_strided_slice %116 {offsets = [0, 96], sizes = [2, 32], strides = [1, 1]} : vector<2x128xf32> to vector<2x32xf32>
    %125 = math.tanh %123 : vector<2x32xf32>
    %126 = arith.mulf %124, %125 : vector<2x32xf32>
    %cst_27 = arith.constant dense<0.000000e+00> : vector<2x128xf32>
    %127 = tpu.matmul %126, %56, %cst_27 {dimension_numbers = #tpu.dot_dimension_numbers<[1], [0], [0], [1], [0, 0, 1, 1], [], []>} : vector<2x32xf32>, vector<32x128xf32>, vector<2x128xf32> -> vector<2x128xf32>
    %128 = arith.addf %37, %127 : vector<2x128xf32>
    %129 = arith.negf %128 : vector<2x128xf32>
    %130 = math.exp %129 : vector<2x128xf32>
    %cst_28 = arith.constant 1.000000e+00 : f32
    %131 = vector.broadcast %cst_28 : f32 to vector<2x128xf32>
    %132 = arith.addf %131, %130 : vector<2x128xf32>
    %133 = arith.divf %131, %132 : vector<2x128xf32>
    %134 = math.tanh %128 : vector<2x128xf32>
    %135 = vector.extract_strided_slice %133 {offsets = [0, 32], sizes = [2, 32], strides = [1, 1]} : vector<2x128xf32> to vector<2x32xf32>
    %136 = arith.mulf %135, %123 : vector<2x32xf32>
    %137 = vector.extract_strided_slice %133 {offsets = [0, 0], sizes = [2, 32], strides = [1, 1]} : vector<2x128xf32> to vector<2x32xf32>
    %138 = vector.extract_strided_slice %134 {offsets = [0, 64], sizes = [2, 32], strides = [1, 1]} : vector<2x128xf32> to vector<2x32xf32>
    %139 = arith.mulf %137, %138 : vector<2x32xf32>
    %140 = arith.addf %136, %139 : vector<2x32xf32>
    %141 = vector.extract_strided_slice %133 {offsets = [0, 96], sizes = [2, 32], strides = [1, 1]} : vector<2x128xf32> to vector<2x32xf32>
    %142 = math.tanh %140 : vector<2x32xf32>
    %143 = arith.mulf %141, %142 : vector<2x32xf32>
    %cst_29 = arith.constant dense<0.000000e+00> : vector<2x128xf32>
    %144 = tpu.matmul %143, %56, %cst_29 {dimension_numbers = #tpu.dot_dimension_numbers<[1], [0], [0], [1], [0, 0, 1, 1], [], []>} : vector<2x32xf32>, vector<32x128xf32>, vector<2x128xf32> -> vector<2x128xf32>
    %145 = arith.addf %43, %144 : vector<2x128xf32>
    %146 = arith.negf %145 : vector<2x128xf32>
    %147 = math.exp %146 : vector<2x128xf32>
    %cst_30 = arith.constant 1.000000e+00 : f32
    %148 = vector.broadcast %cst_30 : f32 to vector<2x128xf32>
    %149 = arith.addf %148, %147 : vector<2x128xf32>
    %150 = arith.divf %148, %149 : vector<2x128xf32>
    %151 = math.tanh %145 : vector<2x128xf32>
    %152 = vector.extract_strided_slice %150 {offsets = [0, 32], sizes = [2, 32], strides = [1, 1]} : vector<2x128xf32> to vector<2x32xf32>
    %153 = arith.mulf %152, %140 : vector<2x32xf32>
    %154 = vector.extract_strided_slice %150 {offsets = [0, 0], sizes = [2, 32], strides = [1, 1]} : vector<2x128xf32> to vector<2x32xf32>
    %155 = vector.extract_strided_slice %151 {offsets = [0, 64], sizes = [2, 32], strides = [1, 1]} : vector<2x128xf32> to vector<2x32xf32>
    %156 = arith.mulf %154, %155 : vector<2x32xf32>
    %157 = arith.addf %153, %156 : vector<2x32xf32>
    %158 = vector.extract_strided_slice %150 {offsets = [0, 96], sizes = [2, 32], strides = [1, 1]} : vector<2x128xf32> to vector<2x32xf32>
    %159 = math.tanh %157 : vector<2x32xf32>
    %160 = arith.mulf %158, %159 : vector<2x32xf32>
    %cst_31 = arith.constant dense<0.000000e+00> : vector<2x128xf32>
    %161 = tpu.matmul %160, %56, %cst_31 {dimension_numbers = #tpu.dot_dimension_numbers<[1], [0], [0], [1], [0, 0, 1, 1], [], []>} : vector<2x32xf32>, vector<32x128xf32>, vector<2x128xf32> -> vector<2x128xf32>
    %162 = arith.addf %49, %161 : vector<2x128xf32>
    %163 = arith.negf %162 : vector<2x128xf32>
    %164 = math.exp %163 : vector<2x128xf32>
    %cst_32 = arith.constant 1.000000e+00 : f32
    %165 = vector.broadcast %cst_32 : f32 to vector<2x128xf32>
    %166 = arith.addf %165, %164 : vector<2x128xf32>
    %167 = arith.divf %165, %166 : vector<2x128xf32>
    %168 = math.tanh %162 : vector<2x128xf32>
    %169 = vector.extract_strided_slice %167 {offsets = [0, 32], sizes = [2, 32], strides = [1, 1]} : vector<2x128xf32> to vector<2x32xf32>
    %170 = arith.mulf %169, %157 : vector<2x32xf32>
    %171 = vector.extract_strided_slice %167 {offsets = [0, 0], sizes = [2, 32], strides = [1, 1]} : vector<2x128xf32> to vector<2x32xf32>
    %172 = vector.extract_strided_slice %168 {offsets = [0, 64], sizes = [2, 32], strides = [1, 1]} : vector<2x128xf32> to vector<2x32xf32>
    %173 = arith.mulf %171, %172 : vector<2x32xf32>
    %174 = arith.addf %170, %173 : vector<2x32xf32>
    %175 = vector.extract_strided_slice %167 {offsets = [0, 96], sizes = [2, 32], strides = [1, 1]} : vector<2x128xf32> to vector<2x32xf32>
    %176 = math.tanh %174 : vector<2x32xf32>
    %177 = arith.mulf %175, %176 : vector<2x32xf32>
    %cst_33 = arith.constant dense<0.000000e+00> : vector<2x128xf32>
    %178 = tpu.matmul %177, %56, %cst_33 {dimension_numbers = #tpu.dot_dimension_numbers<[1], [0], [0], [1], [0, 0, 1, 1], [], []>} : vector<2x32xf32>, vector<32x128xf32>, vector<2x128xf32> -> vector<2x128xf32>
    %179 = arith.addf %55, %178 : vector<2x128xf32>
    %180 = arith.negf %179 : vector<2x128xf32>
    %181 = math.exp %180 : vector<2x128xf32>
    %cst_34 = arith.constant 1.000000e+00 : f32
    %182 = vector.broadcast %cst_34 : f32 to vector<2x128xf32>
    %183 = arith.addf %182, %181 : vector<2x128xf32>
    %184 = arith.divf %182, %183 : vector<2x128xf32>
    %185 = math.tanh %179 : vector<2x128xf32>
    %186 = vector.extract_strided_slice %184 {offsets = [0, 32], sizes = [2, 32], strides = [1, 1]} : vector<2x128xf32> to vector<2x32xf32>
    %187 = arith.mulf %186, %174 : vector<2x32xf32>
    %188 = vector.extract_strided_slice %184 {offsets = [0, 0], sizes = [2, 32], strides = [1, 1]} : vector<2x128xf32> to vector<2x32xf32>
    %189 = vector.extract_strided_slice %185 {offsets = [0, 64], sizes = [2, 32], strides = [1, 1]} : vector<2x128xf32> to vector<2x32xf32>
    %190 = arith.mulf %188, %189 : vector<2x32xf32>
    %191 = arith.addf %187, %190 : vector<2x32xf32>
    %192 = vector.extract_strided_slice %184 {offsets = [0, 96], sizes = [2, 32], strides = [1, 1]} : vector<2x128xf32> to vector<2x32xf32>
    %193 = math.tanh %191 : vector<2x32xf32>
    %194 = arith.mulf %192, %193 : vector<2x32xf32>
    %c0_35 = arith.constant 0 : index
    %c0_36 = arith.constant 0 : index
    %195 = vector.load %arg8[%c0_35, %c0_36] : memref<32x128xf32, #tpu.memory_space<vmem>>, vector<32x128xf32>
    %c0_37 = arith.constant 0 : index
    %c0_38 = arith.constant 0 : index
    %196 = vector.load %arg7[%c0_37, %c0_38] : memref<32x128xf32, #tpu.memory_space<vmem>>, vector<32x128xf32>
    %c0_39 = arith.constant 0 : index
    %c0_40 = arith.constant 0 : index
    %197 = vector.load %arg9[%c0_39, %c0_40] : memref<1x128xf32, #tpu.memory_space<vmem>>, vector<1x128xf32>
    %cst_41 = arith.constant 0.000000e+00 : f32
    %198 = vector.broadcast %cst_41 : f32 to vector<2x32xf32>
    %cst_42 = arith.constant 0.000000e+00 : f32
    %199 = vector.broadcast %cst_42 : f32 to vector<2x32xf32>
    %cst_43 = arith.constant dense<0.000000e+00> : vector<2x128xf32>
    %200 = tpu.matmul %75, %196, %cst_43 {dimension_numbers = #tpu.dot_dimension_numbers<[1], [0], [0], [1], [0, 0, 1, 1], [], []>} : vector<2x32xf32>, vector<32x128xf32>, vector<2x128xf32> -> vector<2x128xf32>
    %201 = vector.broadcast %197 : vector<1x128xf32> to vector<2x128xf32>
    %202 = arith.addf %200, %201 : vector<2x128xf32>
    %cst_44 = arith.constant dense<0.000000e+00> : vector<2x128xf32>
    %203 = tpu.matmul %198, %195, %cst_44 {dimension_numbers = #tpu.dot_dimension_numbers<[1], [0], [0], [1], [0, 0, 1, 1], [], []>} : vector<2x32xf32>, vector<32x128xf32>, vector<2x128xf32> -> vector<2x128xf32>
    %204 = arith.addf %202, %203 : vector<2x128xf32>
    %205 = arith.negf %204 : vector<2x128xf32>
    %206 = math.exp %205 : vector<2x128xf32>
    %cst_45 = arith.constant 1.000000e+00 : f32
    %207 = vector.broadcast %cst_45 : f32 to vector<2x128xf32>
    %208 = arith.addf %207, %206 : vector<2x128xf32>
    %209 = arith.divf %207, %208 : vector<2x128xf32>
    %210 = math.tanh %204 : vector<2x128xf32>
    %211 = vector.extract_strided_slice %209 {offsets = [0, 32], sizes = [2, 32], strides = [1, 1]} : vector<2x128xf32> to vector<2x32xf32>
    %212 = arith.mulf %211, %199 : vector<2x32xf32>
    %213 = vector.extract_strided_slice %209 {offsets = [0, 0], sizes = [2, 32], strides = [1, 1]} : vector<2x128xf32> to vector<2x32xf32>
    %214 = vector.extract_strided_slice %210 {offsets = [0, 64], sizes = [2, 32], strides = [1, 1]} : vector<2x128xf32> to vector<2x32xf32>
    %215 = arith.mulf %213, %214 : vector<2x32xf32>
    %216 = arith.addf %212, %215 : vector<2x32xf32>
    %217 = vector.extract_strided_slice %209 {offsets = [0, 96], sizes = [2, 32], strides = [1, 1]} : vector<2x128xf32> to vector<2x32xf32>
    %218 = math.tanh %216 : vector<2x32xf32>
    %219 = arith.mulf %217, %218 : vector<2x32xf32>
    %cst_46 = arith.constant dense<0.000000e+00> : vector<2x128xf32>
    %220 = tpu.matmul %92, %196, %cst_46 {dimension_numbers = #tpu.dot_dimension_numbers<[1], [0], [0], [1], [0, 0, 1, 1], [], []>} : vector<2x32xf32>, vector<32x128xf32>, vector<2x128xf32> -> vector<2x128xf32>
    %221 = vector.broadcast %197 : vector<1x128xf32> to vector<2x128xf32>
    %222 = arith.addf %220, %221 : vector<2x128xf32>
    %cst_47 = arith.constant dense<0.000000e+00> : vector<2x128xf32>
    %223 = tpu.matmul %219, %195, %cst_47 {dimension_numbers = #tpu.dot_dimension_numbers<[1], [0], [0], [1], [0, 0, 1, 1], [], []>} : vector<2x32xf32>, vector<32x128xf32>, vector<2x128xf32> -> vector<2x128xf32>
    %224 = arith.addf %222, %223 : vector<2x128xf32>
    %225 = arith.negf %224 : vector<2x128xf32>
    %226 = math.exp %225 : vector<2x128xf32>
    %cst_48 = arith.constant 1.000000e+00 : f32
    %227 = vector.broadcast %cst_48 : f32 to vector<2x128xf32>
    %228 = arith.addf %227, %226 : vector<2x128xf32>
    %229 = arith.divf %227, %228 : vector<2x128xf32>
    %230 = math.tanh %224 : vector<2x128xf32>
    %231 = vector.extract_strided_slice %229 {offsets = [0, 32], sizes = [2, 32], strides = [1, 1]} : vector<2x128xf32> to vector<2x32xf32>
    %232 = arith.mulf %231, %216 : vector<2x32xf32>
    %233 = vector.extract_strided_slice %229 {offsets = [0, 0], sizes = [2, 32], strides = [1, 1]} : vector<2x128xf32> to vector<2x32xf32>
    %234 = vector.extract_strided_slice %230 {offsets = [0, 64], sizes = [2, 32], strides = [1, 1]} : vector<2x128xf32> to vector<2x32xf32>
    %235 = arith.mulf %233, %234 : vector<2x32xf32>
    %236 = arith.addf %232, %235 : vector<2x32xf32>
    %237 = vector.extract_strided_slice %229 {offsets = [0, 96], sizes = [2, 32], strides = [1, 1]} : vector<2x128xf32> to vector<2x32xf32>
    %238 = math.tanh %236 : vector<2x32xf32>
    %239 = arith.mulf %237, %238 : vector<2x32xf32>
    %cst_49 = arith.constant dense<0.000000e+00> : vector<2x128xf32>
    %240 = tpu.matmul %109, %196, %cst_49 {dimension_numbers = #tpu.dot_dimension_numbers<[1], [0], [0], [1], [0, 0, 1, 1], [], []>} : vector<2x32xf32>, vector<32x128xf32>, vector<2x128xf32> -> vector<2x128xf32>
    %241 = vector.broadcast %197 : vector<1x128xf32> to vector<2x128xf32>
    %242 = arith.addf %240, %241 : vector<2x128xf32>
    %cst_50 = arith.constant dense<0.000000e+00> : vector<2x128xf32>
    %243 = tpu.matmul %239, %195, %cst_50 {dimension_numbers = #tpu.dot_dimension_numbers<[1], [0], [0], [1], [0, 0, 1, 1], [], []>} : vector<2x32xf32>, vector<32x128xf32>, vector<2x128xf32> -> vector<2x128xf32>
    %244 = arith.addf %242, %243 : vector<2x128xf32>
    %245 = arith.negf %244 : vector<2x128xf32>
    %246 = math.exp %245 : vector<2x128xf32>
    %cst_51 = arith.constant 1.000000e+00 : f32
    %247 = vector.broadcast %cst_51 : f32 to vector<2x128xf32>
    %248 = arith.addf %247, %246 : vector<2x128xf32>
    %249 = arith.divf %247, %248 : vector<2x128xf32>
    %250 = math.tanh %244 : vector<2x128xf32>
    %251 = vector.extract_strided_slice %249 {offsets = [0, 32], sizes = [2, 32], strides = [1, 1]} : vector<2x128xf32> to vector<2x32xf32>
    %252 = arith.mulf %251, %236 : vector<2x32xf32>
    %253 = vector.extract_strided_slice %249 {offsets = [0, 0], sizes = [2, 32], strides = [1, 1]} : vector<2x128xf32> to vector<2x32xf32>
    %254 = vector.extract_strided_slice %250 {offsets = [0, 64], sizes = [2, 32], strides = [1, 1]} : vector<2x128xf32> to vector<2x32xf32>
    %255 = arith.mulf %253, %254 : vector<2x32xf32>
    %256 = arith.addf %252, %255 : vector<2x32xf32>
    %257 = vector.extract_strided_slice %249 {offsets = [0, 96], sizes = [2, 32], strides = [1, 1]} : vector<2x128xf32> to vector<2x32xf32>
    %258 = math.tanh %256 : vector<2x32xf32>
    %259 = arith.mulf %257, %258 : vector<2x32xf32>
    %cst_52 = arith.constant dense<0.000000e+00> : vector<2x128xf32>
    %260 = tpu.matmul %126, %196, %cst_52 {dimension_numbers = #tpu.dot_dimension_numbers<[1], [0], [0], [1], [0, 0, 1, 1], [], []>} : vector<2x32xf32>, vector<32x128xf32>, vector<2x128xf32> -> vector<2x128xf32>
    %261 = vector.broadcast %197 : vector<1x128xf32> to vector<2x128xf32>
    %262 = arith.addf %260, %261 : vector<2x128xf32>
    %cst_53 = arith.constant dense<0.000000e+00> : vector<2x128xf32>
    %263 = tpu.matmul %259, %195, %cst_53 {dimension_numbers = #tpu.dot_dimension_numbers<[1], [0], [0], [1], [0, 0, 1, 1], [], []>} : vector<2x32xf32>, vector<32x128xf32>, vector<2x128xf32> -> vector<2x128xf32>
    %264 = arith.addf %262, %263 : vector<2x128xf32>
    %265 = arith.negf %264 : vector<2x128xf32>
    %266 = math.exp %265 : vector<2x128xf32>
    %cst_54 = arith.constant 1.000000e+00 : f32
    %267 = vector.broadcast %cst_54 : f32 to vector<2x128xf32>
    %268 = arith.addf %267, %266 : vector<2x128xf32>
    %269 = arith.divf %267, %268 : vector<2x128xf32>
    %270 = math.tanh %264 : vector<2x128xf32>
    %271 = vector.extract_strided_slice %269 {offsets = [0, 32], sizes = [2, 32], strides = [1, 1]} : vector<2x128xf32> to vector<2x32xf32>
    %272 = arith.mulf %271, %256 : vector<2x32xf32>
    %273 = vector.extract_strided_slice %269 {offsets = [0, 0], sizes = [2, 32], strides = [1, 1]} : vector<2x128xf32> to vector<2x32xf32>
    %274 = vector.extract_strided_slice %270 {offsets = [0, 64], sizes = [2, 32], strides = [1, 1]} : vector<2x128xf32> to vector<2x32xf32>
    %275 = arith.mulf %273, %274 : vector<2x32xf32>
    %276 = arith.addf %272, %275 : vector<2x32xf32>
    %277 = vector.extract_strided_slice %269 {offsets = [0, 96], sizes = [2, 32], strides = [1, 1]} : vector<2x128xf32> to vector<2x32xf32>
    %278 = math.tanh %276 : vector<2x32xf32>
    %279 = arith.mulf %277, %278 : vector<2x32xf32>
    %cst_55 = arith.constant dense<0.000000e+00> : vector<2x128xf32>
    %280 = tpu.matmul %143, %196, %cst_55 {dimension_numbers = #tpu.dot_dimension_numbers<[1], [0], [0], [1], [0, 0, 1, 1], [], []>} : vector<2x32xf32>, vector<32x128xf32>, vector<2x128xf32> -> vector<2x128xf32>
    %281 = vector.broadcast %197 : vector<1x128xf32> to vector<2x128xf32>
    %282 = arith.addf %280, %281 : vector<2x128xf32>
    %cst_56 = arith.constant dense<0.000000e+00> : vector<2x128xf32>
    %283 = tpu.matmul %279, %195, %cst_56 {dimension_numbers = #tpu.dot_dimension_numbers<[1], [0], [0], [1], [0, 0, 1, 1], [], []>} : vector<2x32xf32>, vector<32x128xf32>, vector<2x128xf32> -> vector<2x128xf32>
    %284 = arith.addf %282, %283 : vector<2x128xf32>
    %285 = arith.negf %284 : vector<2x128xf32>
    %286 = math.exp %285 : vector<2x128xf32>
    %cst_57 = arith.constant 1.000000e+00 : f32
    %287 = vector.broadcast %cst_57 : f32 to vector<2x128xf32>
    %288 = arith.addf %287, %286 : vector<2x128xf32>
    %289 = arith.divf %287, %288 : vector<2x128xf32>
    %290 = math.tanh %284 : vector<2x128xf32>
    %291 = vector.extract_strided_slice %289 {offsets = [0, 32], sizes = [2, 32], strides = [1, 1]} : vector<2x128xf32> to vector<2x32xf32>
    %292 = arith.mulf %291, %276 : vector<2x32xf32>
    %293 = vector.extract_strided_slice %289 {offsets = [0, 0], sizes = [2, 32], strides = [1, 1]} : vector<2x128xf32> to vector<2x32xf32>
    %294 = vector.extract_strided_slice %290 {offsets = [0, 64], sizes = [2, 32], strides = [1, 1]} : vector<2x128xf32> to vector<2x32xf32>
    %295 = arith.mulf %293, %294 : vector<2x32xf32>
    %296 = arith.addf %292, %295 : vector<2x32xf32>
    %297 = vector.extract_strided_slice %289 {offsets = [0, 96], sizes = [2, 32], strides = [1, 1]} : vector<2x128xf32> to vector<2x32xf32>
    %298 = math.tanh %296 : vector<2x32xf32>
    %299 = arith.mulf %297, %298 : vector<2x32xf32>
    %cst_58 = arith.constant dense<0.000000e+00> : vector<2x128xf32>
    %300 = tpu.matmul %160, %196, %cst_58 {dimension_numbers = #tpu.dot_dimension_numbers<[1], [0], [0], [1], [0, 0, 1, 1], [], []>} : vector<2x32xf32>, vector<32x128xf32>, vector<2x128xf32> -> vector<2x128xf32>
    %301 = vector.broadcast %197 : vector<1x128xf32> to vector<2x128xf32>
    %302 = arith.addf %300, %301 : vector<2x128xf32>
    %cst_59 = arith.constant dense<0.000000e+00> : vector<2x128xf32>
    %303 = tpu.matmul %299, %195, %cst_59 {dimension_numbers = #tpu.dot_dimension_numbers<[1], [0], [0], [1], [0, 0, 1, 1], [], []>} : vector<2x32xf32>, vector<32x128xf32>, vector<2x128xf32> -> vector<2x128xf32>
    %304 = arith.addf %302, %303 : vector<2x128xf32>
    %305 = arith.negf %304 : vector<2x128xf32>
    %306 = math.exp %305 : vector<2x128xf32>
    %cst_60 = arith.constant 1.000000e+00 : f32
    %307 = vector.broadcast %cst_60 : f32 to vector<2x128xf32>
    %308 = arith.addf %307, %306 : vector<2x128xf32>
    %309 = arith.divf %307, %308 : vector<2x128xf32>
    %310 = math.tanh %304 : vector<2x128xf32>
    %311 = vector.extract_strided_slice %309 {offsets = [0, 32], sizes = [2, 32], strides = [1, 1]} : vector<2x128xf32> to vector<2x32xf32>
    %312 = arith.mulf %311, %296 : vector<2x32xf32>
    %313 = vector.extract_strided_slice %309 {offsets = [0, 0], sizes = [2, 32], strides = [1, 1]} : vector<2x128xf32> to vector<2x32xf32>
    %314 = vector.extract_strided_slice %310 {offsets = [0, 64], sizes = [2, 32], strides = [1, 1]} : vector<2x128xf32> to vector<2x32xf32>
    %315 = arith.mulf %313, %314 : vector<2x32xf32>
    %316 = arith.addf %312, %315 : vector<2x32xf32>
    %317 = vector.extract_strided_slice %309 {offsets = [0, 96], sizes = [2, 32], strides = [1, 1]} : vector<2x128xf32> to vector<2x32xf32>
    %318 = math.tanh %316 : vector<2x32xf32>
    %319 = arith.mulf %317, %318 : vector<2x32xf32>
    %cst_61 = arith.constant dense<0.000000e+00> : vector<2x128xf32>
    %320 = tpu.matmul %177, %196, %cst_61 {dimension_numbers = #tpu.dot_dimension_numbers<[1], [0], [0], [1], [0, 0, 1, 1], [], []>} : vector<2x32xf32>, vector<32x128xf32>, vector<2x128xf32> -> vector<2x128xf32>
    %321 = vector.broadcast %197 : vector<1x128xf32> to vector<2x128xf32>
    %322 = arith.addf %320, %321 : vector<2x128xf32>
    %cst_62 = arith.constant dense<0.000000e+00> : vector<2x128xf32>
    %323 = tpu.matmul %319, %195, %cst_62 {dimension_numbers = #tpu.dot_dimension_numbers<[1], [0], [0], [1], [0, 0, 1, 1], [], []>} : vector<2x32xf32>, vector<32x128xf32>, vector<2x128xf32> -> vector<2x128xf32>
    %324 = arith.addf %322, %323 : vector<2x128xf32>
    %325 = arith.negf %324 : vector<2x128xf32>
    %326 = math.exp %325 : vector<2x128xf32>
    %cst_63 = arith.constant 1.000000e+00 : f32
    %327 = vector.broadcast %cst_63 : f32 to vector<2x128xf32>
    %328 = arith.addf %327, %326 : vector<2x128xf32>
    %329 = arith.divf %327, %328 : vector<2x128xf32>
    %330 = math.tanh %324 : vector<2x128xf32>
    %331 = vector.extract_strided_slice %329 {offsets = [0, 32], sizes = [2, 32], strides = [1, 1]} : vector<2x128xf32> to vector<2x32xf32>
    %332 = arith.mulf %331, %316 : vector<2x32xf32>
    %333 = vector.extract_strided_slice %329 {offsets = [0, 0], sizes = [2, 32], strides = [1, 1]} : vector<2x128xf32> to vector<2x32xf32>
    %334 = vector.extract_strided_slice %330 {offsets = [0, 64], sizes = [2, 32], strides = [1, 1]} : vector<2x128xf32> to vector<2x32xf32>
    %335 = arith.mulf %333, %334 : vector<2x32xf32>
    %336 = arith.addf %332, %335 : vector<2x32xf32>
    %337 = vector.extract_strided_slice %329 {offsets = [0, 96], sizes = [2, 32], strides = [1, 1]} : vector<2x128xf32> to vector<2x32xf32>
    %338 = math.tanh %336 : vector<2x32xf32>
    %339 = arith.mulf %337, %338 : vector<2x32xf32>
    %cst_64 = arith.constant dense<0.000000e+00> : vector<2x128xf32>
    %340 = tpu.matmul %194, %196, %cst_64 {dimension_numbers = #tpu.dot_dimension_numbers<[1], [0], [0], [1], [0, 0, 1, 1], [], []>} : vector<2x32xf32>, vector<32x128xf32>, vector<2x128xf32> -> vector<2x128xf32>
    %341 = vector.broadcast %197 : vector<1x128xf32> to vector<2x128xf32>
    %342 = arith.addf %340, %341 : vector<2x128xf32>
    %cst_65 = arith.constant dense<0.000000e+00> : vector<2x128xf32>
    %343 = tpu.matmul %339, %195, %cst_65 {dimension_numbers = #tpu.dot_dimension_numbers<[1], [0], [0], [1], [0, 0, 1, 1], [], []>} : vector<2x32xf32>, vector<32x128xf32>, vector<2x128xf32> -> vector<2x128xf32>
    %344 = arith.addf %342, %343 : vector<2x128xf32>
    %345 = arith.negf %344 : vector<2x128xf32>
    %346 = math.exp %345 : vector<2x128xf32>
    %cst_66 = arith.constant 1.000000e+00 : f32
    %347 = vector.broadcast %cst_66 : f32 to vector<2x128xf32>
    %348 = arith.addf %347, %346 : vector<2x128xf32>
    %349 = arith.divf %347, %348 : vector<2x128xf32>
    %350 = math.tanh %344 : vector<2x128xf32>
    %351 = vector.extract_strided_slice %349 {offsets = [0, 32], sizes = [2, 32], strides = [1, 1]} : vector<2x128xf32> to vector<2x32xf32>
    %352 = arith.mulf %351, %336 : vector<2x32xf32>
    %353 = vector.extract_strided_slice %349 {offsets = [0, 0], sizes = [2, 32], strides = [1, 1]} : vector<2x128xf32> to vector<2x32xf32>
    %354 = vector.extract_strided_slice %350 {offsets = [0, 64], sizes = [2, 32], strides = [1, 1]} : vector<2x128xf32> to vector<2x32xf32>
    %355 = arith.mulf %353, %354 : vector<2x32xf32>
    %356 = arith.addf %352, %355 : vector<2x32xf32>
    %357 = vector.extract_strided_slice %349 {offsets = [0, 96], sizes = [2, 32], strides = [1, 1]} : vector<2x128xf32> to vector<2x32xf32>
    %358 = math.tanh %356 : vector<2x32xf32>
    %359 = arith.mulf %357, %358 : vector<2x32xf32>
    %c0_67 = arith.constant 0 : index
    %c0_68 = arith.constant 0 : index
    %360 = vector.load %arg12[%c0_67, %c0_68] : memref<2x256xf32, #tpu.memory_space<vmem>>, vector<2x32xf32>
    tpu.vector_store %arg12[%c0_67, %c0_68], %219 {strides = array<i32>} : memref<2x256xf32, #tpu.memory_space<vmem>>, vector<2x32xf32>,
    %c0_69 = arith.constant 0 : index
    %c32 = arith.constant 32 : index
    %361 = vector.load %arg12[%c0_69, %c32] : memref<2x256xf32, #tpu.memory_space<vmem>>, vector<2x32xf32>
    tpu.vector_store %arg12[%c0_69, %c32], %239 {strides = array<i32>} : memref<2x256xf32, #tpu.memory_space<vmem>>, vector<2x32xf32>,
    %c0_70 = arith.constant 0 : index
    %c64 = arith.constant 64 : index
    %362 = vector.load %arg12[%c0_70, %c64] : memref<2x256xf32, #tpu.memory_space<vmem>>, vector<2x32xf32>
    tpu.vector_store %arg12[%c0_70, %c64], %259 {strides = array<i32>} : memref<2x256xf32, #tpu.memory_space<vmem>>, vector<2x32xf32>,
    %c0_71 = arith.constant 0 : index
    %c96 = arith.constant 96 : index
    %363 = vector.load %arg12[%c0_71, %c96] : memref<2x256xf32, #tpu.memory_space<vmem>>, vector<2x32xf32>
    tpu.vector_store %arg12[%c0_71, %c96], %279 {strides = array<i32>} : memref<2x256xf32, #tpu.memory_space<vmem>>, vector<2x32xf32>,
    %c0_72 = arith.constant 0 : index
    %c128 = arith.constant 128 : index
    %364 = vector.load %arg12[%c0_72, %c128] : memref<2x256xf32, #tpu.memory_space<vmem>>, vector<2x32xf32>
    tpu.vector_store %arg12[%c0_72, %c128], %299 {strides = array<i32>} : memref<2x256xf32, #tpu.memory_space<vmem>>, vector<2x32xf32>,
    %c0_73 = arith.constant 0 : index
    %c160 = arith.constant 160 : index
    %365 = vector.load %arg12[%c0_73, %c160] : memref<2x256xf32, #tpu.memory_space<vmem>>, vector<2x32xf32>
    tpu.vector_store %arg12[%c0_73, %c160], %319 {strides = array<i32>} : memref<2x256xf32, #tpu.memory_space<vmem>>, vector<2x32xf32>,
    %c0_74 = arith.constant 0 : index
    %c192 = arith.constant 192 : index
    %366 = vector.load %arg12[%c0_74, %c192] : memref<2x256xf32, #tpu.memory_space<vmem>>, vector<2x32xf32>
    tpu.vector_store %arg12[%c0_74, %c192], %339 {strides = array<i32>} : memref<2x256xf32, #tpu.memory_space<vmem>>, vector<2x32xf32>,
    %c0_75 = arith.constant 0 : index
    %c224 = arith.constant 224 : index
    %367 = vector.load %arg12[%c0_75, %c224] : memref<2x256xf32, #tpu.memory_space<vmem>>, vector<2x32xf32>
    tpu.vector_store %arg12[%c0_75, %c224], %359 {strides = array<i32>} : memref<2x256xf32, #tpu.memory_space<vmem>>, vector<2x32xf32>,
    %c0_76 = arith.constant 0 : index
    %c0_77 = arith.constant 0 : index
    %368 = vector.load %arg1[%c0_76, %c0_77] : memref<2x8xi32, #tpu.memory_space<vmem>>, vector<2x8xi32>
    %369 = tpu.iota {dimensions = array<i32: 1>} : vector<2x25xi32>
    %370 = vector.extract_strided_slice %368 {offsets = [0, 0], sizes = [2, 1], strides = [1, 1]} : vector<2x8xi32> to vector<2x1xi32>
    %371 = vector.broadcast %370 : vector<2x1xi32> to vector<2x25xi32>
    %372 = arith.cmpi eq, %371, %369 : vector<2x25xi32>
    %373 = arith.extui %372 : vector<2x25xi1> to vector<2x25xi32>
    %374 = arith.sitofp %373 : vector<2x25xi32> to vector<2x25xf32>
    %cst_78 = arith.constant dense<0.000000e+00> : vector<2x128xf32>
    %375 = tpu.matmul %374, %5, %cst_78 {dimension_numbers = #tpu.dot_dimension_numbers<[1], [0], [0], [1], [0, 0, 1, 1], [], []>} : vector<2x25xf32>, vector<25x128xf32>, vector<2x128xf32> -> vector<2x128xf32>
    %376 = vector.extract_strided_slice %368 {offsets = [0, 1], sizes = [2, 1], strides = [1, 1]} : vector<2x8xi32> to vector<2x1xi32>
    %377 = vector.broadcast %376 : vector<2x1xi32> to vector<2x25xi32>
    %378 = arith.cmpi eq, %377, %369 : vector<2x25xi32>
    %379 = arith.extui %378 : vector<2x25xi1> to vector<2x25xi32>
    %380 = arith.sitofp %379 : vector<2x25xi32> to vector<2x25xf32>
    %cst_79 = arith.constant dense<0.000000e+00> : vector<2x128xf32>
    %381 = tpu.matmul %380, %5, %cst_79 {dimension_numbers = #tpu.dot_dimension_numbers<[1], [0], [0], [1], [0, 0, 1, 1], [], []>} : vector<2x25xf32>, vector<25x128xf32>, vector<2x128xf32> -> vector<2x128xf32>
    %382 = vector.extract_strided_slice %368 {offsets = [0, 2], sizes = [2, 1], strides = [1, 1]} : vector<2x8xi32> to vector<2x1xi32>
    %383 = vector.broadcast %382 : vector<2x1xi32> to vector<2x25xi32>
    %384 = arith.cmpi eq, %383, %369 : vector<2x25xi32>
    %385 = arith.extui %384 : vector<2x25xi1> to vector<2x25xi32>
    %386 = arith.sitofp %385 : vector<2x25xi32> to vector<2x25xf32>
    %cst_80 = arith.constant dense<0.000000e+00> : vector<2x128xf32>
    %387 = tpu.matmul %386, %5, %cst_80 {dimension_numbers = #tpu.dot_dimension_numbers<[1], [0], [0], [1], [0, 0, 1, 1], [], []>} : vector<2x25xf32>, vector<25x128xf32>, vector<2x128xf32> -> vector<2x128xf32>
    %388 = vector.extract_strided_slice %368 {offsets = [0, 3], sizes = [2, 1], strides = [1, 1]} : vector<2x8xi32> to vector<2x1xi32>
    %389 = vector.broadcast %388 : vector<2x1xi32> to vector<2x25xi32>
    %390 = arith.cmpi eq, %389, %369 : vector<2x25xi32>
    %391 = arith.extui %390 : vector<2x25xi1> to vector<2x25xi32>
    %392 = arith.sitofp %391 : vector<2x25xi32> to vector<2x25xf32>
    %cst_81 = arith.constant dense<0.000000e+00> : vector<2x128xf32>
    %393 = tpu.matmul %392, %5, %cst_81 {dimension_numbers = #tpu.dot_dimension_numbers<[1], [0], [0], [1], [0, 0, 1, 1], [], []>} : vector<2x25xf32>, vector<25x128xf32>, vector<2x128xf32> -> vector<2x128xf32>
    %394 = vector.extract_strided_slice %368 {offsets = [0, 4], sizes = [2, 1], strides = [1, 1]} : vector<2x8xi32> to vector<2x1xi32>
    %395 = vector.broadcast %394 : vector<2x1xi32> to vector<2x25xi32>
    %396 = arith.cmpi eq, %395, %369 : vector<2x25xi32>
    %397 = arith.extui %396 : vector<2x25xi1> to vector<2x25xi32>
    %398 = arith.sitofp %397 : vector<2x25xi32> to vector<2x25xf32>
    %cst_82 = arith.constant dense<0.000000e+00> : vector<2x128xf32>
    %399 = tpu.matmul %398, %5, %cst_82 {dimension_numbers = #tpu.dot_dimension_numbers<[1], [0], [0], [1], [0, 0, 1, 1], [], []>} : vector<2x25xf32>, vector<25x128xf32>, vector<2x128xf32> -> vector<2x128xf32>
    %400 = vector.extract_strided_slice %368 {offsets = [0, 5], sizes = [2, 1], strides = [1, 1]} : vector<2x8xi32> to vector<2x1xi32>
    %401 = vector.broadcast %400 : vector<2x1xi32> to vector<2x25xi32>
    %402 = arith.cmpi eq, %401, %369 : vector<2x25xi32>
    %403 = arith.extui %402 : vector<2x25xi1> to vector<2x25xi32>
    %404 = arith.sitofp %403 : vector<2x25xi32> to vector<2x25xf32>
    %cst_83 = arith.constant dense<0.000000e+00> : vector<2x128xf32>
    %405 = tpu.matmul %404, %5, %cst_83 {dimension_numbers = #tpu.dot_dimension_numbers<[1], [0], [0], [1], [0, 0, 1, 1], [], []>} : vector<2x25xf32>, vector<25x128xf32>, vector<2x128xf32> -> vector<2x128xf32>
    %406 = vector.extract_strided_slice %368 {offsets = [0, 6], sizes = [2, 1], strides = [1, 1]} : vector<2x8xi32> to vector<2x1xi32>
    %407 = vector.broadcast %406 : vector<2x1xi32> to vector<2x25xi32>
    %408 = arith.cmpi eq, %407, %369 : vector<2x25xi32>
    %409 = arith.extui %408 : vector<2x25xi1> to vector<2x25xi32>
    %410 = arith.sitofp %409 : vector<2x25xi32> to vector<2x25xf32>
    %cst_84 = arith.constant dense<0.000000e+00> : vector<2x128xf32>
    %411 = tpu.matmul %410, %5, %cst_84 {dimension_numbers = #tpu.dot_dimension_numbers<[1], [0], [0], [1], [0, 0, 1, 1], [], []>} : vector<2x25xf32>, vector<25x128xf32>, vector<2x128xf32> -> vector<2x128xf32>
    %412 = vector.extract_strided_slice %368 {offsets = [0, 7], sizes = [2, 1], strides = [1, 1]} : vector<2x8xi32> to vector<2x1xi32>
    %413 = vector.broadcast %412 : vector<2x1xi32> to vector<2x25xi32>
    %414 = arith.cmpi eq, %413, %369 : vector<2x25xi32>
    %415 = arith.extui %414 : vector<2x25xi1> to vector<2x25xi32>
    %416 = arith.sitofp %415 : vector<2x25xi32> to vector<2x25xf32>
    %cst_85 = arith.constant dense<0.000000e+00> : vector<2x128xf32>
    %417 = tpu.matmul %416, %5, %cst_85 {dimension_numbers = #tpu.dot_dimension_numbers<[1], [0], [0], [1], [0, 0, 1, 1], [], []>} : vector<2x25xf32>, vector<25x128xf32>, vector<2x128xf32> -> vector<2x128xf32>
    %c0_86 = arith.constant 0 : index
    %c0_87 = arith.constant 0 : index
    %418 = vector.load %arg5[%c0_86, %c0_87] : memref<32x128xf32, #tpu.memory_space<vmem>>, vector<32x128xf32>
    %cst_88 = arith.constant 0.000000e+00 : f32
    %419 = vector.broadcast %cst_88 : f32 to vector<2x32xf32>
    %cst_89 = arith.constant 0.000000e+00 : f32
    %420 = vector.broadcast %cst_89 : f32 to vector<2x32xf32>
    %cst_90 = arith.constant dense<0.000000e+00> : vector<2x128xf32>
    %421 = tpu.matmul %419, %418, %cst_90 {dimension_numbers = #tpu.dot_dimension_numbers<[1], [0], [0], [1], [0, 0, 1, 1], [], []>} : vector<2x32xf32>, vector<32x128xf32>, vector<2x128xf32> -> vector<2x128xf32>
    %422 = arith.addf %375, %421 : vector<2x128xf32>
    %423 = arith.negf %422 : vector<2x128xf32>
    %424 = math.exp %423 : vector<2x128xf32>
    %cst_91 = arith.constant 1.000000e+00 : f32
    %425 = vector.broadcast %cst_91 : f32 to vector<2x128xf32>
    %426 = arith.addf %425, %424 : vector<2x128xf32>
    %427 = arith.divf %425, %426 : vector<2x128xf32>
    %428 = math.tanh %422 : vector<2x128xf32>
    %429 = vector.extract_strided_slice %427 {offsets = [0, 32], sizes = [2, 32], strides = [1, 1]} : vector<2x128xf32> to vector<2x32xf32>
    %430 = arith.mulf %429, %420 : vector<2x32xf32>
    %431 = vector.extract_strided_slice %427 {offsets = [0, 0], sizes = [2, 32], strides = [1, 1]} : vector<2x128xf32> to vector<2x32xf32>
    %432 = vector.extract_strided_slice %428 {offsets = [0, 64], sizes = [2, 32], strides = [1, 1]} : vector<2x128xf32> to vector<2x32xf32>
    %433 = arith.mulf %431, %432 : vector<2x32xf32>
    %434 = arith.addf %430, %433 : vector<2x32xf32>
    %435 = vector.extract_strided_slice %427 {offsets = [0, 96], sizes = [2, 32], strides = [1, 1]} : vector<2x128xf32> to vector<2x32xf32>
    %436 = math.tanh %434 : vector<2x32xf32>
    %437 = arith.mulf %435, %436 : vector<2x32xf32>
    %cst_92 = arith.constant dense<0.000000e+00> : vector<2x128xf32>
    %438 = tpu.matmul %437, %418, %cst_92 {dimension_numbers = #tpu.dot_dimension_numbers<[1], [0], [0], [1], [0, 0, 1, 1], [], []>} : vector<2x32xf32>, vector<32x128xf32>, vector<2x128xf32> -> vector<2x128xf32>
    %439 = arith.addf %381, %438 : vector<2x128xf32>
    %440 = arith.negf %439 : vector<2x128xf32>
    %441 = math.exp %440 : vector<2x128xf32>
    %cst_93 = arith.constant 1.000000e+00 : f32
    %442 = vector.broadcast %cst_93 : f32 to vector<2x128xf32>
    %443 = arith.addf %442, %441 : vector<2x128xf32>
    %444 = arith.divf %442, %443 : vector<2x128xf32>
    %445 = math.tanh %439 : vector<2x128xf32>
    %446 = vector.extract_strided_slice %444 {offsets = [0, 32], sizes = [2, 32], strides = [1, 1]} : vector<2x128xf32> to vector<2x32xf32>
    %447 = arith.mulf %446, %434 : vector<2x32xf32>
    %448 = vector.extract_strided_slice %444 {offsets = [0, 0], sizes = [2, 32], strides = [1, 1]} : vector<2x128xf32> to vector<2x32xf32>
    %449 = vector.extract_strided_slice %445 {offsets = [0, 64], sizes = [2, 32], strides = [1, 1]} : vector<2x128xf32> to vector<2x32xf32>
    %450 = arith.mulf %448, %449 : vector<2x32xf32>
    %451 = arith.addf %447, %450 : vector<2x32xf32>
    %452 = vector.extract_strided_slice %444 {offsets = [0, 96], sizes = [2, 32], strides = [1, 1]} : vector<2x128xf32> to vector<2x32xf32>
    %453 = math.tanh %451 : vector<2x32xf32>
    %454 = arith.mulf %452, %453 : vector<2x32xf32>
    %cst_94 = arith.constant dense<0.000000e+00> : vector<2x128xf32>
    %455 = tpu.matmul %454, %418, %cst_94 {dimension_numbers = #tpu.dot_dimension_numbers<[1], [0], [0], [1], [0, 0, 1, 1], [], []>} : vector<2x32xf32>, vector<32x128xf32>, vector<2x128xf32> -> vector<2x128xf32>
    %456 = arith.addf %387, %455 : vector<2x128xf32>
    %457 = arith.negf %456 : vector<2x128xf32>
    %458 = math.exp %457 : vector<2x128xf32>
    %cst_95 = arith.constant 1.000000e+00 : f32
    %459 = vector.broadcast %cst_95 : f32 to vector<2x128xf32>
    %460 = arith.addf %459, %458 : vector<2x128xf32>
    %461 = arith.divf %459, %460 : vector<2x128xf32>
    %462 = math.tanh %456 : vector<2x128xf32>
    %463 = vector.extract_strided_slice %461 {offsets = [0, 32], sizes = [2, 32], strides = [1, 1]} : vector<2x128xf32> to vector<2x32xf32>
    %464 = arith.mulf %463, %451 : vector<2x32xf32>
    %465 = vector.extract_strided_slice %461 {offsets = [0, 0], sizes = [2, 32], strides = [1, 1]} : vector<2x128xf32> to vector<2x32xf32>
    %466 = vector.extract_strided_slice %462 {offsets = [0, 64], sizes = [2, 32], strides = [1, 1]} : vector<2x128xf32> to vector<2x32xf32>
    %467 = arith.mulf %465, %466 : vector<2x32xf32>
    %468 = arith.addf %464, %467 : vector<2x32xf32>
    %469 = vector.extract_strided_slice %461 {offsets = [0, 96], sizes = [2, 32], strides = [1, 1]} : vector<2x128xf32> to vector<2x32xf32>
    %470 = math.tanh %468 : vector<2x32xf32>
    %471 = arith.mulf %469, %470 : vector<2x32xf32>
    %cst_96 = arith.constant dense<0.000000e+00> : vector<2x128xf32>
    %472 = tpu.matmul %471, %418, %cst_96 {dimension_numbers = #tpu.dot_dimension_numbers<[1], [0], [0], [1], [0, 0, 1, 1], [], []>} : vector<2x32xf32>, vector<32x128xf32>, vector<2x128xf32> -> vector<2x128xf32>
    %473 = arith.addf %393, %472 : vector<2x128xf32>
    %474 = arith.negf %473 : vector<2x128xf32>
    %475 = math.exp %474 : vector<2x128xf32>
    %cst_97 = arith.constant 1.000000e+00 : f32
    %476 = vector.broadcast %cst_97 : f32 to vector<2x128xf32>
    %477 = arith.addf %476, %475 : vector<2x128xf32>
    %478 = arith.divf %476, %477 : vector<2x128xf32>
    %479 = math.tanh %473 : vector<2x128xf32>
    %480 = vector.extract_strided_slice %478 {offsets = [0, 32], sizes = [2, 32], strides = [1, 1]} : vector<2x128xf32> to vector<2x32xf32>
    %481 = arith.mulf %480, %468 : vector<2x32xf32>
    %482 = vector.extract_strided_slice %478 {offsets = [0, 0], sizes = [2, 32], strides = [1, 1]} : vector<2x128xf32> to vector<2x32xf32>
    %483 = vector.extract_strided_slice %479 {offsets = [0, 64], sizes = [2, 32], strides = [1, 1]} : vector<2x128xf32> to vector<2x32xf32>
    %484 = arith.mulf %482, %483 : vector<2x32xf32>
    %485 = arith.addf %481, %484 : vector<2x32xf32>
    %486 = vector.extract_strided_slice %478 {offsets = [0, 96], sizes = [2, 32], strides = [1, 1]} : vector<2x128xf32> to vector<2x32xf32>
    %487 = math.tanh %485 : vector<2x32xf32>
    %488 = arith.mulf %486, %487 : vector<2x32xf32>
    %cst_98 = arith.constant dense<0.000000e+00> : vector<2x128xf32>
    %489 = tpu.matmul %488, %418, %cst_98 {dimension_numbers = #tpu.dot_dimension_numbers<[1], [0], [0], [1], [0, 0, 1, 1], [], []>} : vector<2x32xf32>, vector<32x128xf32>, vector<2x128xf32> -> vector<2x128xf32>
    %490 = arith.addf %399, %489 : vector<2x128xf32>
    %491 = arith.negf %490 : vector<2x128xf32>
    %492 = math.exp %491 : vector<2x128xf32>
    %cst_99 = arith.constant 1.000000e+00 : f32
    %493 = vector.broadcast %cst_99 : f32 to vector<2x128xf32>
    %494 = arith.addf %493, %492 : vector<2x128xf32>
    %495 = arith.divf %493, %494 : vector<2x128xf32>
    %496 = math.tanh %490 : vector<2x128xf32>
    %497 = vector.extract_strided_slice %495 {offsets = [0, 32], sizes = [2, 32], strides = [1, 1]} : vector<2x128xf32> to vector<2x32xf32>
    %498 = arith.mulf %497, %485 : vector<2x32xf32>
    %499 = vector.extract_strided_slice %495 {offsets = [0, 0], sizes = [2, 32], strides = [1, 1]} : vector<2x128xf32> to vector<2x32xf32>
    %500 = vector.extract_strided_slice %496 {offsets = [0, 64], sizes = [2, 32], strides = [1, 1]} : vector<2x128xf32> to vector<2x32xf32>
    %501 = arith.mulf %499, %500 : vector<2x32xf32>
    %502 = arith.addf %498, %501 : vector<2x32xf32>
    %503 = vector.extract_strided_slice %495 {offsets = [0, 96], sizes = [2, 32], strides = [1, 1]} : vector<2x128xf32> to vector<2x32xf32>
    %504 = math.tanh %502 : vector<2x32xf32>
    %505 = arith.mulf %503, %504 : vector<2x32xf32>
    %cst_100 = arith.constant dense<0.000000e+00> : vector<2x128xf32>
    %506 = tpu.matmul %505, %418, %cst_100 {dimension_numbers = #tpu.dot_dimension_numbers<[1], [0], [0], [1], [0, 0, 1, 1], [], []>} : vector<2x32xf32>, vector<32x128xf32>, vector<2x128xf32> -> vector<2x128xf32>
    %507 = arith.addf %405, %506 : vector<2x128xf32>
    %508 = arith.negf %507 : vector<2x128xf32>
    %509 = math.exp %508 : vector<2x128xf32>
    %cst_101 = arith.constant 1.000000e+00 : f32
    %510 = vector.broadcast %cst_101 : f32 to vector<2x128xf32>
    %511 = arith.addf %510, %509 : vector<2x128xf32>
    %512 = arith.divf %510, %511 : vector<2x128xf32>
    %513 = math.tanh %507 : vector<2x128xf32>
    %514 = vector.extract_strided_slice %512 {offsets = [0, 32], sizes = [2, 32], strides = [1, 1]} : vector<2x128xf32> to vector<2x32xf32>
    %515 = arith.mulf %514, %502 : vector<2x32xf32>
    %516 = vector.extract_strided_slice %512 {offsets = [0, 0], sizes = [2, 32], strides = [1, 1]} : vector<2x128xf32> to vector<2x32xf32>
    %517 = vector.extract_strided_slice %513 {offsets = [0, 64], sizes = [2, 32], strides = [1, 1]} : vector<2x128xf32> to vector<2x32xf32>
    %518 = arith.mulf %516, %517 : vector<2x32xf32>
    %519 = arith.addf %515, %518 : vector<2x32xf32>
    %520 = vector.extract_strided_slice %512 {offsets = [0, 96], sizes = [2, 32], strides = [1, 1]} : vector<2x128xf32> to vector<2x32xf32>
    %521 = math.tanh %519 : vector<2x32xf32>
    %522 = arith.mulf %520, %521 : vector<2x32xf32>
    %cst_102 = arith.constant dense<0.000000e+00> : vector<2x128xf32>
    %523 = tpu.matmul %522, %418, %cst_102 {dimension_numbers = #tpu.dot_dimension_numbers<[1], [0], [0], [1], [0, 0, 1, 1], [], []>} : vector<2x32xf32>, vector<32x128xf32>, vector<2x128xf32> -> vector<2x128xf32>
    %524 = arith.addf %411, %523 : vector<2x128xf32>
    %525 = arith.negf %524 : vector<2x128xf32>
    %526 = math.exp %525 : vector<2x128xf32>
    %cst_103 = arith.constant 1.000000e+00 : f32
    %527 = vector.broadcast %cst_103 : f32 to vector<2x128xf32>
    %528 = arith.addf %527, %526 : vector<2x128xf32>
    %529 = arith.divf %527, %528 : vector<2x128xf32>
    %530 = math.tanh %524 : vector<2x128xf32>
    %531 = vector.extract_strided_slice %529 {offsets = [0, 32], sizes = [2, 32], strides = [1, 1]} : vector<2x128xf32> to vector<2x32xf32>
    %532 = arith.mulf %531, %519 : vector<2x32xf32>
    %533 = vector.extract_strided_slice %529 {offsets = [0, 0], sizes = [2, 32], strides = [1, 1]} : vector<2x128xf32> to vector<2x32xf32>
    %534 = vector.extract_strided_slice %530 {offsets = [0, 64], sizes = [2, 32], strides = [1, 1]} : vector<2x128xf32> to vector<2x32xf32>
    %535 = arith.mulf %533, %534 : vector<2x32xf32>
    %536 = arith.addf %532, %535 : vector<2x32xf32>
    %537 = vector.extract_strided_slice %529 {offsets = [0, 96], sizes = [2, 32], strides = [1, 1]} : vector<2x128xf32> to vector<2x32xf32>
    %538 = math.tanh %536 : vector<2x32xf32>
    %539 = arith.mulf %537, %538 : vector<2x32xf32>
    %cst_104 = arith.constant dense<0.000000e+00> : vector<2x128xf32>
    %540 = tpu.matmul %539, %418, %cst_104 {dimension_numbers = #tpu.dot_dimension_numbers<[1], [0], [0], [1], [0, 0, 1, 1], [], []>} : vector<2x32xf32>, vector<32x128xf32>, vector<2x128xf32> -> vector<2x128xf32>
    %541 = arith.addf %417, %540 : vector<2x128xf32>
    %542 = arith.negf %541 : vector<2x128xf32>
    %543 = math.exp %542 : vector<2x128xf32>
    %cst_105 = arith.constant 1.000000e+00 : f32
    %544 = vector.broadcast %cst_105 : f32 to vector<2x128xf32>
    %545 = arith.addf %544, %543 : vector<2x128xf32>
    %546 = arith.divf %544, %545 : vector<2x128xf32>
    %547 = math.tanh %541 : vector<2x128xf32>
    %548 = vector.extract_strided_slice %546 {offsets = [0, 32], sizes = [2, 32], strides = [1, 1]} : vector<2x128xf32> to vector<2x32xf32>
    %549 = arith.mulf %548, %536 : vector<2x32xf32>
    %550 = vector.extract_strided_slice %546 {offsets = [0, 0], sizes = [2, 32], strides = [1, 1]} : vector<2x128xf32> to vector<2x32xf32>
    %551 = vector.extract_strided_slice %547 {offsets = [0, 64], sizes = [2, 32], strides = [1, 1]} : vector<2x128xf32> to vector<2x32xf32>
    %552 = arith.mulf %550, %551 : vector<2x32xf32>
    %553 = arith.addf %549, %552 : vector<2x32xf32>
    %554 = vector.extract_strided_slice %546 {offsets = [0, 96], sizes = [2, 32], strides = [1, 1]} : vector<2x128xf32> to vector<2x32xf32>
    %555 = math.tanh %553 : vector<2x32xf32>
    %556 = arith.mulf %554, %555 : vector<2x32xf32>
    %c0_106 = arith.constant 0 : index
    %c0_107 = arith.constant 0 : index
    %557 = vector.load %arg8[%c0_106, %c0_107] : memref<32x128xf32, #tpu.memory_space<vmem>>, vector<32x128xf32>
    %c0_108 = arith.constant 0 : index
    %c0_109 = arith.constant 0 : index
    %558 = vector.load %arg7[%c0_108, %c0_109] : memref<32x128xf32, #tpu.memory_space<vmem>>, vector<32x128xf32>
    %c0_110 = arith.constant 0 : index
    %c0_111 = arith.constant 0 : index
    %559 = vector.load %arg9[%c0_110, %c0_111] : memref<1x128xf32, #tpu.memory_space<vmem>>, vector<1x128xf32>
    %cst_112 = arith.constant 0.000000e+00 : f32
    %560 = vector.broadcast %cst_112 : f32 to vector<2x32xf32>
    %cst_113 = arith.constant 0.000000e+00 : f32
    %561 = vector.broadcast %cst_113 : f32 to vector<2x32xf32>
    %cst_114 = arith.constant dense<0.000000e+00> : vector<2x128xf32>
    %562 = tpu.matmul %437, %558, %cst_114 {dimension_numbers = #tpu.dot_dimension_numbers<[1], [0], [0], [1], [0, 0, 1, 1], [], []>} : vector<2x32xf32>, vector<32x128xf32>, vector<2x128xf32> -> vector<2x128xf32>
    %563 = vector.broadcast %559 : vector<1x128xf32> to vector<2x128xf32>
    %564 = arith.addf %562, %563 : vector<2x128xf32>
    %cst_115 = arith.constant dense<0.000000e+00> : vector<2x128xf32>
    %565 = tpu.matmul %560, %557, %cst_115 {dimension_numbers = #tpu.dot_dimension_numbers<[1], [0], [0], [1], [0, 0, 1, 1], [], []>} : vector<2x32xf32>, vector<32x128xf32>, vector<2x128xf32> -> vector<2x128xf32>
    %566 = arith.addf %564, %565 : vector<2x128xf32>
    %567 = arith.negf %566 : vector<2x128xf32>
    %568 = math.exp %567 : vector<2x128xf32>
    %cst_116 = arith.constant 1.000000e+00 : f32
    %569 = vector.broadcast %cst_116 : f32 to vector<2x128xf32>
    %570 = arith.addf %569, %568 : vector<2x128xf32>
    %571 = arith.divf %569, %570 : vector<2x128xf32>
    %572 = math.tanh %566 : vector<2x128xf32>
    %573 = vector.extract_strided_slice %571 {offsets = [0, 32], sizes = [2, 32], strides = [1, 1]} : vector<2x128xf32> to vector<2x32xf32>
    %574 = arith.mulf %573, %561 : vector<2x32xf32>
    %575 = vector.extract_strided_slice %571 {offsets = [0, 0], sizes = [2, 32], strides = [1, 1]} : vector<2x128xf32> to vector<2x32xf32>
    %576 = vector.extract_strided_slice %572 {offsets = [0, 64], sizes = [2, 32], strides = [1, 1]} : vector<2x128xf32> to vector<2x32xf32>
    %577 = arith.mulf %575, %576 : vector<2x32xf32>
    %578 = arith.addf %574, %577 : vector<2x32xf32>
    %579 = vector.extract_strided_slice %571 {offsets = [0, 96], sizes = [2, 32], strides = [1, 1]} : vector<2x128xf32> to vector<2x32xf32>
    %580 = math.tanh %578 : vector<2x32xf32>
    %581 = arith.mulf %579, %580 : vector<2x32xf32>
    %cst_117 = arith.constant dense<0.000000e+00> : vector<2x128xf32>
    %582 = tpu.matmul %454, %558, %cst_117 {dimension_numbers = #tpu.dot_dimension_numbers<[1], [0], [0], [1], [0, 0, 1, 1], [], []>} : vector<2x32xf32>, vector<32x128xf32>, vector<2x128xf32> -> vector<2x128xf32>
    %583 = vector.broadcast %559 : vector<1x128xf32> to vector<2x128xf32>
    %584 = arith.addf %582, %583 : vector<2x128xf32>
    %cst_118 = arith.constant dense<0.000000e+00> : vector<2x128xf32>
    %585 = tpu.matmul %581, %557, %cst_118 {dimension_numbers = #tpu.dot_dimension_numbers<[1], [0], [0], [1], [0, 0, 1, 1], [], []>} : vector<2x32xf32>, vector<32x128xf32>, vector<2x128xf32> -> vector<2x128xf32>
    %586 = arith.addf %584, %585 : vector<2x128xf32>
    %587 = arith.negf %586 : vector<2x128xf32>
    %588 = math.exp %587 : vector<2x128xf32>
    %cst_119 = arith.constant 1.000000e+00 : f32
    %589 = vector.broadcast %cst_119 : f32 to vector<2x128xf32>
    %590 = arith.addf %589, %588 : vector<2x128xf32>
    %591 = arith.divf %589, %590 : vector<2x128xf32>
    %592 = math.tanh %586 : vector<2x128xf32>
    %593 = vector.extract_strided_slice %591 {offsets = [0, 32], sizes = [2, 32], strides = [1, 1]} : vector<2x128xf32> to vector<2x32xf32>
    %594 = arith.mulf %593, %578 : vector<2x32xf32>
    %595 = vector.extract_strided_slice %591 {offsets = [0, 0], sizes = [2, 32], strides = [1, 1]} : vector<2x128xf32> to vector<2x32xf32>
    %596 = vector.extract_strided_slice %592 {offsets = [0, 64], sizes = [2, 32], strides = [1, 1]} : vector<2x128xf32> to vector<2x32xf32>
    %597 = arith.mulf %595, %596 : vector<2x32xf32>
    %598 = arith.addf %594, %597 : vector<2x32xf32>
    %599 = vector.extract_strided_slice %591 {offsets = [0, 96], sizes = [2, 32], strides = [1, 1]} : vector<2x128xf32> to vector<2x32xf32>
    %600 = math.tanh %598 : vector<2x32xf32>
    %601 = arith.mulf %599, %600 : vector<2x32xf32>
    %cst_120 = arith.constant dense<0.000000e+00> : vector<2x128xf32>
    %602 = tpu.matmul %471, %558, %cst_120 {dimension_numbers = #tpu.dot_dimension_numbers<[1], [0], [0], [1], [0, 0, 1, 1], [], []>} : vector<2x32xf32>, vector<32x128xf32>, vector<2x128xf32> -> vector<2x128xf32>
    %603 = vector.broadcast %559 : vector<1x128xf32> to vector<2x128xf32>
    %604 = arith.addf %602, %603 : vector<2x128xf32>
    %cst_121 = arith.constant dense<0.000000e+00> : vector<2x128xf32>
    %605 = tpu.matmul %601, %557, %cst_121 {dimension_numbers = #tpu.dot_dimension_numbers<[1], [0], [0], [1], [0, 0, 1, 1], [], []>} : vector<2x32xf32>, vector<32x128xf32>, vector<2x128xf32> -> vector<2x128xf32>
    %606 = arith.addf %604, %605 : vector<2x128xf32>
    %607 = arith.negf %606 : vector<2x128xf32>
    %608 = math.exp %607 : vector<2x128xf32>
    %cst_122 = arith.constant 1.000000e+00 : f32
    %609 = vector.broadcast %cst_122 : f32 to vector<2x128xf32>
    %610 = arith.addf %609, %608 : vector<2x128xf32>
    %611 = arith.divf %609, %610 : vector<2x128xf32>
    %612 = math.tanh %606 : vector<2x128xf32>
    %613 = vector.extract_strided_slice %611 {offsets = [0, 32], sizes = [2, 32], strides = [1, 1]} : vector<2x128xf32> to vector<2x32xf32>
    %614 = arith.mulf %613, %598 : vector<2x32xf32>
    %615 = vector.extract_strided_slice %611 {offsets = [0, 0], sizes = [2, 32], strides = [1, 1]} : vector<2x128xf32> to vector<2x32xf32>
    %616 = vector.extract_strided_slice %612 {offsets = [0, 64], sizes = [2, 32], strides = [1, 1]} : vector<2x128xf32> to vector<2x32xf32>
    %617 = arith.mulf %615, %616 : vector<2x32xf32>
    %618 = arith.addf %614, %617 : vector<2x32xf32>
    %619 = vector.extract_strided_slice %611 {offsets = [0, 96], sizes = [2, 32], strides = [1, 1]} : vector<2x128xf32> to vector<2x32xf32>
    %620 = math.tanh %618 : vector<2x32xf32>
    %621 = arith.mulf %619, %620 : vector<2x32xf32>
    %cst_123 = arith.constant dense<0.000000e+00> : vector<2x128xf32>
    %622 = tpu.matmul %488, %558, %cst_123 {dimension_numbers = #tpu.dot_dimension_numbers<[1], [0], [0], [1], [0, 0, 1, 1], [], []>} : vector<2x32xf32>, vector<32x128xf32>, vector<2x128xf32> -> vector<2x128xf32>
    %623 = vector.broadcast %559 : vector<1x128xf32> to vector<2x128xf32>
    %624 = arith.addf %622, %623 : vector<2x128xf32>
    %cst_124 = arith.constant dense<0.000000e+00> : vector<2x128xf32>
    %625 = tpu.matmul %621, %557, %cst_124 {dimension_numbers = #tpu.dot_dimension_numbers<[1], [0], [0], [1], [0, 0, 1, 1], [], []>} : vector<2x32xf32>, vector<32x128xf32>, vector<2x128xf32> -> vector<2x128xf32>
    %626 = arith.addf %624, %625 : vector<2x128xf32>
    %627 = arith.negf %626 : vector<2x128xf32>
    %628 = math.exp %627 : vector<2x128xf32>
    %cst_125 = arith.constant 1.000000e+00 : f32
    %629 = vector.broadcast %cst_125 : f32 to vector<2x128xf32>
    %630 = arith.addf %629, %628 : vector<2x128xf32>
    %631 = arith.divf %629, %630 : vector<2x128xf32>
    %632 = math.tanh %626 : vector<2x128xf32>
    %633 = vector.extract_strided_slice %631 {offsets = [0, 32], sizes = [2, 32], strides = [1, 1]} : vector<2x128xf32> to vector<2x32xf32>
    %634 = arith.mulf %633, %618 : vector<2x32xf32>
    %635 = vector.extract_strided_slice %631 {offsets = [0, 0], sizes = [2, 32], strides = [1, 1]} : vector<2x128xf32> to vector<2x32xf32>
    %636 = vector.extract_strided_slice %632 {offsets = [0, 64], sizes = [2, 32], strides = [1, 1]} : vector<2x128xf32> to vector<2x32xf32>
    %637 = arith.mulf %635, %636 : vector<2x32xf32>
    %638 = arith.addf %634, %637 : vector<2x32xf32>
    %639 = vector.extract_strided_slice %631 {offsets = [0, 96], sizes = [2, 32], strides = [1, 1]} : vector<2x128xf32> to vector<2x32xf32>
    %640 = math.tanh %638 : vector<2x32xf32>
    %641 = arith.mulf %639, %640 : vector<2x32xf32>
    %cst_126 = arith.constant dense<0.000000e+00> : vector<2x128xf32>
    %642 = tpu.matmul %505, %558, %cst_126 {dimension_numbers = #tpu.dot_dimension_numbers<[1], [0], [0], [1], [0, 0, 1, 1], [], []>} : vector<2x32xf32>, vector<32x128xf32>, vector<2x128xf32> -> vector<2x128xf32>
    %643 = vector.broadcast %559 : vector<1x128xf32> to vector<2x128xf32>
    %644 = arith.addf %642, %643 : vector<2x128xf32>
    %cst_127 = arith.constant dense<0.000000e+00> : vector<2x128xf32>
    %645 = tpu.matmul %641, %557, %cst_127 {dimension_numbers = #tpu.dot_dimension_numbers<[1], [0], [0], [1], [0, 0, 1, 1], [], []>} : vector<2x32xf32>, vector<32x128xf32>, vector<2x128xf32> -> vector<2x128xf32>
    %646 = arith.addf %644, %645 : vector<2x128xf32>
    %647 = arith.negf %646 : vector<2x128xf32>
    %648 = math.exp %647 : vector<2x128xf32>
    %cst_128 = arith.constant 1.000000e+00 : f32
    %649 = vector.broadcast %cst_128 : f32 to vector<2x128xf32>
    %650 = arith.addf %649, %648 : vector<2x128xf32>
    %651 = arith.divf %649, %650 : vector<2x128xf32>
    %652 = math.tanh %646 : vector<2x128xf32>
    %653 = vector.extract_strided_slice %651 {offsets = [0, 32], sizes = [2, 32], strides = [1, 1]} : vector<2x128xf32> to vector<2x32xf32>
    %654 = arith.mulf %653, %638 : vector<2x32xf32>
    %655 = vector.extract_strided_slice %651 {offsets = [0, 0], sizes = [2, 32], strides = [1, 1]} : vector<2x128xf32> to vector<2x32xf32>
    %656 = vector.extract_strided_slice %652 {offsets = [0, 64], sizes = [2, 32], strides = [1, 1]} : vector<2x128xf32> to vector<2x32xf32>
    %657 = arith.mulf %655, %656 : vector<2x32xf32>
    %658 = arith.addf %654, %657 : vector<2x32xf32>
    %659 = vector.extract_strided_slice %651 {offsets = [0, 96], sizes = [2, 32], strides = [1, 1]} : vector<2x128xf32> to vector<2x32xf32>
    %660 = math.tanh %658 : vector<2x32xf32>
    %661 = arith.mulf %659, %660 : vector<2x32xf32>
    %cst_129 = arith.constant dense<0.000000e+00> : vector<2x128xf32>
    %662 = tpu.matmul %522, %558, %cst_129 {dimension_numbers = #tpu.dot_dimension_numbers<[1], [0], [0], [1], [0, 0, 1, 1], [], []>} : vector<2x32xf32>, vector<32x128xf32>, vector<2x128xf32> -> vector<2x128xf32>
    %663 = vector.broadcast %559 : vector<1x128xf32> to vector<2x128xf32>
    %664 = arith.addf %662, %663 : vector<2x128xf32>
    %cst_130 = arith.constant dense<0.000000e+00> : vector<2x128xf32>
    %665 = tpu.matmul %661, %557, %cst_130 {dimension_numbers = #tpu.dot_dimension_numbers<[1], [0], [0], [1], [0, 0, 1, 1], [], []>} : vector<2x32xf32>, vector<32x128xf32>, vector<2x128xf32> -> vector<2x128xf32>
    %666 = arith.addf %664, %665 : vector<2x128xf32>
    %667 = arith.negf %666 : vector<2x128xf32>
    %668 = math.exp %667 : vector<2x128xf32>
    %cst_131 = arith.constant 1.000000e+00 : f32
    %669 = vector.broadcast %cst_131 : f32 to vector<2x128xf32>
    %670 = arith.addf %669, %668 : vector<2x128xf32>
    %671 = arith.divf %669, %670 : vector<2x128xf32>
    %672 = math.tanh %666 : vector<2x128xf32>
    %673 = vector.extract_strided_slice %671 {offsets = [0, 32], sizes = [2, 32], strides = [1, 1]} : vector<2x128xf32> to vector<2x32xf32>
    %674 = arith.mulf %673, %658 : vector<2x32xf32>
    %675 = vector.extract_strided_slice %671 {offsets = [0, 0], sizes = [2, 32], strides = [1, 1]} : vector<2x128xf32> to vector<2x32xf32>
    %676 = vector.extract_strided_slice %672 {offsets = [0, 64], sizes = [2, 32], strides = [1, 1]} : vector<2x128xf32> to vector<2x32xf32>
    %677 = arith.mulf %675, %676 : vector<2x32xf32>
    %678 = arith.addf %674, %677 : vector<2x32xf32>
    %679 = vector.extract_strided_slice %671 {offsets = [0, 96], sizes = [2, 32], strides = [1, 1]} : vector<2x128xf32> to vector<2x32xf32>
    %680 = math.tanh %678 : vector<2x32xf32>
    %681 = arith.mulf %679, %680 : vector<2x32xf32>
    %cst_132 = arith.constant dense<0.000000e+00> : vector<2x128xf32>
    %682 = tpu.matmul %539, %558, %cst_132 {dimension_numbers = #tpu.dot_dimension_numbers<[1], [0], [0], [1], [0, 0, 1, 1], [], []>} : vector<2x32xf32>, vector<32x128xf32>, vector<2x128xf32> -> vector<2x128xf32>
    %683 = vector.broadcast %559 : vector<1x128xf32> to vector<2x128xf32>
    %684 = arith.addf %682, %683 : vector<2x128xf32>
    %cst_133 = arith.constant dense<0.000000e+00> : vector<2x128xf32>
    %685 = tpu.matmul %681, %557, %cst_133 {dimension_numbers = #tpu.dot_dimension_numbers<[1], [0], [0], [1], [0, 0, 1, 1], [], []>} : vector<2x32xf32>, vector<32x128xf32>, vector<2x128xf32> -> vector<2x128xf32>
    %686 = arith.addf %684, %685 : vector<2x128xf32>
    %687 = arith.negf %686 : vector<2x128xf32>
    %688 = math.exp %687 : vector<2x128xf32>
    %cst_134 = arith.constant 1.000000e+00 : f32
    %689 = vector.broadcast %cst_134 : f32 to vector<2x128xf32>
    %690 = arith.addf %689, %688 : vector<2x128xf32>
    %691 = arith.divf %689, %690 : vector<2x128xf32>
    %692 = math.tanh %686 : vector<2x128xf32>
    %693 = vector.extract_strided_slice %691 {offsets = [0, 32], sizes = [2, 32], strides = [1, 1]} : vector<2x128xf32> to vector<2x32xf32>
    %694 = arith.mulf %693, %678 : vector<2x32xf32>
    %695 = vector.extract_strided_slice %691 {offsets = [0, 0], sizes = [2, 32], strides = [1, 1]} : vector<2x128xf32> to vector<2x32xf32>
    %696 = vector.extract_strided_slice %692 {offsets = [0, 64], sizes = [2, 32], strides = [1, 1]} : vector<2x128xf32> to vector<2x32xf32>
    %697 = arith.mulf %695, %696 : vector<2x32xf32>
    %698 = arith.addf %694, %697 : vector<2x32xf32>
    %699 = vector.extract_strided_slice %691 {offsets = [0, 96], sizes = [2, 32], strides = [1, 1]} : vector<2x128xf32> to vector<2x32xf32>
    %700 = math.tanh %698 : vector<2x32xf32>
    %701 = arith.mulf %699, %700 : vector<2x32xf32>
    %cst_135 = arith.constant dense<0.000000e+00> : vector<2x128xf32>
    %702 = tpu.matmul %556, %558, %cst_135 {dimension_numbers = #tpu.dot_dimension_numbers<[1], [0], [0], [1], [0, 0, 1, 1], [], []>} : vector<2x32xf32>, vector<32x128xf32>, vector<2x128xf32> -> vector<2x128xf32>
    %703 = vector.broadcast %559 : vector<1x128xf32> to vector<2x128xf32>
    %704 = arith.addf %702, %703 : vector<2x128xf32>
    %cst_136 = arith.constant dense<0.000000e+00> : vector<2x128xf32>
    %705 = tpu.matmul %701, %557, %cst_136 {dimension_numbers = #tpu.dot_dimension_numbers<[1], [0], [0], [1], [0, 0, 1, 1], [], []>} : vector<2x32xf32>, vector<32x128xf32>, vector<2x128xf32> -> vector<2x128xf32>
    %706 = arith.addf %704, %705 : vector<2x128xf32>
    %707 = arith.negf %706 : vector<2x128xf32>
    %708 = math.exp %707 : vector<2x128xf32>
    %cst_137 = arith.constant 1.000000e+00 : f32
    %709 = vector.broadcast %cst_137 : f32 to vector<2x128xf32>
    %710 = arith.addf %709, %708 : vector<2x128xf32>
    %711 = arith.divf %709, %710 : vector<2x128xf32>
    %712 = math.tanh %706 : vector<2x128xf32>
    %713 = vector.extract_strided_slice %711 {offsets = [0, 32], sizes = [2, 32], strides = [1, 1]} : vector<2x128xf32> to vector<2x32xf32>
    %714 = arith.mulf %713, %698 : vector<2x32xf32>
    %715 = vector.extract_strided_slice %711 {offsets = [0, 0], sizes = [2, 32], strides = [1, 1]} : vector<2x128xf32> to vector<2x32xf32>
    %716 = vector.extract_strided_slice %712 {offsets = [0, 64], sizes = [2, 32], strides = [1, 1]} : vector<2x128xf32> to vector<2x32xf32>
    %717 = arith.mulf %715, %716 : vector<2x32xf32>
    %718 = arith.addf %714, %717 : vector<2x32xf32>
    %719 = vector.extract_strided_slice %711 {offsets = [0, 96], sizes = [2, 32], strides = [1, 1]} : vector<2x128xf32> to vector<2x32xf32>
    %720 = math.tanh %718 : vector<2x32xf32>
    %721 = arith.mulf %719, %720 : vector<2x32xf32>
    %c0_138 = arith.constant 0 : index
    %c0_139 = arith.constant 0 : index
    %722 = vector.load %arg13[%c0_138, %c0_139] : memref<2x256xf32, #tpu.memory_space<vmem>>, vector<2x32xf32>
    tpu.vector_store %arg13[%c0_138, %c0_139], %581 {strides = array<i32>} : memref<2x256xf32, #tpu.memory_space<vmem>>, vector<2x32xf32>,
    %c0_140 = arith.constant 0 : index
    %c32_141 = arith.constant 32 : index
    %723 = vector.load %arg13[%c0_140, %c32_141] : memref<2x256xf32, #tpu.memory_space<vmem>>, vector<2x32xf32>
    tpu.vector_store %arg13[%c0_140, %c32_141], %601 {strides = array<i32>} : memref<2x256xf32, #tpu.memory_space<vmem>>, vector<2x32xf32>,
    %c0_142 = arith.constant 0 : index
    %c64_143 = arith.constant 64 : index
    %724 = vector.load %arg13[%c0_142, %c64_143] : memref<2x256xf32, #tpu.memory_space<vmem>>, vector<2x32xf32>
    tpu.vector_store %arg13[%c0_142, %c64_143], %621 {strides = array<i32>} : memref<2x256xf32, #tpu.memory_space<vmem>>, vector<2x32xf32>,
    %c0_144 = arith.constant 0 : index
    %c96_145 = arith.constant 96 : index
    %725 = vector.load %arg13[%c0_144, %c96_145] : memref<2x256xf32, #tpu.memory_space<vmem>>, vector<2x32xf32>
    tpu.vector_store %arg13[%c0_144, %c96_145], %641 {strides = array<i32>} : memref<2x256xf32, #tpu.memory_space<vmem>>, vector<2x32xf32>,
    %c0_146 = arith.constant 0 : index
    %c128_147 = arith.constant 128 : index
    %726 = vector.load %arg13[%c0_146, %c128_147] : memref<2x256xf32, #tpu.memory_space<vmem>>, vector<2x32xf32>
    tpu.vector_store %arg13[%c0_146, %c128_147], %661 {strides = array<i32>} : memref<2x256xf32, #tpu.memory_space<vmem>>, vector<2x32xf32>,
    %c0_148 = arith.constant 0 : index
    %c160_149 = arith.constant 160 : index
    %727 = vector.load %arg13[%c0_148, %c160_149] : memref<2x256xf32, #tpu.memory_space<vmem>>, vector<2x32xf32>
    tpu.vector_store %arg13[%c0_148, %c160_149], %681 {strides = array<i32>} : memref<2x256xf32, #tpu.memory_space<vmem>>, vector<2x32xf32>,
    %c0_150 = arith.constant 0 : index
    %c192_151 = arith.constant 192 : index
    %728 = vector.load %arg13[%c0_150, %c192_151] : memref<2x256xf32, #tpu.memory_space<vmem>>, vector<2x32xf32>
    tpu.vector_store %arg13[%c0_150, %c192_151], %701 {strides = array<i32>} : memref<2x256xf32, #tpu.memory_space<vmem>>, vector<2x32xf32>,
    %c0_152 = arith.constant 0 : index
    %c224_153 = arith.constant 224 : index
    %729 = vector.load %arg13[%c0_152, %c224_153] : memref<2x256xf32, #tpu.memory_space<vmem>>, vector<2x32xf32>
    tpu.vector_store %arg13[%c0_152, %c224_153], %721 {strides = array<i32>} : memref<2x256xf32, #tpu.memory_space<vmem>>, vector<2x32xf32>,
    %c0_154 = arith.constant 0 : index
    %c0_155 = arith.constant 0 : index
    %730 = vector.load %arg10[%c0_154, %c0_155] : memref<32x12xf32, #tpu.memory_space<vmem>>, vector<32x12xf32>
    %cst_156 = arith.constant dense<0.000000e+00> : vector<2x12xf32>
    %731 = tpu.matmul %359, %730, %cst_156 {dimension_numbers = #tpu.dot_dimension_numbers<[1], [0], [0], [1], [0, 0, 1, 1], [], []>} : vector<2x32xf32>, vector<32x12xf32>, vector<2x12xf32> -> vector<2x12xf32>
    %c0_157 = arith.constant 0 : index
    %c0_158 = arith.constant 0 : index
    %732 = vector.load %arg11[%c0_157, %c0_158] : memref<1x12xf32, #tpu.memory_space<vmem>>, vector<1x12xf32>
    %733 = vector.broadcast %732 : vector<1x12xf32> to vector<2x12xf32>
    %734 = arith.addf %731, %733 : vector<2x12xf32>
    %735 = tpu.iota {dimensions = array<i32: 1>} : vector<2x12xi32>
    %c0_159 = arith.constant 0 : index
    %c0_160 = arith.constant 0 : index
    %736 = vector.load %arg2[%c0_159, %c0_160] : memref<2x1xi32, #tpu.memory_space<vmem>>, vector<2x1xi32>
    %737 = vector.broadcast %736 : vector<2x1xi32> to vector<2x12xi32>
    %738 = arith.cmpi eq, %737, %735 : vector<2x12xi32>
    %cst_161 = arith.constant 0.000000e+00 : f32
    %739 = vector.broadcast %cst_161 : f32 to vector<2x12xf32>
    %740 = arith.select %738, %734, %739 : vector<2x12xi1>, vector<2x12xf32>
    %cst_162 = arith.constant dense<0.000000e+00> : vector<2xf32>
    %741 = vector.multi_reduction <add>, %740, %cst_162 [1] : vector<2x12xf32> to vector<2xf32>
    %742 = vector.shape_cast %741 : vector<2xf32> to vector<2x1xf32>
    %c0_163 = arith.constant 0 : index
    %c0_164 = arith.constant 0 : index
    %743 = vector.load %arg14[%c0_163, %c0_164] : memref<2x1xf32, #tpu.memory_space<vmem>>, vector<2x1xf32>
    tpu.vector_store %arg14[%c0_163, %c0_164], %742 {strides = array<i32>} : memref<2x1xf32, #tpu.memory_space<vmem>>, vector<2x1xf32>,
    return
  }
}

</mosaic_0001>

<llo_original>
// kernel: dkt_lstm_forward.1
$region0: #{dkt_lstm_forward.1}
  #allocation0 [shape = 'u32[]', space=smem, size = 0x4, offset = 0x4, fixed_abs, tag = 'smem constant byte address 0x4 - core index']
  #allocation1 [shape = 'u32[144,128]{1,0:T(1,128)}', space=vmem, size = 0x12000, scoped, tag = 'internal scratch']
  %s0 = inlined_call_operand.vmem [shape: s32[2,8], index: 0, kind: input, shape index: {}]
  %s1 = inlined_call_operand.vmem [shape: s32[2,8], index: 1, kind: input, shape index: {}]
  %s2 = inlined_call_operand.vmem [shape: s32[2,1], index: 2, kind: input, shape index: {}]
  %s3 = inlined_call_operand.vmem [shape: f32[25,16], index: 3, kind: input, shape index: {}]
  %s4 = inlined_call_operand.hbm [shape: f32[16,128], index: 4, kind: input, shape index: {}]
  %s5 = inlined_call_operand.vmem [shape: f32[32,128], index: 5, kind: input, shape index: {}]
  %s6 = inlined_call_operand.hbm [shape: f32[1,128], index: 6, kind: input, shape index: {}]
  %s7 = inlined_call_operand.vmem [shape: f32[32,128], index: 7, kind: input, shape index: {}]
  %s8 = inlined_call_operand.vmem [shape: f32[32,128], index: 8, kind: input, shape index: {}]
  %s9 = inlined_call_operand.vmem [shape: f32[1,128], index: 9, kind: input, shape index: {}]
  %s10 = inlined_call_operand.vmem [shape: f32[32,12], index: 10, kind: input, shape index: {}]
  %s11 = inlined_call_operand.hbm [shape: f32[1,12], index: 11, kind: input, shape index: {}]
  %s12 = inlined_call_operand.vmem [shape: f32[2,256], index: 12, kind: output, shape index: {0}]
  %s13 = inlined_call_operand.vmem [shape: f32[2,256], index: 13, kind: output, shape index: {1}]
  %s14 = inlined_call_operand.vmem [shape: f32[2,1], index: 14, kind: output, shape index: {2}]
  %15 = xla_tuple %s12, %s13, %s14
  %s16 = sld [smem:[#allocation0]]
  $region86: #{dkt_lstm_forward.1} parent=0
    _
  %s18 = ssub.s32 1, %s16
  %s19 = scalar_select 0, %s18, %s16
  $region1: #{dkt_lstm_forward.1} parent=0
    #allocation2 [shape = 'u8[8192]{0}', space=vmem, size = 0x2000, scoped, tag = 'input window, operand 4, single buffered']
    #allocation3 [shape = 's32[1]{0}', space=sflag, size = 0x4, scoped, tag = 'scoped memory for dkt_lstm_forward.1']
    #allocation4 [shape = 'u8[512]{0}', space=vmem, size = 0x400, scoped, tag = 'input window, operand 6, single buffered']
    #allocation5 [shape = 's32[1]{0}', space=sflag, size = 0x4, scoped, tag = 'scoped memory for dkt_lstm_forward.1']
    #allocation6 [shape = 'u8[512]{0}', space=vmem, size = 0x400, scoped, tag = 'input window, operand 11, single buffered']
    %20 = vsyncpa [#allocation3], 0
    %21 = vsyncpa [#allocation5], 0
    // Predicated region
    $region2: #{dkt_lstm_forward.1} parent=1 // pred_check
      _
    $region3: #{dkt_lstm_forward.1} parent=1 // pred_check_branch
      %23 = sbr.rel (0) target = $region5
    $region4: #{dkt_lstm_forward.1} parent=1 // pred_region
      _
    $region5: #{dkt_lstm_forward.1} parent=1 // pred_fallthru
      _
    // Predicated region
    $region6: #{dkt_lstm_forward.1} parent=1 // pred_check
      _
    $region7: #{dkt_lstm_forward.1} parent=1 // pred_check_branch
      %25 = sbr.rel (0) target = $region9
    $region8: #{dkt_lstm_forward.1} parent=1 // pred_region
      _
    $region9: #{dkt_lstm_forward.1} parent=1 // pred_fallthru
      _
    // Predicated region
    $region10: #{dkt_lstm_forward.1} parent=1 // pred_check
      _
    $region11: #{dkt_lstm_forward.1} parent=1 // pred_check_branch
      %27 = sbr.rel (0) target = $region13
    $region12: #{dkt_lstm_forward.1} parent=1 // pred_region
      _
    $region13: #{dkt_lstm_forward.1} parent=1 // pred_fallthru
      _
    // Predicated region
    $region14: #{dkt_lstm_forward.1} parent=1 // pred_check
      _
    $region15: #{dkt_lstm_forward.1} parent=1 // pred_check_branch
      %29 = sbr.rel (0) target = $region17
    $region16: #{dkt_lstm_forward.1} parent=1 // pred_region
      _
    $region17: #{dkt_lstm_forward.1} parent=1 // pred_fallthru
      _
    // Predicated region
    $region18: #{dkt_lstm_forward.1} parent=1 // pred_check
      _
    $region19: #{dkt_lstm_forward.1} parent=1 // pred_check_branch
      %31 = sbr.rel (0) target = $region21
    $region20: #{dkt_lstm_forward.1} parent=1 // pred_region
      %s33 = ssub.s32 256, 256
      %34 = vsyncadd [#allocation3], %s33
      %s35 = sshll.u32 [#allocation2], 4
      %s36 = int_to_ptr.vmem [resolvable:$true] %s35
      %41 = dma.hbm_to_vmem [thread:$0]  %s4, 256, %s36, [#allocation3], 128, 128, 8
    $region21: #{dkt_lstm_forward.1} parent=1 // pred_fallthru
      _
    // Predicated region
    $region22: #{dkt_lstm_forward.1} parent=1 // pred_check
      _
    $region23: #{dkt_lstm_forward.1} parent=1 // pred_check_branch
      %43 = sbr.rel (0) target = $region25
    $region24: #{dkt_lstm_forward.1} parent=1 // pred_region
      _
    $region25: #{dkt_lstm_forward.1} parent=1 // pred_fallthru
      _
    // Predicated region
    $region26: #{dkt_lstm_forward.1} parent=1 // pred_check
      _
    $region27: #{dkt_lstm_forward.1} parent=1 // pred_check_branch
      %45 = sbr.rel (0) target = $region29
    $region28: #{dkt_lstm_forward.1} parent=1 // pred_region
      %s47 = ssub.s32 16, 16
      %48 = vsyncadd [#allocation5], %s47
      %s50 = sshll.u32 [#allocation4], 4
      %s51 = int_to_ptr.vmem [resolvable:$true] %s50
      %53 = dma.hbm_to_vmem [thread:$0]  %s6, 16, %s51, [#allocation5]
    $region29: #{dkt_lstm_forward.1} parent=1 // pred_fallthru
      _
    // Predicated region
    $region30: #{dkt_lstm_forward.1} parent=1 // pred_check
      _
    $region31: #{dkt_lstm_forward.1} parent=1 // pred_check_branch
      %55 = sbr.rel (0) target = $region33
    $region32: #{dkt_lstm_forward.1} parent=1 // pred_region
      _
    $region33: #{dkt_lstm_forward.1} parent=1 // pred_fallthru
      _
    // Predicated region
    $region34: #{dkt_lstm_forward.1} parent=1 // pred_check
      _
    $region35: #{dkt_lstm_forward.1} parent=1 // pred_check_branch
      %57 = sbr.rel (0) target = $region37
    $region36: #{dkt_lstm_forward.1} parent=1 // pred_region
      _
    $region37: #{dkt_lstm_forward.1} parent=1 // pred_fallthru
      _
    // Predicated region
    $region38: #{dkt_lstm_forward.1} parent=1 // pred_check
      _
    $region39: #{dkt_lstm_forward.1} parent=1 // pred_check_branch
      %59 = sbr.rel (0) target = $region41
    $region40: #{dkt_lstm_forward.1} parent=1 // pred_region
      _
    $region41: #{dkt_lstm_forward.1} parent=1 // pred_fallthru
      _
    // Predicated region
    $region42: #{dkt_lstm_forward.1} parent=1 // pred_check
      _
    $region43: #{dkt_lstm_forward.1} parent=1 // pred_check_branch
      %61 = sbr.rel (0) target = $region45
    $region44: #{dkt_lstm_forward.1} parent=1 // pred_region
      _
    $region45: #{dkt_lstm_forward.1} parent=1 // pred_fallthru
      _
    // Predicated region
    $region46: #{dkt_lstm_forward.1} parent=1 // pred_check
      _
    $region47: #{dkt_lstm_forward.1} parent=1 // pred_check_branch
      %63 = sbr.rel (0) target = $region49
    $region48: #{dkt_lstm_forward.1} parent=1 // pred_region
      %s65 = ssub.s32 16, 16
      %66 = vsyncadd [#allocation5], %s65
      %s68 = sshll.u32 [#allocation6], 4
      %s69 = int_to_ptr.vmem [resolvable:$true] %s68
      %71 = dma.hbm_to_vmem [thread:$0]  %s11, 16, %s69, [#allocation5]
    $region49: #{dkt_lstm_forward.1} parent=1 // pred_fallthru
      _
    // Predicated region
    $region50: #{dkt_lstm_forward.1} parent=1 // pred_check
      _
    $region51: #{dkt_lstm_forward.1} parent=1 // pred_check_branch
      %73 = sbr.rel (0) target = $region53
    $region52: #{dkt_lstm_forward.1} parent=1 // pred_region
      %74 = dma.done [#allocation3], 256
    $region53: #{dkt_lstm_forward.1} parent=1 // pred_fallthru
      _
    // Predicated region
    $region54: #{dkt_lstm_forward.1} parent=1 // pred_check
      _
    $region55: #{dkt_lstm_forward.1} parent=1 // pred_check_branch
      %76 = sbr.rel (0) target = $region57
    $region56: #{dkt_lstm_forward.1} parent=1 // pred_region
      %77 = dma.done [#allocation5], 16
    $region57: #{dkt_lstm_forward.1} parent=1 // pred_fallthru
      _
    // Predicated region
    $region58: #{dkt_lstm_forward.1} parent=1 // pred_check
      _
    $region59: #{dkt_lstm_forward.1} parent=1 // pred_check_branch
      %79 = sbr.rel (0) target = $region61
    $region60: #{dkt_lstm_forward.1} parent=1 // pred_region
      %80 = dma.done [#allocation5], 16
    $region61: #{dkt_lstm_forward.1} parent=1 // pred_fallthru
      _
    %v81 = vld [vmem:[%s3] sm:$0xff]
    %v82 = vld [vmem:[%s3 + $0x8] sm:$0xff]
    %v83 = vld [vmem:[%s3 + $0x10] sm:$0xff]
    %v84 = vld [vmem:[%s3 + $0x18] sm:$0x1]
    %v85 = vld [vmem:[#allocation2] sm:$0xff]
    %v86 = vld [vmem:[#allocation2 + $0x8] sm:$0xff]
    %v87 = vld [vmem:[#allocation4] sm:$0x1]
    %v89 = vlaneseq
    %v90 = vshrl.u32 %v89, 7
    %v91 = vsub.s32 0, %v90
    %v92 = vrot.slane %v87, %v91
    %vm94 = vcmask 130048
    %v96 = vsel %vm94, %v81, 0
    %v99 = vsel %vm94, %v82, 0
    %v102 = vsel %vm94, %v83, 0
    %v105 = vsel %vm94, %v84, 0
    %107 = vmatprep.subr.mxu0 0.0
    %108 = vmatpush1.msra.mxu0 %v85
    %109 = vmatprep.subr.mxu0 0.0
    %110 = vmatpush1.msra.mxu0 %v86
    %111 = vmatprep.subr.mxu0 0.0
    %112 = vmatpush1.msra.mxu0 0.0
    %113 = vmatprep.subr.mxu0 0.0
    %114 = vmatpush1.msra.mxu0 0.0
    %115 = vmatprep.subr.mxu0 0.0
    %116 = vmatpush1.msra.mxu0 0.0
    %117 = vmatprep.subr.mxu0 0.0
    %118 = vmatpush1.msra.mxu0 0.0
    %119 = vmatprep.subr.mxu0 0.0
    %120 = vmatpush1.msra.mxu0 0.0
    %121 = vmatprep.subr.mxu0 0.0
    %122 = vmatpush1.msra.mxu0 0.0
    %123 = vmatprep.subr.mxu0 0.0
    %124 = vmatpush1.msra.mxu0 0.0
    %125 = vmatprep.subr.mxu0 0.0
    %126 = vmatpush1.msra.mxu0 0.0
    %127 = vmatprep.subr.mxu0 0.0
    %128 = vmatpush1.msra.mxu0 0.0
    %129 = vmatprep.subr.mxu0 0.0
    %130 = vmatpush1.msra.mxu0 0.0
    %131 = vmatprep.subr.mxu0 0.0
    %132 = vmatpush1.msra.mxu0 0.0
    %133 = vmatprep.subr.mxu0 0.0
    %134 = vmatpush1.msra.mxu0 0.0
    %135 = vmatprep.subr.mxu0 0.0
    %136 = vmatpush1.msra.mxu0 0.0
    %137 = vmatprep.subr.mxu0 0.0
    %138 = vmatpush1.msra.mxu0 0.0
    %139 = vmatprep.subr.mxu0 0.0
    %140 = vmatpush1.msra.mxu0 0.0
    %141 = vmatprep.subr.mxu0 0.0
    %142 = vmatpush1.msra.mxu0 0.0
    %143 = vmatprep.subr.mxu0 0.0
    %144 = vmatpush1.msra.mxu0 0.0
    %145 = vmatprep.subr.mxu0 0.0
    %146 = vmatpush1.msra.mxu0 0.0
    %147 = vmatprep.subr.mxu0 0.0
    %148 = vmatpush1.msra.mxu0 0.0
    %149 = vmatprep.subr.mxu0 0.0
    %150 = vmatpush1.msra.mxu0 0.0
    %151 = vmatprep.subr.mxu0 0.0
    %152 = vmatpush1.msra.mxu0 0.0
    %153 = vmatprep.subr.mxu0 0.0
    %154 = vmatpush1.msra.mxu0 0.0
    %155 = vmatprep.subr.mxu0 0.0
    %156 = vmatpush1.msra.mxu0 0.0
    %157 = vmatprep.subr.mxu0 0.0
    %158 = vmatpush1.msra.mxu0 0.0
    %159 = vmatprep.subr.mxu0 0.0
    %160 = vmatpush1.msra.mxu0 0.0
    %161 = vmatprep.subr.mxu0 0.0
    %162 = vmatpush1.msra.mxu0 0.0
    %163 = vmatprep.subr.mxu0 0.0
    %164 = vmatpush1.msra.mxu0 0.0
    %165 = vmatprep.subr.mxu0 0.0
    %166 = vmatpush1.msra.mxu0 0.0
    %167 = vmatprep.subr.mxu0 0.0
    %168 = vmatpush1.msra.mxu0 0.0
    %169 = vmatprep.subr.mxu0 0.0
    %170 = vmatpush1.msra.mxu0 0.0
    %171 = vmatprep.mubr.f32.mxu0 0.0
    %172 = vmatmul.mubr.f32.gmra.mrb[0].mxu0 %v96
    %v173 = vpop.f32.mrb[0].mxu0
    %v174 = vadd.f32 %v92, %v173
    %v175 = vpop.f32.mrb[0].mxu0
    %176 = vmatprep.mubr.f32.mxu0 0.0
    %177 = vmatmul.mubr.f32.gmra.mrb[0].mxu0 %v99
    %v178 = vpop.f32.mrb[0].mxu0
    %v179 = vadd.f32 %v92, %v178
    %v180 = vpop.f32.mrb[0].mxu0
    %181 = vmatprep.mubr.f32.mxu0 0.0
    %182 = vmatmul.mubr.f32.gmra.mrb[0].mxu0 %v102
    %v183 = vpop.f32.mrb[0].mxu0
    %v184 = vadd.f32 %v92, %v183
    %v185 = vpop.f32.mrb[0].mxu0
    %186 = vmatprep.mubr.f32.mxu0 0.0
    %187 = vmatmul.mubr.f32.gmra.mrb[0].mxu0 %v105
    %v188 = vpop.f32.mrb[0].mxu0
    %v189 = vadd.f32 %v92, %v188
    %v190 = vpop.f32.mrb[0].mxu0
    %191 = vdwg.mxu0
    %v192 = vld [vmem:[%s0] sm:$0x3]
    %v193 = vlaneseq
    %v194 = vand.u32 %v193, 127
    %195 = vset.pattern.permute.xlu0 0
    %196 = vperm.xlu0 %195, %v192
    %v197 = vpop.permute.xlu0 %196
    %vm198 = vcmp.eq.s32.totalorder %v197, %v194
    %v199 = vsel %vm198, 1, 0
    %v200 = vcvt.s32.f32 %v199
    %201 = vset.pattern.permute.xlu0 1
    %202 = vperm.xlu0 %201, %v192
    %v203 = vpop.permute.xlu0 %202
    %vm204 = vcmp.eq.s32.totalorder %v203, %v194
    %v205 = vsel %vm204, 1, 0
    %v206 = vcvt.s32.f32 %v205
    %207 = vset.pattern.permute.xlu0 2
    %208 = vperm.xlu0 %207, %v192
    %v209 = vpop.permute.xlu0 %208
    %vm210 = vcmp.eq.s32.totalorder %v209, %v194
    %v211 = vsel %vm210, 1, 0
    %v212 = vcvt.s32.f32 %v211
    %213 = vset.pattern.permute.xlu0 3
    %214 = vperm.xlu0 %213, %v192
    %v215 = vpop.permute.xlu0 %214
    %vm216 = vcmp.eq.s32.totalorder %v215, %v194
    %v217 = vsel %vm216, 1, 0
    %v218 = vcvt.s32.f32 %v217
    %219 = vset.pattern.permute.xlu0 4
    %220 = vperm.xlu0 %219, %v192
    %v221 = vpop.permute.xlu0 %220
    %vm222 = vcmp.eq.s32.totalorder %v221, %v194
    %v223 = vsel %vm222, 1, 0
    %v224 = vcvt.s32.f32 %v223
    %225 = vset.pattern.permute.xlu0 5
    %226 = vperm.xlu0 %225, %v192
    %v227 = vpop.permute.xlu0 %226
    %vm228 = vcmp.eq.s32.totalorder %v227, %v194
    %v229 = vsel %vm228, 1, 0
    %v230 = vcvt.s32.f32 %v229
    %231 = vset.pattern.permute.xlu0 6
    %232 = vperm.xlu0 %231, %v192
    %v233 = vpop.permute.xlu0 %232
    %vm234 = vcmp.eq.s32.totalorder %v233, %v194
    %v235 = vsel %vm234, 1, 0
    %v236 = vcvt.s32.f32 %v235
    %237 = vset.pattern.permute.xlu0 7
    %238 = vperm.xlu0 %237, %v192
    %v239 = vpop.permute.xlu0 %238
    %vm240 = vcmp.eq.s32.totalorder %v239, %v194
    %v241 = vsel %vm240, 1, 0
    %v242 = vcvt.s32.f32 %v241
    %v243 = vld [vmem:[%s5] sm:$0xff]
    %v244 = vld [vmem:[%s5 + $0x8] sm:$0xff]
    %v245 = vld [vmem:[%s5 + $0x10] sm:$0xff]
    %v246 = vld [vmem:[%s5 + $0x18] sm:$0xff]
    %vm247 = vcmask 261120
    %v249 = vsel %vm247, 0.0, 0
    %251 = vmatprep.subr.mxu0 0.0
    %252 = vmatpush1.msra.mxu0 %v243
    %253 = vmatprep.subr.mxu0 0.0
    %254 = vmatpush1.msra.mxu0 %v244
    %255 = vmatprep.subr.mxu0 0.0
    %256 = vmatpush1.msra.mxu0 %v245
    %257 = vmatprep.subr.mxu0 0.0
    %258 = vmatpush1.msra.mxu0 %v246
    %259 = vmatprep.subr.mxu0 0.0
    %260 = vmatpush1.msra.mxu0 0.0
    %261 = vmatprep.subr.mxu0 0.0
    %262 = vmatpush1.msra.mxu0 0.0
    %263 = vmatprep.subr.mxu0 0.0
    %264 = vmatpush1.msra.mxu0 0.0
    %265 = vmatprep.subr.mxu0 0.0
    %266 = vmatpush1.msra.mxu0 0.0
    %267 = vmatprep.subr.mxu0 0.0
    %268 = vmatpush1.msra.mxu0 0.0
    %269 = vmatprep.subr.mxu0 0.0
    %270 = vmatpush1.msra.mxu0 0.0
    %271 = vmatprep.subr.mxu0 0.0
    %272 = vmatpush1.msra.mxu0 0.0
    %273 = vmatprep.subr.mxu0 0.0
    %274 = vmatpush1.msra.mxu0 0.0
    %275 = vmatprep.subr.mxu0 0.0
    %276 = vmatpush1.msra.mxu0 0.0
    %277 = vmatprep.subr.mxu0 0.0
    %278 = vmatpush1.msra.mxu0 0.0
    %279 = vmatprep.subr.mxu0 0.0
    %280 = vmatpush1.msra.mxu0 0.0
    %281 = vmatprep.subr.mxu0 0.0
    %282 = vmatpush1.msra.mxu0 0.0
    %283 = vmatprep.subr.mxu0 0.0
    %284 = vmatpush1.msra.mxu0 0.0
    %285 = vmatprep.subr.mxu0 0.0
    %286 = vmatpush1.msra.mxu0 0.0
    %287 = vmatprep.subr.mxu0 0.0
    %288 = vmatpush1.msra.mxu0 0.0
    %289 = vmatprep.subr.mxu0 0.0
    %290 = vmatpush1.msra.mxu0 0.0
    %291 = vmatprep.subr.mxu0 0.0
    %292 = vmatpush1.msra.mxu0 0.0
    %293 = vmatprep.subr.mxu0 0.0
    %294 = vmatpush1.msra.mxu0 0.0
    %295 = vmatprep.subr.mxu0 0.0
    %296 = vmatpush1.msra.mxu0 0.0
    %297 = vmatprep.subr.mxu0 0.0
    %298 = vmatpush1.msra.mxu0 0.0
    %299 = vmatprep.subr.mxu0 0.0
    %300 = vmatpush1.msra.mxu0 0.0
    %301 = vmatprep.subr.mxu0 0.0
    %302 = vmatpush1.msra.mxu0 0.0
    %303 = vmatprep.subr.mxu0 0.0
    %304 = vmatpush1.msra.mxu0 0.0
    %305 = vmatprep.subr.mxu0 0.0
    %306 = vmatpush1.msra.mxu0 0.0
    %307 = vmatprep.subr.mxu0 0.0
    %308 = vmatpush1.msra.mxu0 0.0
    %309 = vmatprep.subr.mxu0 0.0
    %310 = vmatpush1.msra.mxu0 0.0
    %311 = vmatprep.subr.mxu0 0.0
    %312 = vmatpush1.msra.mxu0 0.0
    %313 = vmatprep.subr.mxu0 0.0
    %314 = vmatpush1.msra.mxu0 0.0
    %315 = vmatprep.mubr.f32.mxu0 0.0
    %316 = vmatmul.mubr.f32.gmra.mrb[0].mxu0 %v249
    %v317 = vpop.f32.mrb[0].mxu0
    %v318 = vadd.f32 0.0, %v317
    %v319 = vpop.f32.mrb[0].mxu0
    %320 = vdwg.mxu0
    %vm321 = vcmask 203776
    %v323 = vsel %vm321, %v200, 0
    %vm325 = vcmask 1040384
    %v327 = vsel %vm325, %v189, 0
    %329 = vmatprep.subr.mxu0 0.0
    %330 = vmatpush1.msra.mxu0 %v174
    %331 = vmatprep.subr.mxu0 0.0
    %332 = vmatpush1.msra.mxu0 %v179
    %333 = vmatprep.subr.mxu0 0.0
    %334 = vmatpush1.msra.mxu0 %v184
    %335 = vmatprep.subr.mxu0 0.0
    %336 = vmatpush1.msra.mxu0 %v327
    %337 = vmatprep.subr.mxu0 0.0
    %338 = vmatpush1.msra.mxu0 0.0
    %339 = vmatprep.subr.mxu0 0.0
    %340 = vmatpush1.msra.mxu0 0.0
    %341 = vmatprep.subr.mxu0 0.0
    %342 = vmatpush1.msra.mxu0 0.0
    %343 = vmatprep.subr.mxu0 0.0
    %344 = vmatpush1.msra.mxu0 0.0
    %345 = vmatprep.subr.mxu0 0.0
    %346 = vmatpush1.msra.mxu0 0.0
    %347 = vmatprep.subr.mxu0 0.0
    %348 = vmatpush1.msra.mxu0 0.0
    %349 = vmatprep.subr.mxu0 0.0
    %350 = vmatpush1.msra.mxu0 0.0
    %351 = vmatprep.subr.mxu0 0.0
    %352 = vmatpush1.msra.mxu0 0.0
    %353 = vmatprep.subr.mxu0 0.0
    %354 = vmatpush1.msra.mxu0 0.0
    %355 = vmatprep.subr.mxu0 0.0
    %356 = vmatpush1.msra.mxu0 0.0
    %357 = vmatprep.subr.mxu0 0.0
    %358 = vmatpush1.msra.mxu0 0.0
    %359 = vmatprep.subr.mxu0 0.0
    %360 = vmatpush1.msra.mxu0 0.0
    %361 = vmatprep.subr.mxu0 0.0
    %362 = vmatpush1.msra.mxu0 0.0
    %363 = vmatprep.subr.mxu0 0.0
    %364 = vmatpush1.msra.mxu0 0.0
    %365 = vmatprep.subr.mxu0 0.0
    %366 = vmatpush1.msra.mxu0 0.0
    %367 = vmatprep.subr.mxu0 0.0
    %368 = vmatpush1.msra.mxu0 0.0
    %369 = vmatprep.subr.mxu0 0.0
    %370 = vmatpush1.msra.mxu0 0.0
    %371 = vmatprep.subr.mxu0 0.0
    %372 = vmatpush1.msra.mxu0 0.0
    %373 = vmatprep.subr.mxu0 0.0
    %374 = vmatpush1.msra.mxu0 0.0
    %375 = vmatprep.subr.mxu0 0.0
    %376 = vmatpush1.msra.mxu0 0.0
    %377 = vmatprep.subr.mxu0 0.0
    %378 = vmatpush1.msra.mxu0 0.0
    %379 = vmatprep.subr.mxu0 0.0
    %380 = vmatpush1.msra.mxu0 0.0
    %381 = vmatprep.subr.mxu0 0.0
    %382 = vmatpush1.msra.mxu0 0.0
    %383 = vmatprep.subr.mxu0 0.0
    %384 = vmatpush1.msra.mxu0 0.0
    %385 = vmatprep.subr.mxu0 0.0
    %386 = vmatpush1.msra.mxu0 0.0
    %387 = vmatprep.subr.mxu0 0.0
    %388 = vmatpush1.msra.mxu0 0.0
    %389 = vmatprep.subr.mxu0 0.0
    %390 = vmatpush1.msra.mxu0 0.0
    %391 = vmatprep.subr.mxu0 0.0
    %392 = vmatpush1.msra.mxu0 0.0
    %393 = vmatprep.mubr.f32.mxu0 0.0
    %394 = vmatmul.mubr.f32.gmra.mrb[0].mxu0 %v323
    %v395 = vpop.f32.mrb[0].mxu0
    %v396 = vadd.f32 %v318, %v395
    %v397 = vpop.f32.mrb[0].mxu0
    %398 = vdwg.mxu0
    %v399 = vxor.u32 %v396, 2147483648
    %v400 = vmul.f32 %v399, 1.442695
    %v401 = vpow.pop %v400
    %v402 = vadd.f32 %v401, 1.0
    %v403 = vrcp.pop %v402
    %v404 = vmul.f32 1.0, %v403
    %v405 = vtanh.pop %v396
    %v406 = vmul.f32 %v404, 0.0
    %408 = vrot.lane.b32.xlu0 %v405, 64
    %v409 = vpop.permute.xlu0 %408
    %v411 = vmul.f32 %v404, %v409
    %413 = vrot.lane.b32.xlu0 %v411, 32
    %v414 = vpop.permute.xlu0 %413
    %v416 = vadd.f32 %v406, %v414
    %v417 = vtanh.pop %v416
    %419 = vrot.lane.b32.xlu0 %v417, 64
    %v420 = vpop.permute.xlu0 %419
    %v422 = vmul.f32 %v404, %v420
    %424 = vrot.lane.b32.xlu0 %v422, 32
    %v425 = vpop.permute.xlu0 %424
    %v426 = vsel %vm247, %v425, 0
    %428 = vmatprep.subr.mxu0 0.0
    %429 = vmatpush1.msra.mxu0 %v243
    %430 = vmatprep.subr.mxu0 0.0
    %431 = vmatpush1.msra.mxu0 %v244
    %432 = vmatprep.subr.mxu0 0.0
    %433 = vmatpush1.msra.mxu0 %v245
    %434 = vmatprep.subr.mxu0 0.0
    %435 = vmatpush1.msra.mxu0 %v246
    %436 = vmatprep.subr.mxu0 0.0
    %437 = vmatpush1.msra.mxu0 0.0
    %438 = vmatprep.subr.mxu0 0.0
    %439 = vmatpush1.msra.mxu0 0.0
    %440 = vmatprep.subr.mxu0 0.0
    %441 = vmatpush1.msra.mxu0 0.0
    %442 = vmatprep.subr.mxu0 0.0
    %443 = vmatpush1.msra.mxu0 0.0
    %444 = vmatprep.subr.mxu0 0.0
    %445 = vmatpush1.msra.mxu0 0.0
    %446 = vmatprep.subr.mxu0 0.0
    %447 = vmatpush1.msra.mxu0 0.0
    %448 = vmatprep.subr.mxu0 0.0
    %449 = vmatpush1.msra.mxu0 0.0
    %450 = vmatprep.subr.mxu0 0.0
    %451 = vmatpush1.msra.mxu0 0.0
    %452 = vmatprep.subr.mxu0 0.0
    %453 = vmatpush1.msra.mxu0 0.0
    %454 = vmatprep.subr.mxu0 0.0
    %455 = vmatpush1.msra.mxu0 0.0
    %456 = vmatprep.subr.mxu0 0.0
    %457 = vmatpush1.msra.mxu0 0.0
    %458 = vmatprep.subr.mxu0 0.0
    %459 = vmatpush1.msra.mxu0 0.0
    %460 = vmatprep.subr.mxu0 0.0
    %461 = vmatpush1.msra.mxu0 0.0
    %462 = vmatprep.subr.mxu0 0.0
    %463 = vmatpush1.msra.mxu0 0.0
    %464 = vmatprep.subr.mxu0 0.0
    %465 = vmatpush1.msra.mxu0 0.0
    %466 = vmatprep.subr.mxu0 0.0
    %467 = vmatpush1.msra.mxu0 0.0
    %468 = vmatprep.subr.mxu0 0.0
    %469 = vmatpush1.msra.mxu0 0.0
    %470 = vmatprep.subr.mxu0 0.0
    %471 = vmatpush1.msra.mxu0 0.0
    %472 = vmatprep.subr.mxu0 0.0
    %473 = vmatpush1.msra.mxu0 0.0
    %474 = vmatprep.subr.mxu0 0.0
    %475 = vmatpush1.msra.mxu0 0.0
    %476 = vmatprep.subr.mxu0 0.0
    %477 = vmatpush1.msra.mxu0 0.0
    %478 = vmatprep.subr.mxu0 0.0
    %479 = vmatpush1.msra.mxu0 0.0
    %480 = vmatprep.subr.mxu0 0.0
    %481 = vmatpush1.msra.mxu0 0.0
    %482 = vmatprep.subr.mxu0 0.0
    %483 = vmatpush1.msra.mxu0 0.0
    %484 = vmatprep.subr.mxu0 0.0
    %485 = vmatpush1.msra.mxu0 0.0
    %486 = vmatprep.subr.mxu0 0.0
    %487 = vmatpush1.msra.mxu0 0.0
    %488 = vmatprep.subr.mxu0 0.0
    %489 = vmatpush1.msra.mxu0 0.0
    %490 = vmatprep.subr.mxu0 0.0
    %491 = vmatpush1.msra.mxu0 0.0
    %492 = vmatprep.mubr.f32.mxu0 0.0
    %493 = vmatmul.mubr.f32.gmra.mrb[0].mxu0 %v426
    %v494 = vpop.f32.mrb[0].mxu0
    %v495 = vadd.f32 0.0, %v494
    %v496 = vpop.f32.mrb[0].mxu0
    %497 = vdwg.mxu0
    %v499 = vsel %vm321, %v206, 0
    %501 = vmatprep.subr.mxu0 0.0
    %502 = vmatpush1.msra.mxu0 %v174
    %503 = vmatprep.subr.mxu0 0.0
    %504 = vmatpush1.msra.mxu0 %v179
    %505 = vmatprep.subr.mxu0 0.0
    %506 = vmatpush1.msra.mxu0 %v184
    %507 = vmatprep.subr.mxu0 0.0
    %508 = vmatpush1.msra.mxu0 %v327
    %509 = vmatprep.subr.mxu0 0.0
    %510 = vmatpush1.msra.mxu0 0.0
    %511 = vmatprep.subr.mxu0 0.0
    %512 = vmatpush1.msra.mxu0 0.0
    %513 = vmatprep.subr.mxu0 0.0
    %514 = vmatpush1.msra.mxu0 0.0
    %515 = vmatprep.subr.mxu0 0.0
    %516 = vmatpush1.msra.mxu0 0.0
    %517 = vmatprep.subr.mxu0 0.0
    %518 = vmatpush1.msra.mxu0 0.0
    %519 = vmatprep.subr.mxu0 0.0
    %520 = vmatpush1.msra.mxu0 0.0
    %521 = vmatprep.subr.mxu0 0.0
    %522 = vmatpush1.msra.mxu0 0.0
    %523 = vmatprep.subr.mxu0 0.0
    %524 = vmatpush1.msra.mxu0 0.0
    %525 = vmatprep.subr.mxu0 0.0
    %526 = vmatpush1.msra.mxu0 0.0
    %527 = vmatprep.subr.mxu0 0.0
    %528 = vmatpush1.msra.mxu0 0.0
    %529 = vmatprep.subr.mxu0 0.0
    %530 = vmatpush1.msra.mxu0 0.0
    %531 = vmatprep.subr.mxu0 0.0
    %532 = vmatpush1.msra.mxu0 0.0
    %533 = vmatprep.subr.mxu0 0.0
    %534 = vmatpush1.msra.mxu0 0.0
    %535 = vmatprep.subr.mxu0 0.0
    %536 = vmatpush1.msra.mxu0 0.0
    %537 = vmatprep.subr.mxu0 0.0
    %538 = vmatpush1.msra.mxu0 0.0
    %539 = vmatprep.subr.mxu0 0.0
    %540 = vmatpush1.msra.mxu0 0.0
    %541 = vmatprep.subr.mxu0 0.0
    %542 = vmatpush1.msra.mxu0 0.0
    %543 = vmatprep.subr.mxu0 0.0
    %544 = vmatpush1.msra.mxu0 0.0
    %545 = vmatprep.subr.mxu0 0.0
    %546 = vmatpush1.msra.mxu0 0.0
    %547 = vmatprep.subr.mxu0 0.0
    %548 = vmatpush1.msra.mxu0 0.0
    %549 = vmatprep.subr.mxu0 0.0
    %550 = vmatpush1.msra.mxu0 0.0
    %551 = vmatprep.subr.mxu0 0.0
    %552 = vmatpush1.msra.mxu0 0.0
    %553 = vmatprep.subr.mxu0 0.0
    %554 = vmatpush1.msra.mxu0 0.0
    %555 = vmatprep.subr.mxu0 0.0
    %556 = vmatpush1.msra.mxu0 0.0
    %557 = vmatprep.subr.mxu0 0.0
    %558 = vmatpush1.msra.mxu0 0.0
    %559 = vmatprep.subr.mxu0 0.0
    %560 = vmatpush1.msra.mxu0 0.0
    %561 = vmatprep.subr.mxu0 0.0
    %562 = vmatpush1.msra.mxu0 0.0
    %563 = vmatprep.subr.mxu0 0.0
    %564 = vmatpush1.msra.mxu0 0.0
    %565 = vmatprep.mubr.f32.mxu0 0.0
    %566 = vmatmul.mubr.f32.gmra.mrb[0].mxu0 %v499
    %v567 = vpop.f32.mrb[0].mxu0
    %v568 = vadd.f32 %v495, %v567
    %v569 = vpop.f32.mrb[0].mxu0
    %570 = vdwg.mxu0
    %v571 = vxor.u32 %v568, 2147483648
    %v572 = vmul.f32 %v571, 1.442695
    %v573 = vpow.pop %v572
    %v574 = vadd.f32 %v573, 1.0
    %v575 = vrcp.pop %v574
    %v576 = vmul.f32 1.0, %v575
    %v577 = vtanh.pop %v568
    %v578 = vmul.f32 %v576, %v416
    %580 = vrot.lane.b32.xlu0 %v577, 64
    %v581 = vpop.permute.xlu0 %580
    %v583 = vmul.f32 %v576, %v581
    %585 = vrot.lane.b32.xlu0 %v583, 32
    %v586 = vpop.permute.xlu0 %585
    %v588 = vadd.f32 %v578, %v586
    %v589 = vtanh.pop %v588
    %591 = vrot.lane.b32.xlu0 %v589, 64
    %v592 = vpop.permute.xlu0 %591
    %v594 = vmul.f32 %v576, %v592
    %596 = vrot.lane.b32.xlu0 %v594, 32
    %v597 = vpop.permute.xlu0 %596
    %v598 = vsel %vm247, %v597, 0
    %600 = vmatprep.subr.mxu0 0.0
    %601 = vmatpush1.msra.mxu0 %v243
    %602 = vmatprep.subr.mxu0 0.0
    %603 = vmatpush1.msra.mxu0 %v244
    %604 = vmatprep.subr.mxu0 0.0
    %605 = vmatpush1.msra.mxu0 %v245
    %606 = vmatprep.subr.mxu0 0.0
    %607 = vmatpush1.msra.mxu0 %v246
    %608 = vmatprep.subr.mxu0 0.0
    %609 = vmatpush1.msra.mxu0 0.0
    %610 = vmatprep.subr.mxu0 0.0
    %611 = vmatpush1.msra.mxu0 0.0
    %612 = vmatprep.subr.mxu0 0.0
    %613 = vmatpush1.msra.mxu0 0.0
    %614 = vmatprep.subr.mxu0 0.0
    %615 = vmatpush1.msra.mxu0 0.0
    %616 = vmatprep.subr.mxu0 0.0
    %617 = vmatpush1.msra.mxu0 0.0
    %618 = vmatprep.subr.mxu0 0.0
    %619 = vmatpush1.msra.mxu0 0.0
    %620 = vmatprep.subr.mxu0 0.0
    %621 = vmatpush1.msra.mxu0 0.0
    %622 = vmatprep.subr.mxu0 0.0
    %623 = vmatpush1.msra.mxu0 0.0
    %624 = vmatprep.subr.mxu0 0.0
    %625 = vmatpush1.msra.mxu0 0.0
    %626 = vmatprep.subr.mxu0 0.0
    %627 = vmatpush1.msra.mxu0 0.0
    %628 = vmatprep.subr.mxu0 0.0
    %629 = vmatpush1.msra.mxu0 0.0
    %630 = vmatprep.subr.mxu0 0.0
    %631 = vmatpush1.msra.mxu0 0.0
    %632 = vmatprep.subr.mxu0 0.0
    %633 = vmatpush1.msra.mxu0 0.0
    %634 = vmatprep.subr.mxu0 0.0
    %635 = vmatpush1.msra.mxu0 0.0
    %636 = vmatprep.subr.mxu0 0.0
    %637 = vmatpush1.msra.mxu0 0.0
    %638 = vmatprep.subr.mxu0 0.0
    %639 = vmatpush1.msra.mxu0 0.0
    %640 = vmatprep.subr.mxu0 0.0
    %641 = vmatpush1.msra.mxu0 0.0
    %642 = vmatprep.subr.mxu0 0.0
    %643 = vmatpush1.msra.mxu0 0.0
    %644 = vmatprep.subr.mxu0 0.0
    %645 = vmatpush1.msra.mxu0 0.0
    %646 = vmatprep.subr.mxu0 0.0
    %647 = vmatpush1.msra.mxu0 0.0
    %648 = vmatprep.subr.mxu0 0.0
    %649 = vmatpush1.msra.mxu0 0.0
    %650 = vmatprep.subr.mxu0 0.0
    %651 = vmatpush1.msra.mxu0 0.0
    %652 = vmatprep.subr.mxu0 0.0
    %653 = vmatpush1.msra.mxu0 0.0
    %654 = vmatprep.subr.mxu0 0.0
    %655 = vmatpush1.msra.mxu0 0.0
    %656 = vmatprep.subr.mxu0 0.0
    %657 = vmatpush1.msra.mxu0 0.0
    %658 = vmatprep.subr.mxu0 0.0
    %659 = vmatpush1.msra.mxu0 0.0
    %660 = vmatprep.subr.mxu0 0.0
    %661 = vmatpush1.msra.mxu0 0.0
    %662 = vmatprep.subr.mxu0 0.0
    %663 = vmatpush1.msra.mxu0 0.0
    %664 = vmatprep.mubr.f32.mxu0 0.0
    %665 = vmatmul.mubr.f32.gmra.mrb[0].mxu0 %v598
    %v666 = vpop.f32.mrb[0].mxu0
    %v667 = vadd.f32 0.0, %v666
    %v668 = vpop.f32.mrb[0].mxu0
    %669 = vdwg.mxu0
    %v671 = vsel %vm321, %v212, 0
    %673 = vmatprep.subr.mxu0 0.0
    %674 = vmatpush1.msra.mxu0 %v174
    %675 = vmatprep.subr.mxu0 0.0
    %676 = vmatpush1.msra.mxu0 %v179
    %677 = vmatprep.subr.mxu0 0.0
    %678 = vmatpush1.msra.mxu0 %v184
    %679 = vmatprep.subr.mxu0 0.0
    %680 = vmatpush1.msra.mxu0 %v327
    %681 = vmatprep.subr.mxu0 0.0
    %682 = vmatpush1.msra.mxu0 0.0
    %683 = vmatprep.subr.mxu0 0.0
    %684 = vmatpush1.msra.mxu0 0.0
    %685 = vmatprep.subr.mxu0 0.0
    %686 = vmatpush1.msra.mxu0 0.0
    %687 = vmatprep.subr.mxu0 0.0
    %688 = vmatpush1.msra.mxu0 0.0
    %689 = vmatprep.subr.mxu0 0.0
    %690 = vmatpush1.msra.mxu0 0.0
    %691 = vmatprep.subr.mxu0 0.0
    %692 = vmatpush1.msra.mxu0 0.0
    %693 = vmatprep.subr.mxu0 0.0
    %694 = vmatpush1.msra.mxu0 0.0
    %695 = vmatprep.subr.mxu0 0.0
    %696 = vmatpush1.msra.mxu0 0.0
    %697 = vmatprep.subr.mxu0 0.0
    %698 = vmatpush1.msra.mxu0 0.0
    %699 = vmatprep.subr.mxu0 0.0
    %700 = vmatpush1.msra.mxu0 0.0
    %701 = vmatprep.subr.mxu0 0.0
    %702 = vmatpush1.msra.mxu0 0.0
    %703 = vmatprep.subr.mxu0 0.0
    %704 = vmatpush1.msra.mxu0 0.0
    %705 = vmatprep.subr.mxu0 0.0
    %706 = vmatpush1.msra.mxu0 0.0
    %707 = vmatprep.subr.mxu0 0.0
    %708 = vmatpush1.msra.mxu0 0.0
    %709 = vmatprep.subr.mxu0 0.0
    %710 = vmatpush1.msra.mxu0 0.0
    %711 = vmatprep.subr.mxu0 0.0
    %712 = vmatpush1.msra.mxu0 0.0
    %713 = vmatprep.subr.mxu0 0.0
    %714 = vmatpush1.msra.mxu0 0.0
    %715 = vmatprep.subr.mxu0 0.0
    %716 = vmatpush1.msra.mxu0 0.0
    %717 = vmatprep.subr.mxu0 0.0
    %718 = vmatpush1.msra.mxu0 0.0
    %719 = vmatprep.subr.mxu0 0.0
    %720 = vmatpush1.msra.mxu0 0.0
    %721 = vmatprep.subr.mxu0 0.0
    %722 = vmatpush1.msra.mxu0 0.0
    %723 = vmatprep.subr.mxu0 0.0
    %724 = vmatpush1.msra.mxu0 0.0
    %725 = vmatprep.subr.mxu0 0.0
    %726 = vmatpush1.msra.mxu0 0.0
    %727 = vmatprep.subr.mxu0 0.0
    %728 = vmatpush1.msra.mxu0 0.0
    %729 = vmatprep.subr.mxu0 0.0
    %730 = vmatpush1.msra.mxu0 0.0
    %731 = vmatprep.subr.mxu0 0.0
    %732 = vmatpush1.msra.mxu0 0.0
    %733 = vmatprep.subr.mxu0 0.0
    %734 = vmatpush1.msra.mxu0 0.0
    %735 = vmatprep.subr.mxu0 0.0
    %736 = vmatpush1.msra.mxu0 0.0
    %737 = vmatprep.mubr.f32.mxu0 0.0
    %738 = vmatmul.mubr.f32.gmra.mrb[0].mxu0 %v671
    %v739 = vpop.f32.mrb[0].mxu0
    %v740 = vadd.f32 %v667, %v739
    %v741 = vpop.f32.mrb[0].mxu0
    %742 = vdwg.mxu0
    %v743 = vxor.u32 %v740, 2147483648
    %v744 = vmul.f32 %v743, 1.442695
    %v745 = vpow.pop %v744
    %v746 = vadd.f32 %v745, 1.0
    %v747 = vrcp.pop %v746
    %v748 = vmul.f32 1.0, %v747
    %v749 = vtanh.pop %v740
    %v750 = vmul.f32 %v748, %v588
    %752 = vrot.lane.b32.xlu0 %v749, 64
    %v753 = vpop.permute.xlu0 %752
    %v755 = vmul.f32 %v748, %v753
    %757 = vrot.lane.b32.xlu0 %v755, 32
    %v758 = vpop.permute.xlu0 %757
    %v760 = vadd.f32 %v750, %v758
    %v761 = vtanh.pop %v760
    %763 = vrot.lane.b32.xlu0 %v761, 64
    %v764 = vpop.permute.xlu0 %763
    %v766 = vmul.f32 %v748, %v764
    %768 = vrot.lane.b32.xlu0 %v766, 32
    %v769 = vpop.permute.xlu0 %768
    %v770 = vsel %vm247, %v769, 0
    %772 = vmatprep.subr.mxu0 0.0
    %773 = vmatpush1.msra.mxu0 %v243
    %774 = vmatprep.subr.mxu0 0.0
    %775 = vmatpush1.msra.mxu0 %v244
    %776 = vmatprep.subr.mxu0 0.0
    %777 = vmatpush1.msra.mxu0 %v245
    %778 = vmatprep.subr.mxu0 0.0
    %779 = vmatpush1.msra.mxu0 %v246
    %780 = vmatprep.subr.mxu0 0.0
    %781 = vmatpush1.msra.mxu0 0.0
    %782 = vmatprep.subr.mxu0 0.0
    %783 = vmatpush1.msra.mxu0 0.0
    %784 = vmatprep.subr.mxu0 0.0
    %785 = vmatpush1.msra.mxu0 0.0
    %786 = vmatprep.subr.mxu0 0.0
    %787 = vmatpush1.msra.mxu0 0.0
    %788 = vmatprep.subr.mxu0 0.0
    %789 = vmatpush1.msra.mxu0 0.0
    %790 = vmatprep.subr.mxu0 0.0
    %791 = vmatpush1.msra.mxu0 0.0
    %792 = vmatprep.subr.mxu0 0.0
    %793 = vmatpush1.msra.mxu0 0.0
    %794 = vmatprep.subr.mxu0 0.0
    %795 = vmatpush1.msra.mxu0 0.0
    %796 = vmatprep.subr.mxu0 0.0
    %797 = vmatpush1.msra.mxu0 0.0
    %798 = vmatprep.subr.mxu0 0.0
    %799 = vmatpush1.msra.mxu0 0.0
    %800 = vmatprep.subr.mxu0 0.0
    %801 = vmatpush1.msra.mxu0 0.0
    %802 = vmatprep.subr.mxu0 0.0
    %803 = vmatpush1.msra.mxu0 0.0
    %804 = vmatprep.subr.mxu0 0.0
    %805 = vmatpush1.msra.mxu0 0.0
    %806 = vmatprep.subr.mxu0 0.0
    %807 = vmatpush1.msra.mxu0 0.0
    %808 = vmatprep.subr.mxu0 0.0
    %809 = vmatpush1.msra.mxu0 0.0
    %810 = vmatprep.subr.mxu0 0.0
    %811 = vmatpush1.msra.mxu0 0.0
    %812 = vmatprep.subr.mxu0 0.0
    %813 = vmatpush1.msra.mxu0 0.0
    %814 = vmatprep.subr.mxu0 0.0
    %815 = vmatpush1.msra.mxu0 0.0
    %816 = vmatprep.subr.mxu0 0.0
    %817 = vmatpush1.msra.mxu0 0.0
    %818 = vmatprep.subr.mxu0 0.0
    %819 = vmatpush1.msra.mxu0 0.0
    %820 = vmatprep.subr.mxu0 0.0
    %821 = vmatpush1.msra.mxu0 0.0
    %822 = vmatprep.subr.mxu0 0.0
    %823 = vmatpush1.msra.mxu0 0.0
    %824 = vmatprep.subr.mxu0 0.0
    %825 = vmatpush1.msra.mxu0 0.0
    %826 = vmatprep.subr.mxu0 0.0
    %827 = vmatpush1.msra.mxu0 0.0
    %828 = vmatprep.subr.mxu0 0.0
    %829 = vmatpush1.msra.mxu0 0.0
    %830 = vmatprep.subr.mxu0 0.0
    %831 = vmatpush1.msra.mxu0 0.0
    %832 = vmatprep.subr.mxu0 0.0
    %833 = vmatpush1.msra.mxu0 0.0
    %834 = vmatprep.subr.mxu0 0.0
    %835 = vmatpush1.msra.mxu0 0.0
    %836 = vmatprep.mubr.f32.mxu0 0.0
    %837 = vmatmul.mubr.f32.gmra.mrb[0].mxu0 %v770
    %v838 = vpop.f32.mrb[0].mxu0
    %v839 = vadd.f32 0.0, %v838
    %v840 = vpop.f32.mrb[0].mxu0
    %841 = vdwg.mxu0
    %v843 = vsel %vm321, %v218, 0
    %845 = vmatprep.subr.mxu0 0.0
    %846 = vmatpush1.msra.mxu0 %v174
    %847 = vmatprep.subr.mxu0 0.0
    %848 = vmatpush1.msra.mxu0 %v179
    %849 = vmatprep.subr.mxu0 0.0
    %850 = vmatpush1.msra.mxu0 %v184
    %851 = vmatprep.subr.mxu0 0.0
    %852 = vmatpush1.msra.mxu0 %v327
    %853 = vmatprep.subr.mxu0 0.0
    %854 = vmatpush1.msra.mxu0 0.0
    %855 = vmatprep.subr.mxu0 0.0
    %856 = vmatpush1.msra.mxu0 0.0
    %857 = vmatprep.subr.mxu0 0.0
    %858 = vmatpush1.msra.mxu0 0.0
    %859 = vmatprep.subr.mxu0 0.0
    %860 = vmatpush1.msra.mxu0 0.0
    %861 = vmatprep.subr.mxu0 0.0
    %862 = vmatpush1.msra.mxu0 0.0
    %863 = vmatprep.subr.mxu0 0.0
    %864 = vmatpush1.msra.mxu0 0.0
    %865 = vmatprep.subr.mxu0 0.0
    %866 = vmatpush1.msra.mxu0 0.0
    %867 = vmatprep.subr.mxu0 0.0
    %868 = vmatpush1.msra.mxu0 0.0
    %869 = vmatprep.subr.mxu0 0.0
    %870 = vmatpush1.msra.mxu0 0.0
    %871 = vmatprep.subr.mxu0 0.0
    %872 = vmatpush1.msra.mxu0 0.0
    %873 = vmatprep.subr.mxu0 0.0
    %874 = vmatpush1.msra.mxu0 0.0
    %875 = vmatprep.subr.mxu0 0.0
    %876 = vmatpush1.msra.mxu0 0.0
    %877 = vmatprep.subr.mxu0 0.0
    %878 = vmatpush1.msra.mxu0 0.0
    %879 = vmatprep.subr.mxu0 0.0
    %880 = vmatpush1.msra.mxu0 0.0
    %881 = vmatprep.subr.mxu0 0.0
    %882 = vmatpush1.msra.mxu0 0.0
    %883 = vmatprep.subr.mxu0 0.0
    %884 = vmatpush1.msra.mxu0 0.0
    %885 = vmatprep.subr.mxu0 0.0
    %886 = vmatpush1.msra.mxu0 0.0
    %887 = vmatprep.subr.mxu0 0.0
    %888 = vmatpush1.msra.mxu0 0.0
    %889 = vmatprep.subr.mxu0 0.0
    %890 = vmatpush1.msra.mxu0 0.0
    %891 = vmatprep.subr.mxu0 0.0
    %892 = vmatpush1.msra.mxu0 0.0
    %893 = vmatprep.subr.mxu0 0.0
    %894 = vmatpush1.msra.mxu0 0.0
    %895 = vmatprep.subr.mxu0 0.0
    %896 = vmatpush1.msra.mxu0 0.0
    %897 = vmatprep.subr.mxu0 0.0
    %898 = vmatpush1.msra.mxu0 0.0
    %899 = vmatprep.subr.mxu0 0.0
    %900 = vmatpush1.msra.mxu0 0.0
    %901 = vmatprep.subr.mxu0 0.0
    %902 = vmatpush1.msra.mxu0 0.0
    %903 = vmatprep.subr.mxu0 0.0
    %904 = vmatpush1.msra.mxu0 0.0
    %905 = vmatprep.subr.mxu0 0.0
    %906 = vmatpush1.msra.mxu0 0.0
    %907 = vmatprep.subr.mxu0 0.0
    %908 = vmatpush1.msra.mxu0 0.0
    %909 = vmatprep.mubr.f32.mxu0 0.0
    %910 = vmatmul.mubr.f32.gmra.mrb[0].mxu0 %v843
    %v911 = vpop.f32.mrb[0].mxu0
    %v912 = vadd.f32 %v839, %v911
    %v913 = vpop.f32.mrb[0].mxu0
    %914 = vdwg.mxu0
    %v915 = vxor.u32 %v912, 2147483648
    %v916 = vmul.f32 %v915, 1.442695
    %v917 = vpow.pop %v916
    %v918 = vadd.f32 %v917, 1.0
    %v919 = vrcp.pop %v918
    %v920 = vmul.f32 1.0, %v919
    %v921 = vtanh.pop %v912
    %v922 = vmul.f32 %v920, %v760
    %924 = vrot.lane.b32.xlu0 %v921, 64
    %v925 = vpop.permute.xlu0 %924
    %v927 = vmul.f32 %v920, %v925
    %929 = vrot.lane.b32.xlu0 %v927, 32
    %v930 = vpop.permute.xlu0 %929
    %v932 = vadd.f32 %v922, %v930
    %v933 = vtanh.pop %v932
    %935 = vrot.lane.b32.xlu0 %v933, 64
    %v936 = vpop.permute.xlu0 %935
    %v938 = vmul.f32 %v920, %v936
    %940 = vrot.lane.b32.xlu0 %v938, 32
    %v941 = vpop.permute.xlu0 %940
    %v942 = vsel %vm247, %v941, 0
    %944 = vmatprep.subr.mxu0 0.0
    %945 = vmatpush1.msra.mxu0 %v243
    %946 = vmatprep.subr.mxu0 0.0
    %947 = vmatpush1.msra.mxu0 %v244
    %948 = vmatprep.subr.mxu0 0.0
    %949 = vmatpush1.msra.mxu0 %v245
    %950 = vmatprep.subr.mxu0 0.0
    %951 = vmatpush1.msra.mxu0 %v246
    %952 = vmatprep.subr.mxu0 0.0
    %953 = vmatpush1.msra.mxu0 0.0
    %954 = vmatprep.subr.mxu0 0.0
    %955 = vmatpush1.msra.mxu0 0.0
    %956 = vmatprep.subr.mxu0 0.0
    %957 = vmatpush1.msra.mxu0 0.0
    %958 = vmatprep.subr.mxu0 0.0
    %959 = vmatpush1.msra.mxu0 0.0
    %960 = vmatprep.subr.mxu0 0.0
    %961 = vmatpush1.msra.mxu0 0.0
    %962 = vmatprep.subr.mxu0 0.0
    %963 = vmatpush1.msra.mxu0 0.0
    %964 = vmatprep.subr.mxu0 0.0
    %965 = vmatpush1.msra.mxu0 0.0
    %966 = vmatprep.subr.mxu0 0.0
    %967 = vmatpush1.msra.mxu0 0.0
    %968 = vmatprep.subr.mxu0 0.0
    %969 = vmatpush1.msra.mxu0 0.0
    %970 = vmatprep.subr.mxu0 0.0
    %971 = vmatpush1.msra.mxu0 0.0
    %972 = vmatprep.subr.mxu0 0.0
    %973 = vmatpush1.msra.mxu0 0.0
    %974 = vmatprep.subr.mxu0 0.0
    %975 = vmatpush1.msra.mxu0 0.0
    %976 = vmatprep.subr.mxu0 0.0
    %977 = vmatpush1.msra.mxu0 0.0
    %978 = vmatprep.subr.mxu0 0.0
    %979 = vmatpush1.msra.mxu0 0.0
    %980 = vmatprep.subr.mxu0 0.0
    %981 = vmatpush1.msra.mxu0 0.0
    %982 = vmatprep.subr.mxu0 0.0
    %983 = vmatpush1.msra.mxu0 0.0
    %984 = vmatprep.subr.mxu0 0.0
    %985 = vmatpush1.msra.mxu0 0.0
    %986 = vmatprep.subr.mxu0 0.0
    %987 = vmatpush1.msra.mxu0 0.0
    %988 = vmatprep.subr.mxu0 0.0
    %989 = vmatpush1.msra.mxu0 0.0
    %990 = vmatprep.subr.mxu0 0.0
    %991 = vmatpush1.msra.mxu0 0.0
    %992 = vmatprep.subr.mxu0 0.0
    %993 = vmatpush1.msra.mxu0 0.0
    %994 = vmatprep.subr.mxu0 0.0
    %995 = vmatpush1.msra.mxu0 0.0
    %996 = vmatprep.subr.mxu0 0.0
    %997 = vmatpush1.msra.mxu0 0.0
    %998 = vmatprep.subr.mxu0 0.0
    %999 = vmatpush1.msra.mxu0 0.0
    %1000 = vmatprep.subr.mxu0 0.0
    %1001 = vmatpush1.msra.mxu0 0.0
    %1002 = vmatprep.subr.mxu0 0.0
    %1003 = vmatpush1.msra.mxu0 0.0
    %1004 = vmatprep.subr.mxu0 0.0
    %1005 = vmatpush1.msra.mxu0 0.0
    %1006 = vmatprep.subr.mxu0 0.0
    %1007 = vmatpush1.msra.mxu0 0.0
    %1008 = vmatprep.mubr.f32.mxu0 0.0
    %1009 = vmatmul.mubr.f32.gmra.mrb[0].mxu0 %v942
    %v1010 = vpop.f32.mrb[0].mxu0
    %v1011 = vadd.f32 0.0, %v1010
    %v1012 = vpop.f32.mrb[0].mxu0
    %1013 = vdwg.mxu0
    %v1015 = vsel %vm321, %v224, 0
    %1017 = vmatprep.subr.mxu0 0.0
    %1018 = vmatpush1.msra.mxu0 %v174
    %1019 = vmatprep.subr.mxu0 0.0
    %1020 = vmatpush1.msra.mxu0 %v179
    %1021 = vmatprep.subr.mxu0 0.0
    %1022 = vmatpush1.msra.mxu0 %v184
    %1023 = vmatprep.subr.mxu0 0.0
    %1024 = vmatpush1.msra.mxu0 %v327
    %1025 = vmatprep.subr.mxu0 0.0
    %1026 = vmatpush1.msra.mxu0 0.0
    %1027 = vmatprep.subr.mxu0 0.0
    %1028 = vmatpush1.msra.mxu0 0.0
    %1029 = vmatprep.subr.mxu0 0.0
    %1030 = vmatpush1.msra.mxu0 0.0
    %1031 = vmatprep.subr.mxu0 0.0
    %1032 = vmatpush1.msra.mxu0 0.0
    %1033 = vmatprep.subr.mxu0 0.0
    %1034 = vmatpush1.msra.mxu0 0.0
    %1035 = vmatprep.subr.mxu0 0.0
    %1036 = vmatpush1.msra.mxu0 0.0
    %1037 = vmatprep.subr.mxu0 0.0
    %1038 = vmatpush1.msra.mxu0 0.0
    %1039 = vmatprep.subr.mxu0 0.0
    %1040 = vmatpush1.msra.mxu0 0.0
    %1041 = vmatprep.subr.mxu0 0.0
    %1042 = vmatpush1.msra.mxu0 0.0
    %1043 = vmatprep.subr.mxu0 0.0
    %1044 = vmatpush1.msra.mxu0 0.0
    %1045 = vmatprep.subr.mxu0 0.0
    %1046 = vmatpush1.msra.mxu0 0.0
    %1047 = vmatprep.subr.mxu0 0.0
    %1048 = vmatpush1.msra.mxu0 0.0
    %1049 = vmatprep.subr.mxu0 0.0
    %1050 = vmatpush1.msra.mxu0 0.0
    %1051 = vmatprep.subr.mxu0 0.0
    %1052 = vmatpush1.msra.mxu0 0.0
    %1053 = vmatprep.subr.mxu0 0.0
    %1054 = vmatpush1.msra.mxu0 0.0
    %1055 = vmatprep.subr.mxu0 0.0
    %1056 = vmatpush1.msra.mxu0 0.0
    %1057 = vmatprep.subr.mxu0 0.0
    %1058 = vmatpush1.msra.mxu0 0.0
    %1059 = vmatprep.subr.mxu0 0.0
    %1060 = vmatpush1.msra.mxu0 0.0
    %1061 = vmatprep.subr.mxu0 0.0
    %1062 = vmatpush1.msra.mxu0 0.0
    %1063 = vmatprep.subr.mxu0 0.0
    %1064 = vmatpush1.msra.mxu0 0.0
    %1065 = vmatprep.subr.mxu0 0.0
    %1066 = vmatpush1.msra.mxu0 0.0
    %1067 = vmatprep.subr.mxu0 0.0
    %1068 = vmatpush1.msra.mxu0 0.0
    %1069 = vmatprep.subr.mxu0 0.0
    %1070 = vmatpush1.msra.mxu0 0.0
    %1071 = vmatprep.subr.mxu0 0.0
    %1072 = vmatpush1.msra.mxu0 0.0
    %1073 = vmatprep.subr.mxu0 0.0
    %1074 = vmatpush1.msra.mxu0 0.0
    %1075 = vmatprep.subr.mxu0 0.0
    %1076 = vmatpush1.msra.mxu0 0.0
    %1077 = vmatprep.subr.mxu0 0.0
    %1078 = vmatpush1.msra.mxu0 0.0
    %1079 = vmatprep.subr.mxu0 0.0
    %1080 = vmatpush1.msra.mxu0 0.0
    %1081 = vmatprep.mubr.f32.mxu0 0.0
    %1082 = vmatmul.mubr.f32.gmra.mrb[0].mxu0 %v1015
    %v1083 = vpop.f32.mrb[0].mxu0
    %v1084 = vadd.f32 %v1011, %v1083
    %v1085 = vpop.f32.mrb[0].mxu0
    %1086 = vdwg.mxu0
    %v1087 = vxor.u32 %v1084, 2147483648
    %v1088 = vmul.f32 %v1087, 1.442695
    %v1089 = vpow.pop %v1088
    %v1090 = vadd.f32 %v1089, 1.0
    %v1091 = vrcp.pop %v1090
    %v1092 = vmul.f32 1.0, %v1091
    %v1093 = vtanh.pop %v1084
    %v1094 = vmul.f32 %v1092, %v932
    %1096 = vrot.lane.b32.xlu0 %v1093, 64
    %v1097 = vpop.permute.xlu0 %1096
    %v1099 = vmul.f32 %v1092, %v1097
    %1101 = vrot.lane.b32.xlu0 %v1099, 32
    %v1102 = vpop.permute.xlu0 %1101
    %v1104 = vadd.f32 %v1094, %v1102
    %v1105 = vtanh.pop %v1104
    %1107 = vrot.lane.b32.xlu0 %v1105, 64
    %v1108 = vpop.permute.xlu0 %1107
    %v1110 = vmul.f32 %v1092, %v1108
    %1112 = vrot.lane.b32.xlu0 %v1110, 32
    %v1113 = vpop.permute.xlu0 %1112
    %v1114 = vsel %vm247, %v1113, 0
    %1116 = vmatprep.subr.mxu0 0.0
    %1117 = vmatpush1.msra.mxu0 %v243
    %1118 = vmatprep.subr.mxu0 0.0
    %1119 = vmatpush1.msra.mxu0 %v244
    %1120 = vmatprep.subr.mxu0 0.0
    %1121 = vmatpush1.msra.mxu0 %v245
    %1122 = vmatprep.subr.mxu0 0.0
    %1123 = vmatpush1.msra.mxu0 %v246
    %1124 = vmatprep.subr.mxu0 0.0
    %1125 = vmatpush1.msra.mxu0 0.0
    %1126 = vmatprep.subr.mxu0 0.0
    %1127 = vmatpush1.msra.mxu0 0.0
    %1128 = vmatprep.subr.mxu0 0.0
    %1129 = vmatpush1.msra.mxu0 0.0
    %1130 = vmatprep.subr.mxu0 0.0
    %1131 = vmatpush1.msra.mxu0 0.0
    %1132 = vmatprep.subr.mxu0 0.0
    %1133 = vmatpush1.msra.mxu0 0.0
    %1134 = vmatprep.subr.mxu0 0.0
    %1135 = vmatpush1.msra.mxu0 0.0
    %1136 = vmatprep.subr.mxu0 0.0
    %1137 = vmatpush1.msra.mxu0 0.0
    %1138 = vmatprep.subr.mxu0 0.0
    %1139 = vmatpush1.msra.mxu0 0.0
    %1140 = vmatprep.subr.mxu0 0.0
    %1141 = vmatpush1.msra.mxu0 0.0
    %1142 = vmatprep.subr.mxu0 0.0
    %1143 = vmatpush1.msra.mxu0 0.0
    %1144 = vmatprep.subr.mxu0 0.0
    %1145 = vmatpush1.msra.mxu0 0.0
    %1146 = vmatprep.subr.mxu0 0.0
    %1147 = vmatpush1.msra.mxu0 0.0
    %1148 = vmatprep.subr.mxu0 0.0
    %1149 = vmatpush1.msra.mxu0 0.0
    %1150 = vmatprep.subr.mxu0 0.0
    %1151 = vmatpush1.msra.mxu0 0.0
    %1152 = vmatprep.subr.mxu0 0.0
    %1153 = vmatpush1.msra.mxu0 0.0
    %1154 = vmatprep.subr.mxu0 0.0
    %1155 = vmatpush1.msra.mxu0 0.0
    %1156 = vmatprep.subr.mxu0 0.0
    %1157 = vmatpush1.msra.mxu0 0.0
    %1158 = vmatprep.subr.mxu0 0.0
    %1159 = vmatpush1.msra.mxu0 0.0
    %1160 = vmatprep.subr.mxu0 0.0
    %1161 = vmatpush1.msra.mxu0 0.0
    %1162 = vmatprep.subr.mxu0 0.0
    %1163 = vmatpush1.msra.mxu0 0.0
    %1164 = vmatprep.subr.mxu0 0.0
    %1165 = vmatpush1.msra.mxu0 0.0
    %1166 = vmatprep.subr.mxu0 0.0
    %1167 = vmatpush1.msra.mxu0 0.0
    %1168 = vmatprep.subr.mxu0 0.0
    %1169 = vmatpush1.msra.mxu0 0.0
    %1170 = vmatprep.subr.mxu0 0.0
    %1171 = vmatpush1.msra.mxu0 0.0
    %1172 = vmatprep.subr.mxu0 0.0
    %1173 = vmatpush1.msra.mxu0 0.0
    %1174 = vmatprep.subr.mxu0 0.0
    %1175 = vmatpush1.msra.mxu0 0.0
    %1176 = vmatprep.subr.mxu0 0.0
    %1177 = vmatpush1.msra.mxu0 0.0
    %1178 = vmatprep.subr.mxu0 0.0
    %1179 = vmatpush1.msra.mxu0 0.0
    %1180 = vmatprep.mubr.f32.mxu0 0.0
    %1181 = vmatmul.mubr.f32.gmra.mrb[0].mxu0 %v1114
    %v1182 = vpop.f32.mrb[0].mxu0
    %v1183 = vadd.f32 0.0, %v1182
    %v1184 = vpop.f32.mrb[0].mxu0
    %1185 = vdwg.mxu0
    %v1187 = vsel %vm321, %v230, 0
    %1189 = vmatprep.subr.mxu0 0.0
    %1190 = vmatpush1.msra.mxu0 %v174
    %1191 = vmatprep.subr.mxu0 0.0
    %1192 = vmatpush1.msra.mxu0 %v179
    %1193 = vmatprep.subr.mxu0 0.0
    %1194 = vmatpush1.msra.mxu0 %v184
    %1195 = vmatprep.subr.mxu0 0.0
    %1196 = vmatpush1.msra.mxu0 %v327
    %1197 = vmatprep.subr.mxu0 0.0
    %1198 = vmatpush1.msra.mxu0 0.0
    %1199 = vmatprep.subr.mxu0 0.0
    %1200 = vmatpush1.msra.mxu0 0.0
    %1201 = vmatprep.subr.mxu0 0.0
    %1202 = vmatpush1.msra.mxu0 0.0
    %1203 = vmatprep.subr.mxu0 0.0
    %1204 = vmatpush1.msra.mxu0 0.0
    %1205 = vmatprep.subr.mxu0 0.0
    %1206 = vmatpush1.msra.mxu0 0.0
    %1207 = vmatprep.subr.mxu0 0.0
    %1208 = vmatpush1.msra.mxu0 0.0
    %1209 = vmatprep.subr.mxu0 0.0
    %1210 = vmatpush1.msra.mxu0 0.0
    %1211 = vmatprep.subr.mxu0 0.0
    %1212 = vmatpush1.msra.mxu0 0.0
    %1213 = vmatprep.subr.mxu0 0.0
    %1214 = vmatpush1.msra.mxu0 0.0
    %1215 = vmatprep.subr.mxu0 0.0
    %1216 = vmatpush1.msra.mxu0 0.0
    %1217 = vmatprep.subr.mxu0 0.0
    %1218 = vmatpush1.msra.mxu0 0.0
    %1219 = vmatprep.subr.mxu0 0.0
    %1220 = vmatpush1.msra.mxu0 0.0
    %1221 = vmatprep.subr.mxu0 0.0
    %1222 = vmatpush1.msra.mxu0 0.0
    %1223 = vmatprep.subr.mxu0 0.0
    %1224 = vmatpush1.msra.mxu0 0.0
    %1225 = vmatprep.subr.mxu0 0.0
    %1226 = vmatpush1.msra.mxu0 0.0
    %1227 = vmatprep.subr.mxu0 0.0
    %1228 = vmatpush1.msra.mxu0 0.0
    %1229 = vmatprep.subr.mxu0 0.0
    %1230 = vmatpush1.msra.mxu0 0.0
    %1231 = vmatprep.subr.mxu0 0.0
    %1232 = vmatpush1.msra.mxu0 0.0
    %1233 = vmatprep.subr.mxu0 0.0
    %1234 = vmatpush1.msra.mxu0 0.0
    %1235 = vmatprep.subr.mxu0 0.0
    %1236 = vmatpush1.msra.mxu0 0.0
    %1237 = vmatprep.subr.mxu0 0.0
    %1238 = vmatpush1.msra.mxu0 0.0
    %1239 = vmatprep.subr.mxu0 0.0
    %1240 = vmatpush1.msra.mxu0 0.0
    %1241 = vmatprep.subr.mxu0 0.0
    %1242 = vmatpush1.msra.mxu0 0.0
    %1243 = vmatprep.subr.mxu0 0.0
    %1244 = vmatpush1.msra.mxu0 0.0
    %1245 = vmatprep.subr.mxu0 0.0
    %1246 = vmatpush1.msra.mxu0 0.0
    %1247 = vmatprep.subr.mxu0 0.0
    %1248 = vmatpush1.msra.mxu0 0.0
    %1249 = vmatprep.subr.mxu0 0.0
    %1250 = vmatpush1.msra.mxu0 0.0
    %1251 = vmatprep.subr.mxu0 0.0
    %1252 = vmatpush1.msra.mxu0 0.0
    %1253 = vmatprep.mubr.f32.mxu0 0.0
    %1254 = vmatmul.mubr.f32.gmra.mrb[0].mxu0 %v1187
    %v1255 = vpop.f32.mrb[0].mxu0
    %v1256 = vadd.f32 %v1183, %v1255
    %v1257 = vpop.f32.mrb[0].mxu0
    %1258 = vdwg.mxu0
    %v1259 = vxor.u32 %v1256, 2147483648
    %v1260 = vmul.f32 %v1259, 1.442695
    %v1261 = vpow.pop %v1260
    %v1262 = vadd.f32 %v1261, 1.0
    %v1263 = vrcp.pop %v1262
    %v1264 = vmul.f32 1.0, %v1263
    %v1265 = vtanh.pop %v1256
    %v1266 = vmul.f32 %v1264, %v1104
    %1268 = vrot.lane.b32.xlu0 %v1265, 64
    %v1269 = vpop.permute.xlu0 %1268
    %v1271 = vmul.f32 %v1264, %v1269
    %1273 = vrot.lane.b32.xlu0 %v1271, 32
    %v1274 = vpop.permute.xlu0 %1273
    %v1276 = vadd.f32 %v1266, %v1274
    %v1277 = vtanh.pop %v1276
    %1279 = vrot.lane.b32.xlu0 %v1277, 64
    %v1280 = vpop.permute.xlu0 %1279
    %v1282 = vmul.f32 %v1264, %v1280
    %1284 = vrot.lane.b32.xlu0 %v1282, 32
    %v1285 = vpop.permute.xlu0 %1284
    %v1286 = vsel %vm247, %v1285, 0
    %1288 = vmatprep.subr.mxu0 0.0
    %1289 = vmatpush1.msra.mxu0 %v243
    %1290 = vmatprep.subr.mxu0 0.0
    %1291 = vmatpush1.msra.mxu0 %v244
    %1292 = vmatprep.subr.mxu0 0.0
    %1293 = vmatpush1.msra.mxu0 %v245
    %1294 = vmatprep.subr.mxu0 0.0
    %1295 = vmatpush1.msra.mxu0 %v246
    %1296 = vmatprep.subr.mxu0 0.0
    %1297 = vmatpush1.msra.mxu0 0.0
    %1298 = vmatprep.subr.mxu0 0.0
    %1299 = vmatpush1.msra.mxu0 0.0
    %1300 = vmatprep.subr.mxu0 0.0
    %1301 = vmatpush1.msra.mxu0 0.0
    %1302 = vmatprep.subr.mxu0 0.0
    %1303 = vmatpush1.msra.mxu0 0.0
    %1304 = vmatprep.subr.mxu0 0.0
    %1305 = vmatpush1.msra.mxu0 0.0
    %1306 = vmatprep.subr.mxu0 0.0
    %1307 = vmatpush1.msra.mxu0 0.0
    %1308 = vmatprep.subr.mxu0 0.0
    %1309 = vmatpush1.msra.mxu0 0.0
    %1310 = vmatprep.subr.mxu0 0.0
    %1311 = vmatpush1.msra.mxu0 0.0
    %1312 = vmatprep.subr.mxu0 0.0
    %1313 = vmatpush1.msra.mxu0 0.0
    %1314 = vmatprep.subr.mxu0 0.0
    %1315 = vmatpush1.msra.mxu0 0.0
    %1316 = vmatprep.subr.mxu0 0.0
    %1317 = vmatpush1.msra.mxu0 0.0
    %1318 = vmatprep.subr.mxu0 0.0
    %1319 = vmatpush1.msra.mxu0 0.0
    %1320 = vmatprep.subr.mxu0 0.0
    %1321 = vmatpush1.msra.mxu0 0.0
    %1322 = vmatprep.subr.mxu0 0.0
    %1323 = vmatpush1.msra.mxu0 0.0
    %1324 = vmatprep.subr.mxu0 0.0
    %1325 = vmatpush1.msra.mxu0 0.0
    %1326 = vmatprep.subr.mxu0 0.0
    %1327 = vmatpush1.msra.mxu0 0.0
    %1328 = vmatprep.subr.mxu0 0.0
    %1329 = vmatpush1.msra.mxu0 0.0
    %1330 = vmatprep.subr.mxu0 0.0
    %1331 = vmatpush1.msra.mxu0 0.0
    %1332 = vmatprep.subr.mxu0 0.0
    %1333 = vmatpush1.msra.mxu0 0.0
    %1334 = vmatprep.subr.mxu0 0.0
    %1335 = vmatpush1.msra.mxu0 0.0
    %1336 = vmatprep.subr.mxu0 0.0
    %1337 = vmatpush1.msra.mxu0 0.0
    %1338 = vmatprep.subr.mxu0 0.0
    %1339 = vmatpush1.msra.mxu0 0.0
    %1340 = vmatprep.subr.mxu0 0.0
    %1341 = vmatpush1.msra.mxu0 0.0
    %1342 = vmatprep.subr.mxu0 0.0
    %1343 = vmatpush1.msra.mxu0 0.0
    %1344 = vmatprep.subr.mxu0 0.0
    %1345 = vmatpush1.msra.mxu0 0.0
    %1346 = vmatprep.subr.mxu0 0.0
    %1347 = vmatpush1.msra.mxu0 0.0
    %1348 = vmatprep.subr.mxu0 0.0
    %1349 = vmatpush1.msra.mxu0 0.0
    %1350 = vmatprep.subr.mxu0 0.0
    %1351 = vmatpush1.msra.mxu0 0.0
    %1352 = vmatprep.mubr.f32.mxu0 0.0
    %1353 = vmatmul.mubr.f32.gmra.mrb[0].mxu0 %v1286
    %v1354 = vpop.f32.mrb[0].mxu0
    %v1355 = vadd.f32 0.0, %v1354
    %v1356 = vpop.f32.mrb[0].mxu0
    %1357 = vdwg.mxu0
    %v1359 = vsel %vm321, %v236, 0
    %1361 = vmatprep.subr.mxu0 0.0
    %1362 = vmatpush1.msra.mxu0 %v174
    %1363 = vmatprep.subr.mxu0 0.0
    %1364 = vmatpush1.msra.mxu0 %v179
    %1365 = vmatprep.subr.mxu0 0.0
    %1366 = vmatpush1.msra.mxu0 %v184
    %1367 = vmatprep.subr.mxu0 0.0
    %1368 = vmatpush1.msra.mxu0 %v327
    %1369 = vmatprep.subr.mxu0 0.0
    %1370 = vmatpush1.msra.mxu0 0.0
    %1371 = vmatprep.subr.mxu0 0.0
    %1372 = vmatpush1.msra.mxu0 0.0
    %1373 = vmatprep.subr.mxu0 0.0
    %1374 = vmatpush1.msra.mxu0 0.0
    %1375 = vmatprep.subr.mxu0 0.0
    %1376 = vmatpush1.msra.mxu0 0.0
    %1377 = vmatprep.subr.mxu0 0.0
    %1378 = vmatpush1.msra.mxu0 0.0
    %1379 = vmatprep.subr.mxu0 0.0
    %1380 = vmatpush1.msra.mxu0 0.0
    %1381 = vmatprep.subr.mxu0 0.0
    %1382 = vmatpush1.msra.mxu0 0.0
    %1383 = vmatprep.subr.mxu0 0.0
    %1384 = vmatpush1.msra.mxu0 0.0
    %1385 = vmatprep.subr.mxu0 0.0
    %1386 = vmatpush1.msra.mxu0 0.0
    %1387 = vmatprep.subr.mxu0 0.0
    %1388 = vmatpush1.msra.mxu0 0.0
    %1389 = vmatprep.subr.mxu0 0.0
    %1390 = vmatpush1.msra.mxu0 0.0
    %1391 = vmatprep.subr.mxu0 0.0
    %1392 = vmatpush1.msra.mxu0 0.0
    %1393 = vmatprep.subr.mxu0 0.0
    %1394 = vmatpush1.msra.mxu0 0.0
    %1395 = vmatprep.subr.mxu0 0.0
    %1396 = vmatpush1.msra.mxu0 0.0
    %1397 = vmatprep.subr.mxu0 0.0
    %1398 = vmatpush1.msra.mxu0 0.0
    %1399 = vmatprep.subr.mxu0 0.0
    %1400 = vmatpush1.msra.mxu0 0.0
    %1401 = vmatprep.subr.mxu0 0.0
    %1402 = vmatpush1.msra.mxu0 0.0
    %1403 = vmatprep.subr.mxu0 0.0
    %1404 = vmatpush1.msra.mxu0 0.0
    %1405 = vmatprep.subr.mxu0 0.0
    %1406 = vmatpush1.msra.mxu0 0.0
    %1407 = vmatprep.subr.mxu0 0.0
    %1408 = vmatpush1.msra.mxu0 0.0
    %1409 = vmatprep.subr.mxu0 0.0
    %1410 = vmatpush1.msra.mxu0 0.0
    %1411 = vmatprep.subr.mxu0 0.0
    %1412 = vmatpush1.msra.mxu0 0.0
    %1413 = vmatprep.subr.mxu0 0.0
    %1414 = vmatpush1.msra.mxu0 0.0
    %1415 = vmatprep.subr.mxu0 0.0
    %1416 = vmatpush1.msra.mxu0 0.0
    %1417 = vmatprep.subr.mxu0 0.0
    %1418 = vmatpush1.msra.mxu0 0.0
    %1419 = vmatprep.subr.mxu0 0.0
    %1420 = vmatpush1.msra.mxu0 0.0
    %1421 = vmatprep.subr.mxu0 0.0
    %1422 = vmatpush1.msra.mxu0 0.0
    %1423 = vmatprep.subr.mxu0 0.0
    %1424 = vmatpush1.msra.mxu0 0.0
    %1425 = vmatprep.mubr.f32.mxu0 0.0
    %1426 = vmatmul.mubr.f32.gmra.mrb[0].mxu0 %v1359
    %v1427 = vpop.f32.mrb[0].mxu0
    %v1428 = vadd.f32 %v1355, %v1427
    %v1429 = vpop.f32.mrb[0].mxu0
    %1430 = vdwg.mxu0
    %v1431 = vxor.u32 %v1428, 2147483648
    %v1432 = vmul.f32 %v1431, 1.442695
    %v1433 = vpow.pop %v1432
    %v1434 = vadd.f32 %v1433, 1.0
    %v1435 = vrcp.pop %v1434
    %v1436 = vmul.f32 1.0, %v1435
    %v1437 = vtanh.pop %v1428
    %v1438 = vmul.f32 %v1436, %v1276
    %1440 = vrot.lane.b32.xlu0 %v1437, 64
    %v1441 = vpop.permute.xlu0 %1440
    %v1443 = vmul.f32 %v1436, %v1441
    %1445 = vrot.lane.b32.xlu0 %v1443, 32
    %v1446 = vpop.permute.xlu0 %1445
    %v1448 = vadd.f32 %v1438, %v1446
    %v1449 = vtanh.pop %v1448
    %1451 = vrot.lane.b32.xlu0 %v1449, 64
    %v1452 = vpop.permute.xlu0 %1451
    %v1454 = vmul.f32 %v1436, %v1452
    %1456 = vrot.lane.b32.xlu0 %v1454, 32
    %v1457 = vpop.permute.xlu0 %1456
    %v1458 = vsel %vm247, %v1457, 0
    %1460 = vmatprep.subr.mxu0 0.0
    %1461 = vmatpush1.msra.mxu0 %v243
    %1462 = vmatprep.subr.mxu0 0.0
    %1463 = vmatpush1.msra.mxu0 %v244
    %1464 = vmatprep.subr.mxu0 0.0
    %1465 = vmatpush1.msra.mxu0 %v245
    %1466 = vmatprep.subr.mxu0 0.0
    %1467 = vmatpush1.msra.mxu0 %v246
    %1468 = vmatprep.subr.mxu0 0.0
    %1469 = vmatpush1.msra.mxu0 0.0
    %1470 = vmatprep.subr.mxu0 0.0
    %1471 = vmatpush1.msra.mxu0 0.0
    %1472 = vmatprep.subr.mxu0 0.0
    %1473 = vmatpush1.msra.mxu0 0.0
    %1474 = vmatprep.subr.mxu0 0.0
    %1475 = vmatpush1.msra.mxu0 0.0
    %1476 = vmatprep.subr.mxu0 0.0
    %1477 = vmatpush1.msra.mxu0 0.0
    %1478 = vmatprep.subr.mxu0 0.0
    %1479 = vmatpush1.msra.mxu0 0.0
    %1480 = vmatprep.subr.mxu0 0.0
    %1481 = vmatpush1.msra.mxu0 0.0
    %1482 = vmatprep.subr.mxu0 0.0
    %1483 = vmatpush1.msra.mxu0 0.0
    %1484 = vmatprep.subr.mxu0 0.0
    %1485 = vmatpush1.msra.mxu0 0.0
    %1486 = vmatprep.subr.mxu0 0.0
    %1487 = vmatpush1.msra.mxu0 0.0
    %1488 = vmatprep.subr.mxu0 0.0
    %1489 = vmatpush1.msra.mxu0 0.0
    %1490 = vmatprep.subr.mxu0 0.0
    %1491 = vmatpush1.msra.mxu0 0.0
    %1492 = vmatprep.subr.mxu0 0.0
    %1493 = vmatpush1.msra.mxu0 0.0
    %1494 = vmatprep.subr.mxu0 0.0
    %1495 = vmatpush1.msra.mxu0 0.0
    %1496 = vmatprep.subr.mxu0 0.0
    %1497 = vmatpush1.msra.mxu0 0.0
    %1498 = vmatprep.subr.mxu0 0.0
    %1499 = vmatpush1.msra.mxu0 0.0
    %1500 = vmatprep.subr.mxu0 0.0
    %1501 = vmatpush1.msra.mxu0 0.0
    %1502 = vmatprep.subr.mxu0 0.0
    %1503 = vmatpush1.msra.mxu0 0.0
    %1504 = vmatprep.subr.mxu0 0.0
    %1505 = vmatpush1.msra.mxu0 0.0
    %1506 = vmatprep.subr.mxu0 0.0
    %1507 = vmatpush1.msra.mxu0 0.0
    %1508 = vmatprep.subr.mxu0 0.0
    %1509 = vmatpush1.msra.mxu0 0.0
    %1510 = vmatprep.subr.mxu0 0.0
    %1511 = vmatpush1.msra.mxu0 0.0
    %1512 = vmatprep.subr.mxu0 0.0
    %1513 = vmatpush1.msra.mxu0 0.0
    %1514 = vmatprep.subr.mxu0 0.0
    %1515 = vmatpush1.msra.mxu0 0.0
    %1516 = vmatprep.subr.mxu0 0.0
    %1517 = vmatpush1.msra.mxu0 0.0
    %1518 = vmatprep.subr.mxu0 0.0
    %1519 = vmatpush1.msra.mxu0 0.0
    %1520 = vmatprep.subr.mxu0 0.0
    %1521 = vmatpush1.msra.mxu0 0.0
    %1522 = vmatprep.subr.mxu0 0.0
    %1523 = vmatpush1.msra.mxu0 0.0
    %1524 = vmatprep.mubr.f32.mxu0 0.0
    %1525 = vmatmul.mubr.f32.gmra.mrb[0].mxu0 %v1458
    %v1526 = vpop.f32.mrb[0].mxu0
    %v1527 = vadd.f32 0.0, %v1526
    %v1528 = vpop.f32.mrb[0].mxu0
    %1529 = vdwg.mxu0
    %v1531 = vsel %vm321, %v242, 0
    %1533 = vmatprep.subr.mxu0 0.0
    %1534 = vmatpush1.msra.mxu0 %v174
    %1535 = vmatprep.subr.mxu0 0.0
    %1536 = vmatpush1.msra.mxu0 %v179
    %1537 = vmatprep.subr.mxu0 0.0
    %1538 = vmatpush1.msra.mxu0 %v184
    %1539 = vmatprep.subr.mxu0 0.0
    %1540 = vmatpush1.msra.mxu0 %v327
    %1541 = vmatprep.subr.mxu0 0.0
    %1542 = vmatpush1.msra.mxu0 0.0
    %1543 = vmatprep.subr.mxu0 0.0
    %1544 = vmatpush1.msra.mxu0 0.0
    %1545 = vmatprep.subr.mxu0 0.0
    %1546 = vmatpush1.msra.mxu0 0.0
    %1547 = vmatprep.subr.mxu0 0.0
    %1548 = vmatpush1.msra.mxu0 0.0
    %1549 = vmatprep.subr.mxu0 0.0
    %1550 = vmatpush1.msra.mxu0 0.0
    %1551 = vmatprep.subr.mxu0 0.0
    %1552 = vmatpush1.msra.mxu0 0.0
    %1553 = vmatprep.subr.mxu0 0.0
    %1554 = vmatpush1.msra.mxu0 0.0
    %1555 = vmatprep.subr.mxu0 0.0
    %1556 = vmatpush1.msra.mxu0 0.0
    %1557 = vmatprep.subr.mxu0 0.0
    %1558 = vmatpush1.msra.mxu0 0.0
    %1559 = vmatprep.subr.mxu0 0.0
    %1560 = vmatpush1.msra.mxu0 0.0
    %1561 = vmatprep.subr.mxu0 0.0
    %1562 = vmatpush1.msra.mxu0 0.0
    %1563 = vmatprep.subr.mxu0 0.0
    %1564 = vmatpush1.msra.mxu0 0.0
    %1565 = vmatprep.subr.mxu0 0.0
    %1566 = vmatpush1.msra.mxu0 0.0
    %1567 = vmatprep.subr.mxu0 0.0
    %1568 = vmatpush1.msra.mxu0 0.0
    %1569 = vmatprep.subr.mxu0 0.0
    %1570 = vmatpush1.msra.mxu0 0.0
    %1571 = vmatprep.subr.mxu0 0.0
    %1572 = vmatpush1.msra.mxu0 0.0
    %1573 = vmatprep.subr.mxu0 0.0
    %1574 = vmatpush1.msra.mxu0 0.0
    %1575 = vmatprep.subr.mxu0 0.0
    %1576 = vmatpush1.msra.mxu0 0.0
    %1577 = vmatprep.subr.mxu0 0.0
    %1578 = vmatpush1.msra.mxu0 0.0
    %1579 = vmatprep.subr.mxu0 0.0
    %1580 = vmatpush1.msra.mxu0 0.0
    %1581 = vmatprep.subr.mxu0 0.0
    %1582 = vmatpush1.msra.mxu0 0.0
    %1583 = vmatprep.subr.mxu0 0.0
    %1584 = vmatpush1.msra.mxu0 0.0
    %1585 = vmatprep.subr.mxu0 0.0
    %1586 = vmatpush1.msra.mxu0 0.0
    %1587 = vmatprep.subr.mxu0 0.0
    %1588 = vmatpush1.msra.mxu0 0.0
    %1589 = vmatprep.subr.mxu0 0.0
    %1590 = vmatpush1.msra.mxu0 0.0
    %1591 = vmatprep.subr.mxu0 0.0
    %1592 = vmatpush1.msra.mxu0 0.0
    %1593 = vmatprep.subr.mxu0 0.0
    %1594 = vmatpush1.msra.mxu0 0.0
    %1595 = vmatprep.subr.mxu0 0.0
    %1596 = vmatpush1.msra.mxu0 0.0
    %1597 = vmatprep.mubr.f32.mxu0 0.0
    %1598 = vmatmul.mubr.f32.gmra.mrb[0].mxu0 %v1531
    %v1599 = vpop.f32.mrb[0].mxu0
    %v1600 = vadd.f32 %v1527, %v1599
    %v1601 = vpop.f32.mrb[0].mxu0
    %1602 = vdwg.mxu0
    %v1603 = vxor.u32 %v1600, 2147483648
    %v1604 = vmul.f32 %v1603, 1.442695
    %v1605 = vpow.pop %v1604
    %v1606 = vadd.f32 %v1605, 1.0
    %v1607 = vrcp.pop %v1606
    %v1608 = vmul.f32 1.0, %v1607
    %v1609 = vtanh.pop %v1600
    %v1610 = vmul.f32 %v1608, %v1448
    %1612 = vrot.lane.b32.xlu0 %v1609, 64
    %v1613 = vpop.permute.xlu0 %1612
    %v1615 = vmul.f32 %v1608, %v1613
    %1617 = vrot.lane.b32.xlu0 %v1615, 32
    %v1618 = vpop.permute.xlu0 %1617
    %v1620 = vadd.f32 %v1610, %v1618
    %v1621 = vtanh.pop %v1620
    %1623 = vrot.lane.b32.xlu0 %v1621, 64
    %v1624 = vpop.permute.xlu0 %1623
    %v1626 = vmul.f32 %v1608, %v1624
    %v1627 = vld [vmem:[%s8] sm:$0xff]
    %v1628 = vld [vmem:[%s8 + $0x8] sm:$0xff]
    %v1629 = vld [vmem:[%s8 + $0x10] sm:$0xff]
    %v1630 = vld [vmem:[%s8 + $0x18] sm:$0xff]
    %v1631 = vld [vmem:[%s7] sm:$0xff]
    %v1632 = vld [vmem:[%s7 + $0x8] sm:$0xff]
    %v1633 = vld [vmem:[%s7 + $0x10] sm:$0xff]
    %v1634 = vld [vmem:[%s7 + $0x18] sm:$0xff]
    %v1635 = vld [vmem:[%s9] sm:$0x1]
    %v1637 = vlaneseq
    %v1638 = vshrl.u32 %v1637, 7
    %v1639 = vsub.s32 0, %v1638
    %v1640 = vrot.slane %v1635, %v1639
    %1642 = vmatprep.subr.mxu0 0.0
    %1643 = vmatpush1.msra.mxu0 %v1631
    %1644 = vmatprep.subr.mxu0 0.0
    %1645 = vmatpush1.msra.mxu0 %v1632
    %1646 = vmatprep.subr.mxu0 0.0
    %1647 = vmatpush1.msra.mxu0 %v1633
    %1648 = vmatprep.subr.mxu0 0.0
    %1649 = vmatpush1.msra.mxu0 %v1634
    %1650 = vmatprep.subr.mxu0 0.0
    %1651 = vmatpush1.msra.mxu0 0.0
    %1652 = vmatprep.subr.mxu0 0.0
    %1653 = vmatpush1.msra.mxu0 0.0
    %1654 = vmatprep.subr.mxu0 0.0
    %1655 = vmatpush1.msra.mxu0 0.0
    %1656 = vmatprep.subr.mxu0 0.0
    %1657 = vmatpush1.msra.mxu0 0.0
    %1658 = vmatprep.subr.mxu0 0.0
    %1659 = vmatpush1.msra.mxu0 0.0
    %1660 = vmatprep.subr.mxu0 0.0
    %1661 = vmatpush1.msra.mxu0 0.0
    %1662 = vmatprep.subr.mxu0 0.0
    %1663 = vmatpush1.msra.mxu0 0.0
    %1664 = vmatprep.subr.mxu0 0.0
    %1665 = vmatpush1.msra.mxu0 0.0
    %1666 = vmatprep.subr.mxu0 0.0
    %1667 = vmatpush1.msra.mxu0 0.0
    %1668 = vmatprep.subr.mxu0 0.0
    %1669 = vmatpush1.msra.mxu0 0.0
    %1670 = vmatprep.subr.mxu0 0.0
    %1671 = vmatpush1.msra.mxu0 0.0
    %1672 = vmatprep.subr.mxu0 0.0
    %1673 = vmatpush1.msra.mxu0 0.0
    %1674 = vmatprep.subr.mxu0 0.0
    %1675 = vmatpush1.msra.mxu0 0.0
    %1676 = vmatprep.subr.mxu0 0.0
    %1677 = vmatpush1.msra.mxu0 0.0
    %1678 = vmatprep.subr.mxu0 0.0
    %1679 = vmatpush1.msra.mxu0 0.0
    %1680 = vmatprep.subr.mxu0 0.0
    %1681 = vmatpush1.msra.mxu0 0.0
    %1682 = vmatprep.subr.mxu0 0.0
    %1683 = vmatpush1.msra.mxu0 0.0
    %1684 = vmatprep.subr.mxu0 0.0
    %1685 = vmatpush1.msra.mxu0 0.0
    %1686 = vmatprep.subr.mxu0 0.0
    %1687 = vmatpush1.msra.mxu0 0.0
    %1688 = vmatprep.subr.mxu0 0.0
    %1689 = vmatpush1.msra.mxu0 0.0
    %1690 = vmatprep.subr.mxu0 0.0
    %1691 = vmatpush1.msra.mxu0 0.0
    %1692 = vmatprep.subr.mxu0 0.0
    %1693 = vmatpush1.msra.mxu0 0.0
    %1694 = vmatprep.subr.mxu0 0.0
    %1695 = vmatpush1.msra.mxu0 0.0
    %1696 = vmatprep.subr.mxu0 0.0
    %1697 = vmatpush1.msra.mxu0 0.0
    %1698 = vmatprep.subr.mxu0 0.0
    %1699 = vmatpush1.msra.mxu0 0.0
    %1700 = vmatprep.subr.mxu0 0.0
    %1701 = vmatpush1.msra.mxu0 0.0
    %1702 = vmatprep.subr.mxu0 0.0
    %1703 = vmatpush1.msra.mxu0 0.0
    %1704 = vmatprep.subr.mxu0 0.0
    %1705 = vmatpush1.msra.mxu0 0.0
    %1706 = vmatprep.mubr.f32.mxu0 0.0
    %1707 = vmatmul.mubr.f32.gmra.mrb[0].mxu0 %v426
    %v1708 = vpop.f32.mrb[0].mxu0
    %v1709 = vadd.f32 %v1640, %v1708
    %v1710 = vpop.f32.mrb[0].mxu0
    %1711 = vdwg.mxu0
    %1712 = vmatprep.subr.mxu0 0.0
    %1713 = vmatpush1.msra.mxu0 %v1627
    %1714 = vmatprep.subr.mxu0 0.0
    %1715 = vmatpush1.msra.mxu0 %v1628
    %1716 = vmatprep.subr.mxu0 0.0
    %1717 = vmatpush1.msra.mxu0 %v1629
    %1718 = vmatprep.subr.mxu0 0.0
    %1719 = vmatpush1.msra.mxu0 %v1630
    %1720 = vmatprep.subr.mxu0 0.0
    %1721 = vmatpush1.msra.mxu0 0.0
    %1722 = vmatprep.subr.mxu0 0.0
    %1723 = vmatpush1.msra.mxu0 0.0
    %1724 = vmatprep.subr.mxu0 0.0
    %1725 = vmatpush1.msra.mxu0 0.0
    %1726 = vmatprep.subr.mxu0 0.0
    %1727 = vmatpush1.msra.mxu0 0.0
    %1728 = vmatprep.subr.mxu0 0.0
    %1729 = vmatpush1.msra.mxu0 0.0
    %1730 = vmatprep.subr.mxu0 0.0
    %1731 = vmatpush1.msra.mxu0 0.0
    %1732 = vmatprep.subr.mxu0 0.0
    %1733 = vmatpush1.msra.mxu0 0.0
    %1734 = vmatprep.subr.mxu0 0.0
    %1735 = vmatpush1.msra.mxu0 0.0
    %1736 = vmatprep.subr.mxu0 0.0
    %1737 = vmatpush1.msra.mxu0 0.0
    %1738 = vmatprep.subr.mxu0 0.0
    %1739 = vmatpush1.msra.mxu0 0.0
    %1740 = vmatprep.subr.mxu0 0.0
    %1741 = vmatpush1.msra.mxu0 0.0
    %1742 = vmatprep.subr.mxu0 0.0
    %1743 = vmatpush1.msra.mxu0 0.0
    %1744 = vmatprep.subr.mxu0 0.0
    %1745 = vmatpush1.msra.mxu0 0.0
    %1746 = vmatprep.subr.mxu0 0.0
    %1747 = vmatpush1.msra.mxu0 0.0
    %1748 = vmatprep.subr.mxu0 0.0
    %1749 = vmatpush1.msra.mxu0 0.0
    %1750 = vmatprep.subr.mxu0 0.0
    %1751 = vmatpush1.msra.mxu0 0.0
    %1752 = vmatprep.subr.mxu0 0.0
    %1753 = vmatpush1.msra.mxu0 0.0
    %1754 = vmatprep.subr.mxu0 0.0
    %1755 = vmatpush1.msra.mxu0 0.0
    %1756 = vmatprep.subr.mxu0 0.0
    %1757 = vmatpush1.msra.mxu0 0.0
    %1758 = vmatprep.subr.mxu0 0.0
    %1759 = vmatpush1.msra.mxu0 0.0
    %1760 = vmatprep.subr.mxu0 0.0
    %1761 = vmatpush1.msra.mxu0 0.0
    %1762 = vmatprep.subr.mxu0 0.0
    %1763 = vmatpush1.msra.mxu0 0.0
    %1764 = vmatprep.subr.mxu0 0.0
    %1765 = vmatpush1.msra.mxu0 0.0
    %1766 = vmatprep.subr.mxu0 0.0
    %1767 = vmatpush1.msra.mxu0 0.0
    %1768 = vmatprep.subr.mxu0 0.0
    %1769 = vmatpush1.msra.mxu0 0.0
    %1770 = vmatprep.subr.mxu0 0.0
    %1771 = vmatpush1.msra.mxu0 0.0
    %1772 = vmatprep.subr.mxu0 0.0
    %1773 = vmatpush1.msra.mxu0 0.0
    %1774 = vmatprep.subr.mxu0 0.0
    %1775 = vmatpush1.msra.mxu0 0.0
    %1776 = vmatprep.mubr.f32.mxu0 0.0
    %1777 = vmatmul.mubr.f32.gmra.mrb[0].mxu0 %v249
    %v1778 = vpop.f32.mrb[0].mxu0
    %v1779 = vadd.f32 0.0, %v1778
    %v1780 = vpop.f32.mrb[0].mxu0
    %1781 = vdwg.mxu0
    %v1782 = vadd.f32 %v1709, %v1779
    %v1783 = vxor.u32 %v1782, 2147483648
    %v1784 = vmul.f32 %v1783, 1.442695
    %v1785 = vpow.pop %v1784
    %v1786 = vadd.f32 %v1785, 1.0
    %v1787 = vrcp.pop %v1786
    %v1788 = vmul.f32 1.0, %v1787
    %v1789 = vtanh.pop %v1782
    %v1790 = vmul.f32 %v1788, 0.0
    %1792 = vrot.lane.b32.xlu0 %v1789, 64
    %v1793 = vpop.permute.xlu0 %1792
    %v1795 = vmul.f32 %v1788, %v1793
    %1797 = vrot.lane.b32.xlu0 %v1795, 32
    %v1798 = vpop.permute.xlu0 %1797
    %v1800 = vadd.f32 %v1790, %v1798
    %v1801 = vtanh.pop %v1800
    %1803 = vrot.lane.b32.xlu0 %v1801, 64
    %v1804 = vpop.permute.xlu0 %1803
    %v1806 = vmul.f32 %v1788, %v1804
    %1807 = vmatprep.subr.mxu0 0.0
    %1808 = vmatpush1.msra.mxu0 %v1631
    %1809 = vmatprep.subr.mxu0 0.0
    %1810 = vmatpush1.msra.mxu0 %v1632
    %1811 = vmatprep.subr.mxu0 0.0
    %1812 = vmatpush1.msra.mxu0 %v1633
    %1813 = vmatprep.subr.mxu0 0.0
    %1814 = vmatpush1.msra.mxu0 %v1634
    %1815 = vmatprep.subr.mxu0 0.0
    %1816 = vmatpush1.msra.mxu0 0.0
    %1817 = vmatprep.subr.mxu0 0.0
    %1818 = vmatpush1.msra.mxu0 0.0
    %1819 = vmatprep.subr.mxu0 0.0
    %1820 = vmatpush1.msra.mxu0 0.0
    %1821 = vmatprep.subr.mxu0 0.0
    %1822 = vmatpush1.msra.mxu0 0.0
    %1823 = vmatprep.subr.mxu0 0.0
    %1824 = vmatpush1.msra.mxu0 0.0
    %1825 = vmatprep.subr.mxu0 0.0
    %1826 = vmatpush1.msra.mxu0 0.0
    %1827 = vmatprep.subr.mxu0 0.0
    %1828 = vmatpush1.msra.mxu0 0.0
    %1829 = vmatprep.subr.mxu0 0.0
    %1830 = vmatpush1.msra.mxu0 0.0
    %1831 = vmatprep.subr.mxu0 0.0
    %1832 = vmatpush1.msra.mxu0 0.0
    %1833 = vmatprep.subr.mxu0 0.0
    %1834 = vmatpush1.msra.mxu0 0.0
    %1835 = vmatprep.subr.mxu0 0.0
    %1836 = vmatpush1.msra.mxu0 0.0
    %1837 = vmatprep.subr.mxu0 0.0
    %1838 = vmatpush1.msra.mxu0 0.0
    %1839 = vmatprep.subr.mxu0 0.0
    %1840 = vmatpush1.msra.mxu0 0.0
    %1841 = vmatprep.subr.mxu0 0.0
    %1842 = vmatpush1.msra.mxu0 0.0
    %1843 = vmatprep.subr.mxu0 0.0
    %1844 = vmatpush1.msra.mxu0 0.0
    %1845 = vmatprep.subr.mxu0 0.0
    %1846 = vmatpush1.msra.mxu0 0.0
    %1847 = vmatprep.subr.mxu0 0.0
    %1848 = vmatpush1.msra.mxu0 0.0
    %1849 = vmatprep.subr.mxu0 0.0
    %1850 = vmatpush1.msra.mxu0 0.0
    %1851 = vmatprep.subr.mxu0 0.0
    %1852 = vmatpush1.msra.mxu0 0.0
    %1853 = vmatprep.subr.mxu0 0.0
    %1854 = vmatpush1.msra.mxu0 0.0
    %1855 = vmatprep.subr.mxu0 0.0
    %1856 = vmatpush1.msra.mxu0 0.0
    %1857 = vmatprep.subr.mxu0 0.0
    %1858 = vmatpush1.msra.mxu0 0.0
    %1859 = vmatprep.subr.mxu0 0.0
    %1860 = vmatpush1.msra.mxu0 0.0
    %1861 = vmatprep.subr.mxu0 0.0
    %1862 = vmatpush1.msra.mxu0 0.0
    %1863 = vmatprep.subr.mxu0 0.0
    %1864 = vmatpush1.msra.mxu0 0.0
    %1865 = vmatprep.subr.mxu0 0.0
    %1866 = vmatpush1.msra.mxu0 0.0
    %1867 = vmatprep.subr.mxu0 0.0
    %1868 = vmatpush1.msra.mxu0 0.0
    %1869 = vmatprep.subr.mxu0 0.0
    %1870 = vmatpush1.msra.mxu0 0.0
    %1871 = vmatprep.mubr.f32.mxu0 0.0
    %1872 = vmatmul.mubr.f32.gmra.mrb[0].mxu0 %v598
    %v1873 = vpop.f32.mrb[0].mxu0
    %v1874 = vadd.f32 %v1640, %v1873
    %v1875 = vpop.f32.mrb[0].mxu0
    %1876 = vdwg.mxu0
    %1878 = vrot.lane.b32.xlu0 %v1806, 32
    %v1879 = vpop.permute.xlu0 %1878
    %v1880 = vsel %vm247, %v1879, 0
    %1882 = vmatprep.subr.mxu0 0.0
    %1883 = vmatpush1.msra.mxu0 %v1627
    %1884 = vmatprep.subr.mxu0 0.0
    %1885 = vmatpush1.msra.mxu0 %v1628
    %1886 = vmatprep.subr.mxu0 0.0
    %1887 = vmatpush1.msra.mxu0 %v1629
    %1888 = vmatprep.subr.mxu0 0.0
    %1889 = vmatpush1.msra.mxu0 %v1630
    %1890 = vmatprep.subr.mxu0 0.0
    %1891 = vmatpush1.msra.mxu0 0.0
    %1892 = vmatprep.subr.mxu0 0.0
    %1893 = vmatpush1.msra.mxu0 0.0
    %1894 = vmatprep.subr.mxu0 0.0
    %1895 = vmatpush1.msra.mxu0 0.0
    %1896 = vmatprep.subr.mxu0 0.0
    %1897 = vmatpush1.msra.mxu0 0.0
    %1898 = vmatprep.subr.mxu0 0.0
    %1899 = vmatpush1.msra.mxu0 0.0
    %1900 = vmatprep.subr.mxu0 0.0
    %1901 = vmatpush1.msra.mxu0 0.0
    %1902 = vmatprep.subr.mxu0 0.0
    %1903 = vmatpush1.msra.mxu0 0.0
    %1904 = vmatprep.subr.mxu0 0.0
    %1905 = vmatpush1.msra.mxu0 0.0
    %1906 = vmatprep.subr.mxu0 0.0
    %1907 = vmatpush1.msra.mxu0 0.0
    %1908 = vmatprep.subr.mxu0 0.0
    %1909 = vmatpush1.msra.mxu0 0.0
    %1910 = vmatprep.subr.mxu0 0.0
    %1911 = vmatpush1.msra.mxu0 0.0
    %1912 = vmatprep.subr.mxu0 0.0
    %1913 = vmatpush1.msra.mxu0 0.0
    %1914 = vmatprep.subr.mxu0 0.0
    %1915 = vmatpush1.msra.mxu0 0.0
    %1916 = vmatprep.subr.mxu0 0.0
    %1917 = vmatpush1.msra.mxu0 0.0
    %1918 = vmatprep.subr.mxu0 0.0
    %1919 = vmatpush1.msra.mxu0 0.0
    %1920 = vmatprep.subr.mxu0 0.0
    %1921 = vmatpush1.msra.mxu0 0.0
    %1922 = vmatprep.subr.mxu0 0.0
    %1923 = vmatpush1.msra.mxu0 0.0
    %1924 = vmatprep.subr.mxu0 0.0
    %1925 = vmatpush1.msra.mxu0 0.0
    %1926 = vmatprep.subr.mxu0 0.0
    %1927 = vmatpush1.msra.mxu0 0.0
    %1928 = vmatprep.subr.mxu0 0.0
    %1929 = vmatpush1.msra.mxu0 0.0
    %1930 = vmatprep.subr.mxu0 0.0
    %1931 = vmatpush1.msra.mxu0 0.0
    %1932 = vmatprep.subr.mxu0 0.0
    %1933 = vmatpush1.msra.mxu0 0.0
    %1934 = vmatprep.subr.mxu0 0.0
    %1935 = vmatpush1.msra.mxu0 0.0
    %1936 = vmatprep.subr.mxu0 0.0
    %1937 = vmatpush1.msra.mxu0 0.0
    %1938 = vmatprep.subr.mxu0 0.0
    %1939 = vmatpush1.msra.mxu0 0.0
    %1940 = vmatprep.subr.mxu0 0.0
    %1941 = vmatpush1.msra.mxu0 0.0
    %1942 = vmatprep.subr.mxu0 0.0
    %1943 = vmatpush1.msra.mxu0 0.0
    %1944 = vmatprep.subr.mxu0 0.0
    %1945 = vmatpush1.msra.mxu0 0.0
    %1946 = vmatprep.mubr.f32.mxu0 0.0
    %1947 = vmatmul.mubr.f32.gmra.mrb[0].mxu0 %v1880
    %v1948 = vpop.f32.mrb[0].mxu0
    %v1949 = vadd.f32 0.0, %v1948
    %v1950 = vpop.f32.mrb[0].mxu0
    %1951 = vdwg.mxu0
    %v1952 = vadd.f32 %v1874, %v1949
    %v1953 = vxor.u32 %v1952, 2147483648
    %v1954 = vmul.f32 %v1953, 1.442695
    %v1955 = vpow.pop %v1954
    %v1956 = vadd.f32 %v1955, 1.0
    %v1957 = vrcp.pop %v1956
    %v1958 = vmul.f32 1.0, %v1957
    %v1959 = vtanh.pop %v1952
    %v1960 = vmul.f32 %v1958, %v1800
    %1962 = vrot.lane.b32.xlu0 %v1959, 64
    %v1963 = vpop.permute.xlu0 %1962
    %v1965 = vmul.f32 %v1958, %v1963
    %1967 = vrot.lane.b32.xlu0 %v1965, 32
    %v1968 = vpop.permute.xlu0 %1967
    %v1970 = vadd.f32 %v1960, %v1968
    %v1971 = vtanh.pop %v1970
    %1973 = vrot.lane.b32.xlu0 %v1971, 64
    %v1974 = vpop.permute.xlu0 %1973
    %v1976 = vmul.f32 %v1958, %v1974
    %1977 = vmatprep.subr.mxu0 0.0
    %1978 = vmatpush1.msra.mxu0 %v1631
    %1979 = vmatprep.subr.mxu0 0.0
    %1980 = vmatpush1.msra.mxu0 %v1632
    %1981 = vmatprep.subr.mxu0 0.0
    %1982 = vmatpush1.msra.mxu0 %v1633
    %1983 = vmatprep.subr.mxu0 0.0
    %1984 = vmatpush1.msra.mxu0 %v1634
    %1985 = vmatprep.subr.mxu0 0.0
    %1986 = vmatpush1.msra.mxu0 0.0
    %1987 = vmatprep.subr.mxu0 0.0
    %1988 = vmatpush1.msra.mxu0 0.0
    %1989 = vmatprep.subr.mxu0 0.0
    %1990 = vmatpush1.msra.mxu0 0.0
    %1991 = vmatprep.subr.mxu0 0.0
    %1992 = vmatpush1.msra.mxu0 0.0
    %1993 = vmatprep.subr.mxu0 0.0
    %1994 = vmatpush1.msra.mxu0 0.0
    %1995 = vmatprep.subr.mxu0 0.0
    %1996 = vmatpush1.msra.mxu0 0.0
    %1997 = vmatprep.subr.mxu0 0.0
    %1998 = vmatpush1.msra.mxu0 0.0
    %1999 = vmatprep.subr.mxu0 0.0
    %2000 = vmatpush1.msra.mxu0 0.0
    %2001 = vmatprep.subr.mxu0 0.0
    %2002 = vmatpush1.msra.mxu0 0.0
    %2003 = vmatprep.subr.mxu0 0.0
    %2004 = vmatpush1.msra.mxu0 0.0
    %2005 = vmatprep.subr.mxu0 0.0
    %2006 = vmatpush1.msra.mxu0 0.0
    %2007 = vmatprep.subr.mxu0 0.0
    %2008 = vmatpush1.msra.mxu0 0.0
    %2009 = vmatprep.subr.mxu0 0.0
    %2010 = vmatpush1.msra.mxu0 0.0
    %2011 = vmatprep.subr.mxu0 0.0
    %2012 = vmatpush1.msra.mxu0 0.0
    %2013 = vmatprep.subr.mxu0 0.0
    %2014 = vmatpush1.msra.mxu0 0.0
    %2015 = vmatprep.subr.mxu0 0.0
    %2016 = vmatpush1.msra.mxu0 0.0
    %2017 = vmatprep.subr.mxu0 0.0
    %2018 = vmatpush1.msra.mxu0 0.0
    %2019 = vmatprep.subr.mxu0 0.0
    %2020 = vmatpush1.msra.mxu0 0.0
    %2021 = vmatprep.subr.mxu0 0.0
    %2022 = vmatpush1.msra.mxu0 0.0
    %2023 = vmatprep.subr.mxu0 0.0
    %2024 = vmatpush1.msra.mxu0 0.0
    %2025 = vmatprep.subr.mxu0 0.0
    %2026 = vmatpush1.msra.mxu0 0.0
    %2027 = vmatprep.subr.mxu0 0.0
    %2028 = vmatpush1.msra.mxu0 0.0
    %2029 = vmatprep.subr.mxu0 0.0
    %2030 = vmatpush1.msra.mxu0 0.0
    %2031 = vmatprep.subr.mxu0 0.0
    %2032 = vmatpush1.msra.mxu0 0.0
    %2033 = vmatprep.subr.mxu0 0.0
    %2034 = vmatpush1.msra.mxu0 0.0
    %2035 = vmatprep.subr.mxu0 0.0
    %2036 = vmatpush1.msra.mxu0 0.0
    %2037 = vmatprep.subr.mxu0 0.0
    %2038 = vmatpush1.msra.mxu0 0.0
    %2039 = vmatprep.subr.mxu0 0.0
    %2040 = vmatpush1.msra.mxu0 0.0
    %2041 = vmatprep.mubr.f32.mxu0 0.0
    %2042 = vmatmul.mubr.f32.gmra.mrb[0].mxu0 %v770
    %v2043 = vpop.f32.mrb[0].mxu0
    %v2044 = vadd.f32 %v1640, %v2043
    %v2045 = vpop.f32.mrb[0].mxu0
    %2046 = vdwg.mxu0
    %2048 = vrot.lane.b32.xlu0 %v1976, 32
    %v2049 = vpop.permute.xlu0 %2048
    %v2050 = vsel %vm247, %v2049, 0
    %2052 = vmatprep.subr.mxu0 0.0
    %2053 = vmatpush1.msra.mxu0 %v1627
    %2054 = vmatprep.subr.mxu0 0.0
    %2055 = vmatpush1.msra.mxu0 %v1628
    %2056 = vmatprep.subr.mxu0 0.0
    %2057 = vmatpush1.msra.mxu0 %v1629
    %2058 = vmatprep.subr.mxu0 0.0
    %2059 = vmatpush1.msra.mxu0 %v1630
    %2060 = vmatprep.subr.mxu0 0.0
    %2061 = vmatpush1.msra.mxu0 0.0
    %2062 = vmatprep.subr.mxu0 0.0
    %2063 = vmatpush1.msra.mxu0 0.0
    %2064 = vmatprep.subr.mxu0 0.0
    %2065 = vmatpush1.msra.mxu0 0.0
    %2066 = vmatprep.subr.mxu0 0.0
    %2067 = vmatpush1.msra.mxu0 0.0
    %2068 = vmatprep.subr.mxu0 0.0
    %2069 = vmatpush1.msra.mxu0 0.0
    %2070 = vmatprep.subr.mxu0 0.0
    %2071 = vmatpush1.msra.mxu0 0.0
    %2072 = vmatprep.subr.mxu0 0.0
    %2073 = vmatpush1.msra.mxu0 0.0
    %2074 = vmatprep.subr.mxu0 0.0
    %2075 = vmatpush1.msra.mxu0 0.0
    %2076 = vmatprep.subr.mxu0 0.0
    %2077 = vmatpush1.msra.mxu0 0.0
    %2078 = vmatprep.subr.mxu0 0.0
    %2079 = vmatpush1.msra.mxu0 0.0
    %2080 = vmatprep.subr.mxu0 0.0
    %2081 = vmatpush1.msra.mxu0 0.0
    %2082 = vmatprep.subr.mxu0 0.0
    %2083 = vmatpush1.msra.mxu0 0.0
    %2084 = vmatprep.subr.mxu0 0.0
    %2085 = vmatpush1.msra.mxu0 0.0
    %2086 = vmatprep.subr.mxu0 0.0
    %2087 = vmatpush1.msra.mxu0 0.0
    %2088 = vmatprep.subr.mxu0 0.0
    %2089 = vmatpush1.msra.mxu0 0.0
    %2090 = vmatprep.subr.mxu0 0.0
    %2091 = vmatpush1.msra.mxu0 0.0
    %2092 = vmatprep.subr.mxu0 0.0
    %2093 = vmatpush1.msra.mxu0 0.0
    %2094 = vmatprep.subr.mxu0 0.0
    %2095 = vmatpush1.msra.mxu0 0.0
    %2096 = vmatprep.subr.mxu0 0.0
    %2097 = vmatpush1.msra.mxu0 0.0
    %2098 = vmatprep.subr.mxu0 0.0
    %2099 = vmatpush1.msra.mxu0 0.0
    %2100 = vmatprep.subr.mxu0 0.0
    %2101 = vmatpush1.msra.mxu0 0.0
    %2102 = vmatprep.subr.mxu0 0.0
    %2103 = vmatpush1.msra.mxu0 0.0
    %2104 = vmatprep.subr.mxu0 0.0
    %2105 = vmatpush1.msra.mxu0 0.0
    %2106 = vmatprep.subr.mxu0 0.0
    %2107 = vmatpush1.msra.mxu0 0.0
    %2108 = vmatprep.subr.mxu0 0.0
    %2109 = vmatpush1.msra.mxu0 0.0
    %2110 = vmatprep.subr.mxu0 0.0
    %2111 = vmatpush1.msra.mxu0 0.0
    %2112 = vmatprep.subr.mxu0 0.0
    %2113 = vmatpush1.msra.mxu0 0.0
    %2114 = vmatprep.subr.mxu0 0.0
    %2115 = vmatpush1.msra.mxu0 0.0
    %2116 = vmatprep.mubr.f32.mxu0 0.0
    %2117 = vmatmul.mubr.f32.gmra.mrb[0].mxu0 %v2050
    %v2118 = vpop.f32.mrb[0].mxu0
    %v2119 = vadd.f32 0.0, %v2118
    %v2120 = vpop.f32.mrb[0].mxu0
    %2121 = vdwg.mxu0
    %v2122 = vadd.f32 %v2044, %v2119
    %v2123 = vxor.u32 %v2122, 2147483648
    %v2124 = vmul.f32 %v2123, 1.442695
    %v2125 = vpow.pop %v2124
    %v2126 = vadd.f32 %v2125, 1.0
    %v2127 = vrcp.pop %v2126
    %v2128 = vmul.f32 1.0, %v2127
    %v2129 = vtanh.pop %v2122
    %v2130 = vmul.f32 %v2128, %v1970
    %2132 = vrot.lane.b32.xlu0 %v2129, 64
    %v2133 = vpop.permute.xlu0 %2132
    %v2135 = vmul.f32 %v2128, %v2133
    %2137 = vrot.lane.b32.xlu0 %v2135, 32
    %v2138 = vpop.permute.xlu0 %2137
    %v2140 = vadd.f32 %v2130, %v2138
    %v2141 = vtanh.pop %v2140
    %2143 = vrot.lane.b32.xlu0 %v2141, 64
    %v2144 = vpop.permute.xlu0 %2143
    %v2146 = vmul.f32 %v2128, %v2144
    %2147 = vmatprep.subr.mxu0 0.0
    %2148 = vmatpush1.msra.mxu0 %v1631
    %2149 = vmatprep.subr.mxu0 0.0
    %2150 = vmatpush1.msra.mxu0 %v1632
    %2151 = vmatprep.subr.mxu0 0.0
    %2152 = vmatpush1.msra.mxu0 %v1633
    %2153 = vmatprep.subr.mxu0 0.0
    %2154 = vmatpush1.msra.mxu0 %v1634
    %2155 = vmatprep.subr.mxu0 0.0
    %2156 = vmatpush1.msra.mxu0 0.0
    %2157 = vmatprep.subr.mxu0 0.0
    %2158 = vmatpush1.msra.mxu0 0.0
    %2159 = vmatprep.subr.mxu0 0.0
    %2160 = vmatpush1.msra.mxu0 0.0
    %2161 = vmatprep.subr.mxu0 0.0
    %2162 = vmatpush1.msra.mxu0 0.0
    %2163 = vmatprep.subr.mxu0 0.0
    %2164 = vmatpush1.msra.mxu0 0.0
    %2165 = vmatprep.subr.mxu0 0.0
    %2166 = vmatpush1.msra.mxu0 0.0
    %2167 = vmatprep.subr.mxu0 0.0
    %2168 = vmatpush1.msra.mxu0 0.0
    %2169 = vmatprep.subr.mxu0 0.0
    %2170 = vmatpush1.msra.mxu0 0.0
    %2171 = vmatprep.subr.mxu0 0.0
    %2172 = vmatpush1.msra.mxu0 0.0
    %2173 = vmatprep.subr.mxu0 0.0
    %2174 = vmatpush1.msra.mxu0 0.0
    %2175 = vmatprep.subr.mxu0 0.0
    %2176 = vmatpush1.msra.mxu0 0.0
    %2177 = vmatprep.subr.mxu0 0.0
    %2178 = vmatpush1.msra.mxu0 0.0
    %2179 = vmatprep.subr.mxu0 0.0
    %2180 = vmatpush1.msra.mxu0 0.0
    %2181 = vmatprep.subr.mxu0 0.0
    %2182 = vmatpush1.msra.mxu0 0.0
    %2183 = vmatprep.subr.mxu0 0.0
    %2184 = vmatpush1.msra.mxu0 0.0
    %2185 = vmatprep.subr.mxu0 0.0
    %2186 = vmatpush1.msra.mxu0 0.0
    %2187 = vmatprep.subr.mxu0 0.0
    %2188 = vmatpush1.msra.mxu0 0.0
    %2189 = vmatprep.subr.mxu0 0.0
    %2190 = vmatpush1.msra.mxu0 0.0
    %2191 = vmatprep.subr.mxu0 0.0
    %2192 = vmatpush1.msra.mxu0 0.0
    %2193 = vmatprep.subr.mxu0 0.0
    %2194 = vmatpush1.msra.mxu0 0.0
    %2195 = vmatprep.subr.mxu0 0.0
    %2196 = vmatpush1.msra.mxu0 0.0
    %2197 = vmatprep.subr.mxu0 0.0
    %2198 = vmatpush1.msra.mxu0 0.0
    %2199 = vmatprep.subr.mxu0 0.0
    %2200 = vmatpush1.msra.mxu0 0.0
    %2201 = vmatprep.subr.mxu0 0.0
    %2202 = vmatpush1.msra.mxu0 0.0
    %2203 = vmatprep.subr.mxu0 0.0
    %2204 = vmatpush1.msra.mxu0 0.0
    %2205 = vmatprep.subr.mxu0 0.0
    %2206 = vmatpush1.msra.mxu0 0.0
    %2207 = vmatprep.subr.mxu0 0.0
    %2208 = vmatpush1.msra.mxu0 0.0
    %2209 = vmatprep.subr.mxu0 0.0
    %2210 = vmatpush1.msra.mxu0 0.0
    %2211 = vmatprep.mubr.f32.mxu0 0.0
    %2212 = vmatmul.mubr.f32.gmra.mrb[0].mxu0 %v942
    %v2213 = vpop.f32.mrb[0].mxu0
    %v2214 = vadd.f32 %v1640, %v2213
    %v2215 = vpop.f32.mrb[0].mxu0
    %2216 = vdwg.mxu0
    %2218 = vrot.lane.b32.xlu0 %v2146, 32
    %v2219 = vpop.permute.xlu0 %2218
    %v2220 = vsel %vm247, %v2219, 0
    %2222 = vmatprep.subr.mxu0 0.0
    %2223 = vmatpush1.msra.mxu0 %v1627
    %2224 = vmatprep.subr.mxu0 0.0
    %2225 = vmatpush1.msra.mxu0 %v1628
    %2226 = vmatprep.subr.mxu0 0.0
    %2227 = vmatpush1.msra.mxu0 %v1629
    %2228 = vmatprep.subr.mxu0 0.0
    %2229 = vmatpush1.msra.mxu0 %v1630
    %2230 = vmatprep.subr.mxu0 0.0
    %2231 = vmatpush1.msra.mxu0 0.0
    %2232 = vmatprep.subr.mxu0 0.0
    %2233 = vmatpush1.msra.mxu0 0.0
    %2234 = vmatprep.subr.mxu0 0.0
    %2235 = vmatpush1.msra.mxu0 0.0
    %2236 = vmatprep.subr.mxu0 0.0
    %2237 = vmatpush1.msra.mxu0 0.0
    %2238 = vmatprep.subr.mxu0 0.0
    %2239 = vmatpush1.msra.mxu0 0.0
    %2240 = vmatprep.subr.mxu0 0.0
    %2241 = vmatpush1.msra.mxu0 0.0
    %2242 = vmatprep.subr.mxu0 0.0
    %2243 = vmatpush1.msra.mxu0 0.0
    %2244 = vmatprep.subr.mxu0 0.0
    %2245 = vmatpush1.msra.mxu0 0.0
    %2246 = vmatprep.subr.mxu0 0.0
    %2247 = vmatpush1.msra.mxu0 0.0
    %2248 = vmatprep.subr.mxu0 0.0
    %2249 = vmatpush1.msra.mxu0 0.0
    %2250 = vmatprep.subr.mxu0 0.0
    %2251 = vmatpush1.msra.mxu0 0.0
    %2252 = vmatprep.subr.mxu0 0.0
    %2253 = vmatpush1.msra.mxu0 0.0
    %2254 = vmatprep.subr.mxu0 0.0
    %2255 = vmatpush1.msra.mxu0 0.0
    %2256 = vmatprep.subr.mxu0 0.0
    %2257 = vmatpush1.msra.mxu0 0.0
    %2258 = vmatprep.subr.mxu0 0.0
    %2259 = vmatpush1.msra.mxu0 0.0
    %2260 = vmatprep.subr.mxu0 0.0
    %2261 = vmatpush1.msra.mxu0 0.0
    %2262 = vmatprep.subr.mxu0 0.0
    %2263 = vmatpush1.msra.mxu0 0.0
    %2264 = vmatprep.subr.mxu0 0.0
    %2265 = vmatpush1.msra.mxu0 0.0
    %2266 = vmatprep.subr.mxu0 0.0
    %2267 = vmatpush1.msra.mxu0 0.0
    %2268 = vmatprep.subr.mxu0 0.0
    %2269 = vmatpush1.msra.mxu0 0.0
    %2270 = vmatprep.subr.mxu0 0.0
    %2271 = vmatpush1.msra.mxu0 0.0
    %2272 = vmatprep.subr.mxu0 0.0
    %2273 = vmatpush1.msra.mxu0 0.0
    %2274 = vmatprep.subr.mxu0 0.0
    %2275 = vmatpush1.msra.mxu0 0.0
    %2276 = vmatprep.subr.mxu0 0.0
    %2277 = vmatpush1.msra.mxu0 0.0
    %2278 = vmatprep.subr.mxu0 0.0
    %2279 = vmatpush1.msra.mxu0 0.0
    %2280 = vmatprep.subr.mxu0 0.0
    %2281 = vmatpush1.msra.mxu0 0.0
    %2282 = vmatprep.subr.mxu0 0.0
    %2283 = vmatpush1.msra.mxu0 0.0
    %2284 = vmatprep.subr.mxu0 0.0
    %2285 = vmatpush1.msra.mxu0 0.0
    %2286 = vmatprep.mubr.f32.mxu0 0.0
    %2287 = vmatmul.mubr.f32.gmra.mrb[0].mxu0 %v2220
    %v2288 = vpop.f32.mrb[0].mxu0
    %v2289 = vadd.f32 0.0, %v2288
    %v2290 = vpop.f32.mrb[0].mxu0
    %2291 = vdwg.mxu0
    %v2292 = vadd.f32 %v2214, %v2289
    %v2293 = vxor.u32 %v2292, 2147483648
    %v2294 = vmul.f32 %v2293, 1.442695
    %v2295 = vpow.pop %v2294
    %v2296 = vadd.f32 %v2295, 1.0
    %v2297 = vrcp.pop %v2296
    %v2298 = vmul.f32 1.0, %v2297
    %v2299 = vtanh.pop %v2292
    %v2300 = vmul.f32 %v2298, %v2140
    %2302 = vrot.lane.b32.xlu0 %v2299, 64
    %v2303 = vpop.permute.xlu0 %2302
    %v2305 = vmul.f32 %v2298, %v2303
    %2307 = vrot.lane.b32.xlu0 %v2305, 32
    %v2308 = vpop.permute.xlu0 %2307
    %v2310 = vadd.f32 %v2300, %v2308
    %v2311 = vtanh.pop %v2310
    %2313 = vrot.lane.b32.xlu0 %v2311, 64
    %v2314 = vpop.permute.xlu0 %2313
    %v2316 = vmul.f32 %v2298, %v2314
    %2317 = vmatprep.subr.mxu0 0.0
    %2318 = vmatpush1.msra.mxu0 %v1631
    %2319 = vmatprep.subr.mxu0 0.0
    %2320 = vmatpush1.msra.mxu0 %v1632
    %2321 = vmatprep.subr.mxu0 0.0
    %2322 = vmatpush1.msra.mxu0 %v1633
    %2323 = vmatprep.subr.mxu0 0.0
    %2324 = vmatpush1.msra.mxu0 %v1634
    %2325 = vmatprep.subr.mxu0 0.0
    %2326 = vmatpush1.msra.mxu0 0.0
    %2327 = vmatprep.subr.mxu0 0.0
    %2328 = vmatpush1.msra.mxu0 0.0
    %2329 = vmatprep.subr.mxu0 0.0
    %2330 = vmatpush1.msra.mxu0 0.0
    %2331 = vmatprep.subr.mxu0 0.0
    %2332 = vmatpush1.msra.mxu0 0.0
    %2333 = vmatprep.subr.mxu0 0.0
    %2334 = vmatpush1.msra.mxu0 0.0
    %2335 = vmatprep.subr.mxu0 0.0
    %2336 = vmatpush1.msra.mxu0 0.0
    %2337 = vmatprep.subr.mxu0 0.0
    %2338 = vmatpush1.msra.mxu0 0.0
    %2339 = vmatprep.subr.mxu0 0.0
    %2340 = vmatpush1.msra.mxu0 0.0
    %2341 = vmatprep.subr.mxu0 0.0
    %2342 = vmatpush1.msra.mxu0 0.0
    %2343 = vmatprep.subr.mxu0 0.0
    %2344 = vmatpush1.msra.mxu0 0.0
    %2345 = vmatprep.subr.mxu0 0.0
    %2346 = vmatpush1.msra.mxu0 0.0
    %2347 = vmatprep.subr.mxu0 0.0
    %2348 = vmatpush1.msra.mxu0 0.0
    %2349 = vmatprep.subr.mxu0 0.0
    %2350 = vmatpush1.msra.mxu0 0.0
    %2351 = vmatprep.subr.mxu0 0.0
    %2352 = vmatpush1.msra.mxu0 0.0
    %2353 = vmatprep.subr.mxu0 0.0
    %2354 = vmatpush1.msra.mxu0 0.0
    %2355 = vmatprep.subr.mxu0 0.0
    %2356 = vmatpush1.msra.mxu0 0.0
    %2357 = vmatprep.subr.mxu0 0.0
    %2358 = vmatpush1.msra.mxu0 0.0
    %2359 = vmatprep.subr.mxu0 0.0
    %2360 = vmatpush1.msra.mxu0 0.0
    %2361 = vmatprep.subr.mxu0 0.0
    %2362 = vmatpush1.msra.mxu0 0.0
    %2363 = vmatprep.subr.mxu0 0.0
    %2364 = vmatpush1.msra.mxu0 0.0
    %2365 = vmatprep.subr.mxu0 0.0
    %2366 = vmatpush1.msra.mxu0 0.0
    %2367 = vmatprep.subr.mxu0 0.0
    %2368 = vmatpush1.msra.mxu0 0.0
    %2369 = vmatprep.subr.mxu0 0.0
    %2370 = vmatpush1.msra.mxu0 0.0
    %2371 = vmatprep.subr.mxu0 0.0
    %2372 = vmatpush1.msra.mxu0 0.0
    %2373 = vmatprep.subr.mxu0 0.0
    %2374 = vmatpush1.msra.mxu0 0.0
    %2375 = vmatprep.subr.mxu0 0.0
    %2376 = vmatpush1.msra.mxu0 0.0
    %2377 = vmatprep.subr.mxu0 0.0
    %2378 = vmatpush1.msra.mxu0 0.0
    %2379 = vmatprep.subr.mxu0 0.0
    %2380 = vmatpush1.msra.mxu0 0.0
    %2381 = vmatprep.mubr.f32.mxu0 0.0
    %2382 = vmatmul.mubr.f32.gmra.mrb[0].mxu0 %v1114
    %v2383 = vpop.f32.mrb[0].mxu0
    %v2384 = vadd.f32 %v1640, %v2383
    %v2385 = vpop.f32.mrb[0].mxu0
    %2386 = vdwg.mxu0
    %2388 = vrot.lane.b32.xlu0 %v2316, 32
    %v2389 = vpop.permute.xlu0 %2388
    %v2390 = vsel %vm247, %v2389, 0
    %2392 = vmatprep.subr.mxu0 0.0
    %2393 = vmatpush1.msra.mxu0 %v1627
    %2394 = vmatprep.subr.mxu0 0.0
    %2395 = vmatpush1.msra.mxu0 %v1628
    %2396 = vmatprep.subr.mxu0 0.0
    %2397 = vmatpush1.msra.mxu0 %v1629
    %2398 = vmatprep.subr.mxu0 0.0
    %2399 = vmatpush1.msra.mxu0 %v1630
    %2400 = vmatprep.subr.mxu0 0.0
    %2401 = vmatpush1.msra.mxu0 0.0
    %2402 = vmatprep.subr.mxu0 0.0
    %2403 = vmatpush1.msra.mxu0 0.0
    %2404 = vmatprep.subr.mxu0 0.0
    %2405 = vmatpush1.msra.mxu0 0.0
    %2406 = vmatprep.subr.mxu0 0.0
    %2407 = vmatpush1.msra.mxu0 0.0
    %2408 = vmatprep.subr.mxu0 0.0
    %2409 = vmatpush1.msra.mxu0 0.0
    %2410 = vmatprep.subr.mxu0 0.0
    %2411 = vmatpush1.msra.mxu0 0.0
    %2412 = vmatprep.subr.mxu0 0.0
    %2413 = vmatpush1.msra.mxu0 0.0
    %2414 = vmatprep.subr.mxu0 0.0
    %2415 = vmatpush1.msra.mxu0 0.0
    %2416 = vmatprep.subr.mxu0 0.0
    %2417 = vmatpush1.msra.mxu0 0.0
    %2418 = vmatprep.subr.mxu0 0.0
    %2419 = vmatpush1.msra.mxu0 0.0
    %2420 = vmatprep.subr.mxu0 0.0
    %2421 = vmatpush1.msra.mxu0 0.0
    %2422 = vmatprep.subr.mxu0 0.0
    %2423 = vmatpush1.msra.mxu0 0.0
    %2424 = vmatprep.subr.mxu0 0.0
    %2425 = vmatpush1.msra.mxu0 0.0
    %2426 = vmatprep.subr.mxu0 0.0
    %2427 = vmatpush1.msra.mxu0 0.0
    %2428 = vmatprep.subr.mxu0 0.0
    %2429 = vmatpush1.msra.mxu0 0.0
    %2430 = vmatprep.subr.mxu0 0.0
    %2431 = vmatpush1.msra.mxu0 0.0
    %2432 = vmatprep.subr.mxu0 0.0
    %2433 = vmatpush1.msra.mxu0 0.0
    %2434 = vmatprep.subr.mxu0 0.0
    %2435 = vmatpush1.msra.mxu0 0.0
    %2436 = vmatprep.subr.mxu0 0.0
    %2437 = vmatpush1.msra.mxu0 0.0
    %2438 = vmatprep.subr.mxu0 0.0
    %2439 = vmatpush1.msra.mxu0 0.0
    %2440 = vmatprep.subr.mxu0 0.0
    %2441 = vmatpush1.msra.mxu0 0.0
    %2442 = vmatprep.subr.mxu0 0.0
    %2443 = vmatpush1.msra.mxu0 0.0
    %2444 = vmatprep.subr.mxu0 0.0
    %2445 = vmatpush1.msra.mxu0 0.0
    %2446 = vmatprep.subr.mxu0 0.0
    %2447 = vmatpush1.msra.mxu0 0.0
    %2448 = vmatprep.subr.mxu0 0.0
    %2449 = vmatpush1.msra.mxu0 0.0
    %2450 = vmatprep.subr.mxu0 0.0
    %2451 = vmatpush1.msra.mxu0 0.0
    %2452 = vmatprep.subr.mxu0 0.0
    %2453 = vmatpush1.msra.mxu0 0.0
    %2454 = vmatprep.subr.mxu0 0.0
    %2455 = vmatpush1.msra.mxu0 0.0
    %2456 = vmatprep.mubr.f32.mxu0 0.0
    %2457 = vmatmul.mubr.f32.gmra.mrb[0].mxu0 %v2390
    %v2458 = vpop.f32.mrb[0].mxu0
    %v2459 = vadd.f32 0.0, %v2458
    %v2460 = vpop.f32.mrb[0].mxu0
    %2461 = vdwg.mxu0
    %v2462 = vadd.f32 %v2384, %v2459
    %v2463 = vxor.u32 %v2462, 2147483648
    %v2464 = vmul.f32 %v2463, 1.442695
    %v2465 = vpow.pop %v2464
    %v2466 = vadd.f32 %v2465, 1.0
    %v2467 = vrcp.pop %v2466
    %v2468 = vmul.f32 1.0, %v2467
    %v2469 = vtanh.pop %v2462
    %v2470 = vmul.f32 %v2468, %v2310
    %2472 = vrot.lane.b32.xlu0 %v2469, 64
    %v2473 = vpop.permute.xlu0 %2472
    %v2475 = vmul.f32 %v2468, %v2473
    %2477 = vrot.lane.b32.xlu0 %v2475, 32
    %v2478 = vpop.permute.xlu0 %2477
    %v2480 = vadd.f32 %v2470, %v2478
    %v2481 = vtanh.pop %v2480
    %2483 = vrot.lane.b32.xlu0 %v2481, 64
    %v2484 = vpop.permute.xlu0 %2483
    %v2486 = vmul.f32 %v2468, %v2484
    %2487 = vmatprep.subr.mxu0 0.0
    %2488 = vmatpush1.msra.mxu0 %v1631
    %2489 = vmatprep.subr.mxu0 0.0
    %2490 = vmatpush1.msra.mxu0 %v1632
    %2491 = vmatprep.subr.mxu0 0.0
    %2492 = vmatpush1.msra.mxu0 %v1633
    %2493 = vmatprep.subr.mxu0 0.0
    %2494 = vmatpush1.msra.mxu0 %v1634
    %2495 = vmatprep.subr.mxu0 0.0
    %2496 = vmatpush1.msra.mxu0 0.0
    %2497 = vmatprep.subr.mxu0 0.0
    %2498 = vmatpush1.msra.mxu0 0.0
    %2499 = vmatprep.subr.mxu0 0.0
    %2500 = vmatpush1.msra.mxu0 0.0
    %2501 = vmatprep.subr.mxu0 0.0
    %2502 = vmatpush1.msra.mxu0 0.0
    %2503 = vmatprep.subr.mxu0 0.0
    %2504 = vmatpush1.msra.mxu0 0.0
    %2505 = vmatprep.subr.mxu0 0.0
    %2506 = vmatpush1.msra.mxu0 0.0
    %2507 = vmatprep.subr.mxu0 0.0
    %2508 = vmatpush1.msra.mxu0 0.0
    %2509 = vmatprep.subr.mxu0 0.0
    %2510 = vmatpush1.msra.mxu0 0.0
    %2511 = vmatprep.subr.mxu0 0.0
    %2512 = vmatpush1.msra.mxu0 0.0
    %2513 = vmatprep.subr.mxu0 0.0
    %2514 = vmatpush1.msra.mxu0 0.0
    %2515 = vmatprep.subr.mxu0 0.0
    %2516 = vmatpush1.msra.mxu0 0.0
    %2517 = vmatprep.subr.mxu0 0.0
    %2518 = vmatpush1.msra.mxu0 0.0
    %2519 = vmatprep.subr.mxu0 0.0
    %2520 = vmatpush1.msra.mxu0 0.0
    %2521 = vmatprep.subr.mxu0 0.0
    %2522 = vmatpush1.msra.mxu0 0.0
    %2523 = vmatprep.subr.mxu0 0.0
    %2524 = vmatpush1.msra.mxu0 0.0
    %2525 = vmatprep.subr.mxu0 0.0
    %2526 = vmatpush1.msra.mxu0 0.0
    %2527 = vmatprep.subr.mxu0 0.0
    %2528 = vmatpush1.msra.mxu0 0.0
    %2529 = vmatprep.subr.mxu0 0.0
    %2530 = vmatpush1.msra.mxu0 0.0
    %2531 = vmatprep.subr.mxu0 0.0
    %2532 = vmatpush1.msra.mxu0 0.0
    %2533 = vmatprep.subr.mxu0 0.0
    %2534 = vmatpush1.msra.mxu0 0.0
    %2535 = vmatprep.subr.mxu0 0.0
    %2536 = vmatpush1.msra.mxu0 0.0
    %2537 = vmatprep.subr.mxu0 0.0
    %2538 = vmatpush1.msra.mxu0 0.0
    %2539 = vmatprep.subr.mxu0 0.0
    %2540 = vmatpush1.msra.mxu0 0.0
    %2541 = vmatprep.subr.mxu0 0.0
    %2542 = vmatpush1.msra.mxu0 0.0
    %2543 = vmatprep.subr.mxu0 0.0
    %2544 = vmatpush1.msra.mxu0 0.0
    %2545 = vmatprep.subr.mxu0 0.0
    %2546 = vmatpush1.msra.mxu0 0.0
    %2547 = vmatprep.subr.mxu0 0.0
    %2548 = vmatpush1.msra.mxu0 0.0
    %2549 = vmatprep.subr.mxu0 0.0
    %2550 = vmatpush1.msra.mxu0 0.0
    %2551 = vmatprep.mubr.f32.mxu0 0.0
    %2552 = vmatmul.mubr.f32.gmra.mrb[0].mxu0 %v1286
    %v2553 = vpop.f32.mrb[0].mxu0
    %v2554 = vadd.f32 %v1640, %v2553
    %v2555 = vpop.f32.mrb[0].mxu0
    %2556 = vdwg.mxu0
    %2558 = vrot.lane.b32.xlu0 %v2486, 32
    %v2559 = vpop.permute.xlu0 %2558
    %v2560 = vsel %vm247, %v2559, 0
    %2562 = vmatprep.subr.mxu0 0.0
    %2563 = vmatpush1.msra.mxu0 %v1627
    %2564 = vmatprep.subr.mxu0 0.0
    %2565 = vmatpush1.msra.mxu0 %v1628
    %2566 = vmatprep.subr.mxu0 0.0
    %2567 = vmatpush1.msra.mxu0 %v1629
    %2568 = vmatprep.subr.mxu0 0.0
    %2569 = vmatpush1.msra.mxu0 %v1630
    %2570 = vmatprep.subr.mxu0 0.0
    %2571 = vmatpush1.msra.mxu0 0.0
    %2572 = vmatprep.subr.mxu0 0.0
    %2573 = vmatpush1.msra.mxu0 0.0
    %2574 = vmatprep.subr.mxu0 0.0
    %2575 = vmatpush1.msra.mxu0 0.0
    %2576 = vmatprep.subr.mxu0 0.0
    %2577 = vmatpush1.msra.mxu0 0.0
    %2578 = vmatprep.subr.mxu0 0.0
    %2579 = vmatpush1.msra.mxu0 0.0
    %2580 = vmatprep.subr.mxu0 0.0
    %2581 = vmatpush1.msra.mxu0 0.0
    %2582 = vmatprep.subr.mxu0 0.0
    %2583 = vmatpush1.msra.mxu0 0.0
    %2584 = vmatprep.subr.mxu0 0.0
    %2585 = vmatpush1.msra.mxu0 0.0
    %2586 = vmatprep.subr.mxu0 0.0
    %2587 = vmatpush1.msra.mxu0 0.0
    %2588 = vmatprep.subr.mxu0 0.0
    %2589 = vmatpush1.msra.mxu0 0.0
    %2590 = vmatprep.subr.mxu0 0.0
    %2591 = vmatpush1.msra.mxu0 0.0
    %2592 = vmatprep.subr.mxu0 0.0
    %2593 = vmatpush1.msra.mxu0 0.0
    %2594 = vmatprep.subr.mxu0 0.0
    %2595 = vmatpush1.msra.mxu0 0.0
    %2596 = vmatprep.subr.mxu0 0.0
    %2597 = vmatpush1.msra.mxu0 0.0
    %2598 = vmatprep.subr.mxu0 0.0
    %2599 = vmatpush1.msra.mxu0 0.0
    %2600 = vmatprep.subr.mxu0 0.0
    %2601 = vmatpush1.msra.mxu0 0.0
    %2602 = vmatprep.subr.mxu0 0.0
    %2603 = vmatpush1.msra.mxu0 0.0
    %2604 = vmatprep.subr.mxu0 0.0
    %2605 = vmatpush1.msra.mxu0 0.0
    %2606 = vmatprep.subr.mxu0 0.0
    %2607 = vmatpush1.msra.mxu0 0.0
    %2608 = vmatprep.subr.mxu0 0.0
    %2609 = vmatpush1.msra.mxu0 0.0
    %2610 = vmatprep.subr.mxu0 0.0
    %2611 = vmatpush1.msra.mxu0 0.0
    %2612 = vmatprep.subr.mxu0 0.0
    %2613 = vmatpush1.msra.mxu0 0.0
    %2614 = vmatprep.subr.mxu0 0.0
    %2615 = vmatpush1.msra.mxu0 0.0
    %2616 = vmatprep.subr.mxu0 0.0
    %2617 = vmatpush1.msra.mxu0 0.0
    %2618 = vmatprep.subr.mxu0 0.0
    %2619 = vmatpush1.msra.mxu0 0.0
    %2620 = vmatprep.subr.mxu0 0.0
    %2621 = vmatpush1.msra.mxu0 0.0
    %2622 = vmatprep.subr.mxu0 0.0
    %2623 = vmatpush1.msra.mxu0 0.0
    %2624 = vmatprep.subr.mxu0 0.0
    %2625 = vmatpush1.msra.mxu0 0.0
    %2626 = vmatprep.mubr.f32.mxu0 0.0
    %2627 = vmatmul.mubr.f32.gmra.mrb[0].mxu0 %v2560
    %v2628 = vpop.f32.mrb[0].mxu0
    %v2629 = vadd.f32 0.0, %v2628
    %v2630 = vpop.f32.mrb[0].mxu0
    %2631 = vdwg.mxu0
    %v2632 = vadd.f32 %v2554, %v2629
    %v2633 = vxor.u32 %v2632, 2147483648
    %v2634 = vmul.f32 %v2633, 1.442695
    %v2635 = vpow.pop %v2634
    %v2636 = vadd.f32 %v2635, 1.0
    %v2637 = vrcp.pop %v2636
    %v2638 = vmul.f32 1.0, %v2637
    %v2639 = vtanh.pop %v2632
    %v2640 = vmul.f32 %v2638, %v2480
    %2642 = vrot.lane.b32.xlu0 %v2639, 64
    %v2643 = vpop.permute.xlu0 %2642
    %v2645 = vmul.f32 %v2638, %v2643
    %2647 = vrot.lane.b32.xlu0 %v2645, 32
    %v2648 = vpop.permute.xlu0 %2647
    %v2650 = vadd.f32 %v2640, %v2648
    %v2651 = vtanh.pop %v2650
    %2653 = vrot.lane.b32.xlu0 %v2651, 64
    %v2654 = vpop.permute.xlu0 %2653
    %v2656 = vmul.f32 %v2638, %v2654
    %2657 = vmatprep.subr.mxu0 0.0
    %2658 = vmatpush1.msra.mxu0 %v1631
    %2659 = vmatprep.subr.mxu0 0.0
    %2660 = vmatpush1.msra.mxu0 %v1632
    %2661 = vmatprep.subr.mxu0 0.0
    %2662 = vmatpush1.msra.mxu0 %v1633
    %2663 = vmatprep.subr.mxu0 0.0
    %2664 = vmatpush1.msra.mxu0 %v1634
    %2665 = vmatprep.subr.mxu0 0.0
    %2666 = vmatpush1.msra.mxu0 0.0
    %2667 = vmatprep.subr.mxu0 0.0
    %2668 = vmatpush1.msra.mxu0 0.0
    %2669 = vmatprep.subr.mxu0 0.0
    %2670 = vmatpush1.msra.mxu0 0.0
    %2671 = vmatprep.subr.mxu0 0.0
    %2672 = vmatpush1.msra.mxu0 0.0
    %2673 = vmatprep.subr.mxu0 0.0
    %2674 = vmatpush1.msra.mxu0 0.0
    %2675 = vmatprep.subr.mxu0 0.0
    %2676 = vmatpush1.msra.mxu0 0.0
    %2677 = vmatprep.subr.mxu0 0.0
    %2678 = vmatpush1.msra.mxu0 0.0
    %2679 = vmatprep.subr.mxu0 0.0
    %2680 = vmatpush1.msra.mxu0 0.0
    %2681 = vmatprep.subr.mxu0 0.0
    %2682 = vmatpush1.msra.mxu0 0.0
    %2683 = vmatprep.subr.mxu0 0.0
    %2684 = vmatpush1.msra.mxu0 0.0
    %2685 = vmatprep.subr.mxu0 0.0
    %2686 = vmatpush1.msra.mxu0 0.0
    %2687 = vmatprep.subr.mxu0 0.0
    %2688 = vmatpush1.msra.mxu0 0.0
    %2689 = vmatprep.subr.mxu0 0.0
    %2690 = vmatpush1.msra.mxu0 0.0
    %2691 = vmatprep.subr.mxu0 0.0
    %2692 = vmatpush1.msra.mxu0 0.0
    %2693 = vmatprep.subr.mxu0 0.0
    %2694 = vmatpush1.msra.mxu0 0.0
    %2695 = vmatprep.subr.mxu0 0.0
    %2696 = vmatpush1.msra.mxu0 0.0
    %2697 = vmatprep.subr.mxu0 0.0
    %2698 = vmatpush1.msra.mxu0 0.0
    %2699 = vmatprep.subr.mxu0 0.0
    %2700 = vmatpush1.msra.mxu0 0.0
    %2701 = vmatprep.subr.mxu0 0.0
    %2702 = vmatpush1.msra.mxu0 0.0
    %2703 = vmatprep.subr.mxu0 0.0
    %2704 = vmatpush1.msra.mxu0 0.0
    %2705 = vmatprep.subr.mxu0 0.0
    %2706 = vmatpush1.msra.mxu0 0.0
    %2707 = vmatprep.subr.mxu0 0.0
    %2708 = vmatpush1.msra.mxu0 0.0
    %2709 = vmatprep.subr.mxu0 0.0
    %2710 = vmatpush1.msra.mxu0 0.0
    %2711 = vmatprep.subr.mxu0 0.0
    %2712 = vmatpush1.msra.mxu0 0.0
    %2713 = vmatprep.subr.mxu0 0.0
    %2714 = vmatpush1.msra.mxu0 0.0
    %2715 = vmatprep.subr.mxu0 0.0
    %2716 = vmatpush1.msra.mxu0 0.0
    %2717 = vmatprep.subr.mxu0 0.0
    %2718 = vmatpush1.msra.mxu0 0.0
    %2719 = vmatprep.subr.mxu0 0.0
    %2720 = vmatpush1.msra.mxu0 0.0
    %2721 = vmatprep.mubr.f32.mxu0 0.0
    %2722 = vmatmul.mubr.f32.gmra.mrb[0].mxu0 %v1458
    %v2723 = vpop.f32.mrb[0].mxu0
    %v2724 = vadd.f32 %v1640, %v2723
    %v2725 = vpop.f32.mrb[0].mxu0
    %2726 = vdwg.mxu0
    %2728 = vrot.lane.b32.xlu0 %v2656, 32
    %v2729 = vpop.permute.xlu0 %2728
    %v2730 = vsel %vm247, %v2729, 0
    %2732 = vmatprep.subr.mxu0 0.0
    %2733 = vmatpush1.msra.mxu0 %v1627
    %2734 = vmatprep.subr.mxu0 0.0
    %2735 = vmatpush1.msra.mxu0 %v1628
    %2736 = vmatprep.subr.mxu0 0.0
    %2737 = vmatpush1.msra.mxu0 %v1629
    %2738 = vmatprep.subr.mxu0 0.0
    %2739 = vmatpush1.msra.mxu0 %v1630
    %2740 = vmatprep.subr.mxu0 0.0
    %2741 = vmatpush1.msra.mxu0 0.0
    %2742 = vmatprep.subr.mxu0 0.0
    %2743 = vmatpush1.msra.mxu0 0.0
    %2744 = vmatprep.subr.mxu0 0.0
    %2745 = vmatpush1.msra.mxu0 0.0
    %2746 = vmatprep.subr.mxu0 0.0
    %2747 = vmatpush1.msra.mxu0 0.0
    %2748 = vmatprep.subr.mxu0 0.0
    %2749 = vmatpush1.msra.mxu0 0.0
    %2750 = vmatprep.subr.mxu0 0.0
    %2751 = vmatpush1.msra.mxu0 0.0
    %2752 = vmatprep.subr.mxu0 0.0
    %2753 = vmatpush1.msra.mxu0 0.0
    %2754 = vmatprep.subr.mxu0 0.0
    %2755 = vmatpush1.msra.mxu0 0.0
    %2756 = vmatprep.subr.mxu0 0.0
    %2757 = vmatpush1.msra.mxu0 0.0
    %2758 = vmatprep.subr.mxu0 0.0
    %2759 = vmatpush1.msra.mxu0 0.0
    %2760 = vmatprep.subr.mxu0 0.0
    %2761 = vmatpush1.msra.mxu0 0.0
    %2762 = vmatprep.subr.mxu0 0.0
    %2763 = vmatpush1.msra.mxu0 0.0
    %2764 = vmatprep.subr.mxu0 0.0
    %2765 = vmatpush1.msra.mxu0 0.0
    %2766 = vmatprep.subr.mxu0 0.0
    %2767 = vmatpush1.msra.mxu0 0.0
    %2768 = vmatprep.subr.mxu0 0.0
    %2769 = vmatpush1.msra.mxu0 0.0
    %2770 = vmatprep.subr.mxu0 0.0
    %2771 = vmatpush1.msra.mxu0 0.0
    %2772 = vmatprep.subr.mxu0 0.0
    %2773 = vmatpush1.msra.mxu0 0.0
    %2774 = vmatprep.subr.mxu0 0.0
    %2775 = vmatpush1.msra.mxu0 0.0
    %2776 = vmatprep.subr.mxu0 0.0
    %2777 = vmatpush1.msra.mxu0 0.0
    %2778 = vmatprep.subr.mxu0 0.0
    %2779 = vmatpush1.msra.mxu0 0.0
    %2780 = vmatprep.subr.mxu0 0.0
    %2781 = vmatpush1.msra.mxu0 0.0
    %2782 = vmatprep.subr.mxu0 0.0
    %2783 = vmatpush1.msra.mxu0 0.0
    %2784 = vmatprep.subr.mxu0 0.0
    %2785 = vmatpush1.msra.mxu0 0.0
    %2786 = vmatprep.subr.mxu0 0.0
    %2787 = vmatpush1.msra.mxu0 0.0
    %2788 = vmatprep.subr.mxu0 0.0
    %2789 = vmatpush1.msra.mxu0 0.0
    %2790 = vmatprep.subr.mxu0 0.0
    %2791 = vmatpush1.msra.mxu0 0.0
    %2792 = vmatprep.subr.mxu0 0.0
    %2793 = vmatpush1.msra.mxu0 0.0
    %2794 = vmatprep.subr.mxu0 0.0
    %2795 = vmatpush1.msra.mxu0 0.0
    %2796 = vmatprep.mubr.f32.mxu0 0.0
    %2797 = vmatmul.mubr.f32.gmra.mrb[0].mxu0 %v2730
    %v2798 = vpop.f32.mrb[0].mxu0
    %v2799 = vadd.f32 0.0, %v2798
    %v2800 = vpop.f32.mrb[0].mxu0
    %2801 = vdwg.mxu0
    %v2802 = vadd.f32 %v2724, %v2799
    %v2803 = vxor.u32 %v2802, 2147483648
    %v2804 = vmul.f32 %v2803, 1.442695
    %v2805 = vpow.pop %v2804
    %v2806 = vadd.f32 %v2805, 1.0
    %v2807 = vrcp.pop %v2806
    %v2808 = vmul.f32 1.0, %v2807
    %v2809 = vtanh.pop %v2802
    %v2810 = vmul.f32 %v2808, %v2650
    %2812 = vrot.lane.b32.xlu0 %v2809, 64
    %v2813 = vpop.permute.xlu0 %2812
    %v2815 = vmul.f32 %v2808, %v2813
    %2817 = vrot.lane.b32.xlu0 %v2815, 32
    %v2818 = vpop.permute.xlu0 %2817
    %v2820 = vadd.f32 %v2810, %v2818
    %v2821 = vtanh.pop %v2820
    %2823 = vrot.lane.b32.xlu0 %v2821, 64
    %v2824 = vpop.permute.xlu0 %2823
    %v2826 = vmul.f32 %v2808, %v2824
    %2828 = vrot.lane.b32.xlu0 %v1626, 32
    %v2829 = vpop.permute.xlu0 %2828
    %v2830 = vsel %vm247, %v2829, 0
    %2832 = vmatprep.subr.mxu0 0.0
    %2833 = vmatpush1.msra.mxu0 %v1631
    %2834 = vmatprep.subr.mxu0 0.0
    %2835 = vmatpush1.msra.mxu0 %v1632
    %2836 = vmatprep.subr.mxu0 0.0
    %2837 = vmatpush1.msra.mxu0 %v1633
    %2838 = vmatprep.subr.mxu0 0.0
    %2839 = vmatpush1.msra.mxu0 %v1634
    %2840 = vmatprep.subr.mxu0 0.0
    %2841 = vmatpush1.msra.mxu0 0.0
    %2842 = vmatprep.subr.mxu0 0.0
    %2843 = vmatpush1.msra.mxu0 0.0
    %2844 = vmatprep.subr.mxu0 0.0
    %2845 = vmatpush1.msra.mxu0 0.0
    %2846 = vmatprep.subr.mxu0 0.0
    %2847 = vmatpush1.msra.mxu0 0.0
    %2848 = vmatprep.subr.mxu0 0.0
    %2849 = vmatpush1.msra.mxu0 0.0
    %2850 = vmatprep.subr.mxu0 0.0
    %2851 = vmatpush1.msra.mxu0 0.0
    %2852 = vmatprep.subr.mxu0 0.0
    %2853 = vmatpush1.msra.mxu0 0.0
    %2854 = vmatprep.subr.mxu0 0.0
    %2855 = vmatpush1.msra.mxu0 0.0
    %2856 = vmatprep.subr.mxu0 0.0
    %2857 = vmatpush1.msra.mxu0 0.0
    %2858 = vmatprep.subr.mxu0 0.0
    %2859 = vmatpush1.msra.mxu0 0.0
    %2860 = vmatprep.subr.mxu0 0.0
    %2861 = vmatpush1.msra.mxu0 0.0
    %2862 = vmatprep.subr.mxu0 0.0
    %2863 = vmatpush1.msra.mxu0 0.0
    %2864 = vmatprep.subr.mxu0 0.0
    %2865 = vmatpush1.msra.mxu0 0.0
    %2866 = vmatprep.subr.mxu0 0.0
    %2867 = vmatpush1.msra.mxu0 0.0
    %2868 = vmatprep.subr.mxu0 0.0
    %2869 = vmatpush1.msra.mxu0 0.0
    %2870 = vmatprep.subr.mxu0 0.0
    %2871 = vmatpush1.msra.mxu0 0.0
    %2872 = vmatprep.subr.mxu0 0.0
    %2873 = vmatpush1.msra.mxu0 0.0
    %2874 = vmatprep.subr.mxu0 0.0
    %2875 = vmatpush1.msra.mxu0 0.0
    %2876 = vmatprep.subr.mxu0 0.0
    %2877 = vmatpush1.msra.mxu0 0.0
    %2878 = vmatprep.subr.mxu0 0.0
    %2879 = vmatpush1.msra.mxu0 0.0
    %2880 = vmatprep.subr.mxu0 0.0
    %2881 = vmatpush1.msra.mxu0 0.0
    %2882 = vmatprep.subr.mxu0 0.0
    %2883 = vmatpush1.msra.mxu0 0.0
    %2884 = vmatprep.subr.mxu0 0.0
    %2885 = vmatpush1.msra.mxu0 0.0
    %2886 = vmatprep.subr.mxu0 0.0
    %2887 = vmatpush1.msra.mxu0 0.0
    %2888 = vmatprep.subr.mxu0 0.0
    %2889 = vmatpush1.msra.mxu0 0.0
    %2890 = vmatprep.subr.mxu0 0.0
    %2891 = vmatpush1.msra.mxu0 0.0
    %2892 = vmatprep.subr.mxu0 0.0
    %2893 = vmatpush1.msra.mxu0 0.0
    %2894 = vmatprep.subr.mxu0 0.0
    %2895 = vmatpush1.msra.mxu0 0.0
    %2896 = vmatprep.mubr.f32.mxu0 0.0
    %2897 = vmatmul.mubr.f32.gmra.mrb[0].mxu0 %v2830
    %v2898 = vpop.f32.mrb[0].mxu0
    %v2899 = vadd.f32 %v1640, %v2898
    %v2900 = vpop.f32.mrb[0].mxu0
    %2901 = vdwg.mxu0
    %2903 = vrot.lane.b32.xlu0 %v2826, 32
    %v2904 = vpop.permute.xlu0 %2903
    %v2905 = vsel %vm247, %v2904, 0
    %2907 = vmatprep.subr.mxu0 0.0
    %2908 = vmatpush1.msra.mxu0 %v1627
    %2909 = vmatprep.subr.mxu0 0.0
    %2910 = vmatpush1.msra.mxu0 %v1628
    %2911 = vmatprep.subr.mxu0 0.0
    %2912 = vmatpush1.msra.mxu0 %v1629
    %2913 = vmatprep.subr.mxu0 0.0
    %2914 = vmatpush1.msra.mxu0 %v1630
    %2915 = vmatprep.subr.mxu0 0.0
    %2916 = vmatpush1.msra.mxu0 0.0
    %2917 = vmatprep.subr.mxu0 0.0
    %2918 = vmatpush1.msra.mxu0 0.0
    %2919 = vmatprep.subr.mxu0 0.0
    %2920 = vmatpush1.msra.mxu0 0.0
    %2921 = vmatprep.subr.mxu0 0.0
    %2922 = vmatpush1.msra.mxu0 0.0
    %2923 = vmatprep.subr.mxu0 0.0
    %2924 = vmatpush1.msra.mxu0 0.0
    %2925 = vmatprep.subr.mxu0 0.0
    %2926 = vmatpush1.msra.mxu0 0.0
    %2927 = vmatprep.subr.mxu0 0.0
    %2928 = vmatpush1.msra.mxu0 0.0
    %2929 = vmatprep.subr.mxu0 0.0
    %2930 = vmatpush1.msra.mxu0 0.0
    %2931 = vmatprep.subr.mxu0 0.0
    %2932 = vmatpush1.msra.mxu0 0.0
    %2933 = vmatprep.subr.mxu0 0.0
    %2934 = vmatpush1.msra.mxu0 0.0
    %2935 = vmatprep.subr.mxu0 0.0
    %2936 = vmatpush1.msra.mxu0 0.0
    %2937 = vmatprep.subr.mxu0 0.0
    %2938 = vmatpush1.msra.mxu0 0.0
    %2939 = vmatprep.subr.mxu0 0.0
    %2940 = vmatpush1.msra.mxu0 0.0
    %2941 = vmatprep.subr.mxu0 0.0
    %2942 = vmatpush1.msra.mxu0 0.0
    %2943 = vmatprep.subr.mxu0 0.0
    %2944 = vmatpush1.msra.mxu0 0.0
    %2945 = vmatprep.subr.mxu0 0.0
    %2946 = vmatpush1.msra.mxu0 0.0
    %2947 = vmatprep.subr.mxu0 0.0
    %2948 = vmatpush1.msra.mxu0 0.0
    %2949 = vmatprep.subr.mxu0 0.0
    %2950 = vmatpush1.msra.mxu0 0.0
    %2951 = vmatprep.subr.mxu0 0.0
    %2952 = vmatpush1.msra.mxu0 0.0
    %2953 = vmatprep.subr.mxu0 0.0
    %2954 = vmatpush1.msra.mxu0 0.0
    %2955 = vmatprep.subr.mxu0 0.0
    %2956 = vmatpush1.msra.mxu0 0.0
    %2957 = vmatprep.subr.mxu0 0.0
    %2958 = vmatpush1.msra.mxu0 0.0
    %2959 = vmatprep.subr.mxu0 0.0
    %2960 = vmatpush1.msra.mxu0 0.0
    %2961 = vmatprep.subr.mxu0 0.0
    %2962 = vmatpush1.msra.mxu0 0.0
    %2963 = vmatprep.subr.mxu0 0.0
    %2964 = vmatpush1.msra.mxu0 0.0
    %2965 = vmatprep.subr.mxu0 0.0
    %2966 = vmatpush1.msra.mxu0 0.0
    %2967 = vmatprep.subr.mxu0 0.0
    %2968 = vmatpush1.msra.mxu0 0.0
    %2969 = vmatprep.subr.mxu0 0.0
    %2970 = vmatpush1.msra.mxu0 0.0
    %2971 = vmatprep.mubr.f32.mxu0 0.0
    %2972 = vmatmul.mubr.f32.gmra.mrb[0].mxu0 %v2905
    %v2973 = vpop.f32.mrb[0].mxu0
    %v2974 = vadd.f32 0.0, %v2973
    %v2975 = vpop.f32.mrb[0].mxu0
    %2976 = vdwg.mxu0
    %v2977 = vadd.f32 %v2899, %v2974
    %v2978 = vxor.u32 %v2977, 2147483648
    %v2979 = vmul.f32 %v2978, 1.442695
    %v2980 = vpow.pop %v2979
    %v2981 = vadd.f32 %v2980, 1.0
    %v2982 = vrcp.pop %v2981
    %v2983 = vmul.f32 1.0, %v2982
    %v2984 = vtanh.pop %v2977
    %v2985 = vmul.f32 %v2983, %v2820
    %2987 = vrot.lane.b32.xlu0 %v2984, 64
    %v2988 = vpop.permute.xlu0 %2987
    %v2990 = vmul.f32 %v2983, %v2988
    %2992 = vrot.lane.b32.xlu0 %v2990, 32
    %v2993 = vpop.permute.xlu0 %2992
    %v2995 = vadd.f32 %v2985, %v2993
    %v2996 = vtanh.pop %v2995
    %2998 = vrot.lane.b32.xlu0 %v2996, 64
    %v2999 = vpop.permute.xlu0 %2998
    %v3001 = vmul.f32 %v2983, %v2999
    %v3003 = vunpack.c.l.s4 1983009808
    %v3004 = vunpack.c.0.s8 %v3003
    %v3005 = vlaneseq
    %v3006 = vshrl.u32 %v3005, 7
    %v3007 = vsub.s32 %v3004, %v3006
    %v3008 = vrot.slane %v1806, %v3007
    %3009 = vrot.lane.b32.xlu0 %v3008, 32
    %v3010 = vpop.permute.xlu0 %3009
    %vm3012 = vcmask 254976
    %3013 = vst.msk [vmem:[%s12] sm:$0x3] %vm3012, %v3010
    %v3015 = vunpack.c.l.s4 1983009808
    %v3016 = vunpack.c.0.s8 %v3015
    %v3017 = vlaneseq
    %v3018 = vshrl.u32 %v3017, 7
    %v3019 = vsub.s32 %v3016, %v3018
    %v3020 = vrot.slane %v1976, %v3019
    %3021 = vrot.lane.b32.xlu0 %v3020, 64
    %v3022 = vpop.permute.xlu0 %3021
    %vm3024 = vcmask 517376
    %3025 = vst.msk [vmem:[%s12] sm:$0x3] %vm3024, %v3022
    %v3027 = vunpack.c.l.s4 1983009808
    %v3028 = vunpack.c.0.s8 %v3027
    %v3029 = vlaneseq
    %v3030 = vshrl.u32 %v3029, 7
    %v3031 = vsub.s32 %v3028, %v3030
    %v3032 = vrot.slane %v2146, %v3031
    %3033 = vrot.lane.b32.xlu0 %v3032, 96
    %v3034 = vpop.permute.xlu0 %3033
    %vm3036 = vcmask 779776
    %3037 = vst.msk [vmem:[%s12] sm:$0x3] %vm3036, %v3034
    %vm3038 = vcmask 1042176
    %3039 = vst.msk [vmem:[%s12] sm:$0x3] %vm3038, %v2316
    %v3041 = vunpack.c.l.s4 1983009808
    %v3042 = vunpack.c.0.s8 %v3041
    %v3043 = vlaneseq
    %v3044 = vshrl.u32 %v3043, 7
    %v3045 = vsub.s32 %v3042, %v3044
    %v3046 = vrot.slane %v2486, %v3045
    %3047 = vrot.lane.b32.xlu0 %v3046, 32
    %v3048 = vpop.permute.xlu0 %3047
    %3050 = vst.msk [vmem:[%s12 + $0x2] sm:$0x3] %vm3012, %v3048
    %v3052 = vunpack.c.l.s4 1983009808
    %v3053 = vunpack.c.0.s8 %v3052
    %v3054 = vlaneseq
    %v3055 = vshrl.u32 %v3054, 7
    %v3056 = vsub.s32 %v3053, %v3055
    %v3057 = vrot.slane %v2656, %v3056
    %3058 = vrot.lane.b32.xlu0 %v3057, 64
    %v3059 = vpop.permute.xlu0 %3058
    %3061 = vst.msk [vmem:[%s12 + $0x2] sm:$0x3] %vm3024, %v3059
    %v3063 = vunpack.c.l.s4 1983009808
    %v3064 = vunpack.c.0.s8 %v3063
    %v3065 = vlaneseq
    %v3066 = vshrl.u32 %v3065, 7
    %v3067 = vsub.s32 %v3064, %v3066
    %v3068 = vrot.slane %v2826, %v3067
    %3069 = vrot.lane.b32.xlu0 %v3068, 96
    %v3070 = vpop.permute.xlu0 %3069
    %3072 = vst.msk [vmem:[%s12 + $0x2] sm:$0x3] %vm3036, %v3070
    %3073 = vst.msk [vmem:[%s12 + $0x2] sm:$0x3] %vm3038, %v3001
    %v3074 = vld [vmem:[%s1] sm:$0x3]
    %3075 = vset.pattern.permute.xlu0 0
    %3076 = vperm.xlu0 %3075, %v3074
    %v3077 = vpop.permute.xlu0 %3076
    %vm3078 = vcmp.eq.s32.totalorder %v3077, %v194
    %v3079 = vsel %vm3078, 1, 0
    %v3080 = vcvt.s32.f32 %v3079
    %3081 = vset.pattern.permute.xlu0 1
    %3082 = vperm.xlu0 %3081, %v3074
    %v3083 = vpop.permute.xlu0 %3082
    %vm3084 = vcmp.eq.s32.totalorder %v3083, %v194
    %v3085 = vsel %vm3084, 1, 0
    %v3086 = vcvt.s32.f32 %v3085
    %3087 = vset.pattern.permute.xlu0 2
    %3088 = vperm.xlu0 %3087, %v3074
    %v3089 = vpop.permute.xlu0 %3088
    %vm3090 = vcmp.eq.s32.totalorder %v3089, %v194
    %v3091 = vsel %vm3090, 1, 0
    %v3092 = vcvt.s32.f32 %v3091
    %3093 = vset.pattern.permute.xlu0 3
    %3094 = vperm.xlu0 %3093, %v3074
    %v3095 = vpop.permute.xlu0 %3094
    %vm3096 = vcmp.eq.s32.totalorder %v3095, %v194
    %v3097 = vsel %vm3096, 1, 0
    %v3098 = vcvt.s32.f32 %v3097
    %3099 = vset.pattern.permute.xlu0 4
    %3100 = vperm.xlu0 %3099, %v3074
    %v3101 = vpop.permute.xlu0 %3100
    %vm3102 = vcmp.eq.s32.totalorder %v3101, %v194
    %v3103 = vsel %vm3102, 1, 0
    %v3104 = vcvt.s32.f32 %v3103
    %3105 = vset.pattern.permute.xlu0 5
    %3106 = vperm.xlu0 %3105, %v3074
    %v3107 = vpop.permute.xlu0 %3106
    %vm3108 = vcmp.eq.s32.totalorder %v3107, %v194
    %v3109 = vsel %vm3108, 1, 0
    %v3110 = vcvt.s32.f32 %v3109
    %3111 = vset.pattern.permute.xlu0 6
    %3112 = vperm.xlu0 %3111, %v3074
    %v3113 = vpop.permute.xlu0 %3112
    %vm3114 = vcmp.eq.s32.totalorder %v3113, %v194
    %v3115 = vsel %vm3114, 1, 0
    %v3116 = vcvt.s32.f32 %v3115
    %3117 = vset.pattern.permute.xlu0 7
    %3118 = vperm.xlu0 %3117, %v3074
    %v3119 = vpop.permute.xlu0 %3118
    %vm3120 = vcmp.eq.s32.totalorder %v3119, %v194
    %v3121 = vsel %vm3120, 1, 0
    %v3122 = vcvt.s32.f32 %v3121
    %v3123 = vld [vmem:[%s5] sm:$0xff]
    %v3124 = vld [vmem:[%s5 + $0x8] sm:$0xff]
    %v3125 = vld [vmem:[%s5 + $0x10] sm:$0xff]
    %v3126 = vld [vmem:[%s5 + $0x18] sm:$0xff]
    %3127 = vmatprep.subr.mxu0 0.0
    %3128 = vmatpush1.msra.mxu0 %v3123
    %3129 = vmatprep.subr.mxu0 0.0
    %3130 = vmatpush1.msra.mxu0 %v3124
    %3131 = vmatprep.subr.mxu0 0.0
    %3132 = vmatpush1.msra.mxu0 %v3125
    %3133 = vmatprep.subr.mxu0 0.0
    %3134 = vmatpush1.msra.mxu0 %v3126
    %3135 = vmatprep.subr.mxu0 0.0
    %3136 = vmatpush1.msra.mxu0 0.0
    %3137 = vmatprep.subr.mxu0 0.0
    %3138 = vmatpush1.msra.mxu0 0.0
    %3139 = vmatprep.subr.mxu0 0.0
    %3140 = vmatpush1.msra.mxu0 0.0
    %3141 = vmatprep.subr.mxu0 0.0
    %3142 = vmatpush1.msra.mxu0 0.0
    %3143 = vmatprep.subr.mxu0 0.0
    %3144 = vmatpush1.msra.mxu0 0.0
    %3145 = vmatprep.subr.mxu0 0.0
    %3146 = vmatpush1.msra.mxu0 0.0
    %3147 = vmatprep.subr.mxu0 0.0
    %3148 = vmatpush1.msra.mxu0 0.0
    %3149 = vmatprep.subr.mxu0 0.0
    %3150 = vmatpush1.msra.mxu0 0.0
    %3151 = vmatprep.subr.mxu0 0.0
    %3152 = vmatpush1.msra.mxu0 0.0
    %3153 = vmatprep.subr.mxu0 0.0
    %3154 = vmatpush1.msra.mxu0 0.0
    %3155 = vmatprep.subr.mxu0 0.0
    %3156 = vmatpush1.msra.mxu0 0.0
    %3157 = vmatprep.subr.mxu0 0.0
    %3158 = vmatpush1.msra.mxu0 0.0
    %3159 = vmatprep.subr.mxu0 0.0
    %3160 = vmatpush1.msra.mxu0 0.0
    %3161 = vmatprep.subr.mxu0 0.0
    %3162 = vmatpush1.msra.mxu0 0.0
    %3163 = vmatprep.subr.mxu0 0.0
    %3164 = vmatpush1.msra.mxu0 0.0
    %3165 = vmatprep.subr.mxu0 0.0
    %3166 = vmatpush1.msra.mxu0 0.0
    %3167 = vmatprep.subr.mxu0 0.0
    %3168 = vmatpush1.msra.mxu0 0.0
    %3169 = vmatprep.subr.mxu0 0.0
    %3170 = vmatpush1.msra.mxu0 0.0
    %3171 = vmatprep.subr.mxu0 0.0
    %3172 = vmatpush1.msra.mxu0 0.0
    %3173 = vmatprep.subr.mxu0 0.0
    %3174 = vmatpush1.msra.mxu0 0.0
    %3175 = vmatprep.subr.mxu0 0.0
    %3176 = vmatpush1.msra.mxu0 0.0
    %3177 = vmatprep.subr.mxu0 0.0
    %3178 = vmatpush1.msra.mxu0 0.0
    %3179 = vmatprep.subr.mxu0 0.0
    %3180 = vmatpush1.msra.mxu0 0.0
    %3181 = vmatprep.subr.mxu0 0.0
    %3182 = vmatpush1.msra.mxu0 0.0
    %3183 = vmatprep.subr.mxu0 0.0
    %3184 = vmatpush1.msra.mxu0 0.0
    %3185 = vmatprep.subr.mxu0 0.0
    %3186 = vmatpush1.msra.mxu0 0.0
    %3187 = vmatprep.subr.mxu0 0.0
    %3188 = vmatpush1.msra.mxu0 0.0
    %3189 = vmatprep.subr.mxu0 0.0
    %3190 = vmatpush1.msra.mxu0 0.0
    %3191 = vmatprep.mubr.f32.mxu0 0.0
    %3192 = vmatmul.mubr.f32.gmra.mrb[0].mxu0 %v249
    %v3193 = vpop.f32.mrb[0].mxu0
    %v3194 = vadd.f32 0.0, %v3193
    %v3195 = vpop.f32.mrb[0].mxu0
    %3196 = vdwg.mxu0
    %v3198 = vsel %vm321, %v3080, 0
    %3200 = vmatprep.subr.mxu0 0.0
    %3201 = vmatpush1.msra.mxu0 %v174
    %3202 = vmatprep.subr.mxu0 0.0
    %3203 = vmatpush1.msra.mxu0 %v179
    %3204 = vmatprep.subr.mxu0 0.0
    %3205 = vmatpush1.msra.mxu0 %v184
    %3206 = vmatprep.subr.mxu0 0.0
    %3207 = vmatpush1.msra.mxu0 %v327
    %3208 = vmatprep.subr.mxu0 0.0
    %3209 = vmatpush1.msra.mxu0 0.0
    %3210 = vmatprep.subr.mxu0 0.0
    %3211 = vmatpush1.msra.mxu0 0.0
    %3212 = vmatprep.subr.mxu0 0.0
    %3213 = vmatpush1.msra.mxu0 0.0
    %3214 = vmatprep.subr.mxu0 0.0
    %3215 = vmatpush1.msra.mxu0 0.0
    %3216 = vmatprep.subr.mxu0 0.0
    %3217 = vmatpush1.msra.mxu0 0.0
    %3218 = vmatprep.subr.mxu0 0.0
    %3219 = vmatpush1.msra.mxu0 0.0
    %3220 = vmatprep.subr.mxu0 0.0
    %3221 = vmatpush1.msra.mxu0 0.0
    %3222 = vmatprep.subr.mxu0 0.0
    %3223 = vmatpush1.msra.mxu0 0.0
    %3224 = vmatprep.subr.mxu0 0.0
    %3225 = vmatpush1.msra.mxu0 0.0
    %3226 = vmatprep.subr.mxu0 0.0
    %3227 = vmatpush1.msra.mxu0 0.0
    %3228 = vmatprep.subr.mxu0 0.0
    %3229 = vmatpush1.msra.mxu0 0.0
    %3230 = vmatprep.subr.mxu0 0.0
    %3231 = vmatpush1.msra.mxu0 0.0
    %3232 = vmatprep.subr.mxu0 0.0
    %3233 = vmatpush1.msra.mxu0 0.0
    %3234 = vmatprep.subr.mxu0 0.0
    %3235 = vmatpush1.msra.mxu0 0.0
    %3236 = vmatprep.subr.mxu0 0.0
    %3237 = vmatpush1.msra.mxu0 0.0
    %3238 = vmatprep.subr.mxu0 0.0
    %3239 = vmatpush1.msra.mxu0 0.0
    %3240 = vmatprep.subr.mxu0 0.0
    %3241 = vmatpush1.msra.mxu0 0.0
    %3242 = vmatprep.subr.mxu0 0.0
    %3243 = vmatpush1.msra.mxu0 0.0
    %3244 = vmatprep.subr.mxu0 0.0
    %3245 = vmatpush1.msra.mxu0 0.0
    %3246 = vmatprep.subr.mxu0 0.0
    %3247 = vmatpush1.msra.mxu0 0.0
    %3248 = vmatprep.subr.mxu0 0.0
    %3249 = vmatpush1.msra.mxu0 0.0
    %3250 = vmatprep.subr.mxu0 0.0
    %3251 = vmatpush1.msra.mxu0 0.0
    %3252 = vmatprep.subr.mxu0 0.0
    %3253 = vmatpush1.msra.mxu0 0.0
    %3254 = vmatprep.subr.mxu0 0.0
    %3255 = vmatpush1.msra.mxu0 0.0
    %3256 = vmatprep.subr.mxu0 0.0
    %3257 = vmatpush1.msra.mxu0 0.0
    %3258 = vmatprep.subr.mxu0 0.0
    %3259 = vmatpush1.msra.mxu0 0.0
    %3260 = vmatprep.subr.mxu0 0.0
    %3261 = vmatpush1.msra.mxu0 0.0
    %3262 = vmatprep.subr.mxu0 0.0
    %3263 = vmatpush1.msra.mxu0 0.0
    %3264 = vmatprep.mubr.f32.mxu0 0.0
    %3265 = vmatmul.mubr.f32.gmra.mrb[0].mxu0 %v3198
    %v3266 = vpop.f32.mrb[0].mxu0
    %v3267 = vadd.f32 %v3194, %v3266
    %v3268 = vpop.f32.mrb[0].mxu0
    %3269 = vdwg.mxu0
    %v3270 = vxor.u32 %v3267, 2147483648
    %v3271 = vmul.f32 %v3270, 1.442695
    %v3272 = vpow.pop %v3271
    %v3273 = vadd.f32 %v3272, 1.0
    %v3274 = vrcp.pop %v3273
    %v3275 = vmul.f32 1.0, %v3274
    %v3276 = vtanh.pop %v3267
    %v3277 = vmul.f32 %v3275, 0.0
    %3279 = vrot.lane.b32.xlu0 %v3276, 64
    %v3280 = vpop.permute.xlu0 %3279
    %v3282 = vmul.f32 %v3275, %v3280
    %3284 = vrot.lane.b32.xlu0 %v3282, 32
    %v3285 = vpop.permute.xlu0 %3284
    %v3287 = vadd.f32 %v3277, %v3285
    %v3288 = vtanh.pop %v3287
    %3290 = vrot.lane.b32.xlu0 %v3288, 64
    %v3291 = vpop.permute.xlu0 %3290
    %v3293 = vmul.f32 %v3275, %v3291
    %3295 = vrot.lane.b32.xlu0 %v3293, 32
    %v3296 = vpop.permute.xlu0 %3295
    %v3297 = vsel %vm247, %v3296, 0
    %3299 = vmatprep.subr.mxu0 0.0
    %3300 = vmatpush1.msra.mxu0 %v3123
    %3301 = vmatprep.subr.mxu0 0.0
    %3302 = vmatpush1.msra.mxu0 %v3124
    %3303 = vmatprep.subr.mxu0 0.0
    %3304 = vmatpush1.msra.mxu0 %v3125
    %3305 = vmatprep.subr.mxu0 0.0
    %3306 = vmatpush1.msra.mxu0 %v3126
    %3307 = vmatprep.subr.mxu0 0.0
    %3308 = vmatpush1.msra.mxu0 0.0
    %3309 = vmatprep.subr.mxu0 0.0
    %3310 = vmatpush1.msra.mxu0 0.0
    %3311 = vmatprep.subr.mxu0 0.0
    %3312 = vmatpush1.msra.mxu0 0.0
    %3313 = vmatprep.subr.mxu0 0.0
    %3314 = vmatpush1.msra.mxu0 0.0
    %3315 = vmatprep.subr.mxu0 0.0
    %3316 = vmatpush1.msra.mxu0 0.0
    %3317 = vmatprep.subr.mxu0 0.0
    %3318 = vmatpush1.msra.mxu0 0.0
    %3319 = vmatprep.subr.mxu0 0.0
    %3320 = vmatpush1.msra.mxu0 0.0
    %3321 = vmatprep.subr.mxu0 0.0
    %3322 = vmatpush1.msra.mxu0 0.0
    %3323 = vmatprep.subr.mxu0 0.0
    %3324 = vmatpush1.msra.mxu0 0.0
    %3325 = vmatprep.subr.mxu0 0.0
    %3326 = vmatpush1.msra.mxu0 0.0
    %3327 = vmatprep.subr.mxu0 0.0
    %3328 = vmatpush1.msra.mxu0 0.0
    %3329 = vmatprep.subr.mxu0 0.0
    %3330 = vmatpush1.msra.mxu0 0.0
    %3331 = vmatprep.subr.mxu0 0.0
    %3332 = vmatpush1.msra.mxu0 0.0
    %3333 = vmatprep.subr.mxu0 0.0
    %3334 = vmatpush1.msra.mxu0 0.0
    %3335 = vmatprep.subr.mxu0 0.0
    %3336 = vmatpush1.msra.mxu0 0.0
    %3337 = vmatprep.subr.mxu0 0.0
    %3338 = vmatpush1.msra.mxu0 0.0
    %3339 = vmatprep.subr.mxu0 0.0
    %3340 = vmatpush1.msra.mxu0 0.0
    %3341 = vmatprep.subr.mxu0 0.0
    %3342 = vmatpush1.msra.mxu0 0.0
    %3343 = vmatprep.subr.mxu0 0.0
    %3344 = vmatpush1.msra.mxu0 0.0
    %3345 = vmatprep.subr.mxu0 0.0
    %3346 = vmatpush1.msra.mxu0 0.0
    %3347 = vmatprep.subr.mxu0 0.0
    %3348 = vmatpush1.msra.mxu0 0.0
    %3349 = vmatprep.subr.mxu0 0.0
    %3350 = vmatpush1.msra.mxu0 0.0
    %3351 = vmatprep.subr.mxu0 0.0
    %3352 = vmatpush1.msra.mxu0 0.0
    %3353 = vmatprep.subr.mxu0 0.0
    %3354 = vmatpush1.msra.mxu0 0.0
    %3355 = vmatprep.subr.mxu0 0.0
    %3356 = vmatpush1.msra.mxu0 0.0
    %3357 = vmatprep.subr.mxu0 0.0
    %3358 = vmatpush1.msra.mxu0 0.0
    %3359 = vmatprep.subr.mxu0 0.0
    %3360 = vmatpush1.msra.mxu0 0.0
    %3361 = vmatprep.subr.mxu0 0.0
    %3362 = vmatpush1.msra.mxu0 0.0
    %3363 = vmatprep.mubr.f32.mxu0 0.0
    %3364 = vmatmul.mubr.f32.gmra.mrb[0].mxu0 %v3297
    %v3365 = vpop.f32.mrb[0].mxu0
    %v3366 = vadd.f32 0.0, %v3365
    %v3367 = vpop.f32.mrb[0].mxu0
    %3368 = vdwg.mxu0
    %v3370 = vsel %vm321, %v3086, 0
    %3372 = vmatprep.subr.mxu0 0.0
    %3373 = vmatpush1.msra.mxu0 %v174
    %3374 = vmatprep.subr.mxu0 0.0
    %3375 = vmatpush1.msra.mxu0 %v179
    %3376 = vmatprep.subr.mxu0 0.0
    %3377 = vmatpush1.msra.mxu0 %v184
    %3378 = vmatprep.subr.mxu0 0.0
    %3379 = vmatpush1.msra.mxu0 %v327
    %3380 = vmatprep.subr.mxu0 0.0
    %3381 = vmatpush1.msra.mxu0 0.0
    %3382 = vmatprep.subr.mxu0 0.0
    %3383 = vmatpush1.msra.mxu0 0.0
    %3384 = vmatprep.subr.mxu0 0.0
    %3385 = vmatpush1.msra.mxu0 0.0
    %3386 = vmatprep.subr.mxu0 0.0
    %3387 = vmatpush1.msra.mxu0 0.0
    %3388 = vmatprep.subr.mxu0 0.0
    %3389 = vmatpush1.msra.mxu0 0.0
    %3390 = vmatprep.subr.mxu0 0.0
    %3391 = vmatpush1.msra.mxu0 0.0
    %3392 = vmatprep.subr.mxu0 0.0
    %3393 = vmatpush1.msra.mxu0 0.0
    %3394 = vmatprep.subr.mxu0 0.0
    %3395 = vmatpush1.msra.mxu0 0.0
    %3396 = vmatprep.subr.mxu0 0.0
    %3397 = vmatpush1.msra.mxu0 0.0
    %3398 = vmatprep.subr.mxu0 0.0
    %3399 = vmatpush1.msra.mxu0 0.0
    %3400 = vmatprep.subr.mxu0 0.0
    %3401 = vmatpush1.msra.mxu0 0.0
    %3402 = vmatprep.subr.mxu0 0.0
    %3403 = vmatpush1.msra.mxu0 0.0
    %3404 = vmatprep.subr.mxu0 0.0
    %3405 = vmatpush1.msra.mxu0 0.0
    %3406 = vmatprep.subr.mxu0 0.0
    %3407 = vmatpush1.msra.mxu0 0.0
    %3408 = vmatprep.subr.mxu0 0.0
    %3409 = vmatpush1.msra.mxu0 0.0
    %3410 = vmatprep.subr.mxu0 0.0
    %3411 = vmatpush1.msra.mxu0 0.0
    %3412 = vmatprep.subr.mxu0 0.0
    %3413 = vmatpush1.msra.mxu0 0.0
    %3414 = vmatprep.subr.mxu0 0.0
    %3415 = vmatpush1.msra.mxu0 0.0
    %3416 = vmatprep.subr.mxu0 0.0
    %3417 = vmatpush1.msra.mxu0 0.0
    %3418 = vmatprep.subr.mxu0 0.0
    %3419 = vmatpush1.msra.mxu0 0.0
    %3420 = vmatprep.subr.mxu0 0.0
    %3421 = vmatpush1.msra.mxu0 0.0
    %3422 = vmatprep.subr.mxu0 0.0
    %3423 = vmatpush1.msra.mxu0 0.0
    %3424 = vmatprep.subr.mxu0 0.0
    %3425 = vmatpush1.msra.mxu0 0.0
    %3426 = vmatprep.subr.mxu0 0.0
    %3427 = vmatpush1.msra.mxu0 0.0
    %3428 = vmatprep.subr.mxu0 0.0
    %3429 = vmatpush1.msra.mxu0 0.0
    %3430 = vmatprep.subr.mxu0 0.0
    %3431 = vmatpush1.msra.mxu0 0.0
    %3432 = vmatprep.subr.mxu0 0.0
    %3433 = vmatpush1.msra.mxu0 0.0
    %3434 = vmatprep.subr.mxu0 0.0
    %3435 = vmatpush1.msra.mxu0 0.0
    %3436 = vmatprep.mubr.f32.mxu0 0.0
    %3437 = vmatmul.mubr.f32.gmra.mrb[0].mxu0 %v3370
    %v3438 = vpop.f32.mrb[0].mxu0
    %v3439 = vadd.f32 %v3366, %v3438
    %v3440 = vpop.f32.mrb[0].mxu0
    %3441 = vdwg.mxu0
    %v3442 = vxor.u32 %v3439, 2147483648
    %v3443 = vmul.f32 %v3442, 1.442695
    %v3444 = vpow.pop %v3443
    %v3445 = vadd.f32 %v3444, 1.0
    %v3446 = vrcp.pop %v3445
    %v3447 = vmul.f32 1.0, %v3446
    %v3448 = vtanh.pop %v3439
    %v3449 = vmul.f32 %v3447, %v3287
    %3451 = vrot.lane.b32.xlu0 %v3448, 64
    %v3452 = vpop.permute.xlu0 %3451
    %v3454 = vmul.f32 %v3447, %v3452
    %3456 = vrot.lane.b32.xlu0 %v3454, 32
    %v3457 = vpop.permute.xlu0 %3456
    %v3459 = vadd.f32 %v3449, %v3457
    %v3460 = vtanh.pop %v3459
    %3462 = vrot.lane.b32.xlu0 %v3460, 64
    %v3463 = vpop.permute.xlu0 %3462
    %v3465 = vmul.f32 %v3447, %v3463
    %3467 = vrot.lane.b32.xlu0 %v3465, 32
    %v3468 = vpop.permute.xlu0 %3467
    %v3469 = vsel %vm247, %v3468, 0
    %3471 = vmatprep.subr.mxu0 0.0
    %3472 = vmatpush1.msra.mxu0 %v3123
    %3473 = vmatprep.subr.mxu0 0.0
    %3474 = vmatpush1.msra.mxu0 %v3124
    %3475 = vmatprep.subr.mxu0 0.0
    %3476 = vmatpush1.msra.mxu0 %v3125
    %3477 = vmatprep.subr.mxu0 0.0
    %3478 = vmatpush1.msra.mxu0 %v3126
    %3479 = vmatprep.subr.mxu0 0.0
    %3480 = vmatpush1.msra.mxu0 0.0
    %3481 = vmatprep.subr.mxu0 0.0
    %3482 = vmatpush1.msra.mxu0 0.0
    %3483 = vmatprep.subr.mxu0 0.0
    %3484 = vmatpush1.msra.mxu0 0.0
    %3485 = vmatprep.subr.mxu0 0.0
    %3486 = vmatpush1.msra.mxu0 0.0
    %3487 = vmatprep.subr.mxu0 0.0
    %3488 = vmatpush1.msra.mxu0 0.0
    %3489 = vmatprep.subr.mxu0 0.0
    %3490 = vmatpush1.msra.mxu0 0.0
    %3491 = vmatprep.subr.mxu0 0.0
    %3492 = vmatpush1.msra.mxu0 0.0
    %3493 = vmatprep.subr.mxu0 0.0
    %3494 = vmatpush1.msra.mxu0 0.0
    %3495 = vmatprep.subr.mxu0 0.0
    %3496 = vmatpush1.msra.mxu0 0.0
    %3497 = vmatprep.subr.mxu0 0.0
    %3498 = vmatpush1.msra.mxu0 0.0
    %3499 = vmatprep.subr.mxu0 0.0
    %3500 = vmatpush1.msra.mxu0 0.0
    %3501 = vmatprep.subr.mxu0 0.0
    %3502 = vmatpush1.msra.mxu0 0.0
    %3503 = vmatprep.subr.mxu0 0.0
    %3504 = vmatpush1.msra.mxu0 0.0
    %3505 = vmatprep.subr.mxu0 0.0
    %3506 = vmatpush1.msra.mxu0 0.0
    %3507 = vmatprep.subr.mxu0 0.0
    %3508 = vmatpush1.msra.mxu0 0.0
    %3509 = vmatprep.subr.mxu0 0.0
    %3510 = vmatpush1.msra.mxu0 0.0
    %3511 = vmatprep.subr.mxu0 0.0
    %3512 = vmatpush1.msra.mxu0 0.0
    %3513 = vmatprep.subr.mxu0 0.0
    %3514 = vmatpush1.msra.mxu0 0.0
    %3515 = vmatprep.subr.mxu0 0.0
    %3516 = vmatpush1.msra.mxu0 0.0
    %3517 = vmatprep.subr.mxu0 0.0
    %3518 = vmatpush1.msra.mxu0 0.0
    %3519 = vmatprep.subr.mxu0 0.0
    %3520 = vmatpush1.msra.mxu0 0.0
    %3521 = vmatprep.subr.mxu0 0.0
    %3522 = vmatpush1.msra.mxu0 0.0
    %3523 = vmatprep.subr.mxu0 0.0
    %3524 = vmatpush1.msra.mxu0 0.0
    %3525 = vmatprep.subr.mxu0 0.0
    %3526 = vmatpush1.msra.mxu0 0.0
    %3527 = vmatprep.subr.mxu0 0.0
    %3528 = vmatpush1.msra.mxu0 0.0
    %3529 = vmatprep.subr.mxu0 0.0
    %3530 = vmatpush1.msra.mxu0 0.0
    %3531 = vmatprep.subr.mxu0 0.0
    %3532 = vmatpush1.msra.mxu0 0.0
    %3533 = vmatprep.subr.mxu0 0.0
    %3534 = vmatpush1.msra.mxu0 0.0
    %3535 = vmatprep.mubr.f32.mxu0 0.0
    %3536 = vmatmul.mubr.f32.gmra.mrb[0].mxu0 %v3469
    %v3537 = vpop.f32.mrb[0].mxu0
    %v3538 = vadd.f32 0.0, %v3537
    %v3539 = vpop.f32.mrb[0].mxu0
    %3540 = vdwg.mxu0
    %v3542 = vsel %vm321, %v3092, 0
    %3544 = vmatprep.subr.mxu0 0.0
    %3545 = vmatpush1.msra.mxu0 %v174
    %3546 = vmatprep.subr.mxu0 0.0
    %3547 = vmatpush1.msra.mxu0 %v179
    %3548 = vmatprep.subr.mxu0 0.0
    %3549 = vmatpush1.msra.mxu0 %v184
    %3550 = vmatprep.subr.mxu0 0.0
    %3551 = vmatpush1.msra.mxu0 %v327
    %3552 = vmatprep.subr.mxu0 0.0
    %3553 = vmatpush1.msra.mxu0 0.0
    %3554 = vmatprep.subr.mxu0 0.0
    %3555 = vmatpush1.msra.mxu0 0.0
    %3556 = vmatprep.subr.mxu0 0.0
    %3557 = vmatpush1.msra.mxu0 0.0
    %3558 = vmatprep.subr.mxu0 0.0
    %3559 = vmatpush1.msra.mxu0 0.0
    %3560 = vmatprep.subr.mxu0 0.0
    %3561 = vmatpush1.msra.mxu0 0.0
    %3562 = vmatprep.subr.mxu0 0.0
    %3563 = vmatpush1.msra.mxu0 0.0
    %3564 = vmatprep.subr.mxu0 0.0
    %3565 = vmatpush1.msra.mxu0 0.0
    %3566 = vmatprep.subr.mxu0 0.0
    %3567 = vmatpush1.msra.mxu0 0.0
    %3568 = vmatprep.subr.mxu0 0.0
    %3569 = vmatpush1.msra.mxu0 0.0
    %3570 = vmatprep.subr.mxu0 0.0
    %3571 = vmatpush1.msra.mxu0 0.0
    %3572 = vmatprep.subr.mxu0 0.0
    %3573 = vmatpush1.msra.mxu0 0.0
    %3574 = vmatprep.subr.mxu0 0.0
    %3575 = vmatpush1.msra.mxu0 0.0
    %3576 = vmatprep.subr.mxu0 0.0
    %3577 = vmatpush1.msra.mxu0 0.0
    %3578 = vmatprep.subr.mxu0 0.0
    %3579 = vmatpush1.msra.mxu0 0.0
    %3580 = vmatprep.subr.mxu0 0.0
    %3581 = vmatpush1.msra.mxu0 0.0
    %3582 = vmatprep.subr.mxu0 0.0
    %3583 = vmatpush1.msra.mxu0 0.0
    %3584 = vmatprep.subr.mxu0 0.0
    %3585 = vmatpush1.msra.mxu0 0.0
    %3586 = vmatprep.subr.mxu0 0.0
    %3587 = vmatpush1.msra.mxu0 0.0
    %3588 = vmatprep.subr.mxu0 0.0
    %3589 = vmatpush1.msra.mxu0 0.0
    %3590 = vmatprep.subr.mxu0 0.0
    %3591 = vmatpush1.msra.mxu0 0.0
    %3592 = vmatprep.subr.mxu0 0.0
    %3593 = vmatpush1.msra.mxu0 0.0
    %3594 = vmatprep.subr.mxu0 0.0
    %3595 = vmatpush1.msra.mxu0 0.0
    %3596 = vmatprep.subr.mxu0 0.0
    %3597 = vmatpush1.msra.mxu0 0.0
    %3598 = vmatprep.subr.mxu0 0.0
    %3599 = vmatpush1.msra.mxu0 0.0
    %3600 = vmatprep.subr.mxu0 0.0
    %3601 = vmatpush1.msra.mxu0 0.0
    %3602 = vmatprep.subr.mxu0 0.0
    %3603 = vmatpush1.msra.mxu0 0.0
    %3604 = vmatprep.subr.mxu0 0.0
    %3605 = vmatpush1.msra.mxu0 0.0
    %3606 = vmatprep.subr.mxu0 0.0
    %3607 = vmatpush1.msra.mxu0 0.0
    %3608 = vmatprep.mubr.f32.mxu0 0.0
    %3609 = vmatmul.mubr.f32.gmra.mrb[0].mxu0 %v3542
    %v3610 = vpop.f32.mrb[0].mxu0
    %v3611 = vadd.f32 %v3538, %v3610
    %v3612 = vpop.f32.mrb[0].mxu0
    %3613 = vdwg.mxu0
    %v3614 = vxor.u32 %v3611, 2147483648
    %v3615 = vmul.f32 %v3614, 1.442695
    %v3616 = vpow.pop %v3615
    %v3617 = vadd.f32 %v3616, 1.0
    %v3618 = vrcp.pop %v3617
    %v3619 = vmul.f32 1.0, %v3618
    %v3620 = vtanh.pop %v3611
    %v3621 = vmul.f32 %v3619, %v3459
    %3623 = vrot.lane.b32.xlu0 %v3620, 64
    %v3624 = vpop.permute.xlu0 %3623
    %v3626 = vmul.f32 %v3619, %v3624
    %3628 = vrot.lane.b32.xlu0 %v3626, 32
    %v3629 = vpop.permute.xlu0 %3628
    %v3631 = vadd.f32 %v3621, %v3629
    %v3632 = vtanh.pop %v3631
    %3634 = vrot.lane.b32.xlu0 %v3632, 64
    %v3635 = vpop.permute.xlu0 %3634
    %v3637 = vmul.f32 %v3619, %v3635
    %3639 = vrot.lane.b32.xlu0 %v3637, 32
    %v3640 = vpop.permute.xlu0 %3639
    %v3641 = vsel %vm247, %v3640, 0
    %3643 = vmatprep.subr.mxu0 0.0
    %3644 = vmatpush1.msra.mxu0 %v3123
    %3645 = vmatprep.subr.mxu0 0.0
    %3646 = vmatpush1.msra.mxu0 %v3124
    %3647 = vmatprep.subr.mxu0 0.0
    %3648 = vmatpush1.msra.mxu0 %v3125
    %3649 = vmatprep.subr.mxu0 0.0
    %3650 = vmatpush1.msra.mxu0 %v3126
    %3651 = vmatprep.subr.mxu0 0.0
    %3652 = vmatpush1.msra.mxu0 0.0
    %3653 = vmatprep.subr.mxu0 0.0
    %3654 = vmatpush1.msra.mxu0 0.0
    %3655 = vmatprep.subr.mxu0 0.0
    %3656 = vmatpush1.msra.mxu0 0.0
    %3657 = vmatprep.subr.mxu0 0.0
    %3658 = vmatpush1.msra.mxu0 0.0
    %3659 = vmatprep.subr.mxu0 0.0
    %3660 = vmatpush1.msra.mxu0 0.0
    %3661 = vmatprep.subr.mxu0 0.0
    %3662 = vmatpush1.msra.mxu0 0.0
    %3663 = vmatprep.subr.mxu0 0.0
    %3664 = vmatpush1.msra.mxu0 0.0
    %3665 = vmatprep.subr.mxu0 0.0
    %3666 = vmatpush1.msra.mxu0 0.0
    %3667 = vmatprep.subr.mxu0 0.0
    %3668 = vmatpush1.msra.mxu0 0.0
    %3669 = vmatprep.subr.mxu0 0.0
    %3670 = vmatpush1.msra.mxu0 0.0
    %3671 = vmatprep.subr.mxu0 0.0
    %3672 = vmatpush1.msra.mxu0 0.0
    %3673 = vmatprep.subr.mxu0 0.0
    %3674 = vmatpush1.msra.mxu0 0.0
    %3675 = vmatprep.subr.mxu0 0.0
    %3676 = vmatpush1.msra.mxu0 0.0
    %3677 = vmatprep.subr.mxu0 0.0
    %3678 = vmatpush1.msra.mxu0 0.0
    %3679 = vmatprep.subr.mxu0 0.0
    %3680 = vmatpush1.msra.mxu0 0.0
    %3681 = vmatprep.subr.mxu0 0.0
    %3682 = vmatpush1.msra.mxu0 0.0
    %3683 = vmatprep.subr.mxu0 0.0
    %3684 = vmatpush1.msra.mxu0 0.0
    %3685 = vmatprep.subr.mxu0 0.0
    %3686 = vmatpush1.msra.mxu0 0.0
    %3687 = vmatprep.subr.mxu0 0.0
    %3688 = vmatpush1.msra.mxu0 0.0
    %3689 = vmatprep.subr.mxu0 0.0
    %3690 = vmatpush1.msra.mxu0 0.0
    %3691 = vmatprep.subr.mxu0 0.0
    %3692 = vmatpush1.msra.mxu0 0.0
    %3693 = vmatprep.subr.mxu0 0.0
    %3694 = vmatpush1.msra.mxu0 0.0
    %3695 = vmatprep.subr.mxu0 0.0
    %3696 = vmatpush1.msra.mxu0 0.0
    %3697 = vmatprep.subr.mxu0 0.0
    %3698 = vmatpush1.msra.mxu0 0.0
    %3699 = vmatprep.subr.mxu0 0.0
    %3700 = vmatpush1.msra.mxu0 0.0
    %3701 = vmatprep.subr.mxu0 0.0
    %3702 = vmatpush1.msra.mxu0 0.0
    %3703 = vmatprep.subr.mxu0 0.0
    %3704 = vmatpush1.msra.mxu0 0.0
    %3705 = vmatprep.subr.mxu0 0.0
    %3706 = vmatpush1.msra.mxu0 0.0
    %3707 = vmatprep.mubr.f32.mxu0 0.0
    %3708 = vmatmul.mubr.f32.gmra.mrb[0].mxu0 %v3641
    %v3709 = vpop.f32.mrb[0].mxu0
    %v3710 = vadd.f32 0.0, %v3709
    %v3711 = vpop.f32.mrb[0].mxu0
    %3712 = vdwg.mxu0
    %v3714 = vsel %vm321, %v3098, 0
    %3716 = vmatprep.subr.mxu0 0.0
    %3717 = vmatpush1.msra.mxu0 %v174
    %3718 = vmatprep.subr.mxu0 0.0
    %3719 = vmatpush1.msra.mxu0 %v179
    %3720 = vmatprep.subr.mxu0 0.0
    %3721 = vmatpush1.msra.mxu0 %v184
    %3722 = vmatprep.subr.mxu0 0.0
    %3723 = vmatpush1.msra.mxu0 %v327
    %3724 = vmatprep.subr.mxu0 0.0
    %3725 = vmatpush1.msra.mxu0 0.0
    %3726 = vmatprep.subr.mxu0 0.0
    %3727 = vmatpush1.msra.mxu0 0.0
    %3728 = vmatprep.subr.mxu0 0.0
    %3729 = vmatpush1.msra.mxu0 0.0
    %3730 = vmatprep.subr.mxu0 0.0
    %3731 = vmatpush1.msra.mxu0 0.0
    %3732 = vmatprep.subr.mxu0 0.0
    %3733 = vmatpush1.msra.mxu0 0.0
    %3734 = vmatprep.subr.mxu0 0.0
    %3735 = vmatpush1.msra.mxu0 0.0
    %3736 = vmatprep.subr.mxu0 0.0
    %3737 = vmatpush1.msra.mxu0 0.0
    %3738 = vmatprep.subr.mxu0 0.0
    %3739 = vmatpush1.msra.mxu0 0.0
    %3740 = vmatprep.subr.mxu0 0.0
    %3741 = vmatpush1.msra.mxu0 0.0
    %3742 = vmatprep.subr.mxu0 0.0
    %3743 = vmatpush1.msra.mxu0 0.0
    %3744 = vmatprep.subr.mxu0 0.0
    %3745 = vmatpush1.msra.mxu0 0.0
    %3746 = vmatprep.subr.mxu0 0.0
    %3747 = vmatpush1.msra.mxu0 0.0
    %3748 = vmatprep.subr.mxu0 0.0
    %3749 = vmatpush1.msra.mxu0 0.0
    %3750 = vmatprep.subr.mxu0 0.0
    %3751 = vmatpush1.msra.mxu0 0.0
    %3752 = vmatprep.subr.mxu0 0.0
    %3753 = vmatpush1.msra.mxu0 0.0
    %3754 = vmatprep.subr.mxu0 0.0
    %3755 = vmatpush1.msra.mxu0 0.0
    %3756 = vmatprep.subr.mxu0 0.0
    %3757 = vmatpush1.msra.mxu0 0.0
    %3758 = vmatprep.subr.mxu0 0.0
    %3759 = vmatpush1.msra.mxu0 0.0
    %3760 = vmatprep.subr.mxu0 0.0
    %3761 = vmatpush1.msra.mxu0 0.0
    %3762 = vmatprep.subr.mxu0 0.0
    %3763 = vmatpush1.msra.mxu0 0.0
    %3764 = vmatprep.subr.mxu0 0.0
    %3765 = vmatpush1.msra.mxu0 0.0
    %3766 = vmatprep.subr.mxu0 0.0
    %3767 = vmatpush1.msra.mxu0 0.0
    %3768 = vmatprep.subr.mxu0 0.0
    %3769 = vmatpush1.msra.mxu0 0.0
    %3770 = vmatprep.subr.mxu0 0.0
    %3771 = vmatpush1.msra.mxu0 0.0
    %3772 = vmatprep.subr.mxu0 0.0
    %3773 = vmatpush1.msra.mxu0 0.0
    %3774 = vmatprep.subr.mxu0 0.0
    %3775 = vmatpush1.msra.mxu0 0.0
    %3776 = vmatprep.subr.mxu0 0.0
    %3777 = vmatpush1.msra.mxu0 0.0
    %3778 = vmatprep.subr.mxu0 0.0
    %3779 = vmatpush1.msra.mxu0 0.0
    %3780 = vmatprep.mubr.f32.mxu0 0.0
    %3781 = vmatmul.mubr.f32.gmra.mrb[0].mxu0 %v3714
    %v3782 = vpop.f32.mrb[0].mxu0
    %v3783 = vadd.f32 %v3710, %v3782
    %v3784 = vpop.f32.mrb[0].mxu0
    %3785 = vdwg.mxu0
    %v3786 = vxor.u32 %v3783, 2147483648
    %v3787 = vmul.f32 %v3786, 1.442695
    %v3788 = vpow.pop %v3787
    %v3789 = vadd.f32 %v3788, 1.0
    %v3790 = vrcp.pop %v3789
    %v3791 = vmul.f32 1.0, %v3790
    %v3792 = vtanh.pop %v3783
    %v3793 = vmul.f32 %v3791, %v3631
    %3795 = vrot.lane.b32.xlu0 %v3792, 64
    %v3796 = vpop.permute.xlu0 %3795
    %v3798 = vmul.f32 %v3791, %v3796
    %3800 = vrot.lane.b32.xlu0 %v3798, 32
    %v3801 = vpop.permute.xlu0 %3800
    %v3803 = vadd.f32 %v3793, %v3801
    %v3804 = vtanh.pop %v3803
    %3806 = vrot.lane.b32.xlu0 %v3804, 64
    %v3807 = vpop.permute.xlu0 %3806
    %v3809 = vmul.f32 %v3791, %v3807
    %3811 = vrot.lane.b32.xlu0 %v3809, 32
    %v3812 = vpop.permute.xlu0 %3811
    %v3813 = vsel %vm247, %v3812, 0
    %3815 = vmatprep.subr.mxu0 0.0
    %3816 = vmatpush1.msra.mxu0 %v3123
    %3817 = vmatprep.subr.mxu0 0.0
    %3818 = vmatpush1.msra.mxu0 %v3124
    %3819 = vmatprep.subr.mxu0 0.0
    %3820 = vmatpush1.msra.mxu0 %v3125
    %3821 = vmatprep.subr.mxu0 0.0
    %3822 = vmatpush1.msra.mxu0 %v3126
    %3823 = vmatprep.subr.mxu0 0.0
    %3824 = vmatpush1.msra.mxu0 0.0
    %3825 = vmatprep.subr.mxu0 0.0
    %3826 = vmatpush1.msra.mxu0 0.0
    %3827 = vmatprep.subr.mxu0 0.0
    %3828 = vmatpush1.msra.mxu0 0.0
    %3829 = vmatprep.subr.mxu0 0.0
    %3830 = vmatpush1.msra.mxu0 0.0
    %3831 = vmatprep.subr.mxu0 0.0
    %3832 = vmatpush1.msra.mxu0 0.0
    %3833 = vmatprep.subr.mxu0 0.0
    %3834 = vmatpush1.msra.mxu0 0.0
    %3835 = vmatprep.subr.mxu0 0.0
    %3836 = vmatpush1.msra.mxu0 0.0
    %3837 = vmatprep.subr.mxu0 0.0
    %3838 = vmatpush1.msra.mxu0 0.0
    %3839 = vmatprep.subr.mxu0 0.0
    %3840 = vmatpush1.msra.mxu0 0.0
    %3841 = vmatprep.subr.mxu0 0.0
    %3842 = vmatpush1.msra.mxu0 0.0
    %3843 = vmatprep.subr.mxu0 0.0
    %3844 = vmatpush1.msra.mxu0 0.0
    %3845 = vmatprep.subr.mxu0 0.0
    %3846 = vmatpush1.msra.mxu0 0.0
    %3847 = vmatprep.subr.mxu0 0.0
    %3848 = vmatpush1.msra.mxu0 0.0
    %3849 = vmatprep.subr.mxu0 0.0
    %3850 = vmatpush1.msra.mxu0 0.0
    %3851 = vmatprep.subr.mxu0 0.0
    %3852 = vmatpush1.msra.mxu0 0.0
    %3853 = vmatprep.subr.mxu0 0.0
    %3854 = vmatpush1.msra.mxu0 0.0
    %3855 = vmatprep.subr.mxu0 0.0
    %3856 = vmatpush1.msra.mxu0 0.0
    %3857 = vmatprep.subr.mxu0 0.0
    %3858 = vmatpush1.msra.mxu0 0.0
    %3859 = vmatprep.subr.mxu0 0.0
    %3860 = vmatpush1.msra.mxu0 0.0
    %3861 = vmatprep.subr.mxu0 0.0
    %3862 = vmatpush1.msra.mxu0 0.0
    %3863 = vmatprep.subr.mxu0 0.0
    %3864 = vmatpush1.msra.mxu0 0.0
    %3865 = vmatprep.subr.mxu0 0.0
    %3866 = vmatpush1.msra.mxu0 0.0
    %3867 = vmatprep.subr.mxu0 0.0
    %3868 = vmatpush1.msra.mxu0 0.0
    %3869 = vmatprep.subr.mxu0 0.0
    %3870 = vmatpush1.msra.mxu0 0.0
    %3871 = vmatprep.subr.mxu0 0.0
    %3872 = vmatpush1.msra.mxu0 0.0
    %3873 = vmatprep.subr.mxu0 0.0
    %3874 = vmatpush1.msra.mxu0 0.0
    %3875 = vmatprep.subr.mxu0 0.0
    %3876 = vmatpush1.msra.mxu0 0.0
    %3877 = vmatprep.subr.mxu0 0.0
    %3878 = vmatpush1.msra.mxu0 0.0
    %3879 = vmatprep.mubr.f32.mxu0 0.0
    %3880 = vmatmul.mubr.f32.gmra.mrb[0].mxu0 %v3813
    %v3881 = vpop.f32.mrb[0].mxu0
    %v3882 = vadd.f32 0.0, %v3881
    %v3883 = vpop.f32.mrb[0].mxu0
    %3884 = vdwg.mxu0
    %v3886 = vsel %vm321, %v3104, 0
    %3888 = vmatprep.subr.mxu0 0.0
    %3889 = vmatpush1.msra.mxu0 %v174
    %3890 = vmatprep.subr.mxu0 0.0
    %3891 = vmatpush1.msra.mxu0 %v179
    %3892 = vmatprep.subr.mxu0 0.0
    %3893 = vmatpush1.msra.mxu0 %v184
    %3894 = vmatprep.subr.mxu0 0.0
    %3895 = vmatpush1.msra.mxu0 %v327
    %3896 = vmatprep.subr.mxu0 0.0
    %3897 = vmatpush1.msra.mxu0 0.0
    %3898 = vmatprep.subr.mxu0 0.0
    %3899 = vmatpush1.msra.mxu0 0.0
    %3900 = vmatprep.subr.mxu0 0.0
    %3901 = vmatpush1.msra.mxu0 0.0
    %3902 = vmatprep.subr.mxu0 0.0
    %3903 = vmatpush1.msra.mxu0 0.0
    %3904 = vmatprep.subr.mxu0 0.0
    %3905 = vmatpush1.msra.mxu0 0.0
    %3906 = vmatprep.subr.mxu0 0.0
    %3907 = vmatpush1.msra.mxu0 0.0
    %3908 = vmatprep.subr.mxu0 0.0
    %3909 = vmatpush1.msra.mxu0 0.0
    %3910 = vmatprep.subr.mxu0 0.0
    %3911 = vmatpush1.msra.mxu0 0.0
    %3912 = vmatprep.subr.mxu0 0.0
    %3913 = vmatpush1.msra.mxu0 0.0
    %3914 = vmatprep.subr.mxu0 0.0
    %3915 = vmatpush1.msra.mxu0 0.0
    %3916 = vmatprep.subr.mxu0 0.0
    %3917 = vmatpush1.msra.mxu0 0.0
    %3918 = vmatprep.subr.mxu0 0.0
    %3919 = vmatpush1.msra.mxu0 0.0
    %3920 = vmatprep.subr.mxu0 0.0
    %3921 = vmatpush1.msra.mxu0 0.0
    %3922 = vmatprep.subr.mxu0 0.0
    %3923 = vmatpush1.msra.mxu0 0.0
    %3924 = vmatprep.subr.mxu0 0.0
    %3925 = vmatpush1.msra.mxu0 0.0
    %3926 = vmatprep.subr.mxu0 0.0
    %3927 = vmatpush1.msra.mxu0 0.0
    %3928 = vmatprep.subr.mxu0 0.0
    %3929 = vmatpush1.msra.mxu0 0.0
    %3930 = vmatprep.subr.mxu0 0.0
    %3931 = vmatpush1.msra.mxu0 0.0
    %3932 = vmatprep.subr.mxu0 0.0
    %3933 = vmatpush1.msra.mxu0 0.0
    %3934 = vmatprep.subr.mxu0 0.0
    %3935 = vmatpush1.msra.mxu0 0.0
    %3936 = vmatprep.subr.mxu0 0.0
    %3937 = vmatpush1.msra.mxu0 0.0
    %3938 = vmatprep.subr.mxu0 0.0
    %3939 = vmatpush1.msra.mxu0 0.0
    %3940 = vmatprep.subr.mxu0 0.0
    %3941 = vmatpush1.msra.mxu0 0.0
    %3942 = vmatprep.subr.mxu0 0.0
    %3943 = vmatpush1.msra.mxu0 0.0
    %3944 = vmatprep.subr.mxu0 0.0
    %3945 = vmatpush1.msra.mxu0 0.0
    %3946 = vmatprep.subr.mxu0 0.0
    %3947 = vmatpush1.msra.mxu0 0.0
    %3948 = vmatprep.subr.mxu0 0.0
    %3949 = vmatpush1.msra.mxu0 0.0
    %3950 = vmatprep.subr.mxu0 0.0
    %3951 = vmatpush1.msra.mxu0 0.0
    %3952 = vmatprep.mubr.f32.mxu0 0.0
    %3953 = vmatmul.mubr.f32.gmra.mrb[0].mxu0 %v3886
    %v3954 = vpop.f32.mrb[0].mxu0
    %v3955 = vadd.f32 %v3882, %v3954
    %v3956 = vpop.f32.mrb[0].mxu0
    %3957 = vdwg.mxu0
    %v3958 = vxor.u32 %v3955, 2147483648
    %v3959 = vmul.f32 %v3958, 1.442695
    %v3960 = vpow.pop %v3959
    %v3961 = vadd.f32 %v3960, 1.0
    %v3962 = vrcp.pop %v3961
    %v3963 = vmul.f32 1.0, %v3962
    %v3964 = vtanh.pop %v3955
    %v3965 = vmul.f32 %v3963, %v3803
    %3967 = vrot.lane.b32.xlu0 %v3964, 64
    %v3968 = vpop.permute.xlu0 %3967
    %v3970 = vmul.f32 %v3963, %v3968
    %3972 = vrot.lane.b32.xlu0 %v3970, 32
    %v3973 = vpop.permute.xlu0 %3972
    %v3975 = vadd.f32 %v3965, %v3973
    %v3976 = vtanh.pop %v3975
    %3978 = vrot.lane.b32.xlu0 %v3976, 64
    %v3979 = vpop.permute.xlu0 %3978
    %v3981 = vmul.f32 %v3963, %v3979
    %3983 = vrot.lane.b32.xlu0 %v3981, 32
    %v3984 = vpop.permute.xlu0 %3983
    %v3985 = vsel %vm247, %v3984, 0
    %3987 = vmatprep.subr.mxu0 0.0
    %3988 = vmatpush1.msra.mxu0 %v3123
    %3989 = vmatprep.subr.mxu0 0.0
    %3990 = vmatpush1.msra.mxu0 %v3124
    %3991 = vmatprep.subr.mxu0 0.0
    %3992 = vmatpush1.msra.mxu0 %v3125
    %3993 = vmatprep.subr.mxu0 0.0
    %3994 = vmatpush1.msra.mxu0 %v3126
    %3995 = vmatprep.subr.mxu0 0.0
    %3996 = vmatpush1.msra.mxu0 0.0
    %3997 = vmatprep.subr.mxu0 0.0
    %3998 = vmatpush1.msra.mxu0 0.0
    %3999 = vmatprep.subr.mxu0 0.0
    %4000 = vmatpush1.msra.mxu0 0.0
    %4001 = vmatprep.subr.mxu0 0.0
    %4002 = vmatpush1.msra.mxu0 0.0
    %4003 = vmatprep.subr.mxu0 0.0
    %4004 = vmatpush1.msra.mxu0 0.0
    %4005 = vmatprep.subr.mxu0 0.0
    %4006 = vmatpush1.msra.mxu0 0.0
    %4007 = vmatprep.subr.mxu0 0.0
    %4008 = vmatpush1.msra.mxu0 0.0
    %4009 = vmatprep.subr.mxu0 0.0
    %4010 = vmatpush1.msra.mxu0 0.0
    %4011 = vmatprep.subr.mxu0 0.0
    %4012 = vmatpush1.msra.mxu0 0.0
    %4013 = vmatprep.subr.mxu0 0.0
    %4014 = vmatpush1.msra.mxu0 0.0
    %4015 = vmatprep.subr.mxu0 0.0
    %4016 = vmatpush1.msra.mxu0 0.0
    %4017 = vmatprep.subr.mxu0 0.0
    %4018 = vmatpush1.msra.mxu0 0.0
    %4019 = vmatprep.subr.mxu0 0.0
    %4020 = vmatpush1.msra.mxu0 0.0
    %4021 = vmatprep.subr.mxu0 0.0
    %4022 = vmatpush1.msra.mxu0 0.0
    %4023 = vmatprep.subr.mxu0 0.0
    %4024 = vmatpush1.msra.mxu0 0.0
    %4025 = vmatprep.subr.mxu0 0.0
    %4026 = vmatpush1.msra.mxu0 0.0
    %4027 = vmatprep.subr.mxu0 0.0
    %4028 = vmatpush1.msra.mxu0 0.0
    %4029 = vmatprep.subr.mxu0 0.0
    %4030 = vmatpush1.msra.mxu0 0.0
    %4031 = vmatprep.subr.mxu0 0.0
    %4032 = vmatpush1.msra.mxu0 0.0
    %4033 = vmatprep.subr.mxu0 0.0
    %4034 = vmatpush1.msra.mxu0 0.0
    %4035 = vmatprep.subr.mxu0 0.0
    %4036 = vmatpush1.msra.mxu0 0.0
    %4037 = vmatprep.subr.mxu0 0.0
    %4038 = vmatpush1.msra.mxu0 0.0
    %4039 = vmatprep.subr.mxu0 0.0
    %4040 = vmatpush1.msra.mxu0 0.0
    %4041 = vmatprep.subr.mxu0 0.0
    %4042 = vmatpush1.msra.mxu0 0.0
    %4043 = vmatprep.subr.mxu0 0.0
    %4044 = vmatpush1.msra.mxu0 0.0
    %4045 = vmatprep.subr.mxu0 0.0
    %4046 = vmatpush1.msra.mxu0 0.0
    %4047 = vmatprep.subr.mxu0 0.0
    %4048 = vmatpush1.msra.mxu0 0.0
    %4049 = vmatprep.subr.mxu0 0.0
    %4050 = vmatpush1.msra.mxu0 0.0
    %4051 = vmatprep.mubr.f32.mxu0 0.0
    %4052 = vmatmul.mubr.f32.gmra.mrb[0].mxu0 %v3985
    %v4053 = vpop.f32.mrb[0].mxu0
    %v4054 = vadd.f32 0.0, %v4053
    %v4055 = vpop.f32.mrb[0].mxu0
    %4056 = vdwg.mxu0
    %v4058 = vsel %vm321, %v3110, 0
    %4060 = vmatprep.subr.mxu0 0.0
    %4061 = vmatpush1.msra.mxu0 %v174
    %4062 = vmatprep.subr.mxu0 0.0
    %4063 = vmatpush1.msra.mxu0 %v179
    %4064 = vmatprep.subr.mxu0 0.0
    %4065 = vmatpush1.msra.mxu0 %v184
    %4066 = vmatprep.subr.mxu0 0.0
    %4067 = vmatpush1.msra.mxu0 %v327
    %4068 = vmatprep.subr.mxu0 0.0
    %4069 = vmatpush1.msra.mxu0 0.0
    %4070 = vmatprep.subr.mxu0 0.0
    %4071 = vmatpush1.msra.mxu0 0.0
    %4072 = vmatprep.subr.mxu0 0.0
    %4073 = vmatpush1.msra.mxu0 0.0
    %4074 = vmatprep.subr.mxu0 0.0
    %4075 = vmatpush1.msra.mxu0 0.0
    %4076 = vmatprep.subr.mxu0 0.0
    %4077 = vmatpush1.msra.mxu0 0.0
    %4078 = vmatprep.subr.mxu0 0.0
    %4079 = vmatpush1.msra.mxu0 0.0
    %4080 = vmatprep.subr.mxu0 0.0
    %4081 = vmatpush1.msra.mxu0 0.0
    %4082 = vmatprep.subr.mxu0 0.0
    %4083 = vmatpush1.msra.mxu0 0.0
    %4084 = vmatprep.subr.mxu0 0.0
    %4085 = vmatpush1.msra.mxu0 0.0
    %4086 = vmatprep.subr.mxu0 0.0
    %4087 = vmatpush1.msra.mxu0 0.0
    %4088 = vmatprep.subr.mxu0 0.0
    %4089 = vmatpush1.msra.mxu0 0.0
    %4090 = vmatprep.subr.mxu0 0.0
    %4091 = vmatpush1.msra.mxu0 0.0
    %4092 = vmatprep.subr.mxu0 0.0
    %4093 = vmatpush1.msra.mxu0 0.0
    %4094 = vmatprep.subr.mxu0 0.0
    %4095 = vmatpush1.msra.mxu0 0.0
    %4096 = vmatprep.subr.mxu0 0.0
    %4097 = vmatpush1.msra.mxu0 0.0
    %4098 = vmatprep.subr.mxu0 0.0
    %4099 = vmatpush1.msra.mxu0 0.0
    %4100 = vmatprep.subr.mxu0 0.0
    %4101 = vmatpush1.msra.mxu0 0.0
    %4102 = vmatprep.subr.mxu0 0.0
    %4103 = vmatpush1.msra.mxu0 0.0
    %4104 = vmatprep.subr.mxu0 0.0
    %4105 = vmatpush1.msra.mxu0 0.0
    %4106 = vmatprep.subr.mxu0 0.0
    %4107 = vmatpush1.msra.mxu0 0.0
    %4108 = vmatprep.subr.mxu0 0.0
    %4109 = vmatpush1.msra.mxu0 0.0
    %4110 = vmatprep.subr.mxu0 0.0
    %4111 = vmatpush1.msra.mxu0 0.0
    %4112 = vmatprep.subr.mxu0 0.0
    %4113 = vmatpush1.msra.mxu0 0.0
    %4114 = vmatprep.subr.mxu0 0.0
    %4115 = vmatpush1.msra.mxu0 0.0
    %4116 = vmatprep.subr.mxu0 0.0
    %4117 = vmatpush1.msra.mxu0 0.0
    %4118 = vmatprep.subr.mxu0 0.0
    %4119 = vmatpush1.msra.mxu0 0.0
    %4120 = vmatprep.subr.mxu0 0.0
    %4121 = vmatpush1.msra.mxu0 0.0
    %4122 = vmatprep.subr.mxu0 0.0
    %4123 = vmatpush1.msra.mxu0 0.0
    %4124 = vmatprep.mubr.f32.mxu0 0.0
    %4125 = vmatmul.mubr.f32.gmra.mrb[0].mxu0 %v4058
    %v4126 = vpop.f32.mrb[0].mxu0
    %v4127 = vadd.f32 %v4054, %v4126
    %v4128 = vpop.f32.mrb[0].mxu0
    %4129 = vdwg.mxu0
    %v4130 = vxor.u32 %v4127, 2147483648
    %v4131 = vmul.f32 %v4130, 1.442695
    %v4132 = vpow.pop %v4131
    %v4133 = vadd.f32 %v4132, 1.0
    %v4134 = vrcp.pop %v4133
    %v4135 = vmul.f32 1.0, %v4134
    %v4136 = vtanh.pop %v4127
    %v4137 = vmul.f32 %v4135, %v3975
    %4139 = vrot.lane.b32.xlu0 %v4136, 64
    %v4140 = vpop.permute.xlu0 %4139
    %v4142 = vmul.f32 %v4135, %v4140
    %4144 = vrot.lane.b32.xlu0 %v4142, 32
    %v4145 = vpop.permute.xlu0 %4144
    %v4147 = vadd.f32 %v4137, %v4145
    %v4148 = vtanh.pop %v4147
    %4150 = vrot.lane.b32.xlu0 %v4148, 64
    %v4151 = vpop.permute.xlu0 %4150
    %v4153 = vmul.f32 %v4135, %v4151
    %4155 = vrot.lane.b32.xlu0 %v4153, 32
    %v4156 = vpop.permute.xlu0 %4155
    %v4157 = vsel %vm247, %v4156, 0
    %4159 = vmatprep.subr.mxu0 0.0
    %4160 = vmatpush1.msra.mxu0 %v3123
    %4161 = vmatprep.subr.mxu0 0.0
    %4162 = vmatpush1.msra.mxu0 %v3124
    %4163 = vmatprep.subr.mxu0 0.0
    %4164 = vmatpush1.msra.mxu0 %v3125
    %4165 = vmatprep.subr.mxu0 0.0
    %4166 = vmatpush1.msra.mxu0 %v3126
    %4167 = vmatprep.subr.mxu0 0.0
    %4168 = vmatpush1.msra.mxu0 0.0
    %4169 = vmatprep.subr.mxu0 0.0
    %4170 = vmatpush1.msra.mxu0 0.0
    %4171 = vmatprep.subr.mxu0 0.0
    %4172 = vmatpush1.msra.mxu0 0.0
    %4173 = vmatprep.subr.mxu0 0.0
    %4174 = vmatpush1.msra.mxu0 0.0
    %4175 = vmatprep.subr.mxu0 0.0
    %4176 = vmatpush1.msra.mxu0 0.0
    %4177 = vmatprep.subr.mxu0 0.0
    %4178 = vmatpush1.msra.mxu0 0.0
    %4179 = vmatprep.subr.mxu0 0.0
    %4180 = vmatpush1.msra.mxu0 0.0
    %4181 = vmatprep.subr.mxu0 0.0
    %4182 = vmatpush1.msra.mxu0 0.0
    %4183 = vmatprep.subr.mxu0 0.0
    %4184 = vmatpush1.msra.mxu0 0.0
    %4185 = vmatprep.subr.mxu0 0.0
    %4186 = vmatpush1.msra.mxu0 0.0
    %4187 = vmatprep.subr.mxu0 0.0
    %4188 = vmatpush1.msra.mxu0 0.0
    %4189 = vmatprep.subr.mxu0 0.0
    %4190 = vmatpush1.msra.mxu0 0.0
    %4191 = vmatprep.subr.mxu0 0.0
    %4192 = vmatpush1.msra.mxu0 0.0
    %4193 = vmatprep.subr.mxu0 0.0
    %4194 = vmatpush1.msra.mxu0 0.0
    %4195 = vmatprep.subr.mxu0 0.0
    %4196 = vmatpush1.msra.mxu0 0.0
    %4197 = vmatprep.subr.mxu0 0.0
    %4198 = vmatpush1.msra.mxu0 0.0
    %4199 = vmatprep.subr.mxu0 0.0
    %4200 = vmatpush1.msra.mxu0 0.0
    %4201 = vmatprep.subr.mxu0 0.0
    %4202 = vmatpush1.msra.mxu0 0.0
    %4203 = vmatprep.subr.mxu0 0.0
    %4204 = vmatpush1.msra.mxu0 0.0
    %4205 = vmatprep.subr.mxu0 0.0
    %4206 = vmatpush1.msra.mxu0 0.0
    %4207 = vmatprep.subr.mxu0 0.0
    %4208 = vmatpush1.msra.mxu0 0.0
    %4209 = vmatprep.subr.mxu0 0.0
    %4210 = vmatpush1.msra.mxu0 0.0
    %4211 = vmatprep.subr.mxu0 0.0
    %4212 = vmatpush1.msra.mxu0 0.0
    %4213 = vmatprep.subr.mxu0 0.0
    %4214 = vmatpush1.msra.mxu0 0.0
    %4215 = vmatprep.subr.mxu0 0.0
    %4216 = vmatpush1.msra.mxu0 0.0
    %4217 = vmatprep.subr.mxu0 0.0
    %4218 = vmatpush1.msra.mxu0 0.0
    %4219 = vmatprep.subr.mxu0 0.0
    %4220 = vmatpush1.msra.mxu0 0.0
    %4221 = vmatprep.subr.mxu0 0.0
    %4222 = vmatpush1.msra.mxu0 0.0
    %4223 = vmatprep.mubr.f32.mxu0 0.0
    %4224 = vmatmul.mubr.f32.gmra.mrb[0].mxu0 %v4157
    %v4225 = vpop.f32.mrb[0].mxu0
    %v4226 = vadd.f32 0.0, %v4225
    %v4227 = vpop.f32.mrb[0].mxu0
    %4228 = vdwg.mxu0
    %v4230 = vsel %vm321, %v3116, 0
    %4232 = vmatprep.subr.mxu0 0.0
    %4233 = vmatpush1.msra.mxu0 %v174
    %4234 = vmatprep.subr.mxu0 0.0
    %4235 = vmatpush1.msra.mxu0 %v179
    %4236 = vmatprep.subr.mxu0 0.0
    %4237 = vmatpush1.msra.mxu0 %v184
    %4238 = vmatprep.subr.mxu0 0.0
    %4239 = vmatpush1.msra.mxu0 %v327
    %4240 = vmatprep.subr.mxu0 0.0
    %4241 = vmatpush1.msra.mxu0 0.0
    %4242 = vmatprep.subr.mxu0 0.0
    %4243 = vmatpush1.msra.mxu0 0.0
    %4244 = vmatprep.subr.mxu0 0.0
    %4245 = vmatpush1.msra.mxu0 0.0
    %4246 = vmatprep.subr.mxu0 0.0
    %4247 = vmatpush1.msra.mxu0 0.0
    %4248 = vmatprep.subr.mxu0 0.0
    %4249 = vmatpush1.msra.mxu0 0.0
    %4250 = vmatprep.subr.mxu0 0.0
    %4251 = vmatpush1.msra.mxu0 0.0
    %4252 = vmatprep.subr.mxu0 0.0
    %4253 = vmatpush1.msra.mxu0 0.0
    %4254 = vmatprep.subr.mxu0 0.0
    %4255 = vmatpush1.msra.mxu0 0.0
    %4256 = vmatprep.subr.mxu0 0.0
    %4257 = vmatpush1.msra.mxu0 0.0
    %4258 = vmatprep.subr.mxu0 0.0
    %4259 = vmatpush1.msra.mxu0 0.0
    %4260 = vmatprep.subr.mxu0 0.0
    %4261 = vmatpush1.msra.mxu0 0.0
    %4262 = vmatprep.subr.mxu0 0.0
    %4263 = vmatpush1.msra.mxu0 0.0
    %4264 = vmatprep.subr.mxu0 0.0
    %4265 = vmatpush1.msra.mxu0 0.0
    %4266 = vmatprep.subr.mxu0 0.0
    %4267 = vmatpush1.msra.mxu0 0.0
    %4268 = vmatprep.subr.mxu0 0.0
    %4269 = vmatpush1.msra.mxu0 0.0
    %4270 = vmatprep.subr.mxu0 0.0
    %4271 = vmatpush1.msra.mxu0 0.0
    %4272 = vmatprep.subr.mxu0 0.0
    %4273 = vmatpush1.msra.mxu0 0.0
    %4274 = vmatprep.subr.mxu0 0.0
    %4275 = vmatpush1.msra.mxu0 0.0
    %4276 = vmatprep.subr.mxu0 0.0
    %4277 = vmatpush1.msra.mxu0 0.0
    %4278 = vmatprep.subr.mxu0 0.0
    %4279 = vmatpush1.msra.mxu0 0.0
    %4280 = vmatprep.subr.mxu0 0.0
    %4281 = vmatpush1.msra.mxu0 0.0
    %4282 = vmatprep.subr.mxu0 0.0
    %4283 = vmatpush1.msra.mxu0 0.0
    %4284 = vmatprep.subr.mxu0 0.0
    %4285 = vmatpush1.msra.mxu0 0.0
    %4286 = vmatprep.subr.mxu0 0.0
    %4287 = vmatpush1.msra.mxu0 0.0
    %4288 = vmatprep.subr.mxu0 0.0
    %4289 = vmatpush1.msra.mxu0 0.0
    %4290 = vmatprep.subr.mxu0 0.0
    %4291 = vmatpush1.msra.mxu0 0.0
    %4292 = vmatprep.subr.mxu0 0.0
    %4293 = vmatpush1.msra.mxu0 0.0
    %4294 = vmatprep.subr.mxu0 0.0
    %4295 = vmatpush1.msra.mxu0 0.0
    %4296 = vmatprep.mubr.f32.mxu0 0.0
    %4297 = vmatmul.mubr.f32.gmra.mrb[0].mxu0 %v4230
    %v4298 = vpop.f32.mrb[0].mxu0
    %v4299 = vadd.f32 %v4226, %v4298
    %v4300 = vpop.f32.mrb[0].mxu0
    %4301 = vdwg.mxu0
    %v4302 = vxor.u32 %v4299, 2147483648
    %v4303 = vmul.f32 %v4302, 1.442695
    %v4304 = vpow.pop %v4303
    %v4305 = vadd.f32 %v4304, 1.0
    %v4306 = vrcp.pop %v4305
    %v4307 = vmul.f32 1.0, %v4306
    %v4308 = vtanh.pop %v4299
    %v4309 = vmul.f32 %v4307, %v4147
    %4311 = vrot.lane.b32.xlu0 %v4308, 64
    %v4312 = vpop.permute.xlu0 %4311
    %v4314 = vmul.f32 %v4307, %v4312
    %4316 = vrot.lane.b32.xlu0 %v4314, 32
    %v4317 = vpop.permute.xlu0 %4316
    %v4319 = vadd.f32 %v4309, %v4317
    %v4320 = vtanh.pop %v4319
    %4322 = vrot.lane.b32.xlu0 %v4320, 64
    %v4323 = vpop.permute.xlu0 %4322
    %v4325 = vmul.f32 %v4307, %v4323
    %4327 = vrot.lane.b32.xlu0 %v4325, 32
    %v4328 = vpop.permute.xlu0 %4327
    %v4329 = vsel %vm247, %v4328, 0
    %4331 = vmatprep.subr.mxu0 0.0
    %4332 = vmatpush1.msra.mxu0 %v3123
    %4333 = vmatprep.subr.mxu0 0.0
    %4334 = vmatpush1.msra.mxu0 %v3124
    %4335 = vmatprep.subr.mxu0 0.0
    %4336 = vmatpush1.msra.mxu0 %v3125
    %4337 = vmatprep.subr.mxu0 0.0
    %4338 = vmatpush1.msra.mxu0 %v3126
    %4339 = vmatprep.subr.mxu0 0.0
    %4340 = vmatpush1.msra.mxu0 0.0
    %4341 = vmatprep.subr.mxu0 0.0
    %4342 = vmatpush1.msra.mxu0 0.0
    %4343 = vmatprep.subr.mxu0 0.0
    %4344 = vmatpush1.msra.mxu0 0.0
    %4345 = vmatprep.subr.mxu0 0.0
    %4346 = vmatpush1.msra.mxu0 0.0
    %4347 = vmatprep.subr.mxu0 0.0
    %4348 = vmatpush1.msra.mxu0 0.0
    %4349 = vmatprep.subr.mxu0 0.0
    %4350 = vmatpush1.msra.mxu0 0.0
    %4351 = vmatprep.subr.mxu0 0.0
    %4352 = vmatpush1.msra.mxu0 0.0
    %4353 = vmatprep.subr.mxu0 0.0
    %4354 = vmatpush1.msra.mxu0 0.0
    %4355 = vmatprep.subr.mxu0 0.0
    %4356 = vmatpush1.msra.mxu0 0.0
    %4357 = vmatprep.subr.mxu0 0.0
    %4358 = vmatpush1.msra.mxu0 0.0
    %4359 = vmatprep.subr.mxu0 0.0
    %4360 = vmatpush1.msra.mxu0 0.0
    %4361 = vmatprep.subr.mxu0 0.0
    %4362 = vmatpush1.msra.mxu0 0.0
    %4363 = vmatprep.subr.mxu0 0.0
    %4364 = vmatpush1.msra.mxu0 0.0
    %4365 = vmatprep.subr.mxu0 0.0
    %4366 = vmatpush1.msra.mxu0 0.0
    %4367 = vmatprep.subr.mxu0 0.0
    %4368 = vmatpush1.msra.mxu0 0.0
    %4369 = vmatprep.subr.mxu0 0.0
    %4370 = vmatpush1.msra.mxu0 0.0
    %4371 = vmatprep.subr.mxu0 0.0
    %4372 = vmatpush1.msra.mxu0 0.0
    %4373 = vmatprep.subr.mxu0 0.0
    %4374 = vmatpush1.msra.mxu0 0.0
    %4375 = vmatprep.subr.mxu0 0.0
    %4376 = vmatpush1.msra.mxu0 0.0
    %4377 = vmatprep.subr.mxu0 0.0
    %4378 = vmatpush1.msra.mxu0 0.0
    %4379 = vmatprep.subr.mxu0 0.0
    %4380 = vmatpush1.msra.mxu0 0.0
    %4381 = vmatprep.subr.mxu0 0.0
    %4382 = vmatpush1.msra.mxu0 0.0
    %4383 = vmatprep.subr.mxu0 0.0
    %4384 = vmatpush1.msra.mxu0 0.0
    %4385 = vmatprep.subr.mxu0 0.0
    %4386 = vmatpush1.msra.mxu0 0.0
    %4387 = vmatprep.subr.mxu0 0.0
    %4388 = vmatpush1.msra.mxu0 0.0
    %4389 = vmatprep.subr.mxu0 0.0
    %4390 = vmatpush1.msra.mxu0 0.0
    %4391 = vmatprep.subr.mxu0 0.0
    %4392 = vmatpush1.msra.mxu0 0.0
    %4393 = vmatprep.subr.mxu0 0.0
    %4394 = vmatpush1.msra.mxu0 0.0
    %4395 = vmatprep.mubr.f32.mxu0 0.0
    %4396 = vmatmul.mubr.f32.gmra.mrb[0].mxu0 %v4329
    %v4397 = vpop.f32.mrb[0].mxu0
    %v4398 = vadd.f32 0.0, %v4397
    %v4399 = vpop.f32.mrb[0].mxu0
    %4400 = vdwg.mxu0
    %v4402 = vsel %vm321, %v3122, 0
    %4404 = vmatprep.subr.mxu0 0.0
    %4405 = vmatpush1.msra.mxu0 %v174
    %4406 = vmatprep.subr.mxu0 0.0
    %4407 = vmatpush1.msra.mxu0 %v179
    %4408 = vmatprep.subr.mxu0 0.0
    %4409 = vmatpush1.msra.mxu0 %v184
    %4410 = vmatprep.subr.mxu0 0.0
    %4411 = vmatpush1.msra.mxu0 %v327
    %4412 = vmatprep.subr.mxu0 0.0
    %4413 = vmatpush1.msra.mxu0 0.0
    %4414 = vmatprep.subr.mxu0 0.0
    %4415 = vmatpush1.msra.mxu0 0.0
    %4416 = vmatprep.subr.mxu0 0.0
    %4417 = vmatpush1.msra.mxu0 0.0
    %4418 = vmatprep.subr.mxu0 0.0
    %4419 = vmatpush1.msra.mxu0 0.0
    %4420 = vmatprep.subr.mxu0 0.0
    %4421 = vmatpush1.msra.mxu0 0.0
    %4422 = vmatprep.subr.mxu0 0.0
    %4423 = vmatpush1.msra.mxu0 0.0
    %4424 = vmatprep.subr.mxu0 0.0
    %4425 = vmatpush1.msra.mxu0 0.0
    %4426 = vmatprep.subr.mxu0 0.0
    %4427 = vmatpush1.msra.mxu0 0.0
    %4428 = vmatprep.subr.mxu0 0.0
    %4429 = vmatpush1.msra.mxu0 0.0
    %4430 = vmatprep.subr.mxu0 0.0
    %4431 = vmatpush1.msra.mxu0 0.0
    %4432 = vmatprep.subr.mxu0 0.0
    %4433 = vmatpush1.msra.mxu0 0.0
    %4434 = vmatprep.subr.mxu0 0.0
    %4435 = vmatpush1.msra.mxu0 0.0
    %4436 = vmatprep.subr.mxu0 0.0
    %4437 = vmatpush1.msra.mxu0 0.0
    %4438 = vmatprep.subr.mxu0 0.0
    %4439 = vmatpush1.msra.mxu0 0.0
    %4440 = vmatprep.subr.mxu0 0.0
    %4441 = vmatpush1.msra.mxu0 0.0
    %4442 = vmatprep.subr.mxu0 0.0
    %4443 = vmatpush1.msra.mxu0 0.0
    %4444 = vmatprep.subr.mxu0 0.0
    %4445 = vmatpush1.msra.mxu0 0.0
    %4446 = vmatprep.subr.mxu0 0.0
    %4447 = vmatpush1.msra.mxu0 0.0
    %4448 = vmatprep.subr.mxu0 0.0
    %4449 = vmatpush1.msra.mxu0 0.0
    %4450 = vmatprep.subr.mxu0 0.0
    %4451 = vmatpush1.msra.mxu0 0.0
    %4452 = vmatprep.subr.mxu0 0.0
    %4453 = vmatpush1.msra.mxu0 0.0
    %4454 = vmatprep.subr.mxu0 0.0
    %4455 = vmatpush1.msra.mxu0 0.0
    %4456 = vmatprep.subr.mxu0 0.0
    %4457 = vmatpush1.msra.mxu0 0.0
    %4458 = vmatprep.subr.mxu0 0.0
    %4459 = vmatpush1.msra.mxu0 0.0
    %4460 = vmatprep.subr.mxu0 0.0
    %4461 = vmatpush1.msra.mxu0 0.0
    %4462 = vmatprep.subr.mxu0 0.0
    %4463 = vmatpush1.msra.mxu0 0.0
    %4464 = vmatprep.subr.mxu0 0.0
    %4465 = vmatpush1.msra.mxu0 0.0
    %4466 = vmatprep.subr.mxu0 0.0
    %4467 = vmatpush1.msra.mxu0 0.0
    %4468 = vmatprep.mubr.f32.mxu0 0.0
    %4469 = vmatmul.mubr.f32.gmra.mrb[0].mxu0 %v4402
    %v4470 = vpop.f32.mrb[0].mxu0
    %v4471 = vadd.f32 %v4398, %v4470
    %v4472 = vpop.f32.mrb[0].mxu0
    %4473 = vdwg.mxu0
    %v4474 = vxor.u32 %v4471, 2147483648
    %v4475 = vmul.f32 %v4474, 1.442695
    %v4476 = vpow.pop %v4475
    %v4477 = vadd.f32 %v4476, 1.0
    %v4478 = vrcp.pop %v4477
    %v4479 = vmul.f32 1.0, %v4478
    %v4480 = vtanh.pop %v4471
    %v4481 = vmul.f32 %v4479, %v4319
    %4483 = vrot.lane.b32.xlu0 %v4480, 64
    %v4484 = vpop.permute.xlu0 %4483
    %v4486 = vmul.f32 %v4479, %v4484
    %4488 = vrot.lane.b32.xlu0 %v4486, 32
    %v4489 = vpop.permute.xlu0 %4488
    %v4491 = vadd.f32 %v4481, %v4489
    %v4492 = vtanh.pop %v4491
    %4494 = vrot.lane.b32.xlu0 %v4492, 64
    %v4495 = vpop.permute.xlu0 %4494
    %v4497 = vmul.f32 %v4479, %v4495
    %v4498 = vld [vmem:[%s8] sm:$0xff]
    %v4499 = vld [vmem:[%s8 + $0x8] sm:$0xff]
    %v4500 = vld [vmem:[%s8 + $0x10] sm:$0xff]
    %v4501 = vld [vmem:[%s8 + $0x18] sm:$0xff]
    %v4502 = vld [vmem:[%s7] sm:$0xff]
    %v4503 = vld [vmem:[%s7 + $0x8] sm:$0xff]
    %v4504 = vld [vmem:[%s7 + $0x10] sm:$0xff]
    %v4505 = vld [vmem:[%s7 + $0x18] sm:$0xff]
    %v4506 = vld [vmem:[%s9] sm:$0x1]
    %v4508 = vlaneseq
    %v4509 = vshrl.u32 %v4508, 7
    %v4510 = vsub.s32 0, %v4509
    %v4511 = vrot.slane %v4506, %v4510
    %4513 = vmatprep.subr.mxu0 0.0
    %4514 = vmatpush1.msra.mxu0 %v4502
    %4515 = vmatprep.subr.mxu0 0.0
    %4516 = vmatpush1.msra.mxu0 %v4503
    %4517 = vmatprep.subr.mxu0 0.0
    %4518 = vmatpush1.msra.mxu0 %v4504
    %4519 = vmatprep.subr.mxu0 0.0
    %4520 = vmatpush1.msra.mxu0 %v4505
    %4521 = vmatprep.subr.mxu0 0.0
    %4522 = vmatpush1.msra.mxu0 0.0
    %4523 = vmatprep.subr.mxu0 0.0
    %4524 = vmatpush1.msra.mxu0 0.0
    %4525 = vmatprep.subr.mxu0 0.0
    %4526 = vmatpush1.msra.mxu0 0.0
    %4527 = vmatprep.subr.mxu0 0.0
    %4528 = vmatpush1.msra.mxu0 0.0
    %4529 = vmatprep.subr.mxu0 0.0
    %4530 = vmatpush1.msra.mxu0 0.0
    %4531 = vmatprep.subr.mxu0 0.0
    %4532 = vmatpush1.msra.mxu0 0.0
    %4533 = vmatprep.subr.mxu0 0.0
    %4534 = vmatpush1.msra.mxu0 0.0
    %4535 = vmatprep.subr.mxu0 0.0
    %4536 = vmatpush1.msra.mxu0 0.0
    %4537 = vmatprep.subr.mxu0 0.0
    %4538 = vmatpush1.msra.mxu0 0.0
    %4539 = vmatprep.subr.mxu0 0.0
    %4540 = vmatpush1.msra.mxu0 0.0
    %4541 = vmatprep.subr.mxu0 0.0
    %4542 = vmatpush1.msra.mxu0 0.0
    %4543 = vmatprep.subr.mxu0 0.0
    %4544 = vmatpush1.msra.mxu0 0.0
    %4545 = vmatprep.subr.mxu0 0.0
    %4546 = vmatpush1.msra.mxu0 0.0
    %4547 = vmatprep.subr.mxu0 0.0
    %4548 = vmatpush1.msra.mxu0 0.0
    %4549 = vmatprep.subr.mxu0 0.0
    %4550 = vmatpush1.msra.mxu0 0.0
    %4551 = vmatprep.subr.mxu0 0.0
    %4552 = vmatpush1.msra.mxu0 0.0
    %4553 = vmatprep.subr.mxu0 0.0
    %4554 = vmatpush1.msra.mxu0 0.0
    %4555 = vmatprep.subr.mxu0 0.0
    %4556 = vmatpush1.msra.mxu0 0.0
    %4557 = vmatprep.subr.mxu0 0.0
    %4558 = vmatpush1.msra.mxu0 0.0
    %4559 = vmatprep.subr.mxu0 0.0
    %4560 = vmatpush1.msra.mxu0 0.0
    %4561 = vmatprep.subr.mxu0 0.0
    %4562 = vmatpush1.msra.mxu0 0.0
    %4563 = vmatprep.subr.mxu0 0.0
    %4564 = vmatpush1.msra.mxu0 0.0
    %4565 = vmatprep.subr.mxu0 0.0
    %4566 = vmatpush1.msra.mxu0 0.0
    %4567 = vmatprep.subr.mxu0 0.0
    %4568 = vmatpush1.msra.mxu0 0.0
    %4569 = vmatprep.subr.mxu0 0.0
    %4570 = vmatpush1.msra.mxu0 0.0
    %4571 = vmatprep.subr.mxu0 0.0
    %4572 = vmatpush1.msra.mxu0 0.0
    %4573 = vmatprep.subr.mxu0 0.0
    %4574 = vmatpush1.msra.mxu0 0.0
    %4575 = vmatprep.subr.mxu0 0.0
    %4576 = vmatpush1.msra.mxu0 0.0
    %4577 = vmatprep.mubr.f32.mxu0 0.0
    %4578 = vmatmul.mubr.f32.gmra.mrb[0].mxu0 %v3297
    %v4579 = vpop.f32.mrb[0].mxu0
    %v4580 = vadd.f32 %v4511, %v4579
    %v4581 = vpop.f32.mrb[0].mxu0
    %4582 = vdwg.mxu0
    %4583 = vmatprep.subr.mxu0 0.0
    %4584 = vmatpush1.msra.mxu0 %v4498
    %4585 = vmatprep.subr.mxu0 0.0
    %4586 = vmatpush1.msra.mxu0 %v4499
    %4587 = vmatprep.subr.mxu0 0.0
    %4588 = vmatpush1.msra.mxu0 %v4500
    %4589 = vmatprep.subr.mxu0 0.0
    %4590 = vmatpush1.msra.mxu0 %v4501
    %4591 = vmatprep.subr.mxu0 0.0
    %4592 = vmatpush1.msra.mxu0 0.0
    %4593 = vmatprep.subr.mxu0 0.0
    %4594 = vmatpush1.msra.mxu0 0.0
    %4595 = vmatprep.subr.mxu0 0.0
    %4596 = vmatpush1.msra.mxu0 0.0
    %4597 = vmatprep.subr.mxu0 0.0
    %4598 = vmatpush1.msra.mxu0 0.0
    %4599 = vmatprep.subr.mxu0 0.0
    %4600 = vmatpush1.msra.mxu0 0.0
    %4601 = vmatprep.subr.mxu0 0.0
    %4602 = vmatpush1.msra.mxu0 0.0
    %4603 = vmatprep.subr.mxu0 0.0
    %4604 = vmatpush1.msra.mxu0 0.0
    %4605 = vmatprep.subr.mxu0 0.0
    %4606 = vmatpush1.msra.mxu0 0.0
    %4607 = vmatprep.subr.mxu0 0.0
    %4608 = vmatpush1.msra.mxu0 0.0
    %4609 = vmatprep.subr.mxu0 0.0
    %4610 = vmatpush1.msra.mxu0 0.0
    %4611 = vmatprep.subr.mxu0 0.0
    %4612 = vmatpush1.msra.mxu0 0.0
    %4613 = vmatprep.subr.mxu0 0.0
    %4614 = vmatpush1.msra.mxu0 0.0
    %4615 = vmatprep.subr.mxu0 0.0
    %4616 = vmatpush1.msra.mxu0 0.0
    %4617 = vmatprep.subr.mxu0 0.0
    %4618 = vmatpush1.msra.mxu0 0.0
    %4619 = vmatprep.subr.mxu0 0.0
    %4620 = vmatpush1.msra.mxu0 0.0
    %4621 = vmatprep.subr.mxu0 0.0
    %4622 = vmatpush1.msra.mxu0 0.0
    %4623 = vmatprep.subr.mxu0 0.0
    %4624 = vmatpush1.msra.mxu0 0.0
    %4625 = vmatprep.subr.mxu0 0.0
    %4626 = vmatpush1.msra.mxu0 0.0
    %4627 = vmatprep.subr.mxu0 0.0
    %4628 = vmatpush1.msra.mxu0 0.0
    %4629 = vmatprep.subr.mxu0 0.0
    %4630 = vmatpush1.msra.mxu0 0.0
    %4631 = vmatprep.subr.mxu0 0.0
    %4632 = vmatpush1.msra.mxu0 0.0
    %4633 = vmatprep.subr.mxu0 0.0
    %4634 = vmatpush1.msra.mxu0 0.0
    %4635 = vmatprep.subr.mxu0 0.0
    %4636 = vmatpush1.msra.mxu0 0.0
    %4637 = vmatprep.subr.mxu0 0.0
    %4638 = vmatpush1.msra.mxu0 0.0
    %4639 = vmatprep.subr.mxu0 0.0
    %4640 = vmatpush1.msra.mxu0 0.0
    %4641 = vmatprep.subr.mxu0 0.0
    %4642 = vmatpush1.msra.mxu0 0.0
    %4643 = vmatprep.subr.mxu0 0.0
    %4644 = vmatpush1.msra.mxu0 0.0
    %4645 = vmatprep.subr.mxu0 0.0
    %4646 = vmatpush1.msra.mxu0 0.0
    %4647 = vmatprep.mubr.f32.mxu0 0.0
    %4648 = vmatmul.mubr.f32.gmra.mrb[0].mxu0 %v249
    %v4649 = vpop.f32.mrb[0].mxu0
    %v4650 = vadd.f32 0.0, %v4649
    %v4651 = vpop.f32.mrb[0].mxu0
    %4652 = vdwg.mxu0
    %v4653 = vadd.f32 %v4580, %v4650
    %v4654 = vxor.u32 %v4653, 2147483648
    %v4655 = vmul.f32 %v4654, 1.442695
    %v4656 = vpow.pop %v4655
    %v4657 = vadd.f32 %v4656, 1.0
    %v4658 = vrcp.pop %v4657
    %v4659 = vmul.f32 1.0, %v4658
    %v4660 = vtanh.pop %v4653
    %v4661 = vmul.f32 %v4659, 0.0
    %4663 = vrot.lane.b32.xlu0 %v4660, 64
    %v4664 = vpop.permute.xlu0 %4663
    %v4666 = vmul.f32 %v4659, %v4664
    %4668 = vrot.lane.b32.xlu0 %v4666, 32
    %v4669 = vpop.permute.xlu0 %4668
    %v4671 = vadd.f32 %v4661, %v4669
    %v4672 = vtanh.pop %v4671
    %4674 = vrot.lane.b32.xlu0 %v4672, 64
    %v4675 = vpop.permute.xlu0 %4674
    %v4677 = vmul.f32 %v4659, %v4675
    %4678 = vmatprep.subr.mxu0 0.0
    %4679 = vmatpush1.msra.mxu0 %v4502
    %4680 = vmatprep.subr.mxu0 0.0
    %4681 = vmatpush1.msra.mxu0 %v4503
    %4682 = vmatprep.subr.mxu0 0.0
    %4683 = vmatpush1.msra.mxu0 %v4504
    %4684 = vmatprep.subr.mxu0 0.0
    %4685 = vmatpush1.msra.mxu0 %v4505
    %4686 = vmatprep.subr.mxu0 0.0
    %4687 = vmatpush1.msra.mxu0 0.0
    %4688 = vmatprep.subr.mxu0 0.0
    %4689 = vmatpush1.msra.mxu0 0.0
    %4690 = vmatprep.subr.mxu0 0.0
    %4691 = vmatpush1.msra.mxu0 0.0
    %4692 = vmatprep.subr.mxu0 0.0
    %4693 = vmatpush1.msra.mxu0 0.0
    %4694 = vmatprep.subr.mxu0 0.0
    %4695 = vmatpush1.msra.mxu0 0.0
    %4696 = vmatprep.subr.mxu0 0.0
    %4697 = vmatpush1.msra.mxu0 0.0
    %4698 = vmatprep.subr.mxu0 0.0
    %4699 = vmatpush1.msra.mxu0 0.0
    %4700 = vmatprep.subr.mxu0 0.0
    %4701 = vmatpush1.msra.mxu0 0.0
    %4702 = vmatprep.subr.mxu0 0.0
    %4703 = vmatpush1.msra.mxu0 0.0
    %4704 = vmatprep.subr.mxu0 0.0
    %4705 = vmatpush1.msra.mxu0 0.0
    %4706 = vmatprep.subr.mxu0 0.0
    %4707 = vmatpush1.msra.mxu0 0.0
    %4708 = vmatprep.subr.mxu0 0.0
    %4709 = vmatpush1.msra.mxu0 0.0
    %4710 = vmatprep.subr.mxu0 0.0
    %4711 = vmatpush1.msra.mxu0 0.0
    %4712 = vmatprep.subr.mxu0 0.0
    %4713 = vmatpush1.msra.mxu0 0.0
    %4714 = vmatprep.subr.mxu0 0.0
    %4715 = vmatpush1.msra.mxu0 0.0
    %4716 = vmatprep.subr.mxu0 0.0
    %4717 = vmatpush1.msra.mxu0 0.0
    %4718 = vmatprep.subr.mxu0 0.0
    %4719 = vmatpush1.msra.mxu0 0.0
    %4720 = vmatprep.subr.mxu0 0.0
    %4721 = vmatpush1.msra.mxu0 0.0
    %4722 = vmatprep.subr.mxu0 0.0
    %4723 = vmatpush1.msra.mxu0 0.0
    %4724 = vmatprep.subr.mxu0 0.0
    %4725 = vmatpush1.msra.mxu0 0.0
    %4726 = vmatprep.subr.mxu0 0.0
    %4727 = vmatpush1.msra.mxu0 0.0
    %4728 = vmatprep.subr.mxu0 0.0
    %4729 = vmatpush1.msra.mxu0 0.0
    %4730 = vmatprep.subr.mxu0 0.0
    %4731 = vmatpush1.msra.mxu0 0.0
    %4732 = vmatprep.subr.mxu0 0.0
    %4733 = vmatpush1.msra.mxu0 0.0
    %4734 = vmatprep.subr.mxu0 0.0
    %4735 = vmatpush1.msra.mxu0 0.0
    %4736 = vmatprep.subr.mxu0 0.0
    %4737 = vmatpush1.msra.mxu0 0.0
    %4738 = vmatprep.subr.mxu0 0.0
    %4739 = vmatpush1.msra.mxu0 0.0
    %4740 = vmatprep.subr.mxu0 0.0
    %4741 = vmatpush1.msra.mxu0 0.0
    %4742 = vmatprep.mubr.f32.mxu0 0.0
    %4743 = vmatmul.mubr.f32.gmra.mrb[0].mxu0 %v3469
    %v4744 = vpop.f32.mrb[0].mxu0
    %v4745 = vadd.f32 %v4511, %v4744
    %v4746 = vpop.f32.mrb[0].mxu0
    %4747 = vdwg.mxu0
    %4749 = vrot.lane.b32.xlu0 %v4677, 32
    %v4750 = vpop.permute.xlu0 %4749
    %v4751 = vsel %vm247, %v4750, 0
    %4753 = vmatprep.subr.mxu0 0.0
    %4754 = vmatpush1.msra.mxu0 %v4498
    %4755 = vmatprep.subr.mxu0 0.0
    %4756 = vmatpush1.msra.mxu0 %v4499
    %4757 = vmatprep.subr.mxu0 0.0
    %4758 = vmatpush1.msra.mxu0 %v4500
    %4759 = vmatprep.subr.mxu0 0.0
    %4760 = vmatpush1.msra.mxu0 %v4501
    %4761 = vmatprep.subr.mxu0 0.0
    %4762 = vmatpush1.msra.mxu0 0.0
    %4763 = vmatprep.subr.mxu0 0.0
    %4764 = vmatpush1.msra.mxu0 0.0
    %4765 = vmatprep.subr.mxu0 0.0
    %4766 = vmatpush1.msra.mxu0 0.0
    %4767 = vmatprep.subr.mxu0 0.0
    %4768 = vmatpush1.msra.mxu0 0.0
    %4769 = vmatprep.subr.mxu0 0.0
    %4770 = vmatpush1.msra.mxu0 0.0
    %4771 = vmatprep.subr.mxu0 0.0
    %4772 = vmatpush1.msra.mxu0 0.0
    %4773 = vmatprep.subr.mxu0 0.0
    %4774 = vmatpush1.msra.mxu0 0.0
    %4775 = vmatprep.subr.mxu0 0.0
    %4776 = vmatpush1.msra.mxu0 0.0
    %4777 = vmatprep.subr.mxu0 0.0
    %4778 = vmatpush1.msra.mxu0 0.0
    %4779 = vmatprep.subr.mxu0 0.0
    %4780 = vmatpush1.msra.mxu0 0.0
    %4781 = vmatprep.subr.mxu0 0.0
    %4782 = vmatpush1.msra.mxu0 0.0
    %4783 = vmatprep.subr.mxu0 0.0
    %4784 = vmatpush1.msra.mxu0 0.0
    %4785 = vmatprep.subr.mxu0 0.0
    %4786 = vmatpush1.msra.mxu0 0.0
    %4787 = vmatprep.subr.mxu0 0.0
    %4788 = vmatpush1.msra.mxu0 0.0
    %4789 = vmatprep.subr.mxu0 0.0
    %4790 = vmatpush1.msra.mxu0 0.0
    %4791 = vmatprep.subr.mxu0 0.0
    %4792 = vmatpush1.msra.mxu0 0.0
    %4793 = vmatprep.subr.mxu0 0.0
    %4794 = vmatpush1.msra.mxu0 0.0
    %4795 = vmatprep.subr.mxu0 0.0
    %4796 = vmatpush1.msra.mxu0 0.0
    %4797 = vmatprep.subr.mxu0 0.0
    %4798 = vmatpush1.msra.mxu0 0.0
    %4799 = vmatprep.subr.mxu0 0.0
    %4800 = vmatpush1.msra.mxu0 0.0
    %4801 = vmatprep.subr.mxu0 0.0
    %4802 = vmatpush1.msra.mxu0 0.0
    %4803 = vmatprep.subr.mxu0 0.0
    %4804 = vmatpush1.msra.mxu0 0.0
    %4805 = vmatprep.subr.mxu0 0.0
    %4806 = vmatpush1.msra.mxu0 0.0
    %4807 = vmatprep.subr.mxu0 0.0
    %4808 = vmatpush1.msra.mxu0 0.0
    %4809 = vmatprep.subr.mxu0 0.0
    %4810 = vmatpush1.msra.mxu0 0.0
    %4811 = vmatprep.subr.mxu0 0.0
    %4812 = vmatpush1.msra.mxu0 0.0
    %4813 = vmatprep.subr.mxu0 0.0
    %4814 = vmatpush1.msra.mxu0 0.0
    %4815 = vmatprep.subr.mxu0 0.0
    %4816 = vmatpush1.msra.mxu0 0.0
    %4817 = vmatprep.mubr.f32.mxu0 0.0
    %4818 = vmatmul.mubr.f32.gmra.mrb[0].mxu0 %v4751
    %v4819 = vpop.f32.mrb[0].mxu0
    %v4820 = vadd.f32 0.0, %v4819
    %v4821 = vpop.f32.mrb[0].mxu0
    %4822 = vdwg.mxu0
    %v4823 = vadd.f32 %v4745, %v4820
    %v4824 = vxor.u32 %v4823, 2147483648
    %v4825 = vmul.f32 %v4824, 1.442695
    %v4826 = vpow.pop %v4825
    %v4827 = vadd.f32 %v4826, 1.0
    %v4828 = vrcp.pop %v4827
    %v4829 = vmul.f32 1.0, %v4828
    %v4830 = vtanh.pop %v4823
    %v4831 = vmul.f32 %v4829, %v4671
    %4833 = vrot.lane.b32.xlu0 %v4830, 64
    %v4834 = vpop.permute.xlu0 %4833
    %v4836 = vmul.f32 %v4829, %v4834
    %4838 = vrot.lane.b32.xlu0 %v4836, 32
    %v4839 = vpop.permute.xlu0 %4838
    %v4841 = vadd.f32 %v4831, %v4839
    %v4842 = vtanh.pop %v4841
    %4844 = vrot.lane.b32.xlu0 %v4842, 64
    %v4845 = vpop.permute.xlu0 %4844
    %v4847 = vmul.f32 %v4829, %v4845
    %4848 = vmatprep.subr.mxu0 0.0
    %4849 = vmatpush1.msra.mxu0 %v4502
    %4850 = vmatprep.subr.mxu0 0.0
    %4851 = vmatpush1.msra.mxu0 %v4503
    %4852 = vmatprep.subr.mxu0 0.0
    %4853 = vmatpush1.msra.mxu0 %v4504
    %4854 = vmatprep.subr.mxu0 0.0
    %4855 = vmatpush1.msra.mxu0 %v4505
    %4856 = vmatprep.subr.mxu0 0.0
    %4857 = vmatpush1.msra.mxu0 0.0
    %4858 = vmatprep.subr.mxu0 0.0
    %4859 = vmatpush1.msra.mxu0 0.0
    %4860 = vmatprep.subr.mxu0 0.0
    %4861 = vmatpush1.msra.mxu0 0.0
    %4862 = vmatprep.subr.mxu0 0.0
    %4863 = vmatpush1.msra.mxu0 0.0
    %4864 = vmatprep.subr.mxu0 0.0
    %4865 = vmatpush1.msra.mxu0 0.0
    %4866 = vmatprep.subr.mxu0 0.0
    %4867 = vmatpush1.msra.mxu0 0.0
    %4868 = vmatprep.subr.mxu0 0.0
    %4869 = vmatpush1.msra.mxu0 0.0
    %4870 = vmatprep.subr.mxu0 0.0
    %4871 = vmatpush1.msra.mxu0 0.0
    %4872 = vmatprep.subr.mxu0 0.0
    %4873 = vmatpush1.msra.mxu0 0.0
    %4874 = vmatprep.subr.mxu0 0.0
    %4875 = vmatpush1.msra.mxu0 0.0
    %4876 = vmatprep.subr.mxu0 0.0
    %4877 = vmatpush1.msra.mxu0 0.0
    %4878 = vmatprep.subr.mxu0 0.0
    %4879 = vmatpush1.msra.mxu0 0.0
    %4880 = vmatprep.subr.mxu0 0.0
    %4881 = vmatpush1.msra.mxu0 0.0
    %4882 = vmatprep.subr.mxu0 0.0
    %4883 = vmatpush1.msra.mxu0 0.0
    %4884 = vmatprep.subr.mxu0 0.0
    %4885 = vmatpush1.msra.mxu0 0.0
    %4886 = vmatprep.subr.mxu0 0.0
    %4887 = vmatpush1.msra.mxu0 0.0
    %4888 = vmatprep.subr.mxu0 0.0
    %4889 = vmatpush1.msra.mxu0 0.0
    %4890 = vmatprep.subr.mxu0 0.0
    %4891 = vmatpush1.msra.mxu0 0.0
    %4892 = vmatprep.subr.mxu0 0.0
    %4893 = vmatpush1.msra.mxu0 0.0
    %4894 = vmatprep.subr.mxu0 0.0
    %4895 = vmatpush1.msra.mxu0 0.0
    %4896 = vmatprep.subr.mxu0 0.0
    %4897 = vmatpush1.msra.mxu0 0.0
    %4898 = vmatprep.subr.mxu0 0.0
    %4899 = vmatpush1.msra.mxu0 0.0
    %4900 = vmatprep.subr.mxu0 0.0
    %4901 = vmatpush1.msra.mxu0 0.0
    %4902 = vmatprep.subr.mxu0 0.0
    %4903 = vmatpush1.msra.mxu0 0.0
    %4904 = vmatprep.subr.mxu0 0.0
    %4905 = vmatpush1.msra.mxu0 0.0
    %4906 = vmatprep.subr.mxu0 0.0
    %4907 = vmatpush1.msra.mxu0 0.0
    %4908 = vmatprep.subr.mxu0 0.0
    %4909 = vmatpush1.msra.mxu0 0.0
    %4910 = vmatprep.subr.mxu0 0.0
    %4911 = vmatpush1.msra.mxu0 0.0
    %4912 = vmatprep.mubr.f32.mxu0 0.0
    %4913 = vmatmul.mubr.f32.gmra.mrb[0].mxu0 %v3641
    %v4914 = vpop.f32.mrb[0].mxu0
    %v4915 = vadd.f32 %v4511, %v4914
    %v4916 = vpop.f32.mrb[0].mxu0
    %4917 = vdwg.mxu0
    %4919 = vrot.lane.b32.xlu0 %v4847, 32
    %v4920 = vpop.permute.xlu0 %4919
    %v4921 = vsel %vm247, %v4920, 0
    %4923 = vmatprep.subr.mxu0 0.0
    %4924 = vmatpush1.msra.mxu0 %v4498
    %4925 = vmatprep.subr.mxu0 0.0
    %4926 = vmatpush1.msra.mxu0 %v4499
    %4927 = vmatprep.subr.mxu0 0.0
    %4928 = vmatpush1.msra.mxu0 %v4500
    %4929 = vmatprep.subr.mxu0 0.0
    %4930 = vmatpush1.msra.mxu0 %v4501
    %4931 = vmatprep.subr.mxu0 0.0
    %4932 = vmatpush1.msra.mxu0 0.0
    %4933 = vmatprep.subr.mxu0 0.0
    %4934 = vmatpush1.msra.mxu0 0.0
    %4935 = vmatprep.subr.mxu0 0.0
    %4936 = vmatpush1.msra.mxu0 0.0
    %4937 = vmatprep.subr.mxu0 0.0
    %4938 = vmatpush1.msra.mxu0 0.0
    %4939 = vmatprep.subr.mxu0 0.0
    %4940 = vmatpush1.msra.mxu0 0.0
    %4941 = vmatprep.subr.mxu0 0.0
    %4942 = vmatpush1.msra.mxu0 0.0
    %4943 = vmatprep.subr.mxu0 0.0
    %4944 = vmatpush1.msra.mxu0 0.0
    %4945 = vmatprep.subr.mxu0 0.0
    %4946 = vmatpush1.msra.mxu0 0.0
    %4947 = vmatprep.subr.mxu0 0.0
    %4948 = vmatpush1.msra.mxu0 0.0
    %4949 = vmatprep.subr.mxu0 0.0
    %4950 = vmatpush1.msra.mxu0 0.0
    %4951 = vmatprep.subr.mxu0 0.0
    %4952 = vmatpush1.msra.mxu0 0.0
    %4953 = vmatprep.subr.mxu0 0.0
    %4954 = vmatpush1.msra.mxu0 0.0
    %4955 = vmatprep.subr.mxu0 0.0
    %4956 = vmatpush1.msra.mxu0 0.0
    %4957 = vmatprep.subr.mxu0 0.0
    %4958 = vmatpush1.msra.mxu0 0.0
    %4959 = vmatprep.subr.mxu0 0.0
    %4960 = vmatpush1.msra.mxu0 0.0
    %4961 = vmatprep.subr.mxu0 0.0
    %4962 = vmatpush1.msra.mxu0 0.0
    %4963 = vmatprep.subr.mxu0 0.0
    %4964 = vmatpush1.msra.mxu0 0.0
    %4965 = vmatprep.subr.mxu0 0.0
    %4966 = vmatpush1.msra.mxu0 0.0
    %4967 = vmatprep.subr.mxu0 0.0
    %4968 = vmatpush1.msra.mxu0 0.0
    %4969 = vmatprep.subr.mxu0 0.0
    %4970 = vmatpush1.msra.mxu0 0.0
    %4971 = vmatprep.subr.mxu0 0.0
    %4972 = vmatpush1.msra.mxu0 0.0
    %4973 = vmatprep.subr.mxu0 0.0
    %4974 = vmatpush1.msra.mxu0 0.0
    %4975 = vmatprep.subr.mxu0 0.0
    %4976 = vmatpush1.msra.mxu0 0.0
    %4977 = vmatprep.subr.mxu0 0.0
    %4978 = vmatpush1.msra.mxu0 0.0
    %4979 = vmatprep.subr.mxu0 0.0
    %4980 = vmatpush1.msra.mxu0 0.0
    %4981 = vmatprep.subr.mxu0 0.0
    %4982 = vmatpush1.msra.mxu0 0.0
    %4983 = vmatprep.subr.mxu0 0.0
    %4984 = vmatpush1.msra.mxu0 0.0
    %4985 = vmatprep.subr.mxu0 0.0
    %4986 = vmatpush1.msra.mxu0 0.0
    %4987 = vmatprep.mubr.f32.mxu0 0.0
    %4988 = vmatmul.mubr.f32.gmra.mrb[0].mxu0 %v4921
    %v4989 = vpop.f32.mrb[0].mxu0
    %v4990 = vadd.f32 0.0, %v4989
    %v4991 = vpop.f32.mrb[0].mxu0
    %4992 = vdwg.mxu0
    %v4993 = vadd.f32 %v4915, %v4990
    %v4994 = vxor.u32 %v4993, 2147483648
    %v4995 = vmul.f32 %v4994, 1.442695
    %v4996 = vpow.pop %v4995
    %v4997 = vadd.f32 %v4996, 1.0
    %v4998 = vrcp.pop %v4997
    %v4999 = vmul.f32 1.0, %v4998
    %v5000 = vtanh.pop %v4993
    %v5001 = vmul.f32 %v4999, %v4841
    %5003 = vrot.lane.b32.xlu0 %v5000, 64
    %v5004 = vpop.permute.xlu0 %5003
    %v5006 = vmul.f32 %v4999, %v5004
    %5008 = vrot.lane.b32.xlu0 %v5006, 32
    %v5009 = vpop.permute.xlu0 %5008
    %v5011 = vadd.f32 %v5001, %v5009
    %v5012 = vtanh.pop %v5011
    %5014 = vrot.lane.b32.xlu0 %v5012, 64
    %v5015 = vpop.permute.xlu0 %5014
    %v5017 = vmul.f32 %v4999, %v5015
    %5018 = vmatprep.subr.mxu0 0.0
    %5019 = vmatpush1.msra.mxu0 %v4502
    %5020 = vmatprep.subr.mxu0 0.0
    %5021 = vmatpush1.msra.mxu0 %v4503
    %5022 = vmatprep.subr.mxu0 0.0
    %5023 = vmatpush1.msra.mxu0 %v4504
    %5024 = vmatprep.subr.mxu0 0.0
    %5025 = vmatpush1.msra.mxu0 %v4505
    %5026 = vmatprep.subr.mxu0 0.0
    %5027 = vmatpush1.msra.mxu0 0.0
    %5028 = vmatprep.subr.mxu0 0.0
    %5029 = vmatpush1.msra.mxu0 0.0
    %5030 = vmatprep.subr.mxu0 0.0
    %5031 = vmatpush1.msra.mxu0 0.0
    %5032 = vmatprep.subr.mxu0 0.0
    %5033 = vmatpush1.msra.mxu0 0.0
    %5034 = vmatprep.subr.mxu0 0.0
    %5035 = vmatpush1.msra.mxu0 0.0
    %5036 = vmatprep.subr.mxu0 0.0
    %5037 = vmatpush1.msra.mxu0 0.0
    %5038 = vmatprep.subr.mxu0 0.0
    %5039 = vmatpush1.msra.mxu0 0.0
    %5040 = vmatprep.subr.mxu0 0.0
    %5041 = vmatpush1.msra.mxu0 0.0
    %5042 = vmatprep.subr.mxu0 0.0
    %5043 = vmatpush1.msra.mxu0 0.0
    %5044 = vmatprep.subr.mxu0 0.0
    %5045 = vmatpush1.msra.mxu0 0.0
    %5046 = vmatprep.subr.mxu0 0.0
    %5047 = vmatpush1.msra.mxu0 0.0
    %5048 = vmatprep.subr.mxu0 0.0
    %5049 = vmatpush1.msra.mxu0 0.0
    %5050 = vmatprep.subr.mxu0 0.0
    %5051 = vmatpush1.msra.mxu0 0.0
    %5052 = vmatprep.subr.mxu0 0.0
    %5053 = vmatpush1.msra.mxu0 0.0
    %5054 = vmatprep.subr.mxu0 0.0
    %5055 = vmatpush1.msra.mxu0 0.0
    %5056 = vmatprep.subr.mxu0 0.0
    %5057 = vmatpush1.msra.mxu0 0.0
    %5058 = vmatprep.subr.mxu0 0.0
    %5059 = vmatpush1.msra.mxu0 0.0
    %5060 = vmatprep.subr.mxu0 0.0
    %5061 = vmatpush1.msra.mxu0 0.0
    %5062 = vmatprep.subr.mxu0 0.0
    %5063 = vmatpush1.msra.mxu0 0.0
    %5064 = vmatprep.subr.mxu0 0.0
    %5065 = vmatpush1.msra.mxu0 0.0
    %5066 = vmatprep.subr.mxu0 0.0
    %5067 = vmatpush1.msra.mxu0 0.0
    %5068 = vmatprep.subr.mxu0 0.0
    %5069 = vmatpush1.msra.mxu0 0.0
    %5070 = vmatprep.subr.mxu0 0.0
    %5071 = vmatpush1.msra.mxu0 0.0
    %5072 = vmatprep.subr.mxu0 0.0
    %5073 = vmatpush1.msra.mxu0 0.0
    %5074 = vmatprep.subr.mxu0 0.0
    %5075 = vmatpush1.msra.mxu0 0.0
    %5076 = vmatprep.subr.mxu0 0.0
    %5077 = vmatpush1.msra.mxu0 0.0
    %5078 = vmatprep.subr.mxu0 0.0
    %5079 = vmatpush1.msra.mxu0 0.0
    %5080 = vmatprep.subr.mxu0 0.0
    %5081 = vmatpush1.msra.mxu0 0.0
    %5082 = vmatprep.mubr.f32.mxu0 0.0
    %5083 = vmatmul.mubr.f32.gmra.mrb[0].mxu0 %v3813
    %v5084 = vpop.f32.mrb[0].mxu0
    %v5085 = vadd.f32 %v4511, %v5084
    %v5086 = vpop.f32.mrb[0].mxu0
    %5087 = vdwg.mxu0
    %5089 = vrot.lane.b32.xlu0 %v5017, 32
    %v5090 = vpop.permute.xlu0 %5089
    %v5091 = vsel %vm247, %v5090, 0
    %5093 = vmatprep.subr.mxu0 0.0
    %5094 = vmatpush1.msra.mxu0 %v4498
    %5095 = vmatprep.subr.mxu0 0.0
    %5096 = vmatpush1.msra.mxu0 %v4499
    %5097 = vmatprep.subr.mxu0 0.0
    %5098 = vmatpush1.msra.mxu0 %v4500
    %5099 = vmatprep.subr.mxu0 0.0
    %5100 = vmatpush1.msra.mxu0 %v4501
    %5101 = vmatprep.subr.mxu0 0.0
    %5102 = vmatpush1.msra.mxu0 0.0
    %5103 = vmatprep.subr.mxu0 0.0
    %5104 = vmatpush1.msra.mxu0 0.0
    %5105 = vmatprep.subr.mxu0 0.0
    %5106 = vmatpush1.msra.mxu0 0.0
    %5107 = vmatprep.subr.mxu0 0.0
    %5108 = vmatpush1.msra.mxu0 0.0
    %5109 = vmatprep.subr.mxu0 0.0
    %5110 = vmatpush1.msra.mxu0 0.0
    %5111 = vmatprep.subr.mxu0 0.0
    %5112 = vmatpush1.msra.mxu0 0.0
    %5113 = vmatprep.subr.mxu0 0.0
    %5114 = vmatpush1.msra.mxu0 0.0
    %5115 = vmatprep.subr.mxu0 0.0
    %5116 = vmatpush1.msra.mxu0 0.0
    %5117 = vmatprep.subr.mxu0 0.0
    %5118 = vmatpush1.msra.mxu0 0.0
    %5119 = vmatprep.subr.mxu0 0.0
    %5120 = vmatpush1.msra.mxu0 0.0
    %5121 = vmatprep.subr.mxu0 0.0
    %5122 = vmatpush1.msra.mxu0 0.0
    %5123 = vmatprep.subr.mxu0 0.0
    %5124 = vmatpush1.msra.mxu0 0.0
    %5125 = vmatprep.subr.mxu0 0.0
    %5126 = vmatpush1.msra.mxu0 0.0
    %5127 = vmatprep.subr.mxu0 0.0
    %5128 = vmatpush1.msra.mxu0 0.0
    %5129 = vmatprep.subr.mxu0 0.0
    %5130 = vmatpush1.msra.mxu0 0.0
    %5131 = vmatprep.subr.mxu0 0.0
    %5132 = vmatpush1.msra.mxu0 0.0
    %5133 = vmatprep.subr.mxu0 0.0
    %5134 = vmatpush1.msra.mxu0 0.0
    %5135 = vmatprep.subr.mxu0 0.0
    %5136 = vmatpush1.msra.mxu0 0.0
    %5137 = vmatprep.subr.mxu0 0.0
    %5138 = vmatpush1.msra.mxu0 0.0
    %5139 = vmatprep.subr.mxu0 0.0
    %5140 = vmatpush1.msra.mxu0 0.0
    %5141 = vmatprep.subr.mxu0 0.0
    %5142 = vmatpush1.msra.mxu0 0.0
    %5143 = vmatprep.subr.mxu0 0.0
    %5144 = vmatpush1.msra.mxu0 0.0
    %5145 = vmatprep.subr.mxu0 0.0
    %5146 = vmatpush1.msra.mxu0 0.0
    %5147 = vmatprep.subr.mxu0 0.0
    %5148 = vmatpush1.msra.mxu0 0.0
    %5149 = vmatprep.subr.mxu0 0.0
    %5150 = vmatpush1.msra.mxu0 0.0
    %5151 = vmatprep.subr.mxu0 0.0
    %5152 = vmatpush1.msra.mxu0 0.0
    %5153 = vmatprep.subr.mxu0 0.0
    %5154 = vmatpush1.msra.mxu0 0.0
    %5155 = vmatprep.subr.mxu0 0.0
    %5156 = vmatpush1.msra.mxu0 0.0
    %5157 = vmatprep.mubr.f32.mxu0 0.0
    %5158 = vmatmul.mubr.f32.gmra.mrb[0].mxu0 %v5091
    %v5159 = vpop.f32.mrb[0].mxu0
    %v5160 = vadd.f32 0.0, %v5159
    %v5161 = vpop.f32.mrb[0].mxu0
    %5162 = vdwg.mxu0
    %v5163 = vadd.f32 %v5085, %v5160
    %v5164 = vxor.u32 %v5163, 2147483648
    %v5165 = vmul.f32 %v5164, 1.442695
    %v5166 = vpow.pop %v5165
    %v5167 = vadd.f32 %v5166, 1.0
    %v5168 = vrcp.pop %v5167
    %v5169 = vmul.f32 1.0, %v5168
    %v5170 = vtanh.pop %v5163
    %v5171 = vmul.f32 %v5169, %v5011
    %5173 = vrot.lane.b32.xlu0 %v5170, 64
    %v5174 = vpop.permute.xlu0 %5173
    %v5176 = vmul.f32 %v5169, %v5174
    %5178 = vrot.lane.b32.xlu0 %v5176, 32
    %v5179 = vpop.permute.xlu0 %5178
    %v5181 = vadd.f32 %v5171, %v5179
    %v5182 = vtanh.pop %v5181
    %5184 = vrot.lane.b32.xlu0 %v5182, 64
    %v5185 = vpop.permute.xlu0 %5184
    %v5187 = vmul.f32 %v5169, %v5185
    %5188 = vmatprep.subr.mxu0 0.0
    %5189 = vmatpush1.msra.mxu0 %v4502
    %5190 = vmatprep.subr.mxu0 0.0
    %5191 = vmatpush1.msra.mxu0 %v4503
    %5192 = vmatprep.subr.mxu0 0.0
    %5193 = vmatpush1.msra.mxu0 %v4504
    %5194 = vmatprep.subr.mxu0 0.0
    %5195 = vmatpush1.msra.mxu0 %v4505
    %5196 = vmatprep.subr.mxu0 0.0
    %5197 = vmatpush1.msra.mxu0 0.0
    %5198 = vmatprep.subr.mxu0 0.0
    %5199 = vmatpush1.msra.mxu0 0.0
    %5200 = vmatprep.subr.mxu0 0.0
    %5201 = vmatpush1.msra.mxu0 0.0
    %5202 = vmatprep.subr.mxu0 0.0
    %5203 = vmatpush1.msra.mxu0 0.0
    %5204 = vmatprep.subr.mxu0 0.0
    %5205 = vmatpush1.msra.mxu0 0.0
    %5206 = vmatprep.subr.mxu0 0.0
    %5207 = vmatpush1.msra.mxu0 0.0
    %5208 = vmatprep.subr.mxu0 0.0
    %5209 = vmatpush1.msra.mxu0 0.0
    %5210 = vmatprep.subr.mxu0 0.0
    %5211 = vmatpush1.msra.mxu0 0.0
    %5212 = vmatprep.subr.mxu0 0.0
    %5213 = vmatpush1.msra.mxu0 0.0
    %5214 = vmatprep.subr.mxu0 0.0
    %5215 = vmatpush1.msra.mxu0 0.0
    %5216 = vmatprep.subr.mxu0 0.0
    %5217 = vmatpush1.msra.mxu0 0.0
    %5218 = vmatprep.subr.mxu0 0.0
    %5219 = vmatpush1.msra.mxu0 0.0
    %5220 = vmatprep.subr.mxu0 0.0
    %5221 = vmatpush1.msra.mxu0 0.0
    %5222 = vmatprep.subr.mxu0 0.0
    %5223 = vmatpush1.msra.mxu0 0.0
    %5224 = vmatprep.subr.mxu0 0.0
    %5225 = vmatpush1.msra.mxu0 0.0
    %5226 = vmatprep.subr.mxu0 0.0
    %5227 = vmatpush1.msra.mxu0 0.0
    %5228 = vmatprep.subr.mxu0 0.0
    %5229 = vmatpush1.msra.mxu0 0.0
    %5230 = vmatprep.subr.mxu0 0.0
    %5231 = vmatpush1.msra.mxu0 0.0
    %5232 = vmatprep.subr.mxu0 0.0
    %5233 = vmatpush1.msra.mxu0 0.0
    %5234 = vmatprep.subr.mxu0 0.0
    %5235 = vmatpush1.msra.mxu0 0.0
    %5236 = vmatprep.subr.mxu0 0.0
    %5237 = vmatpush1.msra.mxu0 0.0
    %5238 = vmatprep.subr.mxu0 0.0
    %5239 = vmatpush1.msra.mxu0 0.0
    %5240 = vmatprep.subr.mxu0 0.0
    %5241 = vmatpush1.msra.mxu0 0.0
    %5242 = vmatprep.subr.mxu0 0.0
    %5243 = vmatpush1.msra.mxu0 0.0
    %5244 = vmatprep.subr.mxu0 0.0
    %5245 = vmatpush1.msra.mxu0 0.0
    %5246 = vmatprep.subr.mxu0 0.0
    %5247 = vmatpush1.msra.mxu0 0.0
    %5248 = vmatprep.subr.mxu0 0.0
    %5249 = vmatpush1.msra.mxu0 0.0
    %5250 = vmatprep.subr.mxu0 0.0
    %5251 = vmatpush1.msra.mxu0 0.0
    %5252 = vmatprep.mubr.f32.mxu0 0.0
    %5253 = vmatmul.mubr.f32.gmra.mrb[0].mxu0 %v3985
    %v5254 = vpop.f32.mrb[0].mxu0
    %v5255 = vadd.f32 %v4511, %v5254
    %v5256 = vpop.f32.mrb[0].mxu0
    %5257 = vdwg.mxu0
    %5259 = vrot.lane.b32.xlu0 %v5187, 32
    %v5260 = vpop.permute.xlu0 %5259
    %v5261 = vsel %vm247, %v5260, 0
    %5263 = vmatprep.subr.mxu0 0.0
    %5264 = vmatpush1.msra.mxu0 %v4498
    %5265 = vmatprep.subr.mxu0 0.0
    %5266 = vmatpush1.msra.mxu0 %v4499
    %5267 = vmatprep.subr.mxu0 0.0
    %5268 = vmatpush1.msra.mxu0 %v4500
    %5269 = vmatprep.subr.mxu0 0.0
    %5270 = vmatpush1.msra.mxu0 %v4501
    %5271 = vmatprep.subr.mxu0 0.0
    %5272 = vmatpush1.msra.mxu0 0.0
    %5273 = vmatprep.subr.mxu0 0.0
    %5274 = vmatpush1.msra.mxu0 0.0
    %5275 = vmatprep.subr.mxu0 0.0
    %5276 = vmatpush1.msra.mxu0 0.0
    %5277 = vmatprep.subr.mxu0 0.0
    %5278 = vmatpush1.msra.mxu0 0.0
    %5279 = vmatprep.subr.mxu0 0.0
    %5280 = vmatpush1.msra.mxu0 0.0
    %5281 = vmatprep.subr.mxu0 0.0
    %5282 = vmatpush1.msra.mxu0 0.0
    %5283 = vmatprep.subr.mxu0 0.0
    %5284 = vmatpush1.msra.mxu0 0.0
    %5285 = vmatprep.subr.mxu0 0.0
    %5286 = vmatpush1.msra.mxu0 0.0
    %5287 = vmatprep.subr.mxu0 0.0
    %5288 = vmatpush1.msra.mxu0 0.0
    %5289 = vmatprep.subr.mxu0 0.0
    %5290 = vmatpush1.msra.mxu0 0.0
    %5291 = vmatprep.subr.mxu0 0.0
    %5292 = vmatpush1.msra.mxu0 0.0
    %5293 = vmatprep.subr.mxu0 0.0
    %5294 = vmatpush1.msra.mxu0 0.0
    %5295 = vmatprep.subr.mxu0 0.0
    %5296 = vmatpush1.msra.mxu0 0.0
    %5297 = vmatprep.subr.mxu0 0.0
    %5298 = vmatpush1.msra.mxu0 0.0
    %5299 = vmatprep.subr.mxu0 0.0
    %5300 = vmatpush1.msra.mxu0 0.0
    %5301 = vmatprep.subr.mxu0 0.0
    %5302 = vmatpush1.msra.mxu0 0.0
    %5303 = vmatprep.subr.mxu0 0.0
    %5304 = vmatpush1.msra.mxu0 0.0
    %5305 = vmatprep.subr.mxu0 0.0
    %5306 = vmatpush1.msra.mxu0 0.0
    %5307 = vmatprep.subr.mxu0 0.0
    %5308 = vmatpush1.msra.mxu0 0.0
    %5309 = vmatprep.subr.mxu0 0.0
    %5310 = vmatpush1.msra.mxu0 0.0
    %5311 = vmatprep.subr.mxu0 0.0
    %5312 = vmatpush1.msra.mxu0 0.0
    %5313 = vmatprep.subr.mxu0 0.0
    %5314 = vmatpush1.msra.mxu0 0.0
    %5315 = vmatprep.subr.mxu0 0.0
    %5316 = vmatpush1.msra.mxu0 0.0
    %5317 = vmatprep.subr.mxu0 0.0
    %5318 = vmatpush1.msra.mxu0 0.0
    %5319 = vmatprep.subr.mxu0 0.0
    %5320 = vmatpush1.msra.mxu0 0.0
    %5321 = vmatprep.subr.mxu0 0.0
    %5322 = vmatpush1.msra.mxu0 0.0
    %5323 = vmatprep.subr.mxu0 0.0
    %5324 = vmatpush1.msra.mxu0 0.0
    %5325 = vmatprep.subr.mxu0 0.0
    %5326 = vmatpush1.msra.mxu0 0.0
    %5327 = vmatprep.mubr.f32.mxu0 0.0
    %5328 = vmatmul.mubr.f32.gmra.mrb[0].mxu0 %v5261
    %v5329 = vpop.f32.mrb[0].mxu0
    %v5330 = vadd.f32 0.0, %v5329
    %v5331 = vpop.f32.mrb[0].mxu0
    %5332 = vdwg.mxu0
    %v5333 = vadd.f32 %v5255, %v5330
    %v5334 = vxor.u32 %v5333, 2147483648
    %v5335 = vmul.f32 %v5334, 1.442695
    %v5336 = vpow.pop %v5335
    %v5337 = vadd.f32 %v5336, 1.0
    %v5338 = vrcp.pop %v5337
    %v5339 = vmul.f32 1.0, %v5338
    %v5340 = vtanh.pop %v5333
    %v5341 = vmul.f32 %v5339, %v5181
    %5343 = vrot.lane.b32.xlu0 %v5340, 64
    %v5344 = vpop.permute.xlu0 %5343
    %v5346 = vmul.f32 %v5339, %v5344
    %5348 = vrot.lane.b32.xlu0 %v5346, 32
    %v5349 = vpop.permute.xlu0 %5348
    %v5351 = vadd.f32 %v5341, %v5349
    %v5352 = vtanh.pop %v5351
    %5354 = vrot.lane.b32.xlu0 %v5352, 64
    %v5355 = vpop.permute.xlu0 %5354
    %v5357 = vmul.f32 %v5339, %v5355
    %5358 = vmatprep.subr.mxu0 0.0
    %5359 = vmatpush1.msra.mxu0 %v4502
    %5360 = vmatprep.subr.mxu0 0.0
    %5361 = vmatpush1.msra.mxu0 %v4503
    %5362 = vmatprep.subr.mxu0 0.0
    %5363 = vmatpush1.msra.mxu0 %v4504
    %5364 = vmatprep.subr.mxu0 0.0
    %5365 = vmatpush1.msra.mxu0 %v4505
    %5366 = vmatprep.subr.mxu0 0.0
    %5367 = vmatpush1.msra.mxu0 0.0
    %5368 = vmatprep.subr.mxu0 0.0
    %5369 = vmatpush1.msra.mxu0 0.0
    %5370 = vmatprep.subr.mxu0 0.0
    %5371 = vmatpush1.msra.mxu0 0.0
    %5372 = vmatprep.subr.mxu0 0.0
    %5373 = vmatpush1.msra.mxu0 0.0
    %5374 = vmatprep.subr.mxu0 0.0
    %5375 = vmatpush1.msra.mxu0 0.0
    %5376 = vmatprep.subr.mxu0 0.0
    %5377 = vmatpush1.msra.mxu0 0.0
    %5378 = vmatprep.subr.mxu0 0.0
    %5379 = vmatpush1.msra.mxu0 0.0
    %5380 = vmatprep.subr.mxu0 0.0
    %5381 = vmatpush1.msra.mxu0 0.0
    %5382 = vmatprep.subr.mxu0 0.0
    %5383 = vmatpush1.msra.mxu0 0.0
    %5384 = vmatprep.subr.mxu0 0.0
    %5385 = vmatpush1.msra.mxu0 0.0
    %5386 = vmatprep.subr.mxu0 0.0
    %5387 = vmatpush1.msra.mxu0 0.0
    %5388 = vmatprep.subr.mxu0 0.0
    %5389 = vmatpush1.msra.mxu0 0.0
    %5390 = vmatprep.subr.mxu0 0.0
    %5391 = vmatpush1.msra.mxu0 0.0
    %5392 = vmatprep.subr.mxu0 0.0
    %5393 = vmatpush1.msra.mxu0 0.0
    %5394 = vmatprep.subr.mxu0 0.0
    %5395 = vmatpush1.msra.mxu0 0.0
    %5396 = vmatprep.subr.mxu0 0.0
    %5397 = vmatpush1.msra.mxu0 0.0
    %5398 = vmatprep.subr.mxu0 0.0
    %5399 = vmatpush1.msra.mxu0 0.0
    %5400 = vmatprep.subr.mxu0 0.0
    %5401 = vmatpush1.msra.mxu0 0.0
    %5402 = vmatprep.subr.mxu0 0.0
    %5403 = vmatpush1.msra.mxu0 0.0
    %5404 = vmatprep.subr.mxu0 0.0
    %5405 = vmatpush1.msra.mxu0 0.0
    %5406 = vmatprep.subr.mxu0 0.0
    %5407 = vmatpush1.msra.mxu0 0.0
    %5408 = vmatprep.subr.mxu0 0.0
    %5409 = vmatpush1.msra.mxu0 0.0
    %5410 = vmatprep.subr.mxu0 0.0
    %5411 = vmatpush1.msra.mxu0 0.0
    %5412 = vmatprep.subr.mxu0 0.0
    %5413 = vmatpush1.msra.mxu0 0.0
    %5414 = vmatprep.subr.mxu0 0.0
    %5415 = vmatpush1.msra.mxu0 0.0
    %5416 = vmatprep.subr.mxu0 0.0
    %5417 = vmatpush1.msra.mxu0 0.0
    %5418 = vmatprep.subr.mxu0 0.0
    %5419 = vmatpush1.msra.mxu0 0.0
    %5420 = vmatprep.subr.mxu0 0.0
    %5421 = vmatpush1.msra.mxu0 0.0
    %5422 = vmatprep.mubr.f32.mxu0 0.0
    %5423 = vmatmul.mubr.f32.gmra.mrb[0].mxu0 %v4157
    %v5424 = vpop.f32.mrb[0].mxu0
    %v5425 = vadd.f32 %v4511, %v5424
    %v5426 = vpop.f32.mrb[0].mxu0
    %5427 = vdwg.mxu0
    %5429 = vrot.lane.b32.xlu0 %v5357, 32
    %v5430 = vpop.permute.xlu0 %5429
    %v5431 = vsel %vm247, %v5430, 0
    %5433 = vmatprep.subr.mxu0 0.0
    %5434 = vmatpush1.msra.mxu0 %v4498
    %5435 = vmatprep.subr.mxu0 0.0
    %5436 = vmatpush1.msra.mxu0 %v4499
    %5437 = vmatprep.subr.mxu0 0.0
    %5438 = vmatpush1.msra.mxu0 %v4500
    %5439 = vmatprep.subr.mxu0 0.0
    %5440 = vmatpush1.msra.mxu0 %v4501
    %5441 = vmatprep.subr.mxu0 0.0
    %5442 = vmatpush1.msra.mxu0 0.0
    %5443 = vmatprep.subr.mxu0 0.0
    %5444 = vmatpush1.msra.mxu0 0.0
    %5445 = vmatprep.subr.mxu0 0.0
    %5446 = vmatpush1.msra.mxu0 0.0
    %5447 = vmatprep.subr.mxu0 0.0
    %5448 = vmatpush1.msra.mxu0 0.0
    %5449 = vmatprep.subr.mxu0 0.0
    %5450 = vmatpush1.msra.mxu0 0.0
    %5451 = vmatprep.subr.mxu0 0.0
    %5452 = vmatpush1.msra.mxu0 0.0
    %5453 = vmatprep.subr.mxu0 0.0
    %5454 = vmatpush1.msra.mxu0 0.0
    %5455 = vmatprep.subr.mxu0 0.0
    %5456 = vmatpush1.msra.mxu0 0.0
    %5457 = vmatprep.subr.mxu0 0.0
    %5458 = vmatpush1.msra.mxu0 0.0
    %5459 = vmatprep.subr.mxu0 0.0
    %5460 = vmatpush1.msra.mxu0 0.0
    %5461 = vmatprep.subr.mxu0 0.0
    %5462 = vmatpush1.msra.mxu0 0.0
    %5463 = vmatprep.subr.mxu0 0.0
    %5464 = vmatpush1.msra.mxu0 0.0
    %5465 = vmatprep.subr.mxu0 0.0
    %5466 = vmatpush1.msra.mxu0 0.0
    %5467 = vmatprep.subr.mxu0 0.0
    %5468 = vmatpush1.msra.mxu0 0.0
    %5469 = vmatprep.subr.mxu0 0.0
    %5470 = vmatpush1.msra.mxu0 0.0
    %5471 = vmatprep.subr.mxu0 0.0
    %5472 = vmatpush1.msra.mxu0 0.0
    %5473 = vmatprep.subr.mxu0 0.0
    %5474 = vmatpush1.msra.mxu0 0.0
    %5475 = vmatprep.subr.mxu0 0.0
    %5476 = vmatpush1.msra.mxu0 0.0
    %5477 = vmatprep.subr.mxu0 0.0
    %5478 = vmatpush1.msra.mxu0 0.0
    %5479 = vmatprep.subr.mxu0 0.0
    %5480 = vmatpush1.msra.mxu0 0.0
    %5481 = vmatprep.subr.mxu0 0.0
    %5482 = vmatpush1.msra.mxu0 0.0
    %5483 = vmatprep.subr.mxu0 0.0
    %5484 = vmatpush1.msra.mxu0 0.0
    %5485 = vmatprep.subr.mxu0 0.0
    %5486 = vmatpush1.msra.mxu0 0.0
    %5487 = vmatprep.subr.mxu0 0.0
    %5488 = vmatpush1.msra.mxu0 0.0
    %5489 = vmatprep.subr.mxu0 0.0
    %5490 = vmatpush1.msra.mxu0 0.0
    %5491 = vmatprep.subr.mxu0 0.0
    %5492 = vmatpush1.msra.mxu0 0.0
    %5493 = vmatprep.subr.mxu0 0.0
    %5494 = vmatpush1.msra.mxu0 0.0
    %5495 = vmatprep.subr.mxu0 0.0
    %5496 = vmatpush1.msra.mxu0 0.0
    %5497 = vmatprep.mubr.f32.mxu0 0.0
    %5498 = vmatmul.mubr.f32.gmra.mrb[0].mxu0 %v5431
    %v5499 = vpop.f32.mrb[0].mxu0
    %v5500 = vadd.f32 0.0, %v5499
    %v5501 = vpop.f32.mrb[0].mxu0
    %5502 = vdwg.mxu0
    %v5503 = vadd.f32 %v5425, %v5500
    %v5504 = vxor.u32 %v5503, 2147483648
    %v5505 = vmul.f32 %v5504, 1.442695
    %v5506 = vpow.pop %v5505
    %v5507 = vadd.f32 %v5506, 1.0
    %v5508 = vrcp.pop %v5507
    %v5509 = vmul.f32 1.0, %v5508
    %v5510 = vtanh.pop %v5503
    %v5511 = vmul.f32 %v5509, %v5351
    %5513 = vrot.lane.b32.xlu0 %v5510, 64
    %v5514 = vpop.permute.xlu0 %5513
    %v5516 = vmul.f32 %v5509, %v5514
    %5518 = vrot.lane.b32.xlu0 %v5516, 32
    %v5519 = vpop.permute.xlu0 %5518
    %v5521 = vadd.f32 %v5511, %v5519
    %v5522 = vtanh.pop %v5521
    %5524 = vrot.lane.b32.xlu0 %v5522, 64
    %v5525 = vpop.permute.xlu0 %5524
    %v5527 = vmul.f32 %v5509, %v5525
    %5528 = vmatprep.subr.mxu0 0.0
    %5529 = vmatpush1.msra.mxu0 %v4502
    %5530 = vmatprep.subr.mxu0 0.0
    %5531 = vmatpush1.msra.mxu0 %v4503
    %5532 = vmatprep.subr.mxu0 0.0
    %5533 = vmatpush1.msra.mxu0 %v4504
    %5534 = vmatprep.subr.mxu0 0.0
    %5535 = vmatpush1.msra.mxu0 %v4505
    %5536 = vmatprep.subr.mxu0 0.0
    %5537 = vmatpush1.msra.mxu0 0.0
    %5538 = vmatprep.subr.mxu0 0.0
    %5539 = vmatpush1.msra.mxu0 0.0
    %5540 = vmatprep.subr.mxu0 0.0
    %5541 = vmatpush1.msra.mxu0 0.0
    %5542 = vmatprep.subr.mxu0 0.0
    %5543 = vmatpush1.msra.mxu0 0.0
    %5544 = vmatprep.subr.mxu0 0.0
    %5545 = vmatpush1.msra.mxu0 0.0
    %5546 = vmatprep.subr.mxu0 0.0
    %5547 = vmatpush1.msra.mxu0 0.0
    %5548 = vmatprep.subr.mxu0 0.0
    %5549 = vmatpush1.msra.mxu0 0.0
    %5550 = vmatprep.subr.mxu0 0.0
    %5551 = vmatpush1.msra.mxu0 0.0
    %5552 = vmatprep.subr.mxu0 0.0
    %5553 = vmatpush1.msra.mxu0 0.0
    %5554 = vmatprep.subr.mxu0 0.0
    %5555 = vmatpush1.msra.mxu0 0.0
    %5556 = vmatprep.subr.mxu0 0.0
    %5557 = vmatpush1.msra.mxu0 0.0
    %5558 = vmatprep.subr.mxu0 0.0
    %5559 = vmatpush1.msra.mxu0 0.0
    %5560 = vmatprep.subr.mxu0 0.0
    %5561 = vmatpush1.msra.mxu0 0.0
    %5562 = vmatprep.subr.mxu0 0.0
    %5563 = vmatpush1.msra.mxu0 0.0
    %5564 = vmatprep.subr.mxu0 0.0
    %5565 = vmatpush1.msra.mxu0 0.0
    %5566 = vmatprep.subr.mxu0 0.0
    %5567 = vmatpush1.msra.mxu0 0.0
    %5568 = vmatprep.subr.mxu0 0.0
    %5569 = vmatpush1.msra.mxu0 0.0
    %5570 = vmatprep.subr.mxu0 0.0
    %5571 = vmatpush1.msra.mxu0 0.0
    %5572 = vmatprep.subr.mxu0 0.0
    %5573 = vmatpush1.msra.mxu0 0.0
    %5574 = vmatprep.subr.mxu0 0.0
    %5575 = vmatpush1.msra.mxu0 0.0
    %5576 = vmatprep.subr.mxu0 0.0
    %5577 = vmatpush1.msra.mxu0 0.0
    %5578 = vmatprep.subr.mxu0 0.0
    %5579 = vmatpush1.msra.mxu0 0.0
    %5580 = vmatprep.subr.mxu0 0.0
    %5581 = vmatpush1.msra.mxu0 0.0
    %5582 = vmatprep.subr.mxu0 0.0
    %5583 = vmatpush1.msra.mxu0 0.0
    %5584 = vmatprep.subr.mxu0 0.0
    %5585 = vmatpush1.msra.mxu0 0.0
    %5586 = vmatprep.subr.mxu0 0.0
    %5587 = vmatpush1.msra.mxu0 0.0
    %5588 = vmatprep.subr.mxu0 0.0
    %5589 = vmatpush1.msra.mxu0 0.0
    %5590 = vmatprep.subr.mxu0 0.0
    %5591 = vmatpush1.msra.mxu0 0.0
    %5592 = vmatprep.mubr.f32.mxu0 0.0
    %5593 = vmatmul.mubr.f32.gmra.mrb[0].mxu0 %v4329
    %v5594 = vpop.f32.mrb[0].mxu0
    %v5595 = vadd.f32 %v4511, %v5594
    %v5596 = vpop.f32.mrb[0].mxu0
    %5597 = vdwg.mxu0
    %5599 = vrot.lane.b32.xlu0 %v5527, 32
    %v5600 = vpop.permute.xlu0 %5599
    %v5601 = vsel %vm247, %v5600, 0
    %5603 = vmatprep.subr.mxu0 0.0
    %5604 = vmatpush1.msra.mxu0 %v4498
    %5605 = vmatprep.subr.mxu0 0.0
    %5606 = vmatpush1.msra.mxu0 %v4499
    %5607 = vmatprep.subr.mxu0 0.0
    %5608 = vmatpush1.msra.mxu0 %v4500
    %5609 = vmatprep.subr.mxu0 0.0
    %5610 = vmatpush1.msra.mxu0 %v4501
    %5611 = vmatprep.subr.mxu0 0.0
    %5612 = vmatpush1.msra.mxu0 0.0
    %5613 = vmatprep.subr.mxu0 0.0
    %5614 = vmatpush1.msra.mxu0 0.0
    %5615 = vmatprep.subr.mxu0 0.0
    %5616 = vmatpush1.msra.mxu0 0.0
    %5617 = vmatprep.subr.mxu0 0.0
    %5618 = vmatpush1.msra.mxu0 0.0
    %5619 = vmatprep.subr.mxu0 0.0
    %5620 = vmatpush1.msra.mxu0 0.0
    %5621 = vmatprep.subr.mxu0 0.0
    %5622 = vmatpush1.msra.mxu0 0.0
    %5623 = vmatprep.subr.mxu0 0.0
    %5624 = vmatpush1.msra.mxu0 0.0
    %5625 = vmatprep.subr.mxu0 0.0
    %5626 = vmatpush1.msra.mxu0 0.0
    %5627 = vmatprep.subr.mxu0 0.0
    %5628 = vmatpush1.msra.mxu0 0.0
    %5629 = vmatprep.subr.mxu0 0.0
    %5630 = vmatpush1.msra.mxu0 0.0
    %5631 = vmatprep.subr.mxu0 0.0
    %5632 = vmatpush1.msra.mxu0 0.0
    %5633 = vmatprep.subr.mxu0 0.0
    %5634 = vmatpush1.msra.mxu0 0.0
    %5635 = vmatprep.subr.mxu0 0.0
    %5636 = vmatpush1.msra.mxu0 0.0
    %5637 = vmatprep.subr.mxu0 0.0
    %5638 = vmatpush1.msra.mxu0 0.0
    %5639 = vmatprep.subr.mxu0 0.0
    %5640 = vmatpush1.msra.mxu0 0.0
    %5641 = vmatprep.subr.mxu0 0.0
    %5642 = vmatpush1.msra.mxu0 0.0
    %5643 = vmatprep.subr.mxu0 0.0
    %5644 = vmatpush1.msra.mxu0 0.0
    %5645 = vmatprep.subr.mxu0 0.0
    %5646 = vmatpush1.msra.mxu0 0.0
    %5647 = vmatprep.subr.mxu0 0.0
    %5648 = vmatpush1.msra.mxu0 0.0
    %5649 = vmatprep.subr.mxu0 0.0
    %5650 = vmatpush1.msra.mxu0 0.0
    %5651 = vmatprep.subr.mxu0 0.0
    %5652 = vmatpush1.msra.mxu0 0.0
    %5653 = vmatprep.subr.mxu0 0.0
    %5654 = vmatpush1.msra.mxu0 0.0
    %5655 = vmatprep.subr.mxu0 0.0
    %5656 = vmatpush1.msra.mxu0 0.0
    %5657 = vmatprep.subr.mxu0 0.0
    %5658 = vmatpush1.msra.mxu0 0.0
    %5659 = vmatprep.subr.mxu0 0.0
    %5660 = vmatpush1.msra.mxu0 0.0
    %5661 = vmatprep.subr.mxu0 0.0
    %5662 = vmatpush1.msra.mxu0 0.0
    %5663 = vmatprep.subr.mxu0 0.0
    %5664 = vmatpush1.msra.mxu0 0.0
    %5665 = vmatprep.subr.mxu0 0.0
    %5666 = vmatpush1.msra.mxu0 0.0
    %5667 = vmatprep.mubr.f32.mxu0 0.0
    %5668 = vmatmul.mubr.f32.gmra.mrb[0].mxu0 %v5601
    %v5669 = vpop.f32.mrb[0].mxu0
    %v5670 = vadd.f32 0.0, %v5669
    %v5671 = vpop.f32.mrb[0].mxu0
    %5672 = vdwg.mxu0
    %v5673 = vadd.f32 %v5595, %v5670
    %v5674 = vxor.u32 %v5673, 2147483648
    %v5675 = vmul.f32 %v5674, 1.442695
    %v5676 = vpow.pop %v5675
    %v5677 = vadd.f32 %v5676, 1.0
    %v5678 = vrcp.pop %v5677
    %v5679 = vmul.f32 1.0, %v5678
    %v5680 = vtanh.pop %v5673
    %v5681 = vmul.f32 %v5679, %v5521
    %5683 = vrot.lane.b32.xlu0 %v5680, 64
    %v5684 = vpop.permute.xlu0 %5683
    %v5686 = vmul.f32 %v5679, %v5684
    %5688 = vrot.lane.b32.xlu0 %v5686, 32
    %v5689 = vpop.permute.xlu0 %5688
    %v5691 = vadd.f32 %v5681, %v5689
    %v5692 = vtanh.pop %v5691
    %5694 = vrot.lane.b32.xlu0 %v5692, 64
    %v5695 = vpop.permute.xlu0 %5694
    %v5697 = vmul.f32 %v5679, %v5695
    %5699 = vrot.lane.b32.xlu0 %v4497, 32
    %v5700 = vpop.permute.xlu0 %5699
    %v5701 = vsel %vm247, %v5700, 0
    %5703 = vmatprep.subr.mxu0 0.0
    %5704 = vmatpush1.msra.mxu0 %v4502
    %5705 = vmatprep.subr.mxu0 0.0
    %5706 = vmatpush1.msra.mxu0 %v4503
    %5707 = vmatprep.subr.mxu0 0.0
    %5708 = vmatpush1.msra.mxu0 %v4504
    %5709 = vmatprep.subr.mxu0 0.0
    %5710 = vmatpush1.msra.mxu0 %v4505
    %5711 = vmatprep.subr.mxu0 0.0
    %5712 = vmatpush1.msra.mxu0 0.0
    %5713 = vmatprep.subr.mxu0 0.0
    %5714 = vmatpush1.msra.mxu0 0.0
    %5715 = vmatprep.subr.mxu0 0.0
    %5716 = vmatpush1.msra.mxu0 0.0
    %5717 = vmatprep.subr.mxu0 0.0
    %5718 = vmatpush1.msra.mxu0 0.0
    %5719 = vmatprep.subr.mxu0 0.0
    %5720 = vmatpush1.msra.mxu0 0.0
    %5721 = vmatprep.subr.mxu0 0.0
    %5722 = vmatpush1.msra.mxu0 0.0
    %5723 = vmatprep.subr.mxu0 0.0
    %5724 = vmatpush1.msra.mxu0 0.0
    %5725 = vmatprep.subr.mxu0 0.0
    %5726 = vmatpush1.msra.mxu0 0.0
    %5727 = vmatprep.subr.mxu0 0.0
    %5728 = vmatpush1.msra.mxu0 0.0
    %5729 = vmatprep.subr.mxu0 0.0
    %5730 = vmatpush1.msra.mxu0 0.0
    %5731 = vmatprep.subr.mxu0 0.0
    %5732 = vmatpush1.msra.mxu0 0.0
    %5733 = vmatprep.subr.mxu0 0.0
    %5734 = vmatpush1.msra.mxu0 0.0
    %5735 = vmatprep.subr.mxu0 0.0
    %5736 = vmatpush1.msra.mxu0 0.0
    %5737 = vmatprep.subr.mxu0 0.0
    %5738 = vmatpush1.msra.mxu0 0.0
    %5739 = vmatprep.subr.mxu0 0.0
    %5740 = vmatpush1.msra.mxu0 0.0
    %5741 = vmatprep.subr.mxu0 0.0
    %5742 = vmatpush1.msra.mxu0 0.0
    %5743 = vmatprep.subr.mxu0 0.0
    %5744 = vmatpush1.msra.mxu0 0.0
    %5745 = vmatprep.subr.mxu0 0.0
    %5746 = vmatpush1.msra.mxu0 0.0
    %5747 = vmatprep.subr.mxu0 0.0
    %5748 = vmatpush1.msra.mxu0 0.0
    %5749 = vmatprep.subr.mxu0 0.0
    %5750 = vmatpush1.msra.mxu0 0.0
    %5751 = vmatprep.subr.mxu0 0.0
    %5752 = vmatpush1.msra.mxu0 0.0
    %5753 = vmatprep.subr.mxu0 0.0
    %5754 = vmatpush1.msra.mxu0 0.0
    %5755 = vmatprep.subr.mxu0 0.0
    %5756 = vmatpush1.msra.mxu0 0.0
    %5757 = vmatprep.subr.mxu0 0.0
    %5758 = vmatpush1.msra.mxu0 0.0
    %5759 = vmatprep.subr.mxu0 0.0
    %5760 = vmatpush1.msra.mxu0 0.0
    %5761 = vmatprep.subr.mxu0 0.0
    %5762 = vmatpush1.msra.mxu0 0.0
    %5763 = vmatprep.subr.mxu0 0.0
    %5764 = vmatpush1.msra.mxu0 0.0
    %5765 = vmatprep.subr.mxu0 0.0
    %5766 = vmatpush1.msra.mxu0 0.0
    %5767 = vmatprep.mubr.f32.mxu0 0.0
    %5768 = vmatmul.mubr.f32.gmra.mrb[0].mxu0 %v5701
    %v5769 = vpop.f32.mrb[0].mxu0
    %v5770 = vadd.f32 %v4511, %v5769
    %v5771 = vpop.f32.mrb[0].mxu0
    %5772 = vdwg.mxu0
    %5774 = vrot.lane.b32.xlu0 %v5697, 32
    %v5775 = vpop.permute.xlu0 %5774
    %v5776 = vsel %vm247, %v5775, 0
    %5778 = vmatprep.subr.mxu0 0.0
    %5779 = vmatpush1.msra.mxu0 %v4498
    %5780 = vmatprep.subr.mxu0 0.0
    %5781 = vmatpush1.msra.mxu0 %v4499
    %5782 = vmatprep.subr.mxu0 0.0
    %5783 = vmatpush1.msra.mxu0 %v4500
    %5784 = vmatprep.subr.mxu0 0.0
    %5785 = vmatpush1.msra.mxu0 %v4501
    %5786 = vmatprep.subr.mxu0 0.0
    %5787 = vmatpush1.msra.mxu0 0.0
    %5788 = vmatprep.subr.mxu0 0.0
    %5789 = vmatpush1.msra.mxu0 0.0
    %5790 = vmatprep.subr.mxu0 0.0
    %5791 = vmatpush1.msra.mxu0 0.0
    %5792 = vmatprep.subr.mxu0 0.0
    %5793 = vmatpush1.msra.mxu0 0.0
    %5794 = vmatprep.subr.mxu0 0.0
    %5795 = vmatpush1.msra.mxu0 0.0
    %5796 = vmatprep.subr.mxu0 0.0
    %5797 = vmatpush1.msra.mxu0 0.0
    %5798 = vmatprep.subr.mxu0 0.0
    %5799 = vmatpush1.msra.mxu0 0.0
    %5800 = vmatprep.subr.mxu0 0.0
    %5801 = vmatpush1.msra.mxu0 0.0
    %5802 = vmatprep.subr.mxu0 0.0
    %5803 = vmatpush1.msra.mxu0 0.0
    %5804 = vmatprep.subr.mxu0 0.0
    %5805 = vmatpush1.msra.mxu0 0.0
    %5806 = vmatprep.subr.mxu0 0.0
    %5807 = vmatpush1.msra.mxu0 0.0
    %5808 = vmatprep.subr.mxu0 0.0
    %5809 = vmatpush1.msra.mxu0 0.0
    %5810 = vmatprep.subr.mxu0 0.0
    %5811 = vmatpush1.msra.mxu0 0.0
    %5812 = vmatprep.subr.mxu0 0.0
    %5813 = vmatpush1.msra.mxu0 0.0
    %5814 = vmatprep.subr.mxu0 0.0
    %5815 = vmatpush1.msra.mxu0 0.0
    %5816 = vmatprep.subr.mxu0 0.0
    %5817 = vmatpush1.msra.mxu0 0.0
    %5818 = vmatprep.subr.mxu0 0.0
    %5819 = vmatpush1.msra.mxu0 0.0
    %5820 = vmatprep.subr.mxu0 0.0
    %5821 = vmatpush1.msra.mxu0 0.0
    %5822 = vmatprep.subr.mxu0 0.0
    %5823 = vmatpush1.msra.mxu0 0.0
    %5824 = vmatprep.subr.mxu0 0.0
    %5825 = vmatpush1.msra.mxu0 0.0
    %5826 = vmatprep.subr.mxu0 0.0
    %5827 = vmatpush1.msra.mxu0 0.0
    %5828 = vmatprep.subr.mxu0 0.0
    %5829 = vmatpush1.msra.mxu0 0.0
    %5830 = vmatprep.subr.mxu0 0.0
    %5831 = vmatpush1.msra.mxu0 0.0
    %5832 = vmatprep.subr.mxu0 0.0
    %5833 = vmatpush1.msra.mxu0 0.0
    %5834 = vmatprep.subr.mxu0 0.0
    %5835 = vmatpush1.msra.mxu0 0.0
    %5836 = vmatprep.subr.mxu0 0.0
    %5837 = vmatpush1.msra.mxu0 0.0
    %5838 = vmatprep.subr.mxu0 0.0
    %5839 = vmatpush1.msra.mxu0 0.0
    %5840 = vmatprep.subr.mxu0 0.0
    %5841 = vmatpush1.msra.mxu0 0.0
    %5842 = vmatprep.mubr.f32.mxu0 0.0
    %5843 = vmatmul.mubr.f32.gmra.mrb[0].mxu0 %v5776
    %v5844 = vpop.f32.mrb[0].mxu0
    %v5845 = vadd.f32 0.0, %v5844
    %v5846 = vpop.f32.mrb[0].mxu0
    %5847 = vdwg.mxu0
    %v5848 = vadd.f32 %v5770, %v5845
    %v5849 = vxor.u32 %v5848, 2147483648
    %v5850 = vmul.f32 %v5849, 1.442695
    %v5851 = vpow.pop %v5850
    %v5852 = vadd.f32 %v5851, 1.0
    %v5853 = vrcp.pop %v5852
    %v5854 = vmul.f32 1.0, %v5853
    %v5855 = vtanh.pop %v5848
    %v5856 = vmul.f32 %v5854, %v5691
    %5858 = vrot.lane.b32.xlu0 %v5855, 64
    %v5859 = vpop.permute.xlu0 %5858
    %v5861 = vmul.f32 %v5854, %v5859
    %5863 = vrot.lane.b32.xlu0 %v5861, 32
    %v5864 = vpop.permute.xlu0 %5863
    %v5866 = vadd.f32 %v5856, %v5864
    %v5867 = vtanh.pop %v5866
    %5869 = vrot.lane.b32.xlu0 %v5867, 64
    %v5870 = vpop.permute.xlu0 %5869
    %v5872 = vmul.f32 %v5854, %v5870
    %v5874 = vunpack.c.l.s4 1983009808
    %v5875 = vunpack.c.0.s8 %v5874
    %v5876 = vlaneseq
    %v5877 = vshrl.u32 %v5876, 7
    %v5878 = vsub.s32 %v5875, %v5877
    %v5879 = vrot.slane %v4677, %v5878
    %5880 = vrot.lane.b32.xlu0 %v5879, 32
    %v5881 = vpop.permute.xlu0 %5880
    %5883 = vst.msk [vmem:[%s13] sm:$0x3] %vm3012, %v5881
    %v5885 = vunpack.c.l.s4 1983009808
    %v5886 = vunpack.c.0.s8 %v5885
    %v5887 = vlaneseq
    %v5888 = vshrl.u32 %v5887, 7
    %v5889 = vsub.s32 %v5886, %v5888
    %v5890 = vrot.slane %v4847, %v5889
    %5891 = vrot.lane.b32.xlu0 %v5890, 64
    %v5892 = vpop.permute.xlu0 %5891
    %5894 = vst.msk [vmem:[%s13] sm:$0x3] %vm3024, %v5892
    %v5896 = vunpack.c.l.s4 1983009808
    %v5897 = vunpack.c.0.s8 %v5896
    %v5898 = vlaneseq
    %v5899 = vshrl.u32 %v5898, 7
    %v5900 = vsub.s32 %v5897, %v5899
    %v5901 = vrot.slane %v5017, %v5900
    %5902 = vrot.lane.b32.xlu0 %v5901, 96
    %v5903 = vpop.permute.xlu0 %5902
    %5905 = vst.msk [vmem:[%s13] sm:$0x3] %vm3036, %v5903
    %5906 = vst.msk [vmem:[%s13] sm:$0x3] %vm3038, %v5187
    %v5908 = vunpack.c.l.s4 1983009808
    %v5909 = vunpack.c.0.s8 %v5908
    %v5910 = vlaneseq
    %v5911 = vshrl.u32 %v5910, 7
    %v5912 = vsub.s32 %v5909, %v5911
    %v5913 = vrot.slane %v5357, %v5912
    %5914 = vrot.lane.b32.xlu0 %v5913, 32
    %v5915 = vpop.permute.xlu0 %5914
    %5917 = vst.msk [vmem:[%s13 + $0x2] sm:$0x3] %vm3012, %v5915
    %v5919 = vunpack.c.l.s4 1983009808
    %v5920 = vunpack.c.0.s8 %v5919
    %v5921 = vlaneseq
    %v5922 = vshrl.u32 %v5921, 7
    %v5923 = vsub.s32 %v5920, %v5922
    %v5924 = vrot.slane %v5527, %v5923
    %5925 = vrot.lane.b32.xlu0 %v5924, 64
    %v5926 = vpop.permute.xlu0 %5925
    %5928 = vst.msk [vmem:[%s13 + $0x2] sm:$0x3] %vm3024, %v5926
    %v5930 = vunpack.c.l.s4 1983009808
    %v5931 = vunpack.c.0.s8 %v5930
    %v5932 = vlaneseq
    %v5933 = vshrl.u32 %v5932, 7
    %v5934 = vsub.s32 %v5931, %v5933
    %v5935 = vrot.slane %v5697, %v5934
    %5936 = vrot.lane.b32.xlu0 %v5935, 96
    %v5937 = vpop.permute.xlu0 %5936
    %5939 = vst.msk [vmem:[%s13 + $0x2] sm:$0x3] %vm3036, %v5937
    %5940 = vst.msk [vmem:[%s13 + $0x2] sm:$0x3] %vm3038, %v5872
    %v5941 = vld [vmem:[%s10] sm:$0xff]
    %v5942 = vld [vmem:[%s10 + $0x8] sm:$0xff]
    %v5943 = vld [vmem:[%s10 + $0x10] sm:$0xff]
    %v5944 = vld [vmem:[%s10 + $0x18] sm:$0xff]
    %v5945 = vld [vmem:[#allocation6] sm:$0x1]
    %v5947 = vlaneseq
    %v5948 = vshrl.u32 %v5947, 7
    %v5949 = vsub.s32 0, %v5948
    %v5950 = vrot.slane %v5945, %v5949
    %5953 = vrot.lane.b32.xlu0 %v3001, 32
    %v5954 = vpop.permute.xlu0 %5953
    %v5955 = vsel %vm247, %v5954, 0
    %5957 = vmatprep.subr.mxu0 0.0
    %5958 = vmatpush1.msra.mxu0 %v5941
    %5959 = vmatprep.subr.mxu0 0.0
    %5960 = vmatpush1.msra.mxu0 %v5942
    %5961 = vmatprep.subr.mxu0 0.0
    %5962 = vmatpush1.msra.mxu0 %v5943
    %5963 = vmatprep.subr.mxu0 0.0
    %5964 = vmatpush1.msra.mxu0 %v5944
    %5965 = vmatprep.subr.mxu0 0.0
    %5966 = vmatpush1.msra.mxu0 0.0
    %5967 = vmatprep.subr.mxu0 0.0
    %5968 = vmatpush1.msra.mxu0 0.0
    %5969 = vmatprep.subr.mxu0 0.0
    %5970 = vmatpush1.msra.mxu0 0.0
    %5971 = vmatprep.subr.mxu0 0.0
    %5972 = vmatpush1.msra.mxu0 0.0
    %5973 = vmatprep.subr.mxu0 0.0
    %5974 = vmatpush1.msra.mxu0 0.0
    %5975 = vmatprep.subr.mxu0 0.0
    %5976 = vmatpush1.msra.mxu0 0.0
    %5977 = vmatprep.subr.mxu0 0.0
    %5978 = vmatpush1.msra.mxu0 0.0
    %5979 = vmatprep.subr.mxu0 0.0
    %5980 = vmatpush1.msra.mxu0 0.0
    %5981 = vmatprep.subr.mxu0 0.0
    %5982 = vmatpush1.msra.mxu0 0.0
    %5983 = vmatprep.subr.mxu0 0.0
    %5984 = vmatpush1.msra.mxu0 0.0
    %5985 = vmatprep.subr.mxu0 0.0
    %5986 = vmatpush1.msra.mxu0 0.0
    %5987 = vmatprep.subr.mxu0 0.0
    %5988 = vmatpush1.msra.mxu0 0.0
    %5989 = vmatprep.subr.mxu0 0.0
    %5990 = vmatpush1.msra.mxu0 0.0
    %5991 = vmatprep.subr.mxu0 0.0
    %5992 = vmatpush1.msra.mxu0 0.0
    %5993 = vmatprep.subr.mxu0 0.0
    %5994 = vmatpush1.msra.mxu0 0.0
    %5995 = vmatprep.subr.mxu0 0.0
    %5996 = vmatpush1.msra.mxu0 0.0
    %5997 = vmatprep.subr.mxu0 0.0
    %5998 = vmatpush1.msra.mxu0 0.0
    %5999 = vmatprep.subr.mxu0 0.0
    %6000 = vmatpush1.msra.mxu0 0.0
    %6001 = vmatprep.subr.mxu0 0.0
    %6002 = vmatpush1.msra.mxu0 0.0
    %6003 = vmatprep.subr.mxu0 0.0
    %6004 = vmatpush1.msra.mxu0 0.0
    %6005 = vmatprep.subr.mxu0 0.0
    %6006 = vmatpush1.msra.mxu0 0.0
    %6007 = vmatprep.subr.mxu0 0.0
    %6008 = vmatpush1.msra.mxu0 0.0
    %6009 = vmatprep.subr.mxu0 0.0
    %6010 = vmatpush1.msra.mxu0 0.0
    %6011 = vmatprep.subr.mxu0 0.0
    %6012 = vmatpush1.msra.mxu0 0.0
    %6013 = vmatprep.subr.mxu0 0.0
    %6014 = vmatpush1.msra.mxu0 0.0
    %6015 = vmatprep.subr.mxu0 0.0
    %6016 = vmatpush1.msra.mxu0 0.0
    %6017 = vmatprep.subr.mxu0 0.0
    %6018 = vmatpush1.msra.mxu0 0.0
    %6019 = vmatprep.subr.mxu0 0.0
    %6020 = vmatpush1.msra.mxu0 0.0
    %6021 = vmatprep.mubr.f32.mxu0 0.0
    %6022 = vmatmul.mubr.f32.gmra.mrb[0].mxu0 %v5955
    %v6023 = vpop.f32.mrb[0].mxu0
    %v6024 = vadd.f32 %v5950, %v6023
    %v6025 = vpop.f32.mrb[0].mxu0
    %6026 = vdwg.mxu0
    %v6027 = vld [vmem:[%s2] sm:$0x3]
    %6028 = vset.pattern.permute.xlu0 0
    %6029 = vperm.xlu0 %6028, %v6027
    %v6030 = vpop.permute.xlu0 %6029
    %vm6031 = vcmp.eq.s32.totalorder %v6030, %v194
    %v6032 = vsel %vm6031, %v6024, 0.0
    %vm6033 = vcmask 91136
    %v6034 = vsel %vm6033, %v6032, 0.0
    %6035 = vadd.xlane.f32.xlu0 %v6034
    %v6036 = vpop.xlane.xlu0 %6035
    %vm6037 = vcmask 1024
    %6038 = vst.msk [vmem:[%s14] sm:$0x3] %vm6037, %v6036
    // Predicated region
    $region62: #{dkt_lstm_forward.1} parent=1 // pred_check
      _
    $region63: #{dkt_lstm_forward.1} parent=1 // pred_check_branch
      %6040 = sbr.rel (0) target = $region65
    $region64: #{dkt_lstm_forward.1} parent=1 // pred_region
      _
    $region65: #{dkt_lstm_forward.1} parent=1 // pred_fallthru
      _
    // Predicated region
    $region66: #{dkt_lstm_forward.1} parent=1 // pred_check
      _
    $region67: #{dkt_lstm_forward.1} parent=1 // pred_check_branch
      %6042 = sbr.rel (0) target = $region69
    $region68: #{dkt_lstm_forward.1} parent=1 // pred_region
      _
    $region69: #{dkt_lstm_forward.1} parent=1 // pred_fallthru
      _
    // Predicated region
    $region70: #{dkt_lstm_forward.1} parent=1 // pred_check
      _
    $region71: #{dkt_lstm_forward.1} parent=1 // pred_check_branch
      %6044 = sbr.rel (0) target = $region73
    $region72: #{dkt_lstm_forward.1} parent=1 // pred_region
      _
    $region73: #{dkt_lstm_forward.1} parent=1 // pred_fallthru
      _
    // Predicated region
    $region74: #{dkt_lstm_forward.1} parent=1 // pred_check
      _
    $region75: #{dkt_lstm_forward.1} parent=1 // pred_check_branch
      %6046 = sbr.rel (0) target = $region77
    $region76: #{dkt_lstm_forward.1} parent=1 // pred_region
      _
    $region77: #{dkt_lstm_forward.1} parent=1 // pred_fallthru
      _
    // Predicated region
    $region78: #{dkt_lstm_forward.1} parent=1 // pred_check
      _
    $region79: #{dkt_lstm_forward.1} parent=1 // pred_check_branch
      %6048 = sbr.rel (0) target = $region81
    $region80: #{dkt_lstm_forward.1} parent=1 // pred_region
      _
    $region81: #{dkt_lstm_forward.1} parent=1 // pred_fallthru
      _
    // Predicated region
    $region82: #{dkt_lstm_forward.1} parent=1 // pred_check
      _
    $region83: #{dkt_lstm_forward.1} parent=1 // pred_check_branch
      %6050 = sbr.rel (0) target = $region85
    $region84: #{dkt_lstm_forward.1} parent=1 // pred_region
      _
    $region85: #{dkt_lstm_forward.1} parent=1 // pred_fallthru
      _
    %6051 = vsyncpa [#allocation3], 1
    %6052 = vsyncpa [#allocation5], 1

</llo_original>
